<compile_context>
chip_gen: v7x
topology: tpu7x:2x2x1
jax: 0.10.0
libtpu: 0.0.40
codegen_flags: <defaults>
</compile_context>

<pallas_src>
import functools

import jax
import jax.numpy as jnp
from jax import lax
from jax.experimental import pallas as pl
from jax.experimental.pallas import tpu as pltpu


# --------------------------------------------------------------------------
# Fused Pallas kernel: conv1 + conv2 + conv3 + flatten + fc1 + fc2
# --------------------------------------------------------------------------
def _dqn_fused_kernel(e_ref, w1_ref, b1_ref, w2_ref, b2_ref, w3_ref, b3_ref,
                      wf1_ref, bf1_ref, wf2_ref, bf2_ref, o_ref,
                      h1_ref, h2_ref):
    f32 = jnp.float32
    bf16 = jnp.bfloat16
    n = o_ref.shape[0]                    # padded batch (multiple of 8)
    rows1 = h1_ref.shape[0]               # oh2*ow2*n (= 72)
    c1 = w1_ref.shape[1]                  # 32
    n_off2 = h1_ref.shape[1] // c1        # 16 conv2 kernel offsets
    c2 = w2_ref.shape[1]                  # 64
    n_pos3 = h2_ref.shape[1] // c2        # 9 conv2 output positions

    # ---- conv1 + ReLU (/255 folded into w1) --------------------------------
    # One K=256 dot per conv2 kernel offset; each writes a disjoint 32-column
    # slab of the lane-dense h1 = [rows1, 512] (rows ordered (p, q, n)).
    for ij in range(n_off2):
        acc = jnp.dot(e_ref[pl.ds(ij * rows1, rows1), :], w1_ref[...],
                      preferred_element_type=f32)
        h1_ref[:, pl.ds(ij * c1, c1)] = jnp.maximum(acc + b1_ref[...], 0.0)

    # ---- conv2 + ReLU -------------------------------------------------------
    # One K=512 dot per conv2 output position (contiguous 8-row LHS block);
    # each writes a 64-column slab of the lane-dense h2 = [n, 576].
    for pos in range(n_pos3):
        lhs = h1_ref[pl.ds(pos * n, n), :].astype(bf16)
        acc = jnp.dot(lhs, w2_ref[...], preferred_element_type=f32)
        h2_ref[:, pl.ds(pos * c2, c2)] = jnp.maximum(acc + b2_ref[...], 0.0)

    # ---- conv3 + ReLU (1x1 spatial output == flatten): ONE K=576 dot --------
    h3 = jnp.maximum(
        jnp.dot(h2_ref[...].astype(bf16), w3_ref[...],
                preferred_element_type=f32) + b3_ref[...], 0.0)     # [n, 64]

    # ---- fc1 + ReLU ----------------------------------------------------------
    h4 = jnp.maximum(
        jnp.dot(h3.astype(bf16), wf1_ref[...],
                preferred_element_type=f32) + bf1_ref[...], 0.0)    # [n, 512]

    # ---- fc2 (output padded only to 8 columns) ------------------------------
    o_ref[...] = (jnp.dot(h4.astype(bf16), wf2_ref[...],
                          preferred_element_type=f32)
                  + bf2_ref[...]).astype(o_ref.dtype)               # [n, out_pad]


def _fused_call(e_mat, p, n_pad):
    """Single grid-less pallas_call over the whole network."""
    operands = (e_mat, p["w1"], p["b1"], p["w2"], p["b2"], p["w3"], p["b3"],
                p["wf1"], p["bf1"], p["wf2"], p["bf2"])
    in_specs = [pl.BlockSpec(op.shape, lambda: (0, 0)) for op in operands]

    out_pad = p["wf2"].shape[1]
    c1 = p["w1"].shape[1]                 # 32
    c2 = p["w2"].shape[1]                 # 64
    n_off2 = p["w2"].shape[0] // c1       # 16
    n_pos3 = p["w3"].shape[0] // c2       # 9
    rows1 = n_pos3 * n_pad                # 72

    flops = 2 * (n_off2 * rows1 * p["w1"].shape[0] * c1
                 + n_pos3 * n_pad * p["w2"].shape[0] * c2
                 + n_pad * p["w3"].shape[0] * p["w3"].shape[1]
                 + n_pad * p["wf1"].shape[0] * p["wf1"].shape[1]
                 + n_pad * p["wf2"].shape[0] * out_pad)
    bytes_accessed = int(sum(int(op.size) * op.dtype.itemsize for op in operands)
                         + n_pad * out_pad * 4)

    return pl.pallas_call(
        _dqn_fused_kernel,
        out_shape=jax.ShapeDtypeStruct((n_pad, out_pad), jnp.float32),
        in_specs=in_specs,
        out_specs=pl.BlockSpec((n_pad, out_pad), lambda: (0, 0)),
        scratch_shapes=[
            pltpu.VMEM((rows1, n_off2 * c1), jnp.float32),   # h1 [72, 512]
            pltpu.VMEM((n_pad, n_pos3 * c2), jnp.float32),   # h2 [8, 576]
        ],
        cost_estimate=pl.CostEstimate(flops=flops, transcendentals=0,
                                      bytes_accessed=bytes_accessed),
    )(*operands)


# --------------------------------------------------------------------------
# Parameter init (PyTorch layout) + one-time packing into kernel layout
# --------------------------------------------------------------------------
def init_dqn_params(key, input_dim, output_dim):
    c_in, h, w = input_dim

    def uniform(key, shape, fan_in):
        bound = 1.0 / jnp.sqrt(jnp.float32(fan_in))
        return jax.random.uniform(key, shape, jnp.float32, -bound, bound)

    ks = jax.random.split(key, 10)
    oh1, ow1 = (h - 8) // 4 + 1, (w - 8) // 4 + 1
    oh2, ow2 = (oh1 - 4) // 2 + 1, (ow1 - 4) // 2 + 1
    oh3, ow3 = oh2 - 3 + 1, ow2 - 3 + 1
    conv_out = 64 * oh3 * ow3
    return {
        "w1": uniform(ks[0], (32, c_in, 8, 8), c_in * 8 * 8),
        "b1": uniform(ks[1], (32,), c_in * 8 * 8),
        "w2": uniform(ks[2], (64, 32, 4, 4), 32 * 4 * 4),
        "b2": uniform(ks[3], (64,), 32 * 4 * 4),
        "w3": uniform(ks[4], (64, 64, 3, 3), 64 * 3 * 3),
        "b3": uniform(ks[5], (64,), 64 * 3 * 3),
        "wf1": uniform(ks[6], (conv_out, 512), conv_out),   # stored [in, out]
        "bf1": uniform(ks[7], (512,), conv_out),
        "wf2": uniform(ks[8], (512, output_dim), 512),      # stored [in, out]
        "bf2": uniform(ks[9], (output_dim,), 512),
    }


def pack_dqn_params(params, *, weight_dtype=jnp.bfloat16):
    """One-time (outside the hot path) repack of PyTorch-layout params."""
    f32 = jnp.float32
    w1 = params["w1"]                                    # [32, C, 8, 8]
    oc1, c_in = w1.shape[0], w1.shape[1]
    # Patch-matrix columns are ordered (bi, bj, c, dh, dw), kh=4*bi+dh,
    # kw=4*bj+dw; fold /255 here.
    w1m = (w1.reshape(oc1, c_in, 2, 4, 2, 4)
             .transpose(2, 4, 1, 3, 5, 0)
             .reshape(64 * c_in, oc1) / 255.0)
    w2 = params["w2"]                                    # [64, 32, 4, 4]
    w2m = w2.transpose(2, 3, 1, 0).reshape(-1, w2.shape[0])   # [(kh2,kw2,oc1), oc2]
    w3 = params["w3"]                                    # [64, 64, 3, 3]
    w3m = w3.transpose(2, 3, 1, 0).reshape(-1, w3.shape[0])   # [(p,q,oc2), oc3]
    wf2 = params["wf2"]                                  # [512, out_dim]
    out_dim = wf2.shape[1]
    out_pad = ((out_dim + 7) // 8) * 8                   # small pad only
    wf2p = jnp.zeros((wf2.shape[0], out_pad), f32).at[:, :out_dim].set(wf2)
    bf2p = jnp.zeros((1, out_pad), f32).at[0, :out_dim].set(params["bf2"])
    wd = weight_dtype
    return {
        "w1": w1m.astype(wd), "b1": params["b1"].reshape(1, -1).astype(f32),
        "w2": w2m.astype(wd), "b2": params["b2"].reshape(1, -1).astype(f32),
        "w3": w3m.astype(wd), "b3": params["b3"].reshape(1, -1).astype(f32),
        "wf1": params["wf1"].astype(wd), "bf1": params["bf1"].reshape(1, -1).astype(f32),
        "wf2": wf2p.astype(wd), "bf2": bf2p,
    }


# --------------------------------------------------------------------------
# Forward
# --------------------------------------------------------------------------
def dqn_forward(packed, x_nchw, *, output_dim):
    """x_nchw: [N, C, H, W] float32 pixels in [0, 255]."""
    n, c, h, w = x_nchw.shape
    oh1, ow1 = (h - 8) // 4 + 1, (w - 8) // 4 + 1
    oh2, ow2 = (oh1 - 4) // 2 + 1, (ow1 - 4) // 2 + 1
    oh3, ow3 = oh2 - 3 + 1, ow2 - 3 + 1
    assert oh3 == 1 and ow3 == 1, (
        "fused kernel is specialized to 1x1 conv3 output (H = W = 36)")
    assert h % 4 == 0 and w % 4 == 0 and oh2 == ow2

    # Batch padded to a multiple of 8 (sublane-aligned M).
    n_pad = ((n + 7) // 8) * 8
    x_p = jnp.pad(x_nchw, ((0, n_pad - n), (0, 0), (0, 0), (0, 0)))

    # Space-to-depth (block 4): g[n, gh, gw, (c, dh, dw)] = x[n, c, 4gh+dh, 4gw+dw]
    gh, gw = h // 4, w // 4
    g = (x_p.reshape(n_pad, c, gh, 4, gw, 4)
            .transpose(0, 2, 4, 1, 3, 5)
            .reshape(n_pad, gh, gw, c * 16))

    # ONE gather replaces the old 144-op patch loop: conv1 patches at the
    # conv2-expanded output positions (2p+i, 2q+j).
    off = jnp.arange(4)                       # conv2 kernel offset (i / j)
    pos = jnp.arange(oh2)                     # conv2 output position (p / q)
    blk = jnp.arange(2)                       # conv1 kernel 4x4-block (bi / bj)
    idx = 2 * pos[None, :, None] + off[:, None, None] + blk[None, None, :]  # [4,3,2]
    t = g[:, idx[:, :, :, None, None, None], idx[None, None, None, :, :, :], :]
    # t: [n, i, p, bi, j, q, bj, cell] -> rows (i, j, p, q, n), cols (bi, bj, cell)
    e = (t.transpose(1, 4, 2, 5, 0, 3, 6, 7)
          .reshape(16 * oh2 * ow2 * n_pad, 4 * c * 16)
          .astype(jnp.bfloat16))              # pixels 0..255 are exact in bf16

    out = _fused_call(e, packed, n_pad=n_pad)
    return out[:n, :output_dim]


# --------------------------------------------------------------------------
# Plain-JAX reference (for a loose numerical check; bf16 weights in the kernel)
# --------------------------------------------------------------------------
def dqn_reference(params, x):
    xs = x.astype(jnp.float32) / 255.0

    def conv(hh, ww, bb, s):
        y = lax.conv_general_dilated(hh, ww, (s, s), "VALID",
                                     dimension_numbers=("NCHW", "OIHW", "NCHW"))
        return jnp.maximum(y + bb[None, :, None, None], 0.0)

    hh = conv(xs, params["w1"], params["b1"], 4)
    hh = conv(hh, params["w2"], params["b2"], 2)
    hh = conv(hh, params["w3"], params["b3"], 1)
    hh = hh.reshape(hh.shape[0], -1)
    hh = jnp.maximum(hh @ params["wf1"] + params["bf1"], 0.0)
    return hh @ params["wf2"] + params["bf2"]


# --------------------------------------------------------------------------
if __name__ == "__main__":
    # Smallest spatial size where all three convs are valid: 36 -> 8 -> 3 -> 1.
    input_dim = (4, 36, 36)
    output_dim = 6
    batch = 2

    key = jax.random.PRNGKey(0)
    pkey, xkey = jax.random.split(key)
    params = init_dqn_params(pkey, input_dim, output_dim)
    packed = pack_dqn_params(params)          # one-time repack, outside jit

    # Pixel-like input in [0, 255), float32, NCHW.
    x = jax.random.uniform(xkey, (batch, *input_dim), jnp.float32, 0.0, 255.0)

    fwd = jax.jit(functools.partial(dqn_forward, output_dim=output_dim))
    q_values = fwd(packed, x)
    jax.block_until_ready(q_values)

    assert q_values.shape == (batch, output_dim), q_values.shape
    assert q_values.dtype == jnp.float32

    ref = dqn_reference(params, x)
    err = float(jnp.max(jnp.abs(q_values - ref)))
    assert err < 5e-2, f"max abs err vs reference: {err}"
    print("KERNEL_OK")
</pallas_src>

<mosaic_0001>
module attributes {stable_mosaic.version = 11 : i64} {
  func.func @_dqn_fused_kernel(%arg0: memref<1152x256xbf16, #tpu.memory_space<vmem>>, %arg1: memref<256x32xbf16, #tpu.memory_space<vmem>>, %arg2: memref<1x32xf32, #tpu.memory_space<vmem>>, %arg3: memref<512x64xbf16, #tpu.memory_space<vmem>>, %arg4: memref<1x64xf32, #tpu.memory_space<vmem>>, %arg5: memref<576x64xbf16, #tpu.memory_space<vmem>>, %arg6: memref<1x64xf32, #tpu.memory_space<vmem>>, %arg7: memref<64x512xbf16, #tpu.memory_space<vmem>>, %arg8: memref<1x512xf32, #tpu.memory_space<vmem>>, %arg9: memref<512x8xbf16, #tpu.memory_space<vmem>>, %arg10: memref<1x8xf32, #tpu.memory_space<vmem>>, %arg11: memref<8x8xf32, #tpu.memory_space<vmem>>, %arg12: memref<72x512xf32, #tpu.memory_space<vmem>>, %arg13: memref<8x576xf32, #tpu.memory_space<vmem>>) attributes {dimension_semantics = [], scalar_prefetch = 0 : i64, scratch_operands = 2 : i64, tpu.core_type = #tpu.core_type<tc>} {
    %c0 = arith.constant 0 : index
    %c0_0 = arith.constant 0 : index
    %0 = vector.load %arg0[%c0, %c0_0] : memref<1152x256xbf16, #tpu.memory_space<vmem>>, vector<72x256xbf16>
    %c0_1 = arith.constant 0 : index
    %c0_2 = arith.constant 0 : index
    %1 = vector.load %arg1[%c0_1, %c0_2] : memref<256x32xbf16, #tpu.memory_space<vmem>>, vector<256x32xbf16>
    %cst = arith.constant dense<0.000000e+00> : vector<72x32xf32>
    %2 = tpu.matmul %0, %1, %cst {dimension_numbers = #tpu.dot_dimension_numbers<[1], [0], [0], [1], [0, 0, 1, 1], [], []>} : vector<72x256xbf16>, vector<256x32xbf16>, vector<72x32xf32> -> vector<72x32xf32>
    %c0_3 = arith.constant 0 : index
    %c0_4 = arith.constant 0 : index
    %3 = vector.load %arg2[%c0_3, %c0_4] : memref<1x32xf32, #tpu.memory_space<vmem>>, vector<1x32xf32>
    %4 = vector.broadcast %3 : vector<1x32xf32> to vector<72x32xf32>
    %5 = arith.addf %2, %4 : vector<72x32xf32>
    %cst_5 = arith.constant 0.000000e+00 : f32
    %6 = vector.broadcast %cst_5 : f32 to vector<72x32xf32>
    %7 = arith.maximumf %5, %6 : vector<72x32xf32>
    %c0_6 = arith.constant 0 : index
    %c0_7 = arith.constant 0 : index
    %8 = vector.load %arg12[%c0_6, %c0_7] : memref<72x512xf32, #tpu.memory_space<vmem>>, vector<72x32xf32>
    tpu.vector_store %arg12[%c0_6, %c0_7], %7 {strides = array<i32>} : memref<72x512xf32, #tpu.memory_space<vmem>>, vector<72x32xf32>,
    %c72 = arith.constant 72 : index
    %c0_8 = arith.constant 0 : index
    %9 = vector.load %arg0[%c72, %c0_8] : memref<1152x256xbf16, #tpu.memory_space<vmem>>, vector<72x256xbf16>
    %c0_9 = arith.constant 0 : index
    %c0_10 = arith.constant 0 : index
    %10 = vector.load %arg1[%c0_9, %c0_10] : memref<256x32xbf16, #tpu.memory_space<vmem>>, vector<256x32xbf16>
    %cst_11 = arith.constant dense<0.000000e+00> : vector<72x32xf32>
    %11 = tpu.matmul %9, %10, %cst_11 {dimension_numbers = #tpu.dot_dimension_numbers<[1], [0], [0], [1], [0, 0, 1, 1], [], []>} : vector<72x256xbf16>, vector<256x32xbf16>, vector<72x32xf32> -> vector<72x32xf32>
    %c0_12 = arith.constant 0 : index
    %c0_13 = arith.constant 0 : index
    %12 = vector.load %arg2[%c0_12, %c0_13] : memref<1x32xf32, #tpu.memory_space<vmem>>, vector<1x32xf32>
    %13 = vector.broadcast %12 : vector<1x32xf32> to vector<72x32xf32>
    %14 = arith.addf %11, %13 : vector<72x32xf32>
    %cst_14 = arith.constant 0.000000e+00 : f32
    %15 = vector.broadcast %cst_14 : f32 to vector<72x32xf32>
    %16 = arith.maximumf %14, %15 : vector<72x32xf32>
    %c0_15 = arith.constant 0 : index
    %c32 = arith.constant 32 : index
    %17 = vector.load %arg12[%c0_15, %c32] : memref<72x512xf32, #tpu.memory_space<vmem>>, vector<72x32xf32>
    tpu.vector_store %arg12[%c0_15, %c32], %16 {strides = array<i32>} : memref<72x512xf32, #tpu.memory_space<vmem>>, vector<72x32xf32>,
    %c144 = arith.constant 144 : index
    %c0_16 = arith.constant 0 : index
    %18 = vector.load %arg0[%c144, %c0_16] : memref<1152x256xbf16, #tpu.memory_space<vmem>>, vector<72x256xbf16>
    %c0_17 = arith.constant 0 : index
    %c0_18 = arith.constant 0 : index
    %19 = vector.load %arg1[%c0_17, %c0_18] : memref<256x32xbf16, #tpu.memory_space<vmem>>, vector<256x32xbf16>
    %cst_19 = arith.constant dense<0.000000e+00> : vector<72x32xf32>
    %20 = tpu.matmul %18, %19, %cst_19 {dimension_numbers = #tpu.dot_dimension_numbers<[1], [0], [0], [1], [0, 0, 1, 1], [], []>} : vector<72x256xbf16>, vector<256x32xbf16>, vector<72x32xf32> -> vector<72x32xf32>
    %c0_20 = arith.constant 0 : index
    %c0_21 = arith.constant 0 : index
    %21 = vector.load %arg2[%c0_20, %c0_21] : memref<1x32xf32, #tpu.memory_space<vmem>>, vector<1x32xf32>
    %22 = vector.broadcast %21 : vector<1x32xf32> to vector<72x32xf32>
    %23 = arith.addf %20, %22 : vector<72x32xf32>
    %cst_22 = arith.constant 0.000000e+00 : f32
    %24 = vector.broadcast %cst_22 : f32 to vector<72x32xf32>
    %25 = arith.maximumf %23, %24 : vector<72x32xf32>
    %c0_23 = arith.constant 0 : index
    %c64 = arith.constant 64 : index
    %26 = vector.load %arg12[%c0_23, %c64] : memref<72x512xf32, #tpu.memory_space<vmem>>, vector<72x32xf32>
    tpu.vector_store %arg12[%c0_23, %c64], %25 {strides = array<i32>} : memref<72x512xf32, #tpu.memory_space<vmem>>, vector<72x32xf32>,
    %c216 = arith.constant 216 : index
    %c0_24 = arith.constant 0 : index
    %27 = vector.load %arg0[%c216, %c0_24] : memref<1152x256xbf16, #tpu.memory_space<vmem>>, vector<72x256xbf16>
    %c0_25 = arith.constant 0 : index
    %c0_26 = arith.constant 0 : index
    %28 = vector.load %arg1[%c0_25, %c0_26] : memref<256x32xbf16, #tpu.memory_space<vmem>>, vector<256x32xbf16>
    %cst_27 = arith.constant dense<0.000000e+00> : vector<72x32xf32>
    %29 = tpu.matmul %27, %28, %cst_27 {dimension_numbers = #tpu.dot_dimension_numbers<[1], [0], [0], [1], [0, 0, 1, 1], [], []>} : vector<72x256xbf16>, vector<256x32xbf16>, vector<72x32xf32> -> vector<72x32xf32>
    %c0_28 = arith.constant 0 : index
    %c0_29 = arith.constant 0 : index
    %30 = vector.load %arg2[%c0_28, %c0_29] : memref<1x32xf32, #tpu.memory_space<vmem>>, vector<1x32xf32>
    %31 = vector.broadcast %30 : vector<1x32xf32> to vector<72x32xf32>
    %32 = arith.addf %29, %31 : vector<72x32xf32>
    %cst_30 = arith.constant 0.000000e+00 : f32
    %33 = vector.broadcast %cst_30 : f32 to vector<72x32xf32>
    %34 = arith.maximumf %32, %33 : vector<72x32xf32>
    %c0_31 = arith.constant 0 : index
    %c96 = arith.constant 96 : index
    %35 = vector.load %arg12[%c0_31, %c96] : memref<72x512xf32, #tpu.memory_space<vmem>>, vector<72x32xf32>
    tpu.vector_store %arg12[%c0_31, %c96], %34 {strides = array<i32>} : memref<72x512xf32, #tpu.memory_space<vmem>>, vector<72x32xf32>,
    %c288 = arith.constant 288 : index
    %c0_32 = arith.constant 0 : index
    %36 = vector.load %arg0[%c288, %c0_32] : memref<1152x256xbf16, #tpu.memory_space<vmem>>, vector<72x256xbf16>
    %c0_33 = arith.constant 0 : index
    %c0_34 = arith.constant 0 : index
    %37 = vector.load %arg1[%c0_33, %c0_34] : memref<256x32xbf16, #tpu.memory_space<vmem>>, vector<256x32xbf16>
    %cst_35 = arith.constant dense<0.000000e+00> : vector<72x32xf32>
    %38 = tpu.matmul %36, %37, %cst_35 {dimension_numbers = #tpu.dot_dimension_numbers<[1], [0], [0], [1], [0, 0, 1, 1], [], []>} : vector<72x256xbf16>, vector<256x32xbf16>, vector<72x32xf32> -> vector<72x32xf32>
    %c0_36 = arith.constant 0 : index
    %c0_37 = arith.constant 0 : index
    %39 = vector.load %arg2[%c0_36, %c0_37] : memref<1x32xf32, #tpu.memory_space<vmem>>, vector<1x32xf32>
    %40 = vector.broadcast %39 : vector<1x32xf32> to vector<72x32xf32>
    %41 = arith.addf %38, %40 : vector<72x32xf32>
    %cst_38 = arith.constant 0.000000e+00 : f32
    %42 = vector.broadcast %cst_38 : f32 to vector<72x32xf32>
    %43 = arith.maximumf %41, %42 : vector<72x32xf32>
    %c0_39 = arith.constant 0 : index
    %c128 = arith.constant 128 : index
    %44 = vector.load %arg12[%c0_39, %c128] : memref<72x512xf32, #tpu.memory_space<vmem>>, vector<72x32xf32>
    tpu.vector_store %arg12[%c0_39, %c128], %43 {strides = array<i32>} : memref<72x512xf32, #tpu.memory_space<vmem>>, vector<72x32xf32>,
    %c360 = arith.constant 360 : index
    %c0_40 = arith.constant 0 : index
    %45 = vector.load %arg0[%c360, %c0_40] : memref<1152x256xbf16, #tpu.memory_space<vmem>>, vector<72x256xbf16>
    %c0_41 = arith.constant 0 : index
    %c0_42 = arith.constant 0 : index
    %46 = vector.load %arg1[%c0_41, %c0_42] : memref<256x32xbf16, #tpu.memory_space<vmem>>, vector<256x32xbf16>
    %cst_43 = arith.constant dense<0.000000e+00> : vector<72x32xf32>
    %47 = tpu.matmul %45, %46, %cst_43 {dimension_numbers = #tpu.dot_dimension_numbers<[1], [0], [0], [1], [0, 0, 1, 1], [], []>} : vector<72x256xbf16>, vector<256x32xbf16>, vector<72x32xf32> -> vector<72x32xf32>
    %c0_44 = arith.constant 0 : index
    %c0_45 = arith.constant 0 : index
    %48 = vector.load %arg2[%c0_44, %c0_45] : memref<1x32xf32, #tpu.memory_space<vmem>>, vector<1x32xf32>
    %49 = vector.broadcast %48 : vector<1x32xf32> to vector<72x32xf32>
    %50 = arith.addf %47, %49 : vector<72x32xf32>
    %cst_46 = arith.constant 0.000000e+00 : f32
    %51 = vector.broadcast %cst_46 : f32 to vector<72x32xf32>
    %52 = arith.maximumf %50, %51 : vector<72x32xf32>
    %c0_47 = arith.constant 0 : index
    %c160 = arith.constant 160 : index
    %53 = vector.load %arg12[%c0_47, %c160] : memref<72x512xf32, #tpu.memory_space<vmem>>, vector<72x32xf32>
    tpu.vector_store %arg12[%c0_47, %c160], %52 {strides = array<i32>} : memref<72x512xf32, #tpu.memory_space<vmem>>, vector<72x32xf32>,
    %c432 = arith.constant 432 : index
    %c0_48 = arith.constant 0 : index
    %54 = vector.load %arg0[%c432, %c0_48] : memref<1152x256xbf16, #tpu.memory_space<vmem>>, vector<72x256xbf16>
    %c0_49 = arith.constant 0 : index
    %c0_50 = arith.constant 0 : index
    %55 = vector.load %arg1[%c0_49, %c0_50] : memref<256x32xbf16, #tpu.memory_space<vmem>>, vector<256x32xbf16>
    %cst_51 = arith.constant dense<0.000000e+00> : vector<72x32xf32>
    %56 = tpu.matmul %54, %55, %cst_51 {dimension_numbers = #tpu.dot_dimension_numbers<[1], [0], [0], [1], [0, 0, 1, 1], [], []>} : vector<72x256xbf16>, vector<256x32xbf16>, vector<72x32xf32> -> vector<72x32xf32>
    %c0_52 = arith.constant 0 : index
    %c0_53 = arith.constant 0 : index
    %57 = vector.load %arg2[%c0_52, %c0_53] : memref<1x32xf32, #tpu.memory_space<vmem>>, vector<1x32xf32>
    %58 = vector.broadcast %57 : vector<1x32xf32> to vector<72x32xf32>
    %59 = arith.addf %56, %58 : vector<72x32xf32>
    %cst_54 = arith.constant 0.000000e+00 : f32
    %60 = vector.broadcast %cst_54 : f32 to vector<72x32xf32>
    %61 = arith.maximumf %59, %60 : vector<72x32xf32>
    %c0_55 = arith.constant 0 : index
    %c192 = arith.constant 192 : index
    %62 = vector.load %arg12[%c0_55, %c192] : memref<72x512xf32, #tpu.memory_space<vmem>>, vector<72x32xf32>
    tpu.vector_store %arg12[%c0_55, %c192], %61 {strides = array<i32>} : memref<72x512xf32, #tpu.memory_space<vmem>>, vector<72x32xf32>,
    %c504 = arith.constant 504 : index
    %c0_56 = arith.constant 0 : index
    %63 = vector.load %arg0[%c504, %c0_56] : memref<1152x256xbf16, #tpu.memory_space<vmem>>, vector<72x256xbf16>
    %c0_57 = arith.constant 0 : index
    %c0_58 = arith.constant 0 : index
    %64 = vector.load %arg1[%c0_57, %c0_58] : memref<256x32xbf16, #tpu.memory_space<vmem>>, vector<256x32xbf16>
    %cst_59 = arith.constant dense<0.000000e+00> : vector<72x32xf32>
    %65 = tpu.matmul %63, %64, %cst_59 {dimension_numbers = #tpu.dot_dimension_numbers<[1], [0], [0], [1], [0, 0, 1, 1], [], []>} : vector<72x256xbf16>, vector<256x32xbf16>, vector<72x32xf32> -> vector<72x32xf32>
    %c0_60 = arith.constant 0 : index
    %c0_61 = arith.constant 0 : index
    %66 = vector.load %arg2[%c0_60, %c0_61] : memref<1x32xf32, #tpu.memory_space<vmem>>, vector<1x32xf32>
    %67 = vector.broadcast %66 : vector<1x32xf32> to vector<72x32xf32>
    %68 = arith.addf %65, %67 : vector<72x32xf32>
    %cst_62 = arith.constant 0.000000e+00 : f32
    %69 = vector.broadcast %cst_62 : f32 to vector<72x32xf32>
    %70 = arith.maximumf %68, %69 : vector<72x32xf32>
    %c0_63 = arith.constant 0 : index
    %c224 = arith.constant 224 : index
    %71 = vector.load %arg12[%c0_63, %c224] : memref<72x512xf32, #tpu.memory_space<vmem>>, vector<72x32xf32>
    tpu.vector_store %arg12[%c0_63, %c224], %70 {strides = array<i32>} : memref<72x512xf32, #tpu.memory_space<vmem>>, vector<72x32xf32>,
    %c576 = arith.constant 576 : index
    %c0_64 = arith.constant 0 : index
    %72 = vector.load %arg0[%c576, %c0_64] : memref<1152x256xbf16, #tpu.memory_space<vmem>>, vector<72x256xbf16>
    %c0_65 = arith.constant 0 : index
    %c0_66 = arith.constant 0 : index
    %73 = vector.load %arg1[%c0_65, %c0_66] : memref<256x32xbf16, #tpu.memory_space<vmem>>, vector<256x32xbf16>
    %cst_67 = arith.constant dense<0.000000e+00> : vector<72x32xf32>
    %74 = tpu.matmul %72, %73, %cst_67 {dimension_numbers = #tpu.dot_dimension_numbers<[1], [0], [0], [1], [0, 0, 1, 1], [], []>} : vector<72x256xbf16>, vector<256x32xbf16>, vector<72x32xf32> -> vector<72x32xf32>
    %c0_68 = arith.constant 0 : index
    %c0_69 = arith.constant 0 : index
    %75 = vector.load %arg2[%c0_68, %c0_69] : memref<1x32xf32, #tpu.memory_space<vmem>>, vector<1x32xf32>
    %76 = vector.broadcast %75 : vector<1x32xf32> to vector<72x32xf32>
    %77 = arith.addf %74, %76 : vector<72x32xf32>
    %cst_70 = arith.constant 0.000000e+00 : f32
    %78 = vector.broadcast %cst_70 : f32 to vector<72x32xf32>
    %79 = arith.maximumf %77, %78 : vector<72x32xf32>
    %c0_71 = arith.constant 0 : index
    %c256 = arith.constant 256 : index
    %80 = vector.load %arg12[%c0_71, %c256] : memref<72x512xf32, #tpu.memory_space<vmem>>, vector<72x32xf32>
    tpu.vector_store %arg12[%c0_71, %c256], %79 {strides = array<i32>} : memref<72x512xf32, #tpu.memory_space<vmem>>, vector<72x32xf32>,
    %c648 = arith.constant 648 : index
    %c0_72 = arith.constant 0 : index
    %81 = vector.load %arg0[%c648, %c0_72] : memref<1152x256xbf16, #tpu.memory_space<vmem>>, vector<72x256xbf16>
    %c0_73 = arith.constant 0 : index
    %c0_74 = arith.constant 0 : index
    %82 = vector.load %arg1[%c0_73, %c0_74] : memref<256x32xbf16, #tpu.memory_space<vmem>>, vector<256x32xbf16>
    %cst_75 = arith.constant dense<0.000000e+00> : vector<72x32xf32>
    %83 = tpu.matmul %81, %82, %cst_75 {dimension_numbers = #tpu.dot_dimension_numbers<[1], [0], [0], [1], [0, 0, 1, 1], [], []>} : vector<72x256xbf16>, vector<256x32xbf16>, vector<72x32xf32> -> vector<72x32xf32>
    %c0_76 = arith.constant 0 : index
    %c0_77 = arith.constant 0 : index
    %84 = vector.load %arg2[%c0_76, %c0_77] : memref<1x32xf32, #tpu.memory_space<vmem>>, vector<1x32xf32>
    %85 = vector.broadcast %84 : vector<1x32xf32> to vector<72x32xf32>
    %86 = arith.addf %83, %85 : vector<72x32xf32>
    %cst_78 = arith.constant 0.000000e+00 : f32
    %87 = vector.broadcast %cst_78 : f32 to vector<72x32xf32>
    %88 = arith.maximumf %86, %87 : vector<72x32xf32>
    %c0_79 = arith.constant 0 : index
    %c288_80 = arith.constant 288 : index
    %89 = vector.load %arg12[%c0_79, %c288_80] : memref<72x512xf32, #tpu.memory_space<vmem>>, vector<72x32xf32>
    tpu.vector_store %arg12[%c0_79, %c288_80], %88 {strides = array<i32>} : memref<72x512xf32, #tpu.memory_space<vmem>>, vector<72x32xf32>,
    %c720 = arith.constant 720 : index
    %c0_81 = arith.constant 0 : index
    %90 = vector.load %arg0[%c720, %c0_81] : memref<1152x256xbf16, #tpu.memory_space<vmem>>, vector<72x256xbf16>
    %c0_82 = arith.constant 0 : index
    %c0_83 = arith.constant 0 : index
    %91 = vector.load %arg1[%c0_82, %c0_83] : memref<256x32xbf16, #tpu.memory_space<vmem>>, vector<256x32xbf16>
    %cst_84 = arith.constant dense<0.000000e+00> : vector<72x32xf32>
    %92 = tpu.matmul %90, %91, %cst_84 {dimension_numbers = #tpu.dot_dimension_numbers<[1], [0], [0], [1], [0, 0, 1, 1], [], []>} : vector<72x256xbf16>, vector<256x32xbf16>, vector<72x32xf32> -> vector<72x32xf32>
    %c0_85 = arith.constant 0 : index
    %c0_86 = arith.constant 0 : index
    %93 = vector.load %arg2[%c0_85, %c0_86] : memref<1x32xf32, #tpu.memory_space<vmem>>, vector<1x32xf32>
    %94 = vector.broadcast %93 : vector<1x32xf32> to vector<72x32xf32>
    %95 = arith.addf %92, %94 : vector<72x32xf32>
    %cst_87 = arith.constant 0.000000e+00 : f32
    %96 = vector.broadcast %cst_87 : f32 to vector<72x32xf32>
    %97 = arith.maximumf %95, %96 : vector<72x32xf32>
    %c0_88 = arith.constant 0 : index
    %c320 = arith.constant 320 : index
    %98 = vector.load %arg12[%c0_88, %c320] : memref<72x512xf32, #tpu.memory_space<vmem>>, vector<72x32xf32>
    tpu.vector_store %arg12[%c0_88, %c320], %97 {strides = array<i32>} : memref<72x512xf32, #tpu.memory_space<vmem>>, vector<72x32xf32>,
    %c792 = arith.constant 792 : index
    %c0_89 = arith.constant 0 : index
    %99 = vector.load %arg0[%c792, %c0_89] : memref<1152x256xbf16, #tpu.memory_space<vmem>>, vector<72x256xbf16>
    %c0_90 = arith.constant 0 : index
    %c0_91 = arith.constant 0 : index
    %100 = vector.load %arg1[%c0_90, %c0_91] : memref<256x32xbf16, #tpu.memory_space<vmem>>, vector<256x32xbf16>
    %cst_92 = arith.constant dense<0.000000e+00> : vector<72x32xf32>
    %101 = tpu.matmul %99, %100, %cst_92 {dimension_numbers = #tpu.dot_dimension_numbers<[1], [0], [0], [1], [0, 0, 1, 1], [], []>} : vector<72x256xbf16>, vector<256x32xbf16>, vector<72x32xf32> -> vector<72x32xf32>
    %c0_93 = arith.constant 0 : index
    %c0_94 = arith.constant 0 : index
    %102 = vector.load %arg2[%c0_93, %c0_94] : memref<1x32xf32, #tpu.memory_space<vmem>>, vector<1x32xf32>
    %103 = vector.broadcast %102 : vector<1x32xf32> to vector<72x32xf32>
    %104 = arith.addf %101, %103 : vector<72x32xf32>
    %cst_95 = arith.constant 0.000000e+00 : f32
    %105 = vector.broadcast %cst_95 : f32 to vector<72x32xf32>
    %106 = arith.maximumf %104, %105 : vector<72x32xf32>
    %c0_96 = arith.constant 0 : index
    %c352 = arith.constant 352 : index
    %107 = vector.load %arg12[%c0_96, %c352] : memref<72x512xf32, #tpu.memory_space<vmem>>, vector<72x32xf32>
    tpu.vector_store %arg12[%c0_96, %c352], %106 {strides = array<i32>} : memref<72x512xf32, #tpu.memory_space<vmem>>, vector<72x32xf32>,
    %c864 = arith.constant 864 : index
    %c0_97 = arith.constant 0 : index
    %108 = vector.load %arg0[%c864, %c0_97] : memref<1152x256xbf16, #tpu.memory_space<vmem>>, vector<72x256xbf16>
    %c0_98 = arith.constant 0 : index
    %c0_99 = arith.constant 0 : index
    %109 = vector.load %arg1[%c0_98, %c0_99] : memref<256x32xbf16, #tpu.memory_space<vmem>>, vector<256x32xbf16>
    %cst_100 = arith.constant dense<0.000000e+00> : vector<72x32xf32>
    %110 = tpu.matmul %108, %109, %cst_100 {dimension_numbers = #tpu.dot_dimension_numbers<[1], [0], [0], [1], [0, 0, 1, 1], [], []>} : vector<72x256xbf16>, vector<256x32xbf16>, vector<72x32xf32> -> vector<72x32xf32>
    %c0_101 = arith.constant 0 : index
    %c0_102 = arith.constant 0 : index
    %111 = vector.load %arg2[%c0_101, %c0_102] : memref<1x32xf32, #tpu.memory_space<vmem>>, vector<1x32xf32>
    %112 = vector.broadcast %111 : vector<1x32xf32> to vector<72x32xf32>
    %113 = arith.addf %110, %112 : vector<72x32xf32>
    %cst_103 = arith.constant 0.000000e+00 : f32
    %114 = vector.broadcast %cst_103 : f32 to vector<72x32xf32>
    %115 = arith.maximumf %113, %114 : vector<72x32xf32>
    %c0_104 = arith.constant 0 : index
    %c384 = arith.constant 384 : index
    %116 = vector.load %arg12[%c0_104, %c384] : memref<72x512xf32, #tpu.memory_space<vmem>>, vector<72x32xf32>
    tpu.vector_store %arg12[%c0_104, %c384], %115 {strides = array<i32>} : memref<72x512xf32, #tpu.memory_space<vmem>>, vector<72x32xf32>,
    %c936 = arith.constant 936 : index
    %c0_105 = arith.constant 0 : index
    %117 = vector.load %arg0[%c936, %c0_105] : memref<1152x256xbf16, #tpu.memory_space<vmem>>, vector<72x256xbf16>
    %c0_106 = arith.constant 0 : index
    %c0_107 = arith.constant 0 : index
    %118 = vector.load %arg1[%c0_106, %c0_107] : memref<256x32xbf16, #tpu.memory_space<vmem>>, vector<256x32xbf16>
    %cst_108 = arith.constant dense<0.000000e+00> : vector<72x32xf32>
    %119 = tpu.matmul %117, %118, %cst_108 {dimension_numbers = #tpu.dot_dimension_numbers<[1], [0], [0], [1], [0, 0, 1, 1], [], []>} : vector<72x256xbf16>, vector<256x32xbf16>, vector<72x32xf32> -> vector<72x32xf32>
    %c0_109 = arith.constant 0 : index
    %c0_110 = arith.constant 0 : index
    %120 = vector.load %arg2[%c0_109, %c0_110] : memref<1x32xf32, #tpu.memory_space<vmem>>, vector<1x32xf32>
    %121 = vector.broadcast %120 : vector<1x32xf32> to vector<72x32xf32>
    %122 = arith.addf %119, %121 : vector<72x32xf32>
    %cst_111 = arith.constant 0.000000e+00 : f32
    %123 = vector.broadcast %cst_111 : f32 to vector<72x32xf32>
    %124 = arith.maximumf %122, %123 : vector<72x32xf32>
    %c0_112 = arith.constant 0 : index
    %c416 = arith.constant 416 : index
    %125 = vector.load %arg12[%c0_112, %c416] : memref<72x512xf32, #tpu.memory_space<vmem>>, vector<72x32xf32>
    tpu.vector_store %arg12[%c0_112, %c416], %124 {strides = array<i32>} : memref<72x512xf32, #tpu.memory_space<vmem>>, vector<72x32xf32>,
    %c1008 = arith.constant 1008 : index
    %c0_113 = arith.constant 0 : index
    %126 = vector.load %arg0[%c1008, %c0_113] : memref<1152x256xbf16, #tpu.memory_space<vmem>>, vector<72x256xbf16>
    %c0_114 = arith.constant 0 : index
    %c0_115 = arith.constant 0 : index
    %127 = vector.load %arg1[%c0_114, %c0_115] : memref<256x32xbf16, #tpu.memory_space<vmem>>, vector<256x32xbf16>
    %cst_116 = arith.constant dense<0.000000e+00> : vector<72x32xf32>
    %128 = tpu.matmul %126, %127, %cst_116 {dimension_numbers = #tpu.dot_dimension_numbers<[1], [0], [0], [1], [0, 0, 1, 1], [], []>} : vector<72x256xbf16>, vector<256x32xbf16>, vector<72x32xf32> -> vector<72x32xf32>
    %c0_117 = arith.constant 0 : index
    %c0_118 = arith.constant 0 : index
    %129 = vector.load %arg2[%c0_117, %c0_118] : memref<1x32xf32, #tpu.memory_space<vmem>>, vector<1x32xf32>
    %130 = vector.broadcast %129 : vector<1x32xf32> to vector<72x32xf32>
    %131 = arith.addf %128, %130 : vector<72x32xf32>
    %cst_119 = arith.constant 0.000000e+00 : f32
    %132 = vector.broadcast %cst_119 : f32 to vector<72x32xf32>
    %133 = arith.maximumf %131, %132 : vector<72x32xf32>
    %c0_120 = arith.constant 0 : index
    %c448 = arith.constant 448 : index
    %134 = vector.load %arg12[%c0_120, %c448] : memref<72x512xf32, #tpu.memory_space<vmem>>, vector<72x32xf32>
    tpu.vector_store %arg12[%c0_120, %c448], %133 {strides = array<i32>} : memref<72x512xf32, #tpu.memory_space<vmem>>, vector<72x32xf32>,
    %c1080 = arith.constant 1080 : index
    %c0_121 = arith.constant 0 : index
    %135 = vector.load %arg0[%c1080, %c0_121] : memref<1152x256xbf16, #tpu.memory_space<vmem>>, vector<72x256xbf16>
    %c0_122 = arith.constant 0 : index
    %c0_123 = arith.constant 0 : index
    %136 = vector.load %arg1[%c0_122, %c0_123] : memref<256x32xbf16, #tpu.memory_space<vmem>>, vector<256x32xbf16>
    %cst_124 = arith.constant dense<0.000000e+00> : vector<72x32xf32>
    %137 = tpu.matmul %135, %136, %cst_124 {dimension_numbers = #tpu.dot_dimension_numbers<[1], [0], [0], [1], [0, 0, 1, 1], [], []>} : vector<72x256xbf16>, vector<256x32xbf16>, vector<72x32xf32> -> vector<72x32xf32>
    %c0_125 = arith.constant 0 : index
    %c0_126 = arith.constant 0 : index
    %138 = vector.load %arg2[%c0_125, %c0_126] : memref<1x32xf32, #tpu.memory_space<vmem>>, vector<1x32xf32>
    %139 = vector.broadcast %138 : vector<1x32xf32> to vector<72x32xf32>
    %140 = arith.addf %137, %139 : vector<72x32xf32>
    %cst_127 = arith.constant 0.000000e+00 : f32
    %141 = vector.broadcast %cst_127 : f32 to vector<72x32xf32>
    %142 = arith.maximumf %140, %141 : vector<72x32xf32>
    %c0_128 = arith.constant 0 : index
    %c480 = arith.constant 480 : index
    %143 = vector.load %arg12[%c0_128, %c480] : memref<72x512xf32, #tpu.memory_space<vmem>>, vector<72x32xf32>
    tpu.vector_store %arg12[%c0_128, %c480], %142 {strides = array<i32>} : memref<72x512xf32, #tpu.memory_space<vmem>>, vector<72x32xf32>,
    %c0_129 = arith.constant 0 : index
    %c0_130 = arith.constant 0 : index
    %144 = vector.load %arg12[%c0_129, %c0_130] : memref<72x512xf32, #tpu.memory_space<vmem>>, vector<8x512xf32>
    %145 = arith.truncf %144 : vector<8x512xf32> to vector<8x512xbf16>
    %c0_131 = arith.constant 0 : index
    %c0_132 = arith.constant 0 : index
    %146 = vector.load %arg3[%c0_131, %c0_132] : memref<512x64xbf16, #tpu.memory_space<vmem>>, vector<512x64xbf16>
    %cst_133 = arith.constant dense<0.000000e+00> : vector<8x64xf32>
    %147 = tpu.matmul %145, %146, %cst_133 {dimension_numbers = #tpu.dot_dimension_numbers<[1], [0], [0], [1], [0, 0, 1, 1], [], []>} : vector<8x512xbf16>, vector<512x64xbf16>, vector<8x64xf32> -> vector<8x64xf32>
    %c0_134 = arith.constant 0 : index
    %c0_135 = arith.constant 0 : index
    %148 = vector.load %arg4[%c0_134, %c0_135] : memref<1x64xf32, #tpu.memory_space<vmem>>, vector<1x64xf32>
    %149 = vector.broadcast %148 : vector<1x64xf32> to vector<8x64xf32>
    %150 = arith.addf %147, %149 : vector<8x64xf32>
    %cst_136 = arith.constant 0.000000e+00 : f32
    %151 = vector.broadcast %cst_136 : f32 to vector<8x64xf32>
    %152 = arith.maximumf %150, %151 : vector<8x64xf32>
    %c0_137 = arith.constant 0 : index
    %c0_138 = arith.constant 0 : index
    %153 = vector.load %arg13[%c0_137, %c0_138] : memref<8x576xf32, #tpu.memory_space<vmem>>, vector<8x64xf32>
    tpu.vector_store %arg13[%c0_137, %c0_138], %152 {strides = array<i32>} : memref<8x576xf32, #tpu.memory_space<vmem>>, vector<8x64xf32>,
    %c8 = arith.constant 8 : index
    %c0_139 = arith.constant 0 : index
    %154 = vector.load %arg12[%c8, %c0_139] : memref<72x512xf32, #tpu.memory_space<vmem>>, vector<8x512xf32>
    %155 = arith.truncf %154 : vector<8x512xf32> to vector<8x512xbf16>
    %c0_140 = arith.constant 0 : index
    %c0_141 = arith.constant 0 : index
    %156 = vector.load %arg3[%c0_140, %c0_141] : memref<512x64xbf16, #tpu.memory_space<vmem>>, vector<512x64xbf16>
    %cst_142 = arith.constant dense<0.000000e+00> : vector<8x64xf32>
    %157 = tpu.matmul %155, %156, %cst_142 {dimension_numbers = #tpu.dot_dimension_numbers<[1], [0], [0], [1], [0, 0, 1, 1], [], []>} : vector<8x512xbf16>, vector<512x64xbf16>, vector<8x64xf32> -> vector<8x64xf32>
    %c0_143 = arith.constant 0 : index
    %c0_144 = arith.constant 0 : index
    %158 = vector.load %arg4[%c0_143, %c0_144] : memref<1x64xf32, #tpu.memory_space<vmem>>, vector<1x64xf32>
    %159 = vector.broadcast %158 : vector<1x64xf32> to vector<8x64xf32>
    %160 = arith.addf %157, %159 : vector<8x64xf32>
    %cst_145 = arith.constant 0.000000e+00 : f32
    %161 = vector.broadcast %cst_145 : f32 to vector<8x64xf32>
    %162 = arith.maximumf %160, %161 : vector<8x64xf32>
    %c0_146 = arith.constant 0 : index
    %c64_147 = arith.constant 64 : index
    %163 = vector.load %arg13[%c0_146, %c64_147] : memref<8x576xf32, #tpu.memory_space<vmem>>, vector<8x64xf32>
    tpu.vector_store %arg13[%c0_146, %c64_147], %162 {strides = array<i32>} : memref<8x576xf32, #tpu.memory_space<vmem>>, vector<8x64xf32>,
    %c16 = arith.constant 16 : index
    %c0_148 = arith.constant 0 : index
    %164 = vector.load %arg12[%c16, %c0_148] : memref<72x512xf32, #tpu.memory_space<vmem>>, vector<8x512xf32>
    %165 = arith.truncf %164 : vector<8x512xf32> to vector<8x512xbf16>
    %c0_149 = arith.constant 0 : index
    %c0_150 = arith.constant 0 : index
    %166 = vector.load %arg3[%c0_149, %c0_150] : memref<512x64xbf16, #tpu.memory_space<vmem>>, vector<512x64xbf16>
    %cst_151 = arith.constant dense<0.000000e+00> : vector<8x64xf32>
    %167 = tpu.matmul %165, %166, %cst_151 {dimension_numbers = #tpu.dot_dimension_numbers<[1], [0], [0], [1], [0, 0, 1, 1], [], []>} : vector<8x512xbf16>, vector<512x64xbf16>, vector<8x64xf32> -> vector<8x64xf32>
    %c0_152 = arith.constant 0 : index
    %c0_153 = arith.constant 0 : index
    %168 = vector.load %arg4[%c0_152, %c0_153] : memref<1x64xf32, #tpu.memory_space<vmem>>, vector<1x64xf32>
    %169 = vector.broadcast %168 : vector<1x64xf32> to vector<8x64xf32>
    %170 = arith.addf %167, %169 : vector<8x64xf32>
    %cst_154 = arith.constant 0.000000e+00 : f32
    %171 = vector.broadcast %cst_154 : f32 to vector<8x64xf32>
    %172 = arith.maximumf %170, %171 : vector<8x64xf32>
    %c0_155 = arith.constant 0 : index
    %c128_156 = arith.constant 128 : index
    %173 = vector.load %arg13[%c0_155, %c128_156] : memref<8x576xf32, #tpu.memory_space<vmem>>, vector<8x64xf32>
    tpu.vector_store %arg13[%c0_155, %c128_156], %172 {strides = array<i32>} : memref<8x576xf32, #tpu.memory_space<vmem>>, vector<8x64xf32>,
    %c24 = arith.constant 24 : index
    %c0_157 = arith.constant 0 : index
    %174 = vector.load %arg12[%c24, %c0_157] : memref<72x512xf32, #tpu.memory_space<vmem>>, vector<8x512xf32>
    %175 = arith.truncf %174 : vector<8x512xf32> to vector<8x512xbf16>
    %c0_158 = arith.constant 0 : index
    %c0_159 = arith.constant 0 : index
    %176 = vector.load %arg3[%c0_158, %c0_159] : memref<512x64xbf16, #tpu.memory_space<vmem>>, vector<512x64xbf16>
    %cst_160 = arith.constant dense<0.000000e+00> : vector<8x64xf32>
    %177 = tpu.matmul %175, %176, %cst_160 {dimension_numbers = #tpu.dot_dimension_numbers<[1], [0], [0], [1], [0, 0, 1, 1], [], []>} : vector<8x512xbf16>, vector<512x64xbf16>, vector<8x64xf32> -> vector<8x64xf32>
    %c0_161 = arith.constant 0 : index
    %c0_162 = arith.constant 0 : index
    %178 = vector.load %arg4[%c0_161, %c0_162] : memref<1x64xf32, #tpu.memory_space<vmem>>, vector<1x64xf32>
    %179 = vector.broadcast %178 : vector<1x64xf32> to vector<8x64xf32>
    %180 = arith.addf %177, %179 : vector<8x64xf32>
    %cst_163 = arith.constant 0.000000e+00 : f32
    %181 = vector.broadcast %cst_163 : f32 to vector<8x64xf32>
    %182 = arith.maximumf %180, %181 : vector<8x64xf32>
    %c0_164 = arith.constant 0 : index
    %c192_165 = arith.constant 192 : index
    %183 = vector.load %arg13[%c0_164, %c192_165] : memref<8x576xf32, #tpu.memory_space<vmem>>, vector<8x64xf32>
    tpu.vector_store %arg13[%c0_164, %c192_165], %182 {strides = array<i32>} : memref<8x576xf32, #tpu.memory_space<vmem>>, vector<8x64xf32>,
    %c32_166 = arith.constant 32 : index
    %c0_167 = arith.constant 0 : index
    %184 = vector.load %arg12[%c32_166, %c0_167] : memref<72x512xf32, #tpu.memory_space<vmem>>, vector<8x512xf32>
    %185 = arith.truncf %184 : vector<8x512xf32> to vector<8x512xbf16>
    %c0_168 = arith.constant 0 : index
    %c0_169 = arith.constant 0 : index
    %186 = vector.load %arg3[%c0_168, %c0_169] : memref<512x64xbf16, #tpu.memory_space<vmem>>, vector<512x64xbf16>
    %cst_170 = arith.constant dense<0.000000e+00> : vector<8x64xf32>
    %187 = tpu.matmul %185, %186, %cst_170 {dimension_numbers = #tpu.dot_dimension_numbers<[1], [0], [0], [1], [0, 0, 1, 1], [], []>} : vector<8x512xbf16>, vector<512x64xbf16>, vector<8x64xf32> -> vector<8x64xf32>
    %c0_171 = arith.constant 0 : index
    %c0_172 = arith.constant 0 : index
    %188 = vector.load %arg4[%c0_171, %c0_172] : memref<1x64xf32, #tpu.memory_space<vmem>>, vector<1x64xf32>
    %189 = vector.broadcast %188 : vector<1x64xf32> to vector<8x64xf32>
    %190 = arith.addf %187, %189 : vector<8x64xf32>
    %cst_173 = arith.constant 0.000000e+00 : f32
    %191 = vector.broadcast %cst_173 : f32 to vector<8x64xf32>
    %192 = arith.maximumf %190, %191 : vector<8x64xf32>
    %c0_174 = arith.constant 0 : index
    %c256_175 = arith.constant 256 : index
    %193 = vector.load %arg13[%c0_174, %c256_175] : memref<8x576xf32, #tpu.memory_space<vmem>>, vector<8x64xf32>
    tpu.vector_store %arg13[%c0_174, %c256_175], %192 {strides = array<i32>} : memref<8x576xf32, #tpu.memory_space<vmem>>, vector<8x64xf32>,
    %c40 = arith.constant 40 : index
    %c0_176 = arith.constant 0 : index
    %194 = vector.load %arg12[%c40, %c0_176] : memref<72x512xf32, #tpu.memory_space<vmem>>, vector<8x512xf32>
    %195 = arith.truncf %194 : vector<8x512xf32> to vector<8x512xbf16>
    %c0_177 = arith.constant 0 : index
    %c0_178 = arith.constant 0 : index
    %196 = vector.load %arg3[%c0_177, %c0_178] : memref<512x64xbf16, #tpu.memory_space<vmem>>, vector<512x64xbf16>
    %cst_179 = arith.constant dense<0.000000e+00> : vector<8x64xf32>
    %197 = tpu.matmul %195, %196, %cst_179 {dimension_numbers = #tpu.dot_dimension_numbers<[1], [0], [0], [1], [0, 0, 1, 1], [], []>} : vector<8x512xbf16>, vector<512x64xbf16>, vector<8x64xf32> -> vector<8x64xf32>
    %c0_180 = arith.constant 0 : index
    %c0_181 = arith.constant 0 : index
    %198 = vector.load %arg4[%c0_180, %c0_181] : memref<1x64xf32, #tpu.memory_space<vmem>>, vector<1x64xf32>
    %199 = vector.broadcast %198 : vector<1x64xf32> to vector<8x64xf32>
    %200 = arith.addf %197, %199 : vector<8x64xf32>
    %cst_182 = arith.constant 0.000000e+00 : f32
    %201 = vector.broadcast %cst_182 : f32 to vector<8x64xf32>
    %202 = arith.maximumf %200, %201 : vector<8x64xf32>
    %c0_183 = arith.constant 0 : index
    %c320_184 = arith.constant 320 : index
    %203 = vector.load %arg13[%c0_183, %c320_184] : memref<8x576xf32, #tpu.memory_space<vmem>>, vector<8x64xf32>
    tpu.vector_store %arg13[%c0_183, %c320_184], %202 {strides = array<i32>} : memref<8x576xf32, #tpu.memory_space<vmem>>, vector<8x64xf32>,
    %c48 = arith.constant 48 : index
    %c0_185 = arith.constant 0 : index
    %204 = vector.load %arg12[%c48, %c0_185] : memref<72x512xf32, #tpu.memory_space<vmem>>, vector<8x512xf32>
    %205 = arith.truncf %204 : vector<8x512xf32> to vector<8x512xbf16>
    %c0_186 = arith.constant 0 : index
    %c0_187 = arith.constant 0 : index
    %206 = vector.load %arg3[%c0_186, %c0_187] : memref<512x64xbf16, #tpu.memory_space<vmem>>, vector<512x64xbf16>
    %cst_188 = arith.constant dense<0.000000e+00> : vector<8x64xf32>
    %207 = tpu.matmul %205, %206, %cst_188 {dimension_numbers = #tpu.dot_dimension_numbers<[1], [0], [0], [1], [0, 0, 1, 1], [], []>} : vector<8x512xbf16>, vector<512x64xbf16>, vector<8x64xf32> -> vector<8x64xf32>
    %c0_189 = arith.constant 0 : index
    %c0_190 = arith.constant 0 : index
    %208 = vector.load %arg4[%c0_189, %c0_190] : memref<1x64xf32, #tpu.memory_space<vmem>>, vector<1x64xf32>
    %209 = vector.broadcast %208 : vector<1x64xf32> to vector<8x64xf32>
    %210 = arith.addf %207, %209 : vector<8x64xf32>
    %cst_191 = arith.constant 0.000000e+00 : f32
    %211 = vector.broadcast %cst_191 : f32 to vector<8x64xf32>
    %212 = arith.maximumf %210, %211 : vector<8x64xf32>
    %c0_192 = arith.constant 0 : index
    %c384_193 = arith.constant 384 : index
    %213 = vector.load %arg13[%c0_192, %c384_193] : memref<8x576xf32, #tpu.memory_space<vmem>>, vector<8x64xf32>
    tpu.vector_store %arg13[%c0_192, %c384_193], %212 {strides = array<i32>} : memref<8x576xf32, #tpu.memory_space<vmem>>, vector<8x64xf32>,
    %c56 = arith.constant 56 : index
    %c0_194 = arith.constant 0 : index
    %214 = vector.load %arg12[%c56, %c0_194] : memref<72x512xf32, #tpu.memory_space<vmem>>, vector<8x512xf32>
    %215 = arith.truncf %214 : vector<8x512xf32> to vector<8x512xbf16>
    %c0_195 = arith.constant 0 : index
    %c0_196 = arith.constant 0 : index
    %216 = vector.load %arg3[%c0_195, %c0_196] : memref<512x64xbf16, #tpu.memory_space<vmem>>, vector<512x64xbf16>
    %cst_197 = arith.constant dense<0.000000e+00> : vector<8x64xf32>
    %217 = tpu.matmul %215, %216, %cst_197 {dimension_numbers = #tpu.dot_dimension_numbers<[1], [0], [0], [1], [0, 0, 1, 1], [], []>} : vector<8x512xbf16>, vector<512x64xbf16>, vector<8x64xf32> -> vector<8x64xf32>
    %c0_198 = arith.constant 0 : index
    %c0_199 = arith.constant 0 : index
    %218 = vector.load %arg4[%c0_198, %c0_199] : memref<1x64xf32, #tpu.memory_space<vmem>>, vector<1x64xf32>
    %219 = vector.broadcast %218 : vector<1x64xf32> to vector<8x64xf32>
    %220 = arith.addf %217, %219 : vector<8x64xf32>
    %cst_200 = arith.constant 0.000000e+00 : f32
    %221 = vector.broadcast %cst_200 : f32 to vector<8x64xf32>
    %222 = arith.maximumf %220, %221 : vector<8x64xf32>
    %c0_201 = arith.constant 0 : index
    %c448_202 = arith.constant 448 : index
    %223 = vector.load %arg13[%c0_201, %c448_202] : memref<8x576xf32, #tpu.memory_space<vmem>>, vector<8x64xf32>
    tpu.vector_store %arg13[%c0_201, %c448_202], %222 {strides = array<i32>} : memref<8x576xf32, #tpu.memory_space<vmem>>, vector<8x64xf32>,
    %c64_203 = arith.constant 64 : index
    %c0_204 = arith.constant 0 : index
    %224 = vector.load %arg12[%c64_203, %c0_204] : memref<72x512xf32, #tpu.memory_space<vmem>>, vector<8x512xf32>
    %225 = arith.truncf %224 : vector<8x512xf32> to vector<8x512xbf16>
    %c0_205 = arith.constant 0 : index
    %c0_206 = arith.constant 0 : index
    %226 = vector.load %arg3[%c0_205, %c0_206] : memref<512x64xbf16, #tpu.memory_space<vmem>>, vector<512x64xbf16>
    %cst_207 = arith.constant dense<0.000000e+00> : vector<8x64xf32>
    %227 = tpu.matmul %225, %226, %cst_207 {dimension_numbers = #tpu.dot_dimension_numbers<[1], [0], [0], [1], [0, 0, 1, 1], [], []>} : vector<8x512xbf16>, vector<512x64xbf16>, vector<8x64xf32> -> vector<8x64xf32>
    %c0_208 = arith.constant 0 : index
    %c0_209 = arith.constant 0 : index
    %228 = vector.load %arg4[%c0_208, %c0_209] : memref<1x64xf32, #tpu.memory_space<vmem>>, vector<1x64xf32>
    %229 = vector.broadcast %228 : vector<1x64xf32> to vector<8x64xf32>
    %230 = arith.addf %227, %229 : vector<8x64xf32>
    %cst_210 = arith.constant 0.000000e+00 : f32
    %231 = vector.broadcast %cst_210 : f32 to vector<8x64xf32>
    %232 = arith.maximumf %230, %231 : vector<8x64xf32>
    %c0_211 = arith.constant 0 : index
    %c512 = arith.constant 512 : index
    %233 = vector.load %arg13[%c0_211, %c512] : memref<8x576xf32, #tpu.memory_space<vmem>>, vector<8x64xf32>
    tpu.vector_store %arg13[%c0_211, %c512], %232 {strides = array<i32>} : memref<8x576xf32, #tpu.memory_space<vmem>>, vector<8x64xf32>,
    %c0_212 = arith.constant 0 : index
    %c0_213 = arith.constant 0 : index
    %234 = vector.load %arg13[%c0_212, %c0_213] : memref<8x576xf32, #tpu.memory_space<vmem>>, vector<8x576xf32>
    %235 = arith.truncf %234 : vector<8x576xf32> to vector<8x576xbf16>
    %c0_214 = arith.constant 0 : index
    %c0_215 = arith.constant 0 : index
    %236 = vector.load %arg5[%c0_214, %c0_215] : memref<576x64xbf16, #tpu.memory_space<vmem>>, vector<576x64xbf16>
    %cst_216 = arith.constant dense<0.000000e+00> : vector<8x64xf32>
    %237 = tpu.matmul %235, %236, %cst_216 {dimension_numbers = #tpu.dot_dimension_numbers<[1], [0], [0], [1], [0, 0, 1, 1], [], []>} : vector<8x576xbf16>, vector<576x64xbf16>, vector<8x64xf32> -> vector<8x64xf32>
    %c0_217 = arith.constant 0 : index
    %c0_218 = arith.constant 0 : index
    %238 = vector.load %arg6[%c0_217, %c0_218] : memref<1x64xf32, #tpu.memory_space<vmem>>, vector<1x64xf32>
    %239 = vector.broadcast %238 : vector<1x64xf32> to vector<8x64xf32>
    %240 = arith.addf %237, %239 : vector<8x64xf32>
    %cst_219 = arith.constant 0.000000e+00 : f32
    %241 = vector.broadcast %cst_219 : f32 to vector<8x64xf32>
    %242 = arith.maximumf %240, %241 : vector<8x64xf32>
    %243 = arith.truncf %242 : vector<8x64xf32> to vector<8x64xbf16>
    %c0_220 = arith.constant 0 : index
    %c0_221 = arith.constant 0 : index
    %244 = vector.load %arg7[%c0_220, %c0_221] : memref<64x512xbf16, #tpu.memory_space<vmem>>, vector<64x512xbf16>
    %cst_222 = arith.constant dense<0.000000e+00> : vector<8x512xf32>
    %245 = tpu.matmul %243, %244, %cst_222 {dimension_numbers = #tpu.dot_dimension_numbers<[1], [0], [0], [1], [0, 0, 1, 1], [], []>} : vector<8x64xbf16>, vector<64x512xbf16>, vector<8x512xf32> -> vector<8x512xf32>
    %c0_223 = arith.constant 0 : index
    %c0_224 = arith.constant 0 : index
    %246 = vector.load %arg8[%c0_223, %c0_224] : memref<1x512xf32, #tpu.memory_space<vmem>>, vector<1x512xf32>
    %247 = vector.broadcast %246 : vector<1x512xf32> to vector<8x512xf32>
    %248 = arith.addf %245, %247 : vector<8x512xf32>
    %cst_225 = arith.constant 0.000000e+00 : f32
    %249 = vector.broadcast %cst_225 : f32 to vector<8x512xf32>
    %250 = arith.maximumf %248, %249 : vector<8x512xf32>
    %251 = arith.truncf %250 : vector<8x512xf32> to vector<8x512xbf16>
    %c0_226 = arith.constant 0 : index
    %c0_227 = arith.constant 0 : index
    %252 = vector.load %arg9[%c0_226, %c0_227] : memref<512x8xbf16, #tpu.memory_space<vmem>>, vector<512x8xbf16>
    %cst_228 = arith.constant dense<0.000000e+00> : vector<8x8xf32>
    %253 = tpu.matmul %251, %252, %cst_228 {dimension_numbers = #tpu.dot_dimension_numbers<[1], [0], [0], [1], [0, 0, 1, 1], [], []>} : vector<8x512xbf16>, vector<512x8xbf16>, vector<8x8xf32> -> vector<8x8xf32>
    %c0_229 = arith.constant 0 : index
    %c0_230 = arith.constant 0 : index
    %254 = vector.load %arg10[%c0_229, %c0_230] : memref<1x8xf32, #tpu.memory_space<vmem>>, vector<1x8xf32>
    %255 = vector.broadcast %254 : vector<1x8xf32> to vector<8x8xf32>
    %256 = arith.addf %253, %255 : vector<8x8xf32>
    %c0_231 = arith.constant 0 : index
    %c0_232 = arith.constant 0 : index
    %257 = vector.load %arg11[%c0_231, %c0_232] : memref<8x8xf32, #tpu.memory_space<vmem>>, vector<8x8xf32>
    tpu.vector_store %arg11[%c0_231, %c0_232], %256 {strides = array<i32>} : memref<8x8xf32, #tpu.memory_space<vmem>>, vector<8x8xf32>,
    return
  }
}

</mosaic_0001>

<llo_original>
// kernel: dqn_forward.1
$region0: #{dqn_forward.1}
  #allocation0 [shape = 'u32[]', space=smem, size = 0x4, offset = 0x4, fixed_abs, tag = 'smem constant byte address 0x4 - core index']
  #allocation1 [shape = 'u32[144,128]{1,0:T(1,128)}', space=vmem, size = 0x12000, scoped, tag = 'internal scratch']
  #allocation2 [shape = 'f32[72,512]{1,0:T(8,128)}', space=vmem, size = 0x24000, scoped, tag = 'scratch operand']
  #allocation3 [shape = 'f32[8,576]{1,0:T(8,128)}', space=vmem, size = 0x5000, scoped, tag = 'scratch operand']
  %s0 = inlined_call_operand.vmem [shape: bf16[1152,256], index: 0, kind: input, shape index: {}]
  %s1 = inlined_call_operand.vmem [shape: bf16[256,32], index: 1, kind: input, shape index: {}]
  %s2 = inlined_call_operand.vmem [shape: f32[1,32], index: 2, kind: input, shape index: {}]
  %s3 = inlined_call_operand.vmem [shape: bf16[512,64], index: 3, kind: input, shape index: {}]
  %s4 = inlined_call_operand.vmem [shape: f32[1,64], index: 4, kind: input, shape index: {}]
  %s5 = inlined_call_operand.vmem [shape: bf16[576,64], index: 5, kind: input, shape index: {}]
  %s6 = inlined_call_operand.vmem [shape: f32[1,64], index: 6, kind: input, shape index: {}]
  %s7 = inlined_call_operand.vmem [shape: bf16[64,512], index: 7, kind: input, shape index: {}]
  %s8 = inlined_call_operand.vmem [shape: f32[1,512], index: 8, kind: input, shape index: {}]
  %s9 = inlined_call_operand.vmem [shape: bf16[512,8], index: 9, kind: input, shape index: {}]
  %s10 = inlined_call_operand.vmem [shape: f32[1,8], index: 10, kind: input, shape index: {}]
  %s11 = inlined_call_operand.vmem [shape: f32[8,8], index: 11, kind: output, shape index: {}]
  %s12 = sld [smem:[#allocation0]]
  $region54: #{dqn_forward.1} parent=0
    _
  %s14 = ssub.s32 1, %s12
  %s15 = scalar_select 0, %s14, %s12
  // Predicated region
  $region2: #{dqn_forward.1} parent=0 // pred_check
    _
  $region3: #{dqn_forward.1} parent=0 // pred_check_branch
    %17 = sbr.rel (0) target = $region5
  $region4: #{dqn_forward.1} parent=0 // pred_region
    _
  $region5: #{dqn_forward.1} parent=0 // pred_fallthru
    _
  // Predicated region
  $region6: #{dqn_forward.1} parent=0 // pred_check
    _
  $region7: #{dqn_forward.1} parent=0 // pred_check_branch
    %19 = sbr.rel (0) target = $region9
  $region8: #{dqn_forward.1} parent=0 // pred_region
    _
  $region9: #{dqn_forward.1} parent=0 // pred_fallthru
    _
  // Predicated region
  $region10: #{dqn_forward.1} parent=0 // pred_check
    _
  $region11: #{dqn_forward.1} parent=0 // pred_check_branch
    %21 = sbr.rel (0) target = $region13
  $region12: #{dqn_forward.1} parent=0 // pred_region
    _
  $region13: #{dqn_forward.1} parent=0 // pred_fallthru
    _
  // Predicated region
  $region14: #{dqn_forward.1} parent=0 // pred_check
    _
  $region15: #{dqn_forward.1} parent=0 // pred_check_branch
    %23 = sbr.rel (0) target = $region17
  $region16: #{dqn_forward.1} parent=0 // pred_region
    _
  $region17: #{dqn_forward.1} parent=0 // pred_fallthru
    _
  // Predicated region
  $region18: #{dqn_forward.1} parent=0 // pred_check
    _
  $region19: #{dqn_forward.1} parent=0 // pred_check_branch
    %25 = sbr.rel (0) target = $region21
  $region20: #{dqn_forward.1} parent=0 // pred_region
    _
  $region21: #{dqn_forward.1} parent=0 // pred_fallthru
    _
  // Predicated region
  $region22: #{dqn_forward.1} parent=0 // pred_check
    _
  $region23: #{dqn_forward.1} parent=0 // pred_check_branch
    %27 = sbr.rel (0) target = $region25
  $region24: #{dqn_forward.1} parent=0 // pred_region
    _
  $region25: #{dqn_forward.1} parent=0 // pred_fallthru
    _
  // Predicated region
  $region26: #{dqn_forward.1} parent=0 // pred_check
    _
  $region27: #{dqn_forward.1} parent=0 // pred_check_branch
    %29 = sbr.rel (0) target = $region29
  $region28: #{dqn_forward.1} parent=0 // pred_region
    _
  $region29: #{dqn_forward.1} parent=0 // pred_fallthru
    _
  // Predicated region
  $region30: #{dqn_forward.1} parent=0 // pred_check
    _
  $region31: #{dqn_forward.1} parent=0 // pred_check_branch
    %31 = sbr.rel (0) target = $region33
  $region32: #{dqn_forward.1} parent=0 // pred_region
    _
  $region33: #{dqn_forward.1} parent=0 // pred_fallthru
    _
  // Predicated region
  $region34: #{dqn_forward.1} parent=0 // pred_check
    _
  $region35: #{dqn_forward.1} parent=0 // pred_check_branch
    %33 = sbr.rel (0) target = $region37
  $region36: #{dqn_forward.1} parent=0 // pred_region
    _
  $region37: #{dqn_forward.1} parent=0 // pred_fallthru
    _
  // Predicated region
  $region38: #{dqn_forward.1} parent=0 // pred_check
    _
  $region39: #{dqn_forward.1} parent=0 // pred_check_branch
    %35 = sbr.rel (0) target = $region41
  $region40: #{dqn_forward.1} parent=0 // pred_region
    _
  $region41: #{dqn_forward.1} parent=0 // pred_fallthru
    _
  // Predicated region
  $region42: #{dqn_forward.1} parent=0 // pred_check
    _
  $region43: #{dqn_forward.1} parent=0 // pred_check_branch
    %37 = sbr.rel (0) target = $region45
  $region44: #{dqn_forward.1} parent=0 // pred_region
    _
  $region45: #{dqn_forward.1} parent=0 // pred_fallthru
    _
  %v39 = vld [vmem:[%s0] sm:$0xff]
  %v40 = vld [vmem:[%s0 + $0x8] sm:$0xff]
  %v41 = vld [vmem:[%s0 + $0x10] sm:$0xff]
  %v42 = vld [vmem:[%s0 + $0x18] sm:$0xff]
  %v43 = vld [vmem:[%s0 + $0x20] sm:$0xff]
  %v44 = vld [vmem:[%s0 + $0x28] sm:$0xff]
  %v45 = vld [vmem:[%s0 + $0x30] sm:$0xff]
  %v46 = vld [vmem:[%s0 + $0x38] sm:$0xff]
  %v47 = vld [vmem:[%s0 + $0x40] sm:$0xff]
  %v48 = vld [vmem:[%s1] sm:$0xf]
  %v49 = vld [vmem:[%s1 + $0x4] sm:$0xf]
  %v50 = vld [vmem:[%s1 + $0x8] sm:$0xf]
  %v51 = vld [vmem:[%s1 + $0xc] sm:$0xf]
  %v52 = vld [vmem:[%s1 + $0x10] sm:$0xf]
  %v53 = vld [vmem:[%s1 + $0x14] sm:$0xf]
  %v54 = vld [vmem:[%s1 + $0x18] sm:$0xf]
  %v55 = vld [vmem:[%s1 + $0x1c] sm:$0xf]
  %v56 = vld [vmem:[%s1 + $0x20] sm:$0xf]
  %v57 = vld [vmem:[%s1 + $0x24] sm:$0xf]
  %v58 = vld [vmem:[%s1 + $0x28] sm:$0xf]
  %v59 = vld [vmem:[%s1 + $0x2c] sm:$0xf]
  %v60 = vld [vmem:[%s1 + $0x30] sm:$0xf]
  %v61 = vld [vmem:[%s1 + $0x34] sm:$0xf]
  %v62 = vld [vmem:[%s1 + $0x38] sm:$0xf]
  %v63 = vld [vmem:[%s1 + $0x3c] sm:$0xf]
  %v64 = vld [vmem:[%s1 + $0x40] sm:$0xf]
  %v65 = vld [vmem:[%s1 + $0x44] sm:$0xf]
  %v66 = vld [vmem:[%s1 + $0x48] sm:$0xf]
  %v67 = vld [vmem:[%s1 + $0x4c] sm:$0xf]
  %v68 = vld [vmem:[%s1 + $0x50] sm:$0xf]
  %v69 = vld [vmem:[%s1 + $0x54] sm:$0xf]
  %v70 = vld [vmem:[%s1 + $0x58] sm:$0xf]
  %v71 = vld [vmem:[%s1 + $0x5c] sm:$0xf]
  %v72 = vld [vmem:[%s1 + $0x60] sm:$0xf]
  %v73 = vld [vmem:[%s1 + $0x64] sm:$0xf]
  %v74 = vld [vmem:[%s1 + $0x68] sm:$0xf]
  %v75 = vld [vmem:[%s1 + $0x6c] sm:$0xf]
  %v76 = vld [vmem:[%s1 + $0x70] sm:$0xf]
  %v77 = vld [vmem:[%s1 + $0x74] sm:$0xf]
  %v78 = vld [vmem:[%s1 + $0x78] sm:$0xf]
  %v79 = vld [vmem:[%s1 + $0x7c] sm:$0xf]
  %v80 = vld [vmem:[%s2] sm:$0x1]
  %v82 = vlaneseq
  %v83 = vshrl.u32 %v82, 7
  %v84 = vsub.s32 0, %v83
  %v85 = vrot.slane %v80, %v84
  %v96 = vunpack.c.l.b16 %v39
  %v97 = vunpack.c.h.b16 %v39
  %v98 = vunpack.c.l.b16 %v40
  %v99 = vunpack.c.h.b16 %v40
  %v100 = vunpack.c.l.b16 %v41
  %v101 = vunpack.c.h.b16 %v41
  %v102 = vunpack.c.l.b16 %v42
  %v103 = vunpack.c.h.b16 %v42
  %v104 = vunpack.c.l.b16 %v43
  %v105 = vunpack.c.h.b16 %v43
  %v106 = vunpack.c.l.b16 %v44
  %v107 = vunpack.c.h.b16 %v44
  %v108 = vunpack.c.l.b16 %v45
  %v109 = vunpack.c.h.b16 %v45
  %v110 = vunpack.c.l.b16 %v46
  %v111 = vunpack.c.h.b16 %v46
  %v112 = vunpack.c.l.b16 %v47
  %v113 = vunpack.c.h.b16 %v47
  %v114 = vpack.c.b16 %v98, %v96
  %v115 = vpack.c.b16 %v99, %v97
  %v116 = vpack.c.b16 %v102, %v100
  %v117 = vpack.c.b16 %v103, %v101
  %v118 = vpack.c.b16 %v106, %v104
  %v119 = vpack.c.b16 %v107, %v105
  %v120 = vpack.c.b16 %v110, %v108
  %v121 = vpack.c.b16 %v111, %v109
  %v122 = vpack.c.b16 %v112, %v112
  %v123 = vpack.c.b16 %v113, %v113
  %v166 = vunpack.c.l.b16 %v48
  %v167 = vunpack.c.l.b16 %v49
  %v168 = vunpack.c.l.b16 %v50
  %v169 = vunpack.c.l.b16 %v51
  %v170 = vunpack.c.l.b16 %v52
  %v171 = vunpack.c.l.b16 %v53
  %v172 = vunpack.c.l.b16 %v54
  %v173 = vunpack.c.l.b16 %v55
  %v174 = vunpack.c.l.b16 %v56
  %v175 = vunpack.c.l.b16 %v57
  %v176 = vunpack.c.l.b16 %v58
  %v177 = vunpack.c.l.b16 %v59
  %v178 = vunpack.c.l.b16 %v60
  %v179 = vunpack.c.l.b16 %v61
  %v180 = vunpack.c.l.b16 %v62
  %v181 = vunpack.c.l.b16 %v63
  %v182 = vunpack.c.l.b16 %v64
  %v183 = vunpack.c.l.b16 %v65
  %v184 = vunpack.c.l.b16 %v66
  %v185 = vunpack.c.l.b16 %v67
  %v186 = vunpack.c.l.b16 %v68
  %v187 = vunpack.c.l.b16 %v69
  %v188 = vunpack.c.l.b16 %v70
  %v189 = vunpack.c.l.b16 %v71
  %v190 = vunpack.c.l.b16 %v72
  %v191 = vunpack.c.l.b16 %v73
  %v192 = vunpack.c.l.b16 %v74
  %v193 = vunpack.c.l.b16 %v75
  %v194 = vunpack.c.l.b16 %v76
  %v195 = vunpack.c.l.b16 %v77
  %v196 = vunpack.c.l.b16 %v78
  %v197 = vunpack.c.l.b16 %v79
  %v198 = vpack.c.b16 %v167, %v166
  %v199 = vpack.c.b16 %v169, %v168
  %v200 = vpack.c.b16 %v171, %v170
  %v201 = vpack.c.b16 %v173, %v172
  %v202 = vpack.c.b16 %v175, %v174
  %v203 = vpack.c.b16 %v177, %v176
  %v204 = vpack.c.b16 %v179, %v178
  %v205 = vpack.c.b16 %v181, %v180
  %v206 = vpack.c.b16 %v183, %v182
  %v207 = vpack.c.b16 %v185, %v184
  %v208 = vpack.c.b16 %v187, %v186
  %v209 = vpack.c.b16 %v189, %v188
  %v210 = vpack.c.b16 %v191, %v190
  %v211 = vpack.c.b16 %v193, %v192
  %v212 = vpack.c.b16 %v195, %v194
  %v213 = vpack.c.b16 %v197, %v196
  %230 = vmatprep.subr.bf16.mxu0 0
  %231 = vmatpush1.bf16.msra.mxu0 %v198
  %232 = vmatprep.subr.bf16.mxu0 0
  %233 = vmatpush1.bf16.msra.mxu0 %v199
  %234 = vmatprep.subr.bf16.mxu0 0
  %235 = vmatpush1.bf16.msra.mxu0 %v200
  %236 = vmatprep.subr.bf16.mxu0 0
  %237 = vmatpush1.bf16.msra.mxu0 %v201
  %238 = vmatprep.subr.bf16.mxu0 0
  %239 = vmatpush1.bf16.msra.mxu0 %v202
  %240 = vmatprep.subr.bf16.mxu0 0
  %241 = vmatpush1.bf16.msra.mxu0 %v203
  %242 = vmatprep.subr.bf16.mxu0 0
  %243 = vmatpush1.bf16.msra.mxu0 %v204
  %244 = vmatprep.subr.bf16.mxu0 0
  %245 = vmatpush1.bf16.msra.mxu0 %v205
  %246 = vmatprep.subr.bf16.mxu0 0
  %247 = vmatpush1.bf16.msra.mxu0 %v206
  %248 = vmatprep.subr.bf16.mxu0 0
  %249 = vmatpush1.bf16.msra.mxu0 %v207
  %250 = vmatprep.subr.bf16.mxu0 0
  %251 = vmatpush1.bf16.msra.mxu0 %v208
  %252 = vmatprep.subr.bf16.mxu0 0
  %253 = vmatpush1.bf16.msra.mxu0 %v209
  %254 = vmatprep.subr.bf16.mxu0 0
  %255 = vmatpush1.bf16.msra.mxu0 %v210
  %256 = vmatprep.subr.bf16.mxu0 0
  %257 = vmatpush1.bf16.msra.mxu0 %v211
  %258 = vmatprep.subr.bf16.mxu0 0
  %259 = vmatpush1.bf16.msra.mxu0 %v212
  %260 = vmatprep.subr.bf16.mxu0 0
  %261 = vmatpush1.bf16.msra.mxu0 %v213
  %262 = vmatprep.mubr.bf16.mxu0 %v115
  %263 = vmatmul.mubr.bf16.gmra.mrb[0].mxu0 %v114
  %v264 = vpop.f32.mrb[0].mxu0
  %v265 = vadd.f32 %v85, %v264
  %v266 = vpop.f32.mrb[0].mxu0
  %v267 = vpop.f32.mrb[0].mxu0
  %v268 = vadd.f32 %v85, %v267
  %v269 = vpop.f32.mrb[0].mxu0
  %270 = vmatprep.mubr.bf16.mxu0 %v117
  %271 = vmatmul.mubr.bf16.gmra.mrb[0].mxu0 %v116
  %v272 = vpop.f32.mrb[0].mxu0
  %v273 = vadd.f32 %v85, %v272
  %v274 = vpop.f32.mrb[0].mxu0
  %v275 = vpop.f32.mrb[0].mxu0
  %v276 = vadd.f32 %v85, %v275
  %v277 = vpop.f32.mrb[0].mxu0
  %278 = vmatprep.mubr.bf16.mxu0 %v119
  %279 = vmatmul.mubr.bf16.gmra.mrb[0].mxu0 %v118
  %v280 = vpop.f32.mrb[0].mxu0
  %v281 = vadd.f32 %v85, %v280
  %v282 = vpop.f32.mrb[0].mxu0
  %v283 = vpop.f32.mrb[0].mxu0
  %v284 = vadd.f32 %v85, %v283
  %v285 = vpop.f32.mrb[0].mxu0
  %286 = vmatprep.mubr.bf16.mxu0 %v121
  %287 = vmatmul.mubr.bf16.gmra.mrb[0].mxu0 %v120
  %v288 = vpop.f32.mrb[0].mxu0
  %v289 = vadd.f32 %v85, %v288
  %v290 = vpop.f32.mrb[0].mxu0
  %v291 = vpop.f32.mrb[0].mxu0
  %v292 = vadd.f32 %v85, %v291
  %v293 = vpop.f32.mrb[0].mxu0
  %294 = vmatprep.mubr.bf16.mxu0 %v123
  %295 = vmatmul.mubr.bf16.gmra.mrb[0].mxu0 %v122
  %v296 = vpop.f32.mrb[0].mxu0
  %v297 = vadd.f32 %v85, %v296
  %v298 = vpop.f32.mrb[0].mxu0
  %v299 = vpop.f32.mrb[0].mxu0
  %v300 = vpop.f32.mrb[0].mxu0
  %301 = vdwg.mxu0
  %v302 = vmax.f32 %v265, 0.0
  %v303 = vmax.f32 %v268, 0.0
  %v304 = vmax.f32 %v273, 0.0
  %v305 = vmax.f32 %v276, 0.0
  %v306 = vmax.f32 %v281, 0.0
  %v307 = vmax.f32 %v284, 0.0
  %v308 = vmax.f32 %v289, 0.0
  %v309 = vmax.f32 %v292, 0.0
  %v310 = vmax.f32 %v297, 0.0
  %vm311 = vcmask 261120
  %312 = vst.msk [vmem:[#allocation2] sm:$0xff] %vm311, %v302
  %313 = vst.msk [vmem:[#allocation2 + $0x20] sm:$0xff] %vm311, %v303
  %314 = vst.msk [vmem:[#allocation2 + $0x40] sm:$0xff] %vm311, %v304
  %315 = vst.msk [vmem:[#allocation2 + $0x60] sm:$0xff] %vm311, %v305
  %316 = vst.msk [vmem:[#allocation2 + $0x80] sm:$0xff] %vm311, %v306
  %317 = vst.msk [vmem:[#allocation2 + $0xa0] sm:$0xff] %vm311, %v307
  %318 = vst.msk [vmem:[#allocation2 + $0xc0] sm:$0xff] %vm311, %v308
  %319 = vst.msk [vmem:[#allocation2 + $0xe0] sm:$0xff] %vm311, %v309
  %320 = vst.msk [vmem:[#allocation2 + $0x100] sm:$0xff] %vm311, %v310
  %v321 = vld [vmem:[%s0 + $0x48] sm:$0xff]
  %v322 = vld [vmem:[%s0 + $0x50] sm:$0xff]
  %v323 = vld [vmem:[%s0 + $0x58] sm:$0xff]
  %v324 = vld [vmem:[%s0 + $0x60] sm:$0xff]
  %v325 = vld [vmem:[%s0 + $0x68] sm:$0xff]
  %v326 = vld [vmem:[%s0 + $0x70] sm:$0xff]
  %v327 = vld [vmem:[%s0 + $0x78] sm:$0xff]
  %v328 = vld [vmem:[%s0 + $0x80] sm:$0xff]
  %v329 = vld [vmem:[%s0 + $0x88] sm:$0xff]
  %v330 = vld [vmem:[%s1] sm:$0xf]
  %v331 = vld [vmem:[%s1 + $0x4] sm:$0xf]
  %v332 = vld [vmem:[%s1 + $0x8] sm:$0xf]
  %v333 = vld [vmem:[%s1 + $0xc] sm:$0xf]
  %v334 = vld [vmem:[%s1 + $0x10] sm:$0xf]
  %v335 = vld [vmem:[%s1 + $0x14] sm:$0xf]
  %v336 = vld [vmem:[%s1 + $0x18] sm:$0xf]
  %v337 = vld [vmem:[%s1 + $0x1c] sm:$0xf]
  %v338 = vld [vmem:[%s1 + $0x20] sm:$0xf]
  %v339 = vld [vmem:[%s1 + $0x24] sm:$0xf]
  %v340 = vld [vmem:[%s1 + $0x28] sm:$0xf]
  %v341 = vld [vmem:[%s1 + $0x2c] sm:$0xf]
  %v342 = vld [vmem:[%s1 + $0x30] sm:$0xf]
  %v343 = vld [vmem:[%s1 + $0x34] sm:$0xf]
  %v344 = vld [vmem:[%s1 + $0x38] sm:$0xf]
  %v345 = vld [vmem:[%s1 + $0x3c] sm:$0xf]
  %v346 = vld [vmem:[%s1 + $0x40] sm:$0xf]
  %v347 = vld [vmem:[%s1 + $0x44] sm:$0xf]
  %v348 = vld [vmem:[%s1 + $0x48] sm:$0xf]
  %v349 = vld [vmem:[%s1 + $0x4c] sm:$0xf]
  %v350 = vld [vmem:[%s1 + $0x50] sm:$0xf]
  %v351 = vld [vmem:[%s1 + $0x54] sm:$0xf]
  %v352 = vld [vmem:[%s1 + $0x58] sm:$0xf]
  %v353 = vld [vmem:[%s1 + $0x5c] sm:$0xf]
  %v354 = vld [vmem:[%s1 + $0x60] sm:$0xf]
  %v355 = vld [vmem:[%s1 + $0x64] sm:$0xf]
  %v356 = vld [vmem:[%s1 + $0x68] sm:$0xf]
  %v357 = vld [vmem:[%s1 + $0x6c] sm:$0xf]
  %v358 = vld [vmem:[%s1 + $0x70] sm:$0xf]
  %v359 = vld [vmem:[%s1 + $0x74] sm:$0xf]
  %v360 = vld [vmem:[%s1 + $0x78] sm:$0xf]
  %v361 = vld [vmem:[%s1 + $0x7c] sm:$0xf]
  %v362 = vld [vmem:[%s2] sm:$0x1]
  %v364 = vlaneseq
  %v365 = vshrl.u32 %v364, 7
  %v366 = vsub.s32 0, %v365
  %v367 = vrot.slane %v362, %v366
  %v378 = vunpack.c.l.b16 %v321
  %v379 = vunpack.c.h.b16 %v321
  %v380 = vunpack.c.l.b16 %v322
  %v381 = vunpack.c.h.b16 %v322
  %v382 = vunpack.c.l.b16 %v323
  %v383 = vunpack.c.h.b16 %v323
  %v384 = vunpack.c.l.b16 %v324
  %v385 = vunpack.c.h.b16 %v324
  %v386 = vunpack.c.l.b16 %v325
  %v387 = vunpack.c.h.b16 %v325
  %v388 = vunpack.c.l.b16 %v326
  %v389 = vunpack.c.h.b16 %v326
  %v390 = vunpack.c.l.b16 %v327
  %v391 = vunpack.c.h.b16 %v327
  %v392 = vunpack.c.l.b16 %v328
  %v393 = vunpack.c.h.b16 %v328
  %v394 = vunpack.c.l.b16 %v329
  %v395 = vunpack.c.h.b16 %v329
  %v396 = vpack.c.b16 %v380, %v378
  %v397 = vpack.c.b16 %v381, %v379
  %v398 = vpack.c.b16 %v384, %v382
  %v399 = vpack.c.b16 %v385, %v383
  %v400 = vpack.c.b16 %v388, %v386
  %v401 = vpack.c.b16 %v389, %v387
  %v402 = vpack.c.b16 %v392, %v390
  %v403 = vpack.c.b16 %v393, %v391
  %v404 = vpack.c.b16 %v394, %v394
  %v405 = vpack.c.b16 %v395, %v395
  %v448 = vunpack.c.l.b16 %v330
  %v449 = vunpack.c.l.b16 %v331
  %v450 = vunpack.c.l.b16 %v332
  %v451 = vunpack.c.l.b16 %v333
  %v452 = vunpack.c.l.b16 %v334
  %v453 = vunpack.c.l.b16 %v335
  %v454 = vunpack.c.l.b16 %v336
  %v455 = vunpack.c.l.b16 %v337
  %v456 = vunpack.c.l.b16 %v338
  %v457 = vunpack.c.l.b16 %v339
  %v458 = vunpack.c.l.b16 %v340
  %v459 = vunpack.c.l.b16 %v341
  %v460 = vunpack.c.l.b16 %v342
  %v461 = vunpack.c.l.b16 %v343
  %v462 = vunpack.c.l.b16 %v344
  %v463 = vunpack.c.l.b16 %v345
  %v464 = vunpack.c.l.b16 %v346
  %v465 = vunpack.c.l.b16 %v347
  %v466 = vunpack.c.l.b16 %v348
  %v467 = vunpack.c.l.b16 %v349
  %v468 = vunpack.c.l.b16 %v350
  %v469 = vunpack.c.l.b16 %v351
  %v470 = vunpack.c.l.b16 %v352
  %v471 = vunpack.c.l.b16 %v353
  %v472 = vunpack.c.l.b16 %v354
  %v473 = vunpack.c.l.b16 %v355
  %v474 = vunpack.c.l.b16 %v356
  %v475 = vunpack.c.l.b16 %v357
  %v476 = vunpack.c.l.b16 %v358
  %v477 = vunpack.c.l.b16 %v359
  %v478 = vunpack.c.l.b16 %v360
  %v479 = vunpack.c.l.b16 %v361
  %v480 = vpack.c.b16 %v449, %v448
  %v481 = vpack.c.b16 %v451, %v450
  %v482 = vpack.c.b16 %v453, %v452
  %v483 = vpack.c.b16 %v455, %v454
  %v484 = vpack.c.b16 %v457, %v456
  %v485 = vpack.c.b16 %v459, %v458
  %v486 = vpack.c.b16 %v461, %v460
  %v487 = vpack.c.b16 %v463, %v462
  %v488 = vpack.c.b16 %v465, %v464
  %v489 = vpack.c.b16 %v467, %v466
  %v490 = vpack.c.b16 %v469, %v468
  %v491 = vpack.c.b16 %v471, %v470
  %v492 = vpack.c.b16 %v473, %v472
  %v493 = vpack.c.b16 %v475, %v474
  %v494 = vpack.c.b16 %v477, %v476
  %v495 = vpack.c.b16 %v479, %v478
  %512 = vmatprep.subr.bf16.mxu0 0
  %513 = vmatpush1.bf16.msra.mxu0 %v480
  %514 = vmatprep.subr.bf16.mxu0 0
  %515 = vmatpush1.bf16.msra.mxu0 %v481
  %516 = vmatprep.subr.bf16.mxu0 0
  %517 = vmatpush1.bf16.msra.mxu0 %v482
  %518 = vmatprep.subr.bf16.mxu0 0
  %519 = vmatpush1.bf16.msra.mxu0 %v483
  %520 = vmatprep.subr.bf16.mxu0 0
  %521 = vmatpush1.bf16.msra.mxu0 %v484
  %522 = vmatprep.subr.bf16.mxu0 0
  %523 = vmatpush1.bf16.msra.mxu0 %v485
  %524 = vmatprep.subr.bf16.mxu0 0
  %525 = vmatpush1.bf16.msra.mxu0 %v486
  %526 = vmatprep.subr.bf16.mxu0 0
  %527 = vmatpush1.bf16.msra.mxu0 %v487
  %528 = vmatprep.subr.bf16.mxu0 0
  %529 = vmatpush1.bf16.msra.mxu0 %v488
  %530 = vmatprep.subr.bf16.mxu0 0
  %531 = vmatpush1.bf16.msra.mxu0 %v489
  %532 = vmatprep.subr.bf16.mxu0 0
  %533 = vmatpush1.bf16.msra.mxu0 %v490
  %534 = vmatprep.subr.bf16.mxu0 0
  %535 = vmatpush1.bf16.msra.mxu0 %v491
  %536 = vmatprep.subr.bf16.mxu0 0
  %537 = vmatpush1.bf16.msra.mxu0 %v492
  %538 = vmatprep.subr.bf16.mxu0 0
  %539 = vmatpush1.bf16.msra.mxu0 %v493
  %540 = vmatprep.subr.bf16.mxu0 0
  %541 = vmatpush1.bf16.msra.mxu0 %v494
  %542 = vmatprep.subr.bf16.mxu0 0
  %543 = vmatpush1.bf16.msra.mxu0 %v495
  %544 = vmatprep.mubr.bf16.mxu0 %v397
  %545 = vmatmul.mubr.bf16.gmra.mrb[0].mxu0 %v396
  %v546 = vpop.f32.mrb[0].mxu0
  %v547 = vadd.f32 %v367, %v546
  %v548 = vpop.f32.mrb[0].mxu0
  %v549 = vpop.f32.mrb[0].mxu0
  %v550 = vadd.f32 %v367, %v549
  %v551 = vpop.f32.mrb[0].mxu0
  %552 = vmatprep.mubr.bf16.mxu0 %v399
  %553 = vmatmul.mubr.bf16.gmra.mrb[0].mxu0 %v398
  %v554 = vpop.f32.mrb[0].mxu0
  %v555 = vadd.f32 %v367, %v554
  %v556 = vpop.f32.mrb[0].mxu0
  %v557 = vpop.f32.mrb[0].mxu0
  %v558 = vadd.f32 %v367, %v557
  %v559 = vpop.f32.mrb[0].mxu0
  %560 = vmatprep.mubr.bf16.mxu0 %v401
  %561 = vmatmul.mubr.bf16.gmra.mrb[0].mxu0 %v400
  %v562 = vpop.f32.mrb[0].mxu0
  %v563 = vadd.f32 %v367, %v562
  %v564 = vpop.f32.mrb[0].mxu0
  %v565 = vpop.f32.mrb[0].mxu0
  %v566 = vadd.f32 %v367, %v565
  %v567 = vpop.f32.mrb[0].mxu0
  %568 = vmatprep.mubr.bf16.mxu0 %v403
  %569 = vmatmul.mubr.bf16.gmra.mrb[0].mxu0 %v402
  %v570 = vpop.f32.mrb[0].mxu0
  %v571 = vadd.f32 %v367, %v570
  %v572 = vpop.f32.mrb[0].mxu0
  %v573 = vpop.f32.mrb[0].mxu0
  %v574 = vadd.f32 %v367, %v573
  %v575 = vpop.f32.mrb[0].mxu0
  %576 = vmatprep.mubr.bf16.mxu0 %v405
  %577 = vmatmul.mubr.bf16.gmra.mrb[0].mxu0 %v404
  %v578 = vpop.f32.mrb[0].mxu0
  %v579 = vadd.f32 %v367, %v578
  %v580 = vpop.f32.mrb[0].mxu0
  %v581 = vpop.f32.mrb[0].mxu0
  %v582 = vpop.f32.mrb[0].mxu0
  %583 = vdwg.mxu0
  %v584 = vmax.f32 %v547, 0.0
  %v585 = vmax.f32 %v550, 0.0
  %v586 = vmax.f32 %v555, 0.0
  %v587 = vmax.f32 %v558, 0.0
  %v588 = vmax.f32 %v563, 0.0
  %v589 = vmax.f32 %v566, 0.0
  %v590 = vmax.f32 %v571, 0.0
  %v591 = vmax.f32 %v574, 0.0
  %v592 = vmax.f32 %v579, 0.0
  %602 = vrot.lane.b32.xlu0 %v584, 32
  %v603 = vpop.permute.xlu0 %602
  %604 = vrot.lane.b32.xlu0 %v585, 32
  %v605 = vpop.permute.xlu0 %604
  %606 = vrot.lane.b32.xlu0 %v586, 32
  %v607 = vpop.permute.xlu0 %606
  %608 = vrot.lane.b32.xlu0 %v587, 32
  %v609 = vpop.permute.xlu0 %608
  %610 = vrot.lane.b32.xlu0 %v588, 32
  %v611 = vpop.permute.xlu0 %610
  %612 = vrot.lane.b32.xlu0 %v589, 32
  %v613 = vpop.permute.xlu0 %612
  %614 = vrot.lane.b32.xlu0 %v590, 32
  %v615 = vpop.permute.xlu0 %614
  %616 = vrot.lane.b32.xlu0 %v591, 32
  %v617 = vpop.permute.xlu0 %616
  %618 = vrot.lane.b32.xlu0 %v592, 32
  %v619 = vpop.permute.xlu0 %618
  %vm629 = vcmask 523520
  %630 = vst.msk [vmem:[#allocation2] sm:$0xff] %vm629, %v603
  %631 = vst.msk [vmem:[#allocation2 + $0x20] sm:$0xff] %vm629, %v605
  %632 = vst.msk [vmem:[#allocation2 + $0x40] sm:$0xff] %vm629, %v607
  %633 = vst.msk [vmem:[#allocation2 + $0x60] sm:$0xff] %vm629, %v609
  %634 = vst.msk [vmem:[#allocation2 + $0x80] sm:$0xff] %vm629, %v611
  %635 = vst.msk [vmem:[#allocation2 + $0xa0] sm:$0xff] %vm629, %v613
  %636 = vst.msk [vmem:[#allocation2 + $0xc0] sm:$0xff] %vm629, %v615
  %637 = vst.msk [vmem:[#allocation2 + $0xe0] sm:$0xff] %vm629, %v617
  %638 = vst.msk [vmem:[#allocation2 + $0x100] sm:$0xff] %vm629, %v619
  %v639 = vld [vmem:[%s0 + $0x90] sm:$0xff]
  %v640 = vld [vmem:[%s0 + $0x98] sm:$0xff]
  %v641 = vld [vmem:[%s0 + $0xa0] sm:$0xff]
  %v642 = vld [vmem:[%s0 + $0xa8] sm:$0xff]
  %v643 = vld [vmem:[%s0 + $0xb0] sm:$0xff]
  %v644 = vld [vmem:[%s0 + $0xb8] sm:$0xff]
  %v645 = vld [vmem:[%s0 + $0xc0] sm:$0xff]
  %v646 = vld [vmem:[%s0 + $0xc8] sm:$0xff]
  %v647 = vld [vmem:[%s0 + $0xd0] sm:$0xff]
  %v648 = vld [vmem:[%s1] sm:$0xf]
  %v649 = vld [vmem:[%s1 + $0x4] sm:$0xf]
  %v650 = vld [vmem:[%s1 + $0x8] sm:$0xf]
  %v651 = vld [vmem:[%s1 + $0xc] sm:$0xf]
  %v652 = vld [vmem:[%s1 + $0x10] sm:$0xf]
  %v653 = vld [vmem:[%s1 + $0x14] sm:$0xf]
  %v654 = vld [vmem:[%s1 + $0x18] sm:$0xf]
  %v655 = vld [vmem:[%s1 + $0x1c] sm:$0xf]
  %v656 = vld [vmem:[%s1 + $0x20] sm:$0xf]
  %v657 = vld [vmem:[%s1 + $0x24] sm:$0xf]
  %v658 = vld [vmem:[%s1 + $0x28] sm:$0xf]
  %v659 = vld [vmem:[%s1 + $0x2c] sm:$0xf]
  %v660 = vld [vmem:[%s1 + $0x30] sm:$0xf]
  %v661 = vld [vmem:[%s1 + $0x34] sm:$0xf]
  %v662 = vld [vmem:[%s1 + $0x38] sm:$0xf]
  %v663 = vld [vmem:[%s1 + $0x3c] sm:$0xf]
  %v664 = vld [vmem:[%s1 + $0x40] sm:$0xf]
  %v665 = vld [vmem:[%s1 + $0x44] sm:$0xf]
  %v666 = vld [vmem:[%s1 + $0x48] sm:$0xf]
  %v667 = vld [vmem:[%s1 + $0x4c] sm:$0xf]
  %v668 = vld [vmem:[%s1 + $0x50] sm:$0xf]
  %v669 = vld [vmem:[%s1 + $0x54] sm:$0xf]
  %v670 = vld [vmem:[%s1 + $0x58] sm:$0xf]
  %v671 = vld [vmem:[%s1 + $0x5c] sm:$0xf]
  %v672 = vld [vmem:[%s1 + $0x60] sm:$0xf]
  %v673 = vld [vmem:[%s1 + $0x64] sm:$0xf]
  %v674 = vld [vmem:[%s1 + $0x68] sm:$0xf]
  %v675 = vld [vmem:[%s1 + $0x6c] sm:$0xf]
  %v676 = vld [vmem:[%s1 + $0x70] sm:$0xf]
  %v677 = vld [vmem:[%s1 + $0x74] sm:$0xf]
  %v678 = vld [vmem:[%s1 + $0x78] sm:$0xf]
  %v679 = vld [vmem:[%s1 + $0x7c] sm:$0xf]
  %v680 = vld [vmem:[%s2] sm:$0x1]
  %v682 = vlaneseq
  %v683 = vshrl.u32 %v682, 7
  %v684 = vsub.s32 0, %v683
  %v685 = vrot.slane %v680, %v684
  %v696 = vunpack.c.l.b16 %v639
  %v697 = vunpack.c.h.b16 %v639
  %v698 = vunpack.c.l.b16 %v640
  %v699 = vunpack.c.h.b16 %v640
  %v700 = vunpack.c.l.b16 %v641
  %v701 = vunpack.c.h.b16 %v641
  %v702 = vunpack.c.l.b16 %v642
  %v703 = vunpack.c.h.b16 %v642
  %v704 = vunpack.c.l.b16 %v643
  %v705 = vunpack.c.h.b16 %v643
  %v706 = vunpack.c.l.b16 %v644
  %v707 = vunpack.c.h.b16 %v644
  %v708 = vunpack.c.l.b16 %v645
  %v709 = vunpack.c.h.b16 %v645
  %v710 = vunpack.c.l.b16 %v646
  %v711 = vunpack.c.h.b16 %v646
  %v712 = vunpack.c.l.b16 %v647
  %v713 = vunpack.c.h.b16 %v647
  %v714 = vpack.c.b16 %v698, %v696
  %v715 = vpack.c.b16 %v699, %v697
  %v716 = vpack.c.b16 %v702, %v700
  %v717 = vpack.c.b16 %v703, %v701
  %v718 = vpack.c.b16 %v706, %v704
  %v719 = vpack.c.b16 %v707, %v705
  %v720 = vpack.c.b16 %v710, %v708
  %v721 = vpack.c.b16 %v711, %v709
  %v722 = vpack.c.b16 %v712, %v712
  %v723 = vpack.c.b16 %v713, %v713
  %v766 = vunpack.c.l.b16 %v648
  %v767 = vunpack.c.l.b16 %v649
  %v768 = vunpack.c.l.b16 %v650
  %v769 = vunpack.c.l.b16 %v651
  %v770 = vunpack.c.l.b16 %v652
  %v771 = vunpack.c.l.b16 %v653
  %v772 = vunpack.c.l.b16 %v654
  %v773 = vunpack.c.l.b16 %v655
  %v774 = vunpack.c.l.b16 %v656
  %v775 = vunpack.c.l.b16 %v657
  %v776 = vunpack.c.l.b16 %v658
  %v777 = vunpack.c.l.b16 %v659
  %v778 = vunpack.c.l.b16 %v660
  %v779 = vunpack.c.l.b16 %v661
  %v780 = vunpack.c.l.b16 %v662
  %v781 = vunpack.c.l.b16 %v663
  %v782 = vunpack.c.l.b16 %v664
  %v783 = vunpack.c.l.b16 %v665
  %v784 = vunpack.c.l.b16 %v666
  %v785 = vunpack.c.l.b16 %v667
  %v786 = vunpack.c.l.b16 %v668
  %v787 = vunpack.c.l.b16 %v669
  %v788 = vunpack.c.l.b16 %v670
  %v789 = vunpack.c.l.b16 %v671
  %v790 = vunpack.c.l.b16 %v672
  %v791 = vunpack.c.l.b16 %v673
  %v792 = vunpack.c.l.b16 %v674
  %v793 = vunpack.c.l.b16 %v675
  %v794 = vunpack.c.l.b16 %v676
  %v795 = vunpack.c.l.b16 %v677
  %v796 = vunpack.c.l.b16 %v678
  %v797 = vunpack.c.l.b16 %v679
  %v798 = vpack.c.b16 %v767, %v766
  %v799 = vpack.c.b16 %v769, %v768
  %v800 = vpack.c.b16 %v771, %v770
  %v801 = vpack.c.b16 %v773, %v772
  %v802 = vpack.c.b16 %v775, %v774
  %v803 = vpack.c.b16 %v777, %v776
  %v804 = vpack.c.b16 %v779, %v778
  %v805 = vpack.c.b16 %v781, %v780
  %v806 = vpack.c.b16 %v783, %v782
  %v807 = vpack.c.b16 %v785, %v784
  %v808 = vpack.c.b16 %v787, %v786
  %v809 = vpack.c.b16 %v789, %v788
  %v810 = vpack.c.b16 %v791, %v790
  %v811 = vpack.c.b16 %v793, %v792
  %v812 = vpack.c.b16 %v795, %v794
  %v813 = vpack.c.b16 %v797, %v796
  %830 = vmatprep.subr.bf16.mxu0 0
  %831 = vmatpush1.bf16.msra.mxu0 %v798
  %832 = vmatprep.subr.bf16.mxu0 0
  %833 = vmatpush1.bf16.msra.mxu0 %v799
  %834 = vmatprep.subr.bf16.mxu0 0
  %835 = vmatpush1.bf16.msra.mxu0 %v800
  %836 = vmatprep.subr.bf16.mxu0 0
  %837 = vmatpush1.bf16.msra.mxu0 %v801
  %838 = vmatprep.subr.bf16.mxu0 0
  %839 = vmatpush1.bf16.msra.mxu0 %v802
  %840 = vmatprep.subr.bf16.mxu0 0
  %841 = vmatpush1.bf16.msra.mxu0 %v803
  %842 = vmatprep.subr.bf16.mxu0 0
  %843 = vmatpush1.bf16.msra.mxu0 %v804
  %844 = vmatprep.subr.bf16.mxu0 0
  %845 = vmatpush1.bf16.msra.mxu0 %v805
  %846 = vmatprep.subr.bf16.mxu0 0
  %847 = vmatpush1.bf16.msra.mxu0 %v806
  %848 = vmatprep.subr.bf16.mxu0 0
  %849 = vmatpush1.bf16.msra.mxu0 %v807
  %850 = vmatprep.subr.bf16.mxu0 0
  %851 = vmatpush1.bf16.msra.mxu0 %v808
  %852 = vmatprep.subr.bf16.mxu0 0
  %853 = vmatpush1.bf16.msra.mxu0 %v809
  %854 = vmatprep.subr.bf16.mxu0 0
  %855 = vmatpush1.bf16.msra.mxu0 %v810
  %856 = vmatprep.subr.bf16.mxu0 0
  %857 = vmatpush1.bf16.msra.mxu0 %v811
  %858 = vmatprep.subr.bf16.mxu0 0
  %859 = vmatpush1.bf16.msra.mxu0 %v812
  %860 = vmatprep.subr.bf16.mxu0 0
  %861 = vmatpush1.bf16.msra.mxu0 %v813
  %862 = vmatprep.mubr.bf16.mxu0 %v715
  %863 = vmatmul.mubr.bf16.gmra.mrb[0].mxu0 %v714
  %v864 = vpop.f32.mrb[0].mxu0
  %v865 = vadd.f32 %v685, %v864
  %v866 = vpop.f32.mrb[0].mxu0
  %v867 = vpop.f32.mrb[0].mxu0
  %v868 = vadd.f32 %v685, %v867
  %v869 = vpop.f32.mrb[0].mxu0
  %870 = vmatprep.mubr.bf16.mxu0 %v717
  %871 = vmatmul.mubr.bf16.gmra.mrb[0].mxu0 %v716
  %v872 = vpop.f32.mrb[0].mxu0
  %v873 = vadd.f32 %v685, %v872
  %v874 = vpop.f32.mrb[0].mxu0
  %v875 = vpop.f32.mrb[0].mxu0
  %v876 = vadd.f32 %v685, %v875
  %v877 = vpop.f32.mrb[0].mxu0
  %878 = vmatprep.mubr.bf16.mxu0 %v719
  %879 = vmatmul.mubr.bf16.gmra.mrb[0].mxu0 %v718
  %v880 = vpop.f32.mrb[0].mxu0
  %v881 = vadd.f32 %v685, %v880
  %v882 = vpop.f32.mrb[0].mxu0
  %v883 = vpop.f32.mrb[0].mxu0
  %v884 = vadd.f32 %v685, %v883
  %v885 = vpop.f32.mrb[0].mxu0
  %886 = vmatprep.mubr.bf16.mxu0 %v721
  %887 = vmatmul.mubr.bf16.gmra.mrb[0].mxu0 %v720
  %v888 = vpop.f32.mrb[0].mxu0
  %v889 = vadd.f32 %v685, %v888
  %v890 = vpop.f32.mrb[0].mxu0
  %v891 = vpop.f32.mrb[0].mxu0
  %v892 = vadd.f32 %v685, %v891
  %v893 = vpop.f32.mrb[0].mxu0
  %894 = vmatprep.mubr.bf16.mxu0 %v723
  %895 = vmatmul.mubr.bf16.gmra.mrb[0].mxu0 %v722
  %v896 = vpop.f32.mrb[0].mxu0
  %v897 = vadd.f32 %v685, %v896
  %v898 = vpop.f32.mrb[0].mxu0
  %v899 = vpop.f32.mrb[0].mxu0
  %v900 = vpop.f32.mrb[0].mxu0
  %901 = vdwg.mxu0
  %v902 = vmax.f32 %v865, 0.0
  %v903 = vmax.f32 %v868, 0.0
  %v904 = vmax.f32 %v873, 0.0
  %v905 = vmax.f32 %v876, 0.0
  %v906 = vmax.f32 %v881, 0.0
  %v907 = vmax.f32 %v884, 0.0
  %v908 = vmax.f32 %v889, 0.0
  %v909 = vmax.f32 %v892, 0.0
  %v910 = vmax.f32 %v897, 0.0
  %920 = vrot.lane.b32.xlu0 %v902, 64
  %v921 = vpop.permute.xlu0 %920
  %922 = vrot.lane.b32.xlu0 %v903, 64
  %v923 = vpop.permute.xlu0 %922
  %924 = vrot.lane.b32.xlu0 %v904, 64
  %v925 = vpop.permute.xlu0 %924
  %926 = vrot.lane.b32.xlu0 %v905, 64
  %v927 = vpop.permute.xlu0 %926
  %928 = vrot.lane.b32.xlu0 %v906, 64
  %v929 = vpop.permute.xlu0 %928
  %930 = vrot.lane.b32.xlu0 %v907, 64
  %v931 = vpop.permute.xlu0 %930
  %932 = vrot.lane.b32.xlu0 %v908, 64
  %v933 = vpop.permute.xlu0 %932
  %934 = vrot.lane.b32.xlu0 %v909, 64
  %v935 = vpop.permute.xlu0 %934
  %936 = vrot.lane.b32.xlu0 %v910, 64
  %v937 = vpop.permute.xlu0 %936
  %vm947 = vcmask 785920
  %948 = vst.msk [vmem:[#allocation2] sm:$0xff] %vm947, %v921
  %949 = vst.msk [vmem:[#allocation2 + $0x20] sm:$0xff] %vm947, %v923
  %950 = vst.msk [vmem:[#allocation2 + $0x40] sm:$0xff] %vm947, %v925
  %951 = vst.msk [vmem:[#allocation2 + $0x60] sm:$0xff] %vm947, %v927
  %952 = vst.msk [vmem:[#allocation2 + $0x80] sm:$0xff] %vm947, %v929
  %953 = vst.msk [vmem:[#allocation2 + $0xa0] sm:$0xff] %vm947, %v931
  %954 = vst.msk [vmem:[#allocation2 + $0xc0] sm:$0xff] %vm947, %v933
  %955 = vst.msk [vmem:[#allocation2 + $0xe0] sm:$0xff] %vm947, %v935
  %956 = vst.msk [vmem:[#allocation2 + $0x100] sm:$0xff] %vm947, %v937
  %v957 = vld [vmem:[%s0 + $0xd8] sm:$0xff]
  %v958 = vld [vmem:[%s0 + $0xe0] sm:$0xff]
  %v959 = vld [vmem:[%s0 + $0xe8] sm:$0xff]
  %v960 = vld [vmem:[%s0 + $0xf0] sm:$0xff]
  %v961 = vld [vmem:[%s0 + $0xf8] sm:$0xff]
  %v962 = vld [vmem:[%s0 + $0x100] sm:$0xff]
  %v963 = vld [vmem:[%s0 + $0x108] sm:$0xff]
  %v964 = vld [vmem:[%s0 + $0x110] sm:$0xff]
  %v965 = vld [vmem:[%s0 + $0x118] sm:$0xff]
  %v966 = vld [vmem:[%s1] sm:$0xf]
  %v967 = vld [vmem:[%s1 + $0x4] sm:$0xf]
  %v968 = vld [vmem:[%s1 + $0x8] sm:$0xf]
  %v969 = vld [vmem:[%s1 + $0xc] sm:$0xf]
  %v970 = vld [vmem:[%s1 + $0x10] sm:$0xf]
  %v971 = vld [vmem:[%s1 + $0x14] sm:$0xf]
  %v972 = vld [vmem:[%s1 + $0x18] sm:$0xf]
  %v973 = vld [vmem:[%s1 + $0x1c] sm:$0xf]
  %v974 = vld [vmem:[%s1 + $0x20] sm:$0xf]
  %v975 = vld [vmem:[%s1 + $0x24] sm:$0xf]
  %v976 = vld [vmem:[%s1 + $0x28] sm:$0xf]
  %v977 = vld [vmem:[%s1 + $0x2c] sm:$0xf]
  %v978 = vld [vmem:[%s1 + $0x30] sm:$0xf]
  %v979 = vld [vmem:[%s1 + $0x34] sm:$0xf]
  %v980 = vld [vmem:[%s1 + $0x38] sm:$0xf]
  %v981 = vld [vmem:[%s1 + $0x3c] sm:$0xf]
  %v982 = vld [vmem:[%s1 + $0x40] sm:$0xf]
  %v983 = vld [vmem:[%s1 + $0x44] sm:$0xf]
  %v984 = vld [vmem:[%s1 + $0x48] sm:$0xf]
  %v985 = vld [vmem:[%s1 + $0x4c] sm:$0xf]
  %v986 = vld [vmem:[%s1 + $0x50] sm:$0xf]
  %v987 = vld [vmem:[%s1 + $0x54] sm:$0xf]
  %v988 = vld [vmem:[%s1 + $0x58] sm:$0xf]
  %v989 = vld [vmem:[%s1 + $0x5c] sm:$0xf]
  %v990 = vld [vmem:[%s1 + $0x60] sm:$0xf]
  %v991 = vld [vmem:[%s1 + $0x64] sm:$0xf]
  %v992 = vld [vmem:[%s1 + $0x68] sm:$0xf]
  %v993 = vld [vmem:[%s1 + $0x6c] sm:$0xf]
  %v994 = vld [vmem:[%s1 + $0x70] sm:$0xf]
  %v995 = vld [vmem:[%s1 + $0x74] sm:$0xf]
  %v996 = vld [vmem:[%s1 + $0x78] sm:$0xf]
  %v997 = vld [vmem:[%s1 + $0x7c] sm:$0xf]
  %v998 = vld [vmem:[%s2] sm:$0x1]
  %v1000 = vlaneseq
  %v1001 = vshrl.u32 %v1000, 7
  %v1002 = vsub.s32 0, %v1001
  %v1003 = vrot.slane %v998, %v1002
  %v1014 = vunpack.c.l.b16 %v957
  %v1015 = vunpack.c.h.b16 %v957
  %v1016 = vunpack.c.l.b16 %v958
  %v1017 = vunpack.c.h.b16 %v958
  %v1018 = vunpack.c.l.b16 %v959
  %v1019 = vunpack.c.h.b16 %v959
  %v1020 = vunpack.c.l.b16 %v960
  %v1021 = vunpack.c.h.b16 %v960
  %v1022 = vunpack.c.l.b16 %v961
  %v1023 = vunpack.c.h.b16 %v961
  %v1024 = vunpack.c.l.b16 %v962
  %v1025 = vunpack.c.h.b16 %v962
  %v1026 = vunpack.c.l.b16 %v963
  %v1027 = vunpack.c.h.b16 %v963
  %v1028 = vunpack.c.l.b16 %v964
  %v1029 = vunpack.c.h.b16 %v964
  %v1030 = vunpack.c.l.b16 %v965
  %v1031 = vunpack.c.h.b16 %v965
  %v1032 = vpack.c.b16 %v1016, %v1014
  %v1033 = vpack.c.b16 %v1017, %v1015
  %v1034 = vpack.c.b16 %v1020, %v1018
  %v1035 = vpack.c.b16 %v1021, %v1019
  %v1036 = vpack.c.b16 %v1024, %v1022
  %v1037 = vpack.c.b16 %v1025, %v1023
  %v1038 = vpack.c.b16 %v1028, %v1026
  %v1039 = vpack.c.b16 %v1029, %v1027
  %v1040 = vpack.c.b16 %v1030, %v1030
  %v1041 = vpack.c.b16 %v1031, %v1031
  %v1084 = vunpack.c.l.b16 %v966
  %v1085 = vunpack.c.l.b16 %v967
  %v1086 = vunpack.c.l.b16 %v968
  %v1087 = vunpack.c.l.b16 %v969
  %v1088 = vunpack.c.l.b16 %v970
  %v1089 = vunpack.c.l.b16 %v971
  %v1090 = vunpack.c.l.b16 %v972
  %v1091 = vunpack.c.l.b16 %v973
  %v1092 = vunpack.c.l.b16 %v974
  %v1093 = vunpack.c.l.b16 %v975
  %v1094 = vunpack.c.l.b16 %v976
  %v1095 = vunpack.c.l.b16 %v977
  %v1096 = vunpack.c.l.b16 %v978
  %v1097 = vunpack.c.l.b16 %v979
  %v1098 = vunpack.c.l.b16 %v980
  %v1099 = vunpack.c.l.b16 %v981
  %v1100 = vunpack.c.l.b16 %v982
  %v1101 = vunpack.c.l.b16 %v983
  %v1102 = vunpack.c.l.b16 %v984
  %v1103 = vunpack.c.l.b16 %v985
  %v1104 = vunpack.c.l.b16 %v986
  %v1105 = vunpack.c.l.b16 %v987
  %v1106 = vunpack.c.l.b16 %v988
  %v1107 = vunpack.c.l.b16 %v989
  %v1108 = vunpack.c.l.b16 %v990
  %v1109 = vunpack.c.l.b16 %v991
  %v1110 = vunpack.c.l.b16 %v992
  %v1111 = vunpack.c.l.b16 %v993
  %v1112 = vunpack.c.l.b16 %v994
  %v1113 = vunpack.c.l.b16 %v995
  %v1114 = vunpack.c.l.b16 %v996
  %v1115 = vunpack.c.l.b16 %v997
  %v1116 = vpack.c.b16 %v1085, %v1084
  %v1117 = vpack.c.b16 %v1087, %v1086
  %v1118 = vpack.c.b16 %v1089, %v1088
  %v1119 = vpack.c.b16 %v1091, %v1090
  %v1120 = vpack.c.b16 %v1093, %v1092
  %v1121 = vpack.c.b16 %v1095, %v1094
  %v1122 = vpack.c.b16 %v1097, %v1096
  %v1123 = vpack.c.b16 %v1099, %v1098
  %v1124 = vpack.c.b16 %v1101, %v1100
  %v1125 = vpack.c.b16 %v1103, %v1102
  %v1126 = vpack.c.b16 %v1105, %v1104
  %v1127 = vpack.c.b16 %v1107, %v1106
  %v1128 = vpack.c.b16 %v1109, %v1108
  %v1129 = vpack.c.b16 %v1111, %v1110
  %v1130 = vpack.c.b16 %v1113, %v1112
  %v1131 = vpack.c.b16 %v1115, %v1114
  %1148 = vmatprep.subr.bf16.mxu0 0
  %1149 = vmatpush1.bf16.msra.mxu0 %v1116
  %1150 = vmatprep.subr.bf16.mxu0 0
  %1151 = vmatpush1.bf16.msra.mxu0 %v1117
  %1152 = vmatprep.subr.bf16.mxu0 0
  %1153 = vmatpush1.bf16.msra.mxu0 %v1118
  %1154 = vmatprep.subr.bf16.mxu0 0
  %1155 = vmatpush1.bf16.msra.mxu0 %v1119
  %1156 = vmatprep.subr.bf16.mxu0 0
  %1157 = vmatpush1.bf16.msra.mxu0 %v1120
  %1158 = vmatprep.subr.bf16.mxu0 0
  %1159 = vmatpush1.bf16.msra.mxu0 %v1121
  %1160 = vmatprep.subr.bf16.mxu0 0
  %1161 = vmatpush1.bf16.msra.mxu0 %v1122
  %1162 = vmatprep.subr.bf16.mxu0 0
  %1163 = vmatpush1.bf16.msra.mxu0 %v1123
  %1164 = vmatprep.subr.bf16.mxu0 0
  %1165 = vmatpush1.bf16.msra.mxu0 %v1124
  %1166 = vmatprep.subr.bf16.mxu0 0
  %1167 = vmatpush1.bf16.msra.mxu0 %v1125
  %1168 = vmatprep.subr.bf16.mxu0 0
  %1169 = vmatpush1.bf16.msra.mxu0 %v1126
  %1170 = vmatprep.subr.bf16.mxu0 0
  %1171 = vmatpush1.bf16.msra.mxu0 %v1127
  %1172 = vmatprep.subr.bf16.mxu0 0
  %1173 = vmatpush1.bf16.msra.mxu0 %v1128
  %1174 = vmatprep.subr.bf16.mxu0 0
  %1175 = vmatpush1.bf16.msra.mxu0 %v1129
  %1176 = vmatprep.subr.bf16.mxu0 0
  %1177 = vmatpush1.bf16.msra.mxu0 %v1130
  %1178 = vmatprep.subr.bf16.mxu0 0
  %1179 = vmatpush1.bf16.msra.mxu0 %v1131
  %1180 = vmatprep.mubr.bf16.mxu0 %v1033
  %1181 = vmatmul.mubr.bf16.gmra.mrb[0].mxu0 %v1032
  %v1182 = vpop.f32.mrb[0].mxu0
  %v1183 = vadd.f32 %v1003, %v1182
  %v1184 = vpop.f32.mrb[0].mxu0
  %v1185 = vpop.f32.mrb[0].mxu0
  %v1186 = vadd.f32 %v1003, %v1185
  %v1187 = vpop.f32.mrb[0].mxu0
  %1188 = vmatprep.mubr.bf16.mxu0 %v1035
  %1189 = vmatmul.mubr.bf16.gmra.mrb[0].mxu0 %v1034
  %v1190 = vpop.f32.mrb[0].mxu0
  %v1191 = vadd.f32 %v1003, %v1190
  %v1192 = vpop.f32.mrb[0].mxu0
  %v1193 = vpop.f32.mrb[0].mxu0
  %v1194 = vadd.f32 %v1003, %v1193
  %v1195 = vpop.f32.mrb[0].mxu0
  %1196 = vmatprep.mubr.bf16.mxu0 %v1037
  %1197 = vmatmul.mubr.bf16.gmra.mrb[0].mxu0 %v1036
  %v1198 = vpop.f32.mrb[0].mxu0
  %v1199 = vadd.f32 %v1003, %v1198
  %v1200 = vpop.f32.mrb[0].mxu0
  %v1201 = vpop.f32.mrb[0].mxu0
  %v1202 = vadd.f32 %v1003, %v1201
  %v1203 = vpop.f32.mrb[0].mxu0
  %1204 = vmatprep.mubr.bf16.mxu0 %v1039
  %1205 = vmatmul.mubr.bf16.gmra.mrb[0].mxu0 %v1038
  %v1206 = vpop.f32.mrb[0].mxu0
  %v1207 = vadd.f32 %v1003, %v1206
  %v1208 = vpop.f32.mrb[0].mxu0
  %v1209 = vpop.f32.mrb[0].mxu0
  %v1210 = vadd.f32 %v1003, %v1209
  %v1211 = vpop.f32.mrb[0].mxu0
  %1212 = vmatprep.mubr.bf16.mxu0 %v1041
  %1213 = vmatmul.mubr.bf16.gmra.mrb[0].mxu0 %v1040
  %v1214 = vpop.f32.mrb[0].mxu0
  %v1215 = vadd.f32 %v1003, %v1214
  %v1216 = vpop.f32.mrb[0].mxu0
  %v1217 = vpop.f32.mrb[0].mxu0
  %v1218 = vpop.f32.mrb[0].mxu0
  %1219 = vdwg.mxu0
  %v1220 = vmax.f32 %v1183, 0.0
  %v1221 = vmax.f32 %v1186, 0.0
  %v1222 = vmax.f32 %v1191, 0.0
  %v1223 = vmax.f32 %v1194, 0.0
  %v1224 = vmax.f32 %v1199, 0.0
  %v1225 = vmax.f32 %v1202, 0.0
  %v1226 = vmax.f32 %v1207, 0.0
  %v1227 = vmax.f32 %v1210, 0.0
  %v1228 = vmax.f32 %v1215, 0.0
  %1238 = vrot.lane.b32.xlu0 %v1220, 96
  %v1239 = vpop.permute.xlu0 %1238
  %1240 = vrot.lane.b32.xlu0 %v1221, 96
  %v1241 = vpop.permute.xlu0 %1240
  %1242 = vrot.lane.b32.xlu0 %v1222, 96
  %v1243 = vpop.permute.xlu0 %1242
  %1244 = vrot.lane.b32.xlu0 %v1223, 96
  %v1245 = vpop.permute.xlu0 %1244
  %1246 = vrot.lane.b32.xlu0 %v1224, 96
  %v1247 = vpop.permute.xlu0 %1246
  %1248 = vrot.lane.b32.xlu0 %v1225, 96
  %v1249 = vpop.permute.xlu0 %1248
  %1250 = vrot.lane.b32.xlu0 %v1226, 96
  %v1251 = vpop.permute.xlu0 %1250
  %1252 = vrot.lane.b32.xlu0 %v1227, 96
  %v1253 = vpop.permute.xlu0 %1252
  %1254 = vrot.lane.b32.xlu0 %v1228, 96
  %v1255 = vpop.permute.xlu0 %1254
  %vm1265 = vcmask 1048320
  %1266 = vst.msk [vmem:[#allocation2] sm:$0xff] %vm1265, %v1239
  %1267 = vst.msk [vmem:[#allocation2 + $0x20] sm:$0xff] %vm1265, %v1241
  %1268 = vst.msk [vmem:[#allocation2 + $0x40] sm:$0xff] %vm1265, %v1243
  %1269 = vst.msk [vmem:[#allocation2 + $0x60] sm:$0xff] %vm1265, %v1245
  %1270 = vst.msk [vmem:[#allocation2 + $0x80] sm:$0xff] %vm1265, %v1247
  %1271 = vst.msk [vmem:[#allocation2 + $0xa0] sm:$0xff] %vm1265, %v1249
  %1272 = vst.msk [vmem:[#allocation2 + $0xc0] sm:$0xff] %vm1265, %v1251
  %1273 = vst.msk [vmem:[#allocation2 + $0xe0] sm:$0xff] %vm1265, %v1253
  %1274 = vst.msk [vmem:[#allocation2 + $0x100] sm:$0xff] %vm1265, %v1255
  %v1275 = vld [vmem:[%s0 + $0x120] sm:$0xff]
  %v1276 = vld [vmem:[%s0 + $0x128] sm:$0xff]
  %v1277 = vld [vmem:[%s0 + $0x130] sm:$0xff]
  %v1278 = vld [vmem:[%s0 + $0x138] sm:$0xff]
  %v1279 = vld [vmem:[%s0 + $0x140] sm:$0xff]
  %v1280 = vld [vmem:[%s0 + $0x148] sm:$0xff]
  %v1281 = vld [vmem:[%s0 + $0x150] sm:$0xff]
  %v1282 = vld [vmem:[%s0 + $0x158] sm:$0xff]
  %v1283 = vld [vmem:[%s0 + $0x160] sm:$0xff]
  %v1284 = vld [vmem:[%s1] sm:$0xf]
  %v1285 = vld [vmem:[%s1 + $0x4] sm:$0xf]
  %v1286 = vld [vmem:[%s1 + $0x8] sm:$0xf]
  %v1287 = vld [vmem:[%s1 + $0xc] sm:$0xf]
  %v1288 = vld [vmem:[%s1 + $0x10] sm:$0xf]
  %v1289 = vld [vmem:[%s1 + $0x14] sm:$0xf]
  %v1290 = vld [vmem:[%s1 + $0x18] sm:$0xf]
  %v1291 = vld [vmem:[%s1 + $0x1c] sm:$0xf]
  %v1292 = vld [vmem:[%s1 + $0x20] sm:$0xf]
  %v1293 = vld [vmem:[%s1 + $0x24] sm:$0xf]
  %v1294 = vld [vmem:[%s1 + $0x28] sm:$0xf]
  %v1295 = vld [vmem:[%s1 + $0x2c] sm:$0xf]
  %v1296 = vld [vmem:[%s1 + $0x30] sm:$0xf]
  %v1297 = vld [vmem:[%s1 + $0x34] sm:$0xf]
  %v1298 = vld [vmem:[%s1 + $0x38] sm:$0xf]
  %v1299 = vld [vmem:[%s1 + $0x3c] sm:$0xf]
  %v1300 = vld [vmem:[%s1 + $0x40] sm:$0xf]
  %v1301 = vld [vmem:[%s1 + $0x44] sm:$0xf]
  %v1302 = vld [vmem:[%s1 + $0x48] sm:$0xf]
  %v1303 = vld [vmem:[%s1 + $0x4c] sm:$0xf]
  %v1304 = vld [vmem:[%s1 + $0x50] sm:$0xf]
  %v1305 = vld [vmem:[%s1 + $0x54] sm:$0xf]
  %v1306 = vld [vmem:[%s1 + $0x58] sm:$0xf]
  %v1307 = vld [vmem:[%s1 + $0x5c] sm:$0xf]
  %v1308 = vld [vmem:[%s1 + $0x60] sm:$0xf]
  %v1309 = vld [vmem:[%s1 + $0x64] sm:$0xf]
  %v1310 = vld [vmem:[%s1 + $0x68] sm:$0xf]
  %v1311 = vld [vmem:[%s1 + $0x6c] sm:$0xf]
  %v1312 = vld [vmem:[%s1 + $0x70] sm:$0xf]
  %v1313 = vld [vmem:[%s1 + $0x74] sm:$0xf]
  %v1314 = vld [vmem:[%s1 + $0x78] sm:$0xf]
  %v1315 = vld [vmem:[%s1 + $0x7c] sm:$0xf]
  %v1316 = vld [vmem:[%s2] sm:$0x1]
  %v1318 = vlaneseq
  %v1319 = vshrl.u32 %v1318, 7
  %v1320 = vsub.s32 0, %v1319
  %v1321 = vrot.slane %v1316, %v1320
  %v1332 = vunpack.c.l.b16 %v1275
  %v1333 = vunpack.c.h.b16 %v1275
  %v1334 = vunpack.c.l.b16 %v1276
  %v1335 = vunpack.c.h.b16 %v1276
  %v1336 = vunpack.c.l.b16 %v1277
  %v1337 = vunpack.c.h.b16 %v1277
  %v1338 = vunpack.c.l.b16 %v1278
  %v1339 = vunpack.c.h.b16 %v1278
  %v1340 = vunpack.c.l.b16 %v1279
  %v1341 = vunpack.c.h.b16 %v1279
  %v1342 = vunpack.c.l.b16 %v1280
  %v1343 = vunpack.c.h.b16 %v1280
  %v1344 = vunpack.c.l.b16 %v1281
  %v1345 = vunpack.c.h.b16 %v1281
  %v1346 = vunpack.c.l.b16 %v1282
  %v1347 = vunpack.c.h.b16 %v1282
  %v1348 = vunpack.c.l.b16 %v1283
  %v1349 = vunpack.c.h.b16 %v1283
  %v1350 = vpack.c.b16 %v1334, %v1332
  %v1351 = vpack.c.b16 %v1335, %v1333
  %v1352 = vpack.c.b16 %v1338, %v1336
  %v1353 = vpack.c.b16 %v1339, %v1337
  %v1354 = vpack.c.b16 %v1342, %v1340
  %v1355 = vpack.c.b16 %v1343, %v1341
  %v1356 = vpack.c.b16 %v1346, %v1344
  %v1357 = vpack.c.b16 %v1347, %v1345
  %v1358 = vpack.c.b16 %v1348, %v1348
  %v1359 = vpack.c.b16 %v1349, %v1349
  %v1402 = vunpack.c.l.b16 %v1284
  %v1403 = vunpack.c.l.b16 %v1285
  %v1404 = vunpack.c.l.b16 %v1286
  %v1405 = vunpack.c.l.b16 %v1287
  %v1406 = vunpack.c.l.b16 %v1288
  %v1407 = vunpack.c.l.b16 %v1289
  %v1408 = vunpack.c.l.b16 %v1290
  %v1409 = vunpack.c.l.b16 %v1291
  %v1410 = vunpack.c.l.b16 %v1292
  %v1411 = vunpack.c.l.b16 %v1293
  %v1412 = vunpack.c.l.b16 %v1294
  %v1413 = vunpack.c.l.b16 %v1295
  %v1414 = vunpack.c.l.b16 %v1296
  %v1415 = vunpack.c.l.b16 %v1297
  %v1416 = vunpack.c.l.b16 %v1298
  %v1417 = vunpack.c.l.b16 %v1299
  %v1418 = vunpack.c.l.b16 %v1300
  %v1419 = vunpack.c.l.b16 %v1301
  %v1420 = vunpack.c.l.b16 %v1302
  %v1421 = vunpack.c.l.b16 %v1303
  %v1422 = vunpack.c.l.b16 %v1304
  %v1423 = vunpack.c.l.b16 %v1305
  %v1424 = vunpack.c.l.b16 %v1306
  %v1425 = vunpack.c.l.b16 %v1307
  %v1426 = vunpack.c.l.b16 %v1308
  %v1427 = vunpack.c.l.b16 %v1309
  %v1428 = vunpack.c.l.b16 %v1310
  %v1429 = vunpack.c.l.b16 %v1311
  %v1430 = vunpack.c.l.b16 %v1312
  %v1431 = vunpack.c.l.b16 %v1313
  %v1432 = vunpack.c.l.b16 %v1314
  %v1433 = vunpack.c.l.b16 %v1315
  %v1434 = vpack.c.b16 %v1403, %v1402
  %v1435 = vpack.c.b16 %v1405, %v1404
  %v1436 = vpack.c.b16 %v1407, %v1406
  %v1437 = vpack.c.b16 %v1409, %v1408
  %v1438 = vpack.c.b16 %v1411, %v1410
  %v1439 = vpack.c.b16 %v1413, %v1412
  %v1440 = vpack.c.b16 %v1415, %v1414
  %v1441 = vpack.c.b16 %v1417, %v1416
  %v1442 = vpack.c.b16 %v1419, %v1418
  %v1443 = vpack.c.b16 %v1421, %v1420
  %v1444 = vpack.c.b16 %v1423, %v1422
  %v1445 = vpack.c.b16 %v1425, %v1424
  %v1446 = vpack.c.b16 %v1427, %v1426
  %v1447 = vpack.c.b16 %v1429, %v1428
  %v1448 = vpack.c.b16 %v1431, %v1430
  %v1449 = vpack.c.b16 %v1433, %v1432
  %1466 = vmatprep.subr.bf16.mxu0 0
  %1467 = vmatpush1.bf16.msra.mxu0 %v1434
  %1468 = vmatprep.subr.bf16.mxu0 0
  %1469 = vmatpush1.bf16.msra.mxu0 %v1435
  %1470 = vmatprep.subr.bf16.mxu0 0
  %1471 = vmatpush1.bf16.msra.mxu0 %v1436
  %1472 = vmatprep.subr.bf16.mxu0 0
  %1473 = vmatpush1.bf16.msra.mxu0 %v1437
  %1474 = vmatprep.subr.bf16.mxu0 0
  %1475 = vmatpush1.bf16.msra.mxu0 %v1438
  %1476 = vmatprep.subr.bf16.mxu0 0
  %1477 = vmatpush1.bf16.msra.mxu0 %v1439
  %1478 = vmatprep.subr.bf16.mxu0 0
  %1479 = vmatpush1.bf16.msra.mxu0 %v1440
  %1480 = vmatprep.subr.bf16.mxu0 0
  %1481 = vmatpush1.bf16.msra.mxu0 %v1441
  %1482 = vmatprep.subr.bf16.mxu0 0
  %1483 = vmatpush1.bf16.msra.mxu0 %v1442
  %1484 = vmatprep.subr.bf16.mxu0 0
  %1485 = vmatpush1.bf16.msra.mxu0 %v1443
  %1486 = vmatprep.subr.bf16.mxu0 0
  %1487 = vmatpush1.bf16.msra.mxu0 %v1444
  %1488 = vmatprep.subr.bf16.mxu0 0
  %1489 = vmatpush1.bf16.msra.mxu0 %v1445
  %1490 = vmatprep.subr.bf16.mxu0 0
  %1491 = vmatpush1.bf16.msra.mxu0 %v1446
  %1492 = vmatprep.subr.bf16.mxu0 0
  %1493 = vmatpush1.bf16.msra.mxu0 %v1447
  %1494 = vmatprep.subr.bf16.mxu0 0
  %1495 = vmatpush1.bf16.msra.mxu0 %v1448
  %1496 = vmatprep.subr.bf16.mxu0 0
  %1497 = vmatpush1.bf16.msra.mxu0 %v1449
  %1498 = vmatprep.mubr.bf16.mxu0 %v1351
  %1499 = vmatmul.mubr.bf16.gmra.mrb[0].mxu0 %v1350
  %v1500 = vpop.f32.mrb[0].mxu0
  %v1501 = vadd.f32 %v1321, %v1500
  %v1502 = vpop.f32.mrb[0].mxu0
  %v1503 = vpop.f32.mrb[0].mxu0
  %v1504 = vadd.f32 %v1321, %v1503
  %v1505 = vpop.f32.mrb[0].mxu0
  %1506 = vmatprep.mubr.bf16.mxu0 %v1353
  %1507 = vmatmul.mubr.bf16.gmra.mrb[0].mxu0 %v1352
  %v1508 = vpop.f32.mrb[0].mxu0
  %v1509 = vadd.f32 %v1321, %v1508
  %v1510 = vpop.f32.mrb[0].mxu0
  %v1511 = vpop.f32.mrb[0].mxu0
  %v1512 = vadd.f32 %v1321, %v1511
  %v1513 = vpop.f32.mrb[0].mxu0
  %1514 = vmatprep.mubr.bf16.mxu0 %v1355
  %1515 = vmatmul.mubr.bf16.gmra.mrb[0].mxu0 %v1354
  %v1516 = vpop.f32.mrb[0].mxu0
  %v1517 = vadd.f32 %v1321, %v1516
  %v1518 = vpop.f32.mrb[0].mxu0
  %v1519 = vpop.f32.mrb[0].mxu0
  %v1520 = vadd.f32 %v1321, %v1519
  %v1521 = vpop.f32.mrb[0].mxu0
  %1522 = vmatprep.mubr.bf16.mxu0 %v1357
  %1523 = vmatmul.mubr.bf16.gmra.mrb[0].mxu0 %v1356
  %v1524 = vpop.f32.mrb[0].mxu0
  %v1525 = vadd.f32 %v1321, %v1524
  %v1526 = vpop.f32.mrb[0].mxu0
  %v1527 = vpop.f32.mrb[0].mxu0
  %v1528 = vadd.f32 %v1321, %v1527
  %v1529 = vpop.f32.mrb[0].mxu0
  %1530 = vmatprep.mubr.bf16.mxu0 %v1359
  %1531 = vmatmul.mubr.bf16.gmra.mrb[0].mxu0 %v1358
  %v1532 = vpop.f32.mrb[0].mxu0
  %v1533 = vadd.f32 %v1321, %v1532
  %v1534 = vpop.f32.mrb[0].mxu0
  %v1535 = vpop.f32.mrb[0].mxu0
  %v1536 = vpop.f32.mrb[0].mxu0
  %1537 = vdwg.mxu0
  %v1538 = vmax.f32 %v1501, 0.0
  %v1539 = vmax.f32 %v1504, 0.0
  %v1540 = vmax.f32 %v1509, 0.0
  %v1541 = vmax.f32 %v1512, 0.0
  %v1542 = vmax.f32 %v1517, 0.0
  %v1543 = vmax.f32 %v1520, 0.0
  %v1544 = vmax.f32 %v1525, 0.0
  %v1545 = vmax.f32 %v1528, 0.0
  %v1546 = vmax.f32 %v1533, 0.0
  %1547 = vst.msk [vmem:[#allocation2 + $0x8] sm:$0xff] %vm311, %v1538
  %1548 = vst.msk [vmem:[#allocation2 + $0x28] sm:$0xff] %vm311, %v1539
  %1549 = vst.msk [vmem:[#allocation2 + $0x48] sm:$0xff] %vm311, %v1540
  %1550 = vst.msk [vmem:[#allocation2 + $0x68] sm:$0xff] %vm311, %v1541
  %1551 = vst.msk [vmem:[#allocation2 + $0x88] sm:$0xff] %vm311, %v1542
  %1552 = vst.msk [vmem:[#allocation2 + $0xa8] sm:$0xff] %vm311, %v1543
  %1553 = vst.msk [vmem:[#allocation2 + $0xc8] sm:$0xff] %vm311, %v1544
  %1554 = vst.msk [vmem:[#allocation2 + $0xe8] sm:$0xff] %vm311, %v1545
  %1555 = vst.msk [vmem:[#allocation2 + $0x108] sm:$0xff] %vm311, %v1546
  %v1556 = vld [vmem:[%s0 + $0x168] sm:$0xff]
  %v1557 = vld [vmem:[%s0 + $0x170] sm:$0xff]
  %v1558 = vld [vmem:[%s0 + $0x178] sm:$0xff]
  %v1559 = vld [vmem:[%s0 + $0x180] sm:$0xff]
  %v1560 = vld [vmem:[%s0 + $0x188] sm:$0xff]
  %v1561 = vld [vmem:[%s0 + $0x190] sm:$0xff]
  %v1562 = vld [vmem:[%s0 + $0x198] sm:$0xff]
  %v1563 = vld [vmem:[%s0 + $0x1a0] sm:$0xff]
  %v1564 = vld [vmem:[%s0 + $0x1a8] sm:$0xff]
  %v1565 = vld [vmem:[%s1] sm:$0xf]
  %v1566 = vld [vmem:[%s1 + $0x4] sm:$0xf]
  %v1567 = vld [vmem:[%s1 + $0x8] sm:$0xf]
  %v1568 = vld [vmem:[%s1 + $0xc] sm:$0xf]
  %v1569 = vld [vmem:[%s1 + $0x10] sm:$0xf]
  %v1570 = vld [vmem:[%s1 + $0x14] sm:$0xf]
  %v1571 = vld [vmem:[%s1 + $0x18] sm:$0xf]
  %v1572 = vld [vmem:[%s1 + $0x1c] sm:$0xf]
  %v1573 = vld [vmem:[%s1 + $0x20] sm:$0xf]
  %v1574 = vld [vmem:[%s1 + $0x24] sm:$0xf]
  %v1575 = vld [vmem:[%s1 + $0x28] sm:$0xf]
  %v1576 = vld [vmem:[%s1 + $0x2c] sm:$0xf]
  %v1577 = vld [vmem:[%s1 + $0x30] sm:$0xf]
  %v1578 = vld [vmem:[%s1 + $0x34] sm:$0xf]
  %v1579 = vld [vmem:[%s1 + $0x38] sm:$0xf]
  %v1580 = vld [vmem:[%s1 + $0x3c] sm:$0xf]
  %v1581 = vld [vmem:[%s1 + $0x40] sm:$0xf]
  %v1582 = vld [vmem:[%s1 + $0x44] sm:$0xf]
  %v1583 = vld [vmem:[%s1 + $0x48] sm:$0xf]
  %v1584 = vld [vmem:[%s1 + $0x4c] sm:$0xf]
  %v1585 = vld [vmem:[%s1 + $0x50] sm:$0xf]
  %v1586 = vld [vmem:[%s1 + $0x54] sm:$0xf]
  %v1587 = vld [vmem:[%s1 + $0x58] sm:$0xf]
  %v1588 = vld [vmem:[%s1 + $0x5c] sm:$0xf]
  %v1589 = vld [vmem:[%s1 + $0x60] sm:$0xf]
  %v1590 = vld [vmem:[%s1 + $0x64] sm:$0xf]
  %v1591 = vld [vmem:[%s1 + $0x68] sm:$0xf]
  %v1592 = vld [vmem:[%s1 + $0x6c] sm:$0xf]
  %v1593 = vld [vmem:[%s1 + $0x70] sm:$0xf]
  %v1594 = vld [vmem:[%s1 + $0x74] sm:$0xf]
  %v1595 = vld [vmem:[%s1 + $0x78] sm:$0xf]
  %v1596 = vld [vmem:[%s1 + $0x7c] sm:$0xf]
  %v1597 = vld [vmem:[%s2] sm:$0x1]
  %v1599 = vlaneseq
  %v1600 = vshrl.u32 %v1599, 7
  %v1601 = vsub.s32 0, %v1600
  %v1602 = vrot.slane %v1597, %v1601
  %v1613 = vunpack.c.l.b16 %v1556
  %v1614 = vunpack.c.h.b16 %v1556
  %v1615 = vunpack.c.l.b16 %v1557
  %v1616 = vunpack.c.h.b16 %v1557
  %v1617 = vunpack.c.l.b16 %v1558
  %v1618 = vunpack.c.h.b16 %v1558
  %v1619 = vunpack.c.l.b16 %v1559
  %v1620 = vunpack.c.h.b16 %v1559
  %v1621 = vunpack.c.l.b16 %v1560
  %v1622 = vunpack.c.h.b16 %v1560
  %v1623 = vunpack.c.l.b16 %v1561
  %v1624 = vunpack.c.h.b16 %v1561
  %v1625 = vunpack.c.l.b16 %v1562
  %v1626 = vunpack.c.h.b16 %v1562
  %v1627 = vunpack.c.l.b16 %v1563
  %v1628 = vunpack.c.h.b16 %v1563
  %v1629 = vunpack.c.l.b16 %v1564
  %v1630 = vunpack.c.h.b16 %v1564
  %v1631 = vpack.c.b16 %v1615, %v1613
  %v1632 = vpack.c.b16 %v1616, %v1614
  %v1633 = vpack.c.b16 %v1619, %v1617
  %v1634 = vpack.c.b16 %v1620, %v1618
  %v1635 = vpack.c.b16 %v1623, %v1621
  %v1636 = vpack.c.b16 %v1624, %v1622
  %v1637 = vpack.c.b16 %v1627, %v1625
  %v1638 = vpack.c.b16 %v1628, %v1626
  %v1639 = vpack.c.b16 %v1629, %v1629
  %v1640 = vpack.c.b16 %v1630, %v1630
  %v1683 = vunpack.c.l.b16 %v1565
  %v1684 = vunpack.c.l.b16 %v1566
  %v1685 = vunpack.c.l.b16 %v1567
  %v1686 = vunpack.c.l.b16 %v1568
  %v1687 = vunpack.c.l.b16 %v1569
  %v1688 = vunpack.c.l.b16 %v1570
  %v1689 = vunpack.c.l.b16 %v1571
  %v1690 = vunpack.c.l.b16 %v1572
  %v1691 = vunpack.c.l.b16 %v1573
  %v1692 = vunpack.c.l.b16 %v1574
  %v1693 = vunpack.c.l.b16 %v1575
  %v1694 = vunpack.c.l.b16 %v1576
  %v1695 = vunpack.c.l.b16 %v1577
  %v1696 = vunpack.c.l.b16 %v1578
  %v1697 = vunpack.c.l.b16 %v1579
  %v1698 = vunpack.c.l.b16 %v1580
  %v1699 = vunpack.c.l.b16 %v1581
  %v1700 = vunpack.c.l.b16 %v1582
  %v1701 = vunpack.c.l.b16 %v1583
  %v1702 = vunpack.c.l.b16 %v1584
  %v1703 = vunpack.c.l.b16 %v1585
  %v1704 = vunpack.c.l.b16 %v1586
  %v1705 = vunpack.c.l.b16 %v1587
  %v1706 = vunpack.c.l.b16 %v1588
  %v1707 = vunpack.c.l.b16 %v1589
  %v1708 = vunpack.c.l.b16 %v1590
  %v1709 = vunpack.c.l.b16 %v1591
  %v1710 = vunpack.c.l.b16 %v1592
  %v1711 = vunpack.c.l.b16 %v1593
  %v1712 = vunpack.c.l.b16 %v1594
  %v1713 = vunpack.c.l.b16 %v1595
  %v1714 = vunpack.c.l.b16 %v1596
  %v1715 = vpack.c.b16 %v1684, %v1683
  %v1716 = vpack.c.b16 %v1686, %v1685
  %v1717 = vpack.c.b16 %v1688, %v1687
  %v1718 = vpack.c.b16 %v1690, %v1689
  %v1719 = vpack.c.b16 %v1692, %v1691
  %v1720 = vpack.c.b16 %v1694, %v1693
  %v1721 = vpack.c.b16 %v1696, %v1695
  %v1722 = vpack.c.b16 %v1698, %v1697
  %v1723 = vpack.c.b16 %v1700, %v1699
  %v1724 = vpack.c.b16 %v1702, %v1701
  %v1725 = vpack.c.b16 %v1704, %v1703
  %v1726 = vpack.c.b16 %v1706, %v1705
  %v1727 = vpack.c.b16 %v1708, %v1707
  %v1728 = vpack.c.b16 %v1710, %v1709
  %v1729 = vpack.c.b16 %v1712, %v1711
  %v1730 = vpack.c.b16 %v1714, %v1713
  %1747 = vmatprep.subr.bf16.mxu0 0
  %1748 = vmatpush1.bf16.msra.mxu0 %v1715
  %1749 = vmatprep.subr.bf16.mxu0 0
  %1750 = vmatpush1.bf16.msra.mxu0 %v1716
  %1751 = vmatprep.subr.bf16.mxu0 0
  %1752 = vmatpush1.bf16.msra.mxu0 %v1717
  %1753 = vmatprep.subr.bf16.mxu0 0
  %1754 = vmatpush1.bf16.msra.mxu0 %v1718
  %1755 = vmatprep.subr.bf16.mxu0 0
  %1756 = vmatpush1.bf16.msra.mxu0 %v1719
  %1757 = vmatprep.subr.bf16.mxu0 0
  %1758 = vmatpush1.bf16.msra.mxu0 %v1720
  %1759 = vmatprep.subr.bf16.mxu0 0
  %1760 = vmatpush1.bf16.msra.mxu0 %v1721
  %1761 = vmatprep.subr.bf16.mxu0 0
  %1762 = vmatpush1.bf16.msra.mxu0 %v1722
  %1763 = vmatprep.subr.bf16.mxu0 0
  %1764 = vmatpush1.bf16.msra.mxu0 %v1723
  %1765 = vmatprep.subr.bf16.mxu0 0
  %1766 = vmatpush1.bf16.msra.mxu0 %v1724
  %1767 = vmatprep.subr.bf16.mxu0 0
  %1768 = vmatpush1.bf16.msra.mxu0 %v1725
  %1769 = vmatprep.subr.bf16.mxu0 0
  %1770 = vmatpush1.bf16.msra.mxu0 %v1726
  %1771 = vmatprep.subr.bf16.mxu0 0
  %1772 = vmatpush1.bf16.msra.mxu0 %v1727
  %1773 = vmatprep.subr.bf16.mxu0 0
  %1774 = vmatpush1.bf16.msra.mxu0 %v1728
  %1775 = vmatprep.subr.bf16.mxu0 0
  %1776 = vmatpush1.bf16.msra.mxu0 %v1729
  %1777 = vmatprep.subr.bf16.mxu0 0
  %1778 = vmatpush1.bf16.msra.mxu0 %v1730
  %1779 = vmatprep.mubr.bf16.mxu0 %v1632
  %1780 = vmatmul.mubr.bf16.gmra.mrb[0].mxu0 %v1631
  %v1781 = vpop.f32.mrb[0].mxu0
  %v1782 = vadd.f32 %v1602, %v1781
  %v1783 = vpop.f32.mrb[0].mxu0
  %v1784 = vpop.f32.mrb[0].mxu0
  %v1785 = vadd.f32 %v1602, %v1784
  %v1786 = vpop.f32.mrb[0].mxu0
  %1787 = vmatprep.mubr.bf16.mxu0 %v1634
  %1788 = vmatmul.mubr.bf16.gmra.mrb[0].mxu0 %v1633
  %v1789 = vpop.f32.mrb[0].mxu0
  %v1790 = vadd.f32 %v1602, %v1789
  %v1791 = vpop.f32.mrb[0].mxu0
  %v1792 = vpop.f32.mrb[0].mxu0
  %v1793 = vadd.f32 %v1602, %v1792
  %v1794 = vpop.f32.mrb[0].mxu0
  %1795 = vmatprep.mubr.bf16.mxu0 %v1636
  %1796 = vmatmul.mubr.bf16.gmra.mrb[0].mxu0 %v1635
  %v1797 = vpop.f32.mrb[0].mxu0
  %v1798 = vadd.f32 %v1602, %v1797
  %v1799 = vpop.f32.mrb[0].mxu0
  %v1800 = vpop.f32.mrb[0].mxu0
  %v1801 = vadd.f32 %v1602, %v1800
  %v1802 = vpop.f32.mrb[0].mxu0
  %1803 = vmatprep.mubr.bf16.mxu0 %v1638
  %1804 = vmatmul.mubr.bf16.gmra.mrb[0].mxu0 %v1637
  %v1805 = vpop.f32.mrb[0].mxu0
  %v1806 = vadd.f32 %v1602, %v1805
  %v1807 = vpop.f32.mrb[0].mxu0
  %v1808 = vpop.f32.mrb[0].mxu0
  %v1809 = vadd.f32 %v1602, %v1808
  %v1810 = vpop.f32.mrb[0].mxu0
  %1811 = vmatprep.mubr.bf16.mxu0 %v1640
  %1812 = vmatmul.mubr.bf16.gmra.mrb[0].mxu0 %v1639
  %v1813 = vpop.f32.mrb[0].mxu0
  %v1814 = vadd.f32 %v1602, %v1813
  %v1815 = vpop.f32.mrb[0].mxu0
  %v1816 = vpop.f32.mrb[0].mxu0
  %v1817 = vpop.f32.mrb[0].mxu0
  %1818 = vdwg.mxu0
  %v1819 = vmax.f32 %v1782, 0.0
  %v1820 = vmax.f32 %v1785, 0.0
  %v1821 = vmax.f32 %v1790, 0.0
  %v1822 = vmax.f32 %v1793, 0.0
  %v1823 = vmax.f32 %v1798, 0.0
  %v1824 = vmax.f32 %v1801, 0.0
  %v1825 = vmax.f32 %v1806, 0.0
  %v1826 = vmax.f32 %v1809, 0.0
  %v1827 = vmax.f32 %v1814, 0.0
  %1837 = vrot.lane.b32.xlu0 %v1819, 32
  %v1838 = vpop.permute.xlu0 %1837
  %1839 = vrot.lane.b32.xlu0 %v1820, 32
  %v1840 = vpop.permute.xlu0 %1839
  %1841 = vrot.lane.b32.xlu0 %v1821, 32
  %v1842 = vpop.permute.xlu0 %1841
  %1843 = vrot.lane.b32.xlu0 %v1822, 32
  %v1844 = vpop.permute.xlu0 %1843
  %1845 = vrot.lane.b32.xlu0 %v1823, 32
  %v1846 = vpop.permute.xlu0 %1845
  %1847 = vrot.lane.b32.xlu0 %v1824, 32
  %v1848 = vpop.permute.xlu0 %1847
  %1849 = vrot.lane.b32.xlu0 %v1825, 32
  %v1850 = vpop.permute.xlu0 %1849
  %1851 = vrot.lane.b32.xlu0 %v1826, 32
  %v1852 = vpop.permute.xlu0 %1851
  %1853 = vrot.lane.b32.xlu0 %v1827, 32
  %v1854 = vpop.permute.xlu0 %1853
  %1864 = vst.msk [vmem:[#allocation2 + $0x8] sm:$0xff] %vm629, %v1838
  %1865 = vst.msk [vmem:[#allocation2 + $0x28] sm:$0xff] %vm629, %v1840
  %1866 = vst.msk [vmem:[#allocation2 + $0x48] sm:$0xff] %vm629, %v1842
  %1867 = vst.msk [vmem:[#allocation2 + $0x68] sm:$0xff] %vm629, %v1844
  %1868 = vst.msk [vmem:[#allocation2 + $0x88] sm:$0xff] %vm629, %v1846
  %1869 = vst.msk [vmem:[#allocation2 + $0xa8] sm:$0xff] %vm629, %v1848
  %1870 = vst.msk [vmem:[#allocation2 + $0xc8] sm:$0xff] %vm629, %v1850
  %1871 = vst.msk [vmem:[#allocation2 + $0xe8] sm:$0xff] %vm629, %v1852
  %1872 = vst.msk [vmem:[#allocation2 + $0x108] sm:$0xff] %vm629, %v1854
  %v1873 = vld [vmem:[%s0 + $0x1b0] sm:$0xff]
  %v1874 = vld [vmem:[%s0 + $0x1b8] sm:$0xff]
  %v1875 = vld [vmem:[%s0 + $0x1c0] sm:$0xff]
  %v1876 = vld [vmem:[%s0 + $0x1c8] sm:$0xff]
  %v1877 = vld [vmem:[%s0 + $0x1d0] sm:$0xff]
  %v1878 = vld [vmem:[%s0 + $0x1d8] sm:$0xff]
  %v1879 = vld [vmem:[%s0 + $0x1e0] sm:$0xff]
  %v1880 = vld [vmem:[%s0 + $0x1e8] sm:$0xff]
  %v1881 = vld [vmem:[%s0 + $0x1f0] sm:$0xff]
  %v1882 = vld [vmem:[%s1] sm:$0xf]
  %v1883 = vld [vmem:[%s1 + $0x4] sm:$0xf]
  %v1884 = vld [vmem:[%s1 + $0x8] sm:$0xf]
  %v1885 = vld [vmem:[%s1 + $0xc] sm:$0xf]
  %v1886 = vld [vmem:[%s1 + $0x10] sm:$0xf]
  %v1887 = vld [vmem:[%s1 + $0x14] sm:$0xf]
  %v1888 = vld [vmem:[%s1 + $0x18] sm:$0xf]
  %v1889 = vld [vmem:[%s1 + $0x1c] sm:$0xf]
  %v1890 = vld [vmem:[%s1 + $0x20] sm:$0xf]
  %v1891 = vld [vmem:[%s1 + $0x24] sm:$0xf]
  %v1892 = vld [vmem:[%s1 + $0x28] sm:$0xf]
  %v1893 = vld [vmem:[%s1 + $0x2c] sm:$0xf]
  %v1894 = vld [vmem:[%s1 + $0x30] sm:$0xf]
  %v1895 = vld [vmem:[%s1 + $0x34] sm:$0xf]
  %v1896 = vld [vmem:[%s1 + $0x38] sm:$0xf]
  %v1897 = vld [vmem:[%s1 + $0x3c] sm:$0xf]
  %v1898 = vld [vmem:[%s1 + $0x40] sm:$0xf]
  %v1899 = vld [vmem:[%s1 + $0x44] sm:$0xf]
  %v1900 = vld [vmem:[%s1 + $0x48] sm:$0xf]
  %v1901 = vld [vmem:[%s1 + $0x4c] sm:$0xf]
  %v1902 = vld [vmem:[%s1 + $0x50] sm:$0xf]
  %v1903 = vld [vmem:[%s1 + $0x54] sm:$0xf]
  %v1904 = vld [vmem:[%s1 + $0x58] sm:$0xf]
  %v1905 = vld [vmem:[%s1 + $0x5c] sm:$0xf]
  %v1906 = vld [vmem:[%s1 + $0x60] sm:$0xf]
  %v1907 = vld [vmem:[%s1 + $0x64] sm:$0xf]
  %v1908 = vld [vmem:[%s1 + $0x68] sm:$0xf]
  %v1909 = vld [vmem:[%s1 + $0x6c] sm:$0xf]
  %v1910 = vld [vmem:[%s1 + $0x70] sm:$0xf]
  %v1911 = vld [vmem:[%s1 + $0x74] sm:$0xf]
  %v1912 = vld [vmem:[%s1 + $0x78] sm:$0xf]
  %v1913 = vld [vmem:[%s1 + $0x7c] sm:$0xf]
  %v1914 = vld [vmem:[%s2] sm:$0x1]
  %v1916 = vlaneseq
  %v1917 = vshrl.u32 %v1916, 7
  %v1918 = vsub.s32 0, %v1917
  %v1919 = vrot.slane %v1914, %v1918
  %v1930 = vunpack.c.l.b16 %v1873
  %v1931 = vunpack.c.h.b16 %v1873
  %v1932 = vunpack.c.l.b16 %v1874
  %v1933 = vunpack.c.h.b16 %v1874
  %v1934 = vunpack.c.l.b16 %v1875
  %v1935 = vunpack.c.h.b16 %v1875
  %v1936 = vunpack.c.l.b16 %v1876
  %v1937 = vunpack.c.h.b16 %v1876
  %v1938 = vunpack.c.l.b16 %v1877
  %v1939 = vunpack.c.h.b16 %v1877
  %v1940 = vunpack.c.l.b16 %v1878
  %v1941 = vunpack.c.h.b16 %v1878
  %v1942 = vunpack.c.l.b16 %v1879
  %v1943 = vunpack.c.h.b16 %v1879
  %v1944 = vunpack.c.l.b16 %v1880
  %v1945 = vunpack.c.h.b16 %v1880
  %v1946 = vunpack.c.l.b16 %v1881
  %v1947 = vunpack.c.h.b16 %v1881
  %v1948 = vpack.c.b16 %v1932, %v1930
  %v1949 = vpack.c.b16 %v1933, %v1931
  %v1950 = vpack.c.b16 %v1936, %v1934
  %v1951 = vpack.c.b16 %v1937, %v1935
  %v1952 = vpack.c.b16 %v1940, %v1938
  %v1953 = vpack.c.b16 %v1941, %v1939
  %v1954 = vpack.c.b16 %v1944, %v1942
  %v1955 = vpack.c.b16 %v1945, %v1943
  %v1956 = vpack.c.b16 %v1946, %v1946
  %v1957 = vpack.c.b16 %v1947, %v1947
  %v2000 = vunpack.c.l.b16 %v1882
  %v2001 = vunpack.c.l.b16 %v1883
  %v2002 = vunpack.c.l.b16 %v1884
  %v2003 = vunpack.c.l.b16 %v1885
  %v2004 = vunpack.c.l.b16 %v1886
  %v2005 = vunpack.c.l.b16 %v1887
  %v2006 = vunpack.c.l.b16 %v1888
  %v2007 = vunpack.c.l.b16 %v1889
  %v2008 = vunpack.c.l.b16 %v1890
  %v2009 = vunpack.c.l.b16 %v1891
  %v2010 = vunpack.c.l.b16 %v1892
  %v2011 = vunpack.c.l.b16 %v1893
  %v2012 = vunpack.c.l.b16 %v1894
  %v2013 = vunpack.c.l.b16 %v1895
  %v2014 = vunpack.c.l.b16 %v1896
  %v2015 = vunpack.c.l.b16 %v1897
  %v2016 = vunpack.c.l.b16 %v1898
  %v2017 = vunpack.c.l.b16 %v1899
  %v2018 = vunpack.c.l.b16 %v1900
  %v2019 = vunpack.c.l.b16 %v1901
  %v2020 = vunpack.c.l.b16 %v1902
  %v2021 = vunpack.c.l.b16 %v1903
  %v2022 = vunpack.c.l.b16 %v1904
  %v2023 = vunpack.c.l.b16 %v1905
  %v2024 = vunpack.c.l.b16 %v1906
  %v2025 = vunpack.c.l.b16 %v1907
  %v2026 = vunpack.c.l.b16 %v1908
  %v2027 = vunpack.c.l.b16 %v1909
  %v2028 = vunpack.c.l.b16 %v1910
  %v2029 = vunpack.c.l.b16 %v1911
  %v2030 = vunpack.c.l.b16 %v1912
  %v2031 = vunpack.c.l.b16 %v1913
  %v2032 = vpack.c.b16 %v2001, %v2000
  %v2033 = vpack.c.b16 %v2003, %v2002
  %v2034 = vpack.c.b16 %v2005, %v2004
  %v2035 = vpack.c.b16 %v2007, %v2006
  %v2036 = vpack.c.b16 %v2009, %v2008
  %v2037 = vpack.c.b16 %v2011, %v2010
  %v2038 = vpack.c.b16 %v2013, %v2012
  %v2039 = vpack.c.b16 %v2015, %v2014
  %v2040 = vpack.c.b16 %v2017, %v2016
  %v2041 = vpack.c.b16 %v2019, %v2018
  %v2042 = vpack.c.b16 %v2021, %v2020
  %v2043 = vpack.c.b16 %v2023, %v2022
  %v2044 = vpack.c.b16 %v2025, %v2024
  %v2045 = vpack.c.b16 %v2027, %v2026
  %v2046 = vpack.c.b16 %v2029, %v2028
  %v2047 = vpack.c.b16 %v2031, %v2030
  %2064 = vmatprep.subr.bf16.mxu0 0
  %2065 = vmatpush1.bf16.msra.mxu0 %v2032
  %2066 = vmatprep.subr.bf16.mxu0 0
  %2067 = vmatpush1.bf16.msra.mxu0 %v2033
  %2068 = vmatprep.subr.bf16.mxu0 0
  %2069 = vmatpush1.bf16.msra.mxu0 %v2034
  %2070 = vmatprep.subr.bf16.mxu0 0
  %2071 = vmatpush1.bf16.msra.mxu0 %v2035
  %2072 = vmatprep.subr.bf16.mxu0 0
  %2073 = vmatpush1.bf16.msra.mxu0 %v2036
  %2074 = vmatprep.subr.bf16.mxu0 0
  %2075 = vmatpush1.bf16.msra.mxu0 %v2037
  %2076 = vmatprep.subr.bf16.mxu0 0
  %2077 = vmatpush1.bf16.msra.mxu0 %v2038
  %2078 = vmatprep.subr.bf16.mxu0 0
  %2079 = vmatpush1.bf16.msra.mxu0 %v2039
  %2080 = vmatprep.subr.bf16.mxu0 0
  %2081 = vmatpush1.bf16.msra.mxu0 %v2040
  %2082 = vmatprep.subr.bf16.mxu0 0
  %2083 = vmatpush1.bf16.msra.mxu0 %v2041
  %2084 = vmatprep.subr.bf16.mxu0 0
  %2085 = vmatpush1.bf16.msra.mxu0 %v2042
  %2086 = vmatprep.subr.bf16.mxu0 0
  %2087 = vmatpush1.bf16.msra.mxu0 %v2043
  %2088 = vmatprep.subr.bf16.mxu0 0
  %2089 = vmatpush1.bf16.msra.mxu0 %v2044
  %2090 = vmatprep.subr.bf16.mxu0 0
  %2091 = vmatpush1.bf16.msra.mxu0 %v2045
  %2092 = vmatprep.subr.bf16.mxu0 0
  %2093 = vmatpush1.bf16.msra.mxu0 %v2046
  %2094 = vmatprep.subr.bf16.mxu0 0
  %2095 = vmatpush1.bf16.msra.mxu0 %v2047
  %2096 = vmatprep.mubr.bf16.mxu0 %v1949
  %2097 = vmatmul.mubr.bf16.gmra.mrb[0].mxu0 %v1948
  %v2098 = vpop.f32.mrb[0].mxu0
  %v2099 = vadd.f32 %v1919, %v2098
  %v2100 = vpop.f32.mrb[0].mxu0
  %v2101 = vpop.f32.mrb[0].mxu0
  %v2102 = vadd.f32 %v1919, %v2101
  %v2103 = vpop.f32.mrb[0].mxu0
  %2104 = vmatprep.mubr.bf16.mxu0 %v1951
  %2105 = vmatmul.mubr.bf16.gmra.mrb[0].mxu0 %v1950
  %v2106 = vpop.f32.mrb[0].mxu0
  %v2107 = vadd.f32 %v1919, %v2106
  %v2108 = vpop.f32.mrb[0].mxu0
  %v2109 = vpop.f32.mrb[0].mxu0
  %v2110 = vadd.f32 %v1919, %v2109
  %v2111 = vpop.f32.mrb[0].mxu0
  %2112 = vmatprep.mubr.bf16.mxu0 %v1953
  %2113 = vmatmul.mubr.bf16.gmra.mrb[0].mxu0 %v1952
  %v2114 = vpop.f32.mrb[0].mxu0
  %v2115 = vadd.f32 %v1919, %v2114
  %v2116 = vpop.f32.mrb[0].mxu0
  %v2117 = vpop.f32.mrb[0].mxu0
  %v2118 = vadd.f32 %v1919, %v2117
  %v2119 = vpop.f32.mrb[0].mxu0
  %2120 = vmatprep.mubr.bf16.mxu0 %v1955
  %2121 = vmatmul.mubr.bf16.gmra.mrb[0].mxu0 %v1954
  %v2122 = vpop.f32.mrb[0].mxu0
  %v2123 = vadd.f32 %v1919, %v2122
  %v2124 = vpop.f32.mrb[0].mxu0
  %v2125 = vpop.f32.mrb[0].mxu0
  %v2126 = vadd.f32 %v1919, %v2125
  %v2127 = vpop.f32.mrb[0].mxu0
  %2128 = vmatprep.mubr.bf16.mxu0 %v1957
  %2129 = vmatmul.mubr.bf16.gmra.mrb[0].mxu0 %v1956
  %v2130 = vpop.f32.mrb[0].mxu0
  %v2131 = vadd.f32 %v1919, %v2130
  %v2132 = vpop.f32.mrb[0].mxu0
  %v2133 = vpop.f32.mrb[0].mxu0
  %v2134 = vpop.f32.mrb[0].mxu0
  %2135 = vdwg.mxu0
  %v2136 = vmax.f32 %v2099, 0.0
  %v2137 = vmax.f32 %v2102, 0.0
  %v2138 = vmax.f32 %v2107, 0.0
  %v2139 = vmax.f32 %v2110, 0.0
  %v2140 = vmax.f32 %v2115, 0.0
  %v2141 = vmax.f32 %v2118, 0.0
  %v2142 = vmax.f32 %v2123, 0.0
  %v2143 = vmax.f32 %v2126, 0.0
  %v2144 = vmax.f32 %v2131, 0.0
  %2154 = vrot.lane.b32.xlu0 %v2136, 64
  %v2155 = vpop.permute.xlu0 %2154
  %2156 = vrot.lane.b32.xlu0 %v2137, 64
  %v2157 = vpop.permute.xlu0 %2156
  %2158 = vrot.lane.b32.xlu0 %v2138, 64
  %v2159 = vpop.permute.xlu0 %2158
  %2160 = vrot.lane.b32.xlu0 %v2139, 64
  %v2161 = vpop.permute.xlu0 %2160
  %2162 = vrot.lane.b32.xlu0 %v2140, 64
  %v2163 = vpop.permute.xlu0 %2162
  %2164 = vrot.lane.b32.xlu0 %v2141, 64
  %v2165 = vpop.permute.xlu0 %2164
  %2166 = vrot.lane.b32.xlu0 %v2142, 64
  %v2167 = vpop.permute.xlu0 %2166
  %2168 = vrot.lane.b32.xlu0 %v2143, 64
  %v2169 = vpop.permute.xlu0 %2168
  %2170 = vrot.lane.b32.xlu0 %v2144, 64
  %v2171 = vpop.permute.xlu0 %2170
  %2181 = vst.msk [vmem:[#allocation2 + $0x8] sm:$0xff] %vm947, %v2155
  %2182 = vst.msk [vmem:[#allocation2 + $0x28] sm:$0xff] %vm947, %v2157
  %2183 = vst.msk [vmem:[#allocation2 + $0x48] sm:$0xff] %vm947, %v2159
  %2184 = vst.msk [vmem:[#allocation2 + $0x68] sm:$0xff] %vm947, %v2161
  %2185 = vst.msk [vmem:[#allocation2 + $0x88] sm:$0xff] %vm947, %v2163
  %2186 = vst.msk [vmem:[#allocation2 + $0xa8] sm:$0xff] %vm947, %v2165
  %2187 = vst.msk [vmem:[#allocation2 + $0xc8] sm:$0xff] %vm947, %v2167
  %2188 = vst.msk [vmem:[#allocation2 + $0xe8] sm:$0xff] %vm947, %v2169
  %2189 = vst.msk [vmem:[#allocation2 + $0x108] sm:$0xff] %vm947, %v2171
  %v2190 = vld [vmem:[%s0 + $0x1f8] sm:$0xff]
  %v2191 = vld [vmem:[%s0 + $0x200] sm:$0xff]
  %v2192 = vld [vmem:[%s0 + $0x208] sm:$0xff]
  %v2193 = vld [vmem:[%s0 + $0x210] sm:$0xff]
  %v2194 = vld [vmem:[%s0 + $0x218] sm:$0xff]
  %v2195 = vld [vmem:[%s0 + $0x220] sm:$0xff]
  %v2196 = vld [vmem:[%s0 + $0x228] sm:$0xff]
  %v2197 = vld [vmem:[%s0 + $0x230] sm:$0xff]
  %v2198 = vld [vmem:[%s0 + $0x238] sm:$0xff]
  %v2199 = vld [vmem:[%s1] sm:$0xf]
  %v2200 = vld [vmem:[%s1 + $0x4] sm:$0xf]
  %v2201 = vld [vmem:[%s1 + $0x8] sm:$0xf]
  %v2202 = vld [vmem:[%s1 + $0xc] sm:$0xf]
  %v2203 = vld [vmem:[%s1 + $0x10] sm:$0xf]
  %v2204 = vld [vmem:[%s1 + $0x14] sm:$0xf]
  %v2205 = vld [vmem:[%s1 + $0x18] sm:$0xf]
  %v2206 = vld [vmem:[%s1 + $0x1c] sm:$0xf]
  %v2207 = vld [vmem:[%s1 + $0x20] sm:$0xf]
  %v2208 = vld [vmem:[%s1 + $0x24] sm:$0xf]
  %v2209 = vld [vmem:[%s1 + $0x28] sm:$0xf]
  %v2210 = vld [vmem:[%s1 + $0x2c] sm:$0xf]
  %v2211 = vld [vmem:[%s1 + $0x30] sm:$0xf]
  %v2212 = vld [vmem:[%s1 + $0x34] sm:$0xf]
  %v2213 = vld [vmem:[%s1 + $0x38] sm:$0xf]
  %v2214 = vld [vmem:[%s1 + $0x3c] sm:$0xf]
  %v2215 = vld [vmem:[%s1 + $0x40] sm:$0xf]
  %v2216 = vld [vmem:[%s1 + $0x44] sm:$0xf]
  %v2217 = vld [vmem:[%s1 + $0x48] sm:$0xf]
  %v2218 = vld [vmem:[%s1 + $0x4c] sm:$0xf]
  %v2219 = vld [vmem:[%s1 + $0x50] sm:$0xf]
  %v2220 = vld [vmem:[%s1 + $0x54] sm:$0xf]
  %v2221 = vld [vmem:[%s1 + $0x58] sm:$0xf]
  %v2222 = vld [vmem:[%s1 + $0x5c] sm:$0xf]
  %v2223 = vld [vmem:[%s1 + $0x60] sm:$0xf]
  %v2224 = vld [vmem:[%s1 + $0x64] sm:$0xf]
  %v2225 = vld [vmem:[%s1 + $0x68] sm:$0xf]
  %v2226 = vld [vmem:[%s1 + $0x6c] sm:$0xf]
  %v2227 = vld [vmem:[%s1 + $0x70] sm:$0xf]
  %v2228 = vld [vmem:[%s1 + $0x74] sm:$0xf]
  %v2229 = vld [vmem:[%s1 + $0x78] sm:$0xf]
  %v2230 = vld [vmem:[%s1 + $0x7c] sm:$0xf]
  %v2231 = vld [vmem:[%s2] sm:$0x1]
  %v2233 = vlaneseq
  %v2234 = vshrl.u32 %v2233, 7
  %v2235 = vsub.s32 0, %v2234
  %v2236 = vrot.slane %v2231, %v2235
  %v2247 = vunpack.c.l.b16 %v2190
  %v2248 = vunpack.c.h.b16 %v2190
  %v2249 = vunpack.c.l.b16 %v2191
  %v2250 = vunpack.c.h.b16 %v2191
  %v2251 = vunpack.c.l.b16 %v2192
  %v2252 = vunpack.c.h.b16 %v2192
  %v2253 = vunpack.c.l.b16 %v2193
  %v2254 = vunpack.c.h.b16 %v2193
  %v2255 = vunpack.c.l.b16 %v2194
  %v2256 = vunpack.c.h.b16 %v2194
  %v2257 = vunpack.c.l.b16 %v2195
  %v2258 = vunpack.c.h.b16 %v2195
  %v2259 = vunpack.c.l.b16 %v2196
  %v2260 = vunpack.c.h.b16 %v2196
  %v2261 = vunpack.c.l.b16 %v2197
  %v2262 = vunpack.c.h.b16 %v2197
  %v2263 = vunpack.c.l.b16 %v2198
  %v2264 = vunpack.c.h.b16 %v2198
  %v2265 = vpack.c.b16 %v2249, %v2247
  %v2266 = vpack.c.b16 %v2250, %v2248
  %v2267 = vpack.c.b16 %v2253, %v2251
  %v2268 = vpack.c.b16 %v2254, %v2252
  %v2269 = vpack.c.b16 %v2257, %v2255
  %v2270 = vpack.c.b16 %v2258, %v2256
  %v2271 = vpack.c.b16 %v2261, %v2259
  %v2272 = vpack.c.b16 %v2262, %v2260
  %v2273 = vpack.c.b16 %v2263, %v2263
  %v2274 = vpack.c.b16 %v2264, %v2264
  %v2317 = vunpack.c.l.b16 %v2199
  %v2318 = vunpack.c.l.b16 %v2200
  %v2319 = vunpack.c.l.b16 %v2201
  %v2320 = vunpack.c.l.b16 %v2202
  %v2321 = vunpack.c.l.b16 %v2203
  %v2322 = vunpack.c.l.b16 %v2204
  %v2323 = vunpack.c.l.b16 %v2205
  %v2324 = vunpack.c.l.b16 %v2206
  %v2325 = vunpack.c.l.b16 %v2207
  %v2326 = vunpack.c.l.b16 %v2208
  %v2327 = vunpack.c.l.b16 %v2209
  %v2328 = vunpack.c.l.b16 %v2210
  %v2329 = vunpack.c.l.b16 %v2211
  %v2330 = vunpack.c.l.b16 %v2212
  %v2331 = vunpack.c.l.b16 %v2213
  %v2332 = vunpack.c.l.b16 %v2214
  %v2333 = vunpack.c.l.b16 %v2215
  %v2334 = vunpack.c.l.b16 %v2216
  %v2335 = vunpack.c.l.b16 %v2217
  %v2336 = vunpack.c.l.b16 %v2218
  %v2337 = vunpack.c.l.b16 %v2219
  %v2338 = vunpack.c.l.b16 %v2220
  %v2339 = vunpack.c.l.b16 %v2221
  %v2340 = vunpack.c.l.b16 %v2222
  %v2341 = vunpack.c.l.b16 %v2223
  %v2342 = vunpack.c.l.b16 %v2224
  %v2343 = vunpack.c.l.b16 %v2225
  %v2344 = vunpack.c.l.b16 %v2226
  %v2345 = vunpack.c.l.b16 %v2227
  %v2346 = vunpack.c.l.b16 %v2228
  %v2347 = vunpack.c.l.b16 %v2229
  %v2348 = vunpack.c.l.b16 %v2230
  %v2349 = vpack.c.b16 %v2318, %v2317
  %v2350 = vpack.c.b16 %v2320, %v2319
  %v2351 = vpack.c.b16 %v2322, %v2321
  %v2352 = vpack.c.b16 %v2324, %v2323
  %v2353 = vpack.c.b16 %v2326, %v2325
  %v2354 = vpack.c.b16 %v2328, %v2327
  %v2355 = vpack.c.b16 %v2330, %v2329
  %v2356 = vpack.c.b16 %v2332, %v2331
  %v2357 = vpack.c.b16 %v2334, %v2333
  %v2358 = vpack.c.b16 %v2336, %v2335
  %v2359 = vpack.c.b16 %v2338, %v2337
  %v2360 = vpack.c.b16 %v2340, %v2339
  %v2361 = vpack.c.b16 %v2342, %v2341
  %v2362 = vpack.c.b16 %v2344, %v2343
  %v2363 = vpack.c.b16 %v2346, %v2345
  %v2364 = vpack.c.b16 %v2348, %v2347
  %2381 = vmatprep.subr.bf16.mxu0 0
  %2382 = vmatpush1.bf16.msra.mxu0 %v2349
  %2383 = vmatprep.subr.bf16.mxu0 0
  %2384 = vmatpush1.bf16.msra.mxu0 %v2350
  %2385 = vmatprep.subr.bf16.mxu0 0
  %2386 = vmatpush1.bf16.msra.mxu0 %v2351
  %2387 = vmatprep.subr.bf16.mxu0 0
  %2388 = vmatpush1.bf16.msra.mxu0 %v2352
  %2389 = vmatprep.subr.bf16.mxu0 0
  %2390 = vmatpush1.bf16.msra.mxu0 %v2353
  %2391 = vmatprep.subr.bf16.mxu0 0
  %2392 = vmatpush1.bf16.msra.mxu0 %v2354
  %2393 = vmatprep.subr.bf16.mxu0 0
  %2394 = vmatpush1.bf16.msra.mxu0 %v2355
  %2395 = vmatprep.subr.bf16.mxu0 0
  %2396 = vmatpush1.bf16.msra.mxu0 %v2356
  %2397 = vmatprep.subr.bf16.mxu0 0
  %2398 = vmatpush1.bf16.msra.mxu0 %v2357
  %2399 = vmatprep.subr.bf16.mxu0 0
  %2400 = vmatpush1.bf16.msra.mxu0 %v2358
  %2401 = vmatprep.subr.bf16.mxu0 0
  %2402 = vmatpush1.bf16.msra.mxu0 %v2359
  %2403 = vmatprep.subr.bf16.mxu0 0
  %2404 = vmatpush1.bf16.msra.mxu0 %v2360
  %2405 = vmatprep.subr.bf16.mxu0 0
  %2406 = vmatpush1.bf16.msra.mxu0 %v2361
  %2407 = vmatprep.subr.bf16.mxu0 0
  %2408 = vmatpush1.bf16.msra.mxu0 %v2362
  %2409 = vmatprep.subr.bf16.mxu0 0
  %2410 = vmatpush1.bf16.msra.mxu0 %v2363
  %2411 = vmatprep.subr.bf16.mxu0 0
  %2412 = vmatpush1.bf16.msra.mxu0 %v2364
  %2413 = vmatprep.mubr.bf16.mxu0 %v2266
  %2414 = vmatmul.mubr.bf16.gmra.mrb[0].mxu0 %v2265
  %v2415 = vpop.f32.mrb[0].mxu0
  %v2416 = vadd.f32 %v2236, %v2415
  %v2417 = vpop.f32.mrb[0].mxu0
  %v2418 = vpop.f32.mrb[0].mxu0
  %v2419 = vadd.f32 %v2236, %v2418
  %v2420 = vpop.f32.mrb[0].mxu0
  %2421 = vmatprep.mubr.bf16.mxu0 %v2268
  %2422 = vmatmul.mubr.bf16.gmra.mrb[0].mxu0 %v2267
  %v2423 = vpop.f32.mrb[0].mxu0
  %v2424 = vadd.f32 %v2236, %v2423
  %v2425 = vpop.f32.mrb[0].mxu0
  %v2426 = vpop.f32.mrb[0].mxu0
  %v2427 = vadd.f32 %v2236, %v2426
  %v2428 = vpop.f32.mrb[0].mxu0
  %2429 = vmatprep.mubr.bf16.mxu0 %v2270
  %2430 = vmatmul.mubr.bf16.gmra.mrb[0].mxu0 %v2269
  %v2431 = vpop.f32.mrb[0].mxu0
  %v2432 = vadd.f32 %v2236, %v2431
  %v2433 = vpop.f32.mrb[0].mxu0
  %v2434 = vpop.f32.mrb[0].mxu0
  %v2435 = vadd.f32 %v2236, %v2434
  %v2436 = vpop.f32.mrb[0].mxu0
  %2437 = vmatprep.mubr.bf16.mxu0 %v2272
  %2438 = vmatmul.mubr.bf16.gmra.mrb[0].mxu0 %v2271
  %v2439 = vpop.f32.mrb[0].mxu0
  %v2440 = vadd.f32 %v2236, %v2439
  %v2441 = vpop.f32.mrb[0].mxu0
  %v2442 = vpop.f32.mrb[0].mxu0
  %v2443 = vadd.f32 %v2236, %v2442
  %v2444 = vpop.f32.mrb[0].mxu0
  %2445 = vmatprep.mubr.bf16.mxu0 %v2274
  %2446 = vmatmul.mubr.bf16.gmra.mrb[0].mxu0 %v2273
  %v2447 = vpop.f32.mrb[0].mxu0
  %v2448 = vadd.f32 %v2236, %v2447
  %v2449 = vpop.f32.mrb[0].mxu0
  %v2450 = vpop.f32.mrb[0].mxu0
  %v2451 = vpop.f32.mrb[0].mxu0
  %2452 = vdwg.mxu0
  %v2453 = vmax.f32 %v2416, 0.0
  %v2454 = vmax.f32 %v2419, 0.0
  %v2455 = vmax.f32 %v2424, 0.0
  %v2456 = vmax.f32 %v2427, 0.0
  %v2457 = vmax.f32 %v2432, 0.0
  %v2458 = vmax.f32 %v2435, 0.0
  %v2459 = vmax.f32 %v2440, 0.0
  %v2460 = vmax.f32 %v2443, 0.0
  %v2461 = vmax.f32 %v2448, 0.0
  %2471 = vrot.lane.b32.xlu0 %v2453, 96
  %v2472 = vpop.permute.xlu0 %2471
  %2473 = vrot.lane.b32.xlu0 %v2454, 96
  %v2474 = vpop.permute.xlu0 %2473
  %2475 = vrot.lane.b32.xlu0 %v2455, 96
  %v2476 = vpop.permute.xlu0 %2475
  %2477 = vrot.lane.b32.xlu0 %v2456, 96
  %v2478 = vpop.permute.xlu0 %2477
  %2479 = vrot.lane.b32.xlu0 %v2457, 96
  %v2480 = vpop.permute.xlu0 %2479
  %2481 = vrot.lane.b32.xlu0 %v2458, 96
  %v2482 = vpop.permute.xlu0 %2481
  %2483 = vrot.lane.b32.xlu0 %v2459, 96
  %v2484 = vpop.permute.xlu0 %2483
  %2485 = vrot.lane.b32.xlu0 %v2460, 96
  %v2486 = vpop.permute.xlu0 %2485
  %2487 = vrot.lane.b32.xlu0 %v2461, 96
  %v2488 = vpop.permute.xlu0 %2487
  %2498 = vst.msk [vmem:[#allocation2 + $0x8] sm:$0xff] %vm1265, %v2472
  %2499 = vst.msk [vmem:[#allocation2 + $0x28] sm:$0xff] %vm1265, %v2474
  %2500 = vst.msk [vmem:[#allocation2 + $0x48] sm:$0xff] %vm1265, %v2476
  %2501 = vst.msk [vmem:[#allocation2 + $0x68] sm:$0xff] %vm1265, %v2478
  %2502 = vst.msk [vmem:[#allocation2 + $0x88] sm:$0xff] %vm1265, %v2480
  %2503 = vst.msk [vmem:[#allocation2 + $0xa8] sm:$0xff] %vm1265, %v2482
  %2504 = vst.msk [vmem:[#allocation2 + $0xc8] sm:$0xff] %vm1265, %v2484
  %2505 = vst.msk [vmem:[#allocation2 + $0xe8] sm:$0xff] %vm1265, %v2486
  %2506 = vst.msk [vmem:[#allocation2 + $0x108] sm:$0xff] %vm1265, %v2488
  %v2507 = vld [vmem:[%s0 + $0x240] sm:$0xff]
  %v2508 = vld [vmem:[%s0 + $0x248] sm:$0xff]
  %v2509 = vld [vmem:[%s0 + $0x250] sm:$0xff]
  %v2510 = vld [vmem:[%s0 + $0x258] sm:$0xff]
  %v2511 = vld [vmem:[%s0 + $0x260] sm:$0xff]
  %v2512 = vld [vmem:[%s0 + $0x268] sm:$0xff]
  %v2513 = vld [vmem:[%s0 + $0x270] sm:$0xff]
  %v2514 = vld [vmem:[%s0 + $0x278] sm:$0xff]
  %v2515 = vld [vmem:[%s0 + $0x280] sm:$0xff]
  %v2516 = vld [vmem:[%s1] sm:$0xf]
  %v2517 = vld [vmem:[%s1 + $0x4] sm:$0xf]
  %v2518 = vld [vmem:[%s1 + $0x8] sm:$0xf]
  %v2519 = vld [vmem:[%s1 + $0xc] sm:$0xf]
  %v2520 = vld [vmem:[%s1 + $0x10] sm:$0xf]
  %v2521 = vld [vmem:[%s1 + $0x14] sm:$0xf]
  %v2522 = vld [vmem:[%s1 + $0x18] sm:$0xf]
  %v2523 = vld [vmem:[%s1 + $0x1c] sm:$0xf]
  %v2524 = vld [vmem:[%s1 + $0x20] sm:$0xf]
  %v2525 = vld [vmem:[%s1 + $0x24] sm:$0xf]
  %v2526 = vld [vmem:[%s1 + $0x28] sm:$0xf]
  %v2527 = vld [vmem:[%s1 + $0x2c] sm:$0xf]
  %v2528 = vld [vmem:[%s1 + $0x30] sm:$0xf]
  %v2529 = vld [vmem:[%s1 + $0x34] sm:$0xf]
  %v2530 = vld [vmem:[%s1 + $0x38] sm:$0xf]
  %v2531 = vld [vmem:[%s1 + $0x3c] sm:$0xf]
  %v2532 = vld [vmem:[%s1 + $0x40] sm:$0xf]
  %v2533 = vld [vmem:[%s1 + $0x44] sm:$0xf]
  %v2534 = vld [vmem:[%s1 + $0x48] sm:$0xf]
  %v2535 = vld [vmem:[%s1 + $0x4c] sm:$0xf]
  %v2536 = vld [vmem:[%s1 + $0x50] sm:$0xf]
  %v2537 = vld [vmem:[%s1 + $0x54] sm:$0xf]
  %v2538 = vld [vmem:[%s1 + $0x58] sm:$0xf]
  %v2539 = vld [vmem:[%s1 + $0x5c] sm:$0xf]
  %v2540 = vld [vmem:[%s1 + $0x60] sm:$0xf]
  %v2541 = vld [vmem:[%s1 + $0x64] sm:$0xf]
  %v2542 = vld [vmem:[%s1 + $0x68] sm:$0xf]
  %v2543 = vld [vmem:[%s1 + $0x6c] sm:$0xf]
  %v2544 = vld [vmem:[%s1 + $0x70] sm:$0xf]
  %v2545 = vld [vmem:[%s1 + $0x74] sm:$0xf]
  %v2546 = vld [vmem:[%s1 + $0x78] sm:$0xf]
  %v2547 = vld [vmem:[%s1 + $0x7c] sm:$0xf]
  %v2548 = vld [vmem:[%s2] sm:$0x1]
  %v2550 = vlaneseq
  %v2551 = vshrl.u32 %v2550, 7
  %v2552 = vsub.s32 0, %v2551
  %v2553 = vrot.slane %v2548, %v2552
  %v2564 = vunpack.c.l.b16 %v2507
  %v2565 = vunpack.c.h.b16 %v2507
  %v2566 = vunpack.c.l.b16 %v2508
  %v2567 = vunpack.c.h.b16 %v2508
  %v2568 = vunpack.c.l.b16 %v2509
  %v2569 = vunpack.c.h.b16 %v2509
  %v2570 = vunpack.c.l.b16 %v2510
  %v2571 = vunpack.c.h.b16 %v2510
  %v2572 = vunpack.c.l.b16 %v2511
  %v2573 = vunpack.c.h.b16 %v2511
  %v2574 = vunpack.c.l.b16 %v2512
  %v2575 = vunpack.c.h.b16 %v2512
  %v2576 = vunpack.c.l.b16 %v2513
  %v2577 = vunpack.c.h.b16 %v2513
  %v2578 = vunpack.c.l.b16 %v2514
  %v2579 = vunpack.c.h.b16 %v2514
  %v2580 = vunpack.c.l.b16 %v2515
  %v2581 = vunpack.c.h.b16 %v2515
  %v2582 = vpack.c.b16 %v2566, %v2564
  %v2583 = vpack.c.b16 %v2567, %v2565
  %v2584 = vpack.c.b16 %v2570, %v2568
  %v2585 = vpack.c.b16 %v2571, %v2569
  %v2586 = vpack.c.b16 %v2574, %v2572
  %v2587 = vpack.c.b16 %v2575, %v2573
  %v2588 = vpack.c.b16 %v2578, %v2576
  %v2589 = vpack.c.b16 %v2579, %v2577
  %v2590 = vpack.c.b16 %v2580, %v2580
  %v2591 = vpack.c.b16 %v2581, %v2581
  %v2634 = vunpack.c.l.b16 %v2516
  %v2635 = vunpack.c.l.b16 %v2517
  %v2636 = vunpack.c.l.b16 %v2518
  %v2637 = vunpack.c.l.b16 %v2519
  %v2638 = vunpack.c.l.b16 %v2520
  %v2639 = vunpack.c.l.b16 %v2521
  %v2640 = vunpack.c.l.b16 %v2522
  %v2641 = vunpack.c.l.b16 %v2523
  %v2642 = vunpack.c.l.b16 %v2524
  %v2643 = vunpack.c.l.b16 %v2525
  %v2644 = vunpack.c.l.b16 %v2526
  %v2645 = vunpack.c.l.b16 %v2527
  %v2646 = vunpack.c.l.b16 %v2528
  %v2647 = vunpack.c.l.b16 %v2529
  %v2648 = vunpack.c.l.b16 %v2530
  %v2649 = vunpack.c.l.b16 %v2531
  %v2650 = vunpack.c.l.b16 %v2532
  %v2651 = vunpack.c.l.b16 %v2533
  %v2652 = vunpack.c.l.b16 %v2534
  %v2653 = vunpack.c.l.b16 %v2535
  %v2654 = vunpack.c.l.b16 %v2536
  %v2655 = vunpack.c.l.b16 %v2537
  %v2656 = vunpack.c.l.b16 %v2538
  %v2657 = vunpack.c.l.b16 %v2539
  %v2658 = vunpack.c.l.b16 %v2540
  %v2659 = vunpack.c.l.b16 %v2541
  %v2660 = vunpack.c.l.b16 %v2542
  %v2661 = vunpack.c.l.b16 %v2543
  %v2662 = vunpack.c.l.b16 %v2544
  %v2663 = vunpack.c.l.b16 %v2545
  %v2664 = vunpack.c.l.b16 %v2546
  %v2665 = vunpack.c.l.b16 %v2547
  %v2666 = vpack.c.b16 %v2635, %v2634
  %v2667 = vpack.c.b16 %v2637, %v2636
  %v2668 = vpack.c.b16 %v2639, %v2638
  %v2669 = vpack.c.b16 %v2641, %v2640
  %v2670 = vpack.c.b16 %v2643, %v2642
  %v2671 = vpack.c.b16 %v2645, %v2644
  %v2672 = vpack.c.b16 %v2647, %v2646
  %v2673 = vpack.c.b16 %v2649, %v2648
  %v2674 = vpack.c.b16 %v2651, %v2650
  %v2675 = vpack.c.b16 %v2653, %v2652
  %v2676 = vpack.c.b16 %v2655, %v2654
  %v2677 = vpack.c.b16 %v2657, %v2656
  %v2678 = vpack.c.b16 %v2659, %v2658
  %v2679 = vpack.c.b16 %v2661, %v2660
  %v2680 = vpack.c.b16 %v2663, %v2662
  %v2681 = vpack.c.b16 %v2665, %v2664
  %2698 = vmatprep.subr.bf16.mxu0 0
  %2699 = vmatpush1.bf16.msra.mxu0 %v2666
  %2700 = vmatprep.subr.bf16.mxu0 0
  %2701 = vmatpush1.bf16.msra.mxu0 %v2667
  %2702 = vmatprep.subr.bf16.mxu0 0
  %2703 = vmatpush1.bf16.msra.mxu0 %v2668
  %2704 = vmatprep.subr.bf16.mxu0 0
  %2705 = vmatpush1.bf16.msra.mxu0 %v2669
  %2706 = vmatprep.subr.bf16.mxu0 0
  %2707 = vmatpush1.bf16.msra.mxu0 %v2670
  %2708 = vmatprep.subr.bf16.mxu0 0
  %2709 = vmatpush1.bf16.msra.mxu0 %v2671
  %2710 = vmatprep.subr.bf16.mxu0 0
  %2711 = vmatpush1.bf16.msra.mxu0 %v2672
  %2712 = vmatprep.subr.bf16.mxu0 0
  %2713 = vmatpush1.bf16.msra.mxu0 %v2673
  %2714 = vmatprep.subr.bf16.mxu0 0
  %2715 = vmatpush1.bf16.msra.mxu0 %v2674
  %2716 = vmatprep.subr.bf16.mxu0 0
  %2717 = vmatpush1.bf16.msra.mxu0 %v2675
  %2718 = vmatprep.subr.bf16.mxu0 0
  %2719 = vmatpush1.bf16.msra.mxu0 %v2676
  %2720 = vmatprep.subr.bf16.mxu0 0
  %2721 = vmatpush1.bf16.msra.mxu0 %v2677
  %2722 = vmatprep.subr.bf16.mxu0 0
  %2723 = vmatpush1.bf16.msra.mxu0 %v2678
  %2724 = vmatprep.subr.bf16.mxu0 0
  %2725 = vmatpush1.bf16.msra.mxu0 %v2679
  %2726 = vmatprep.subr.bf16.mxu0 0
  %2727 = vmatpush1.bf16.msra.mxu0 %v2680
  %2728 = vmatprep.subr.bf16.mxu0 0
  %2729 = vmatpush1.bf16.msra.mxu0 %v2681
  %2730 = vmatprep.mubr.bf16.mxu0 %v2583
  %2731 = vmatmul.mubr.bf16.gmra.mrb[0].mxu0 %v2582
  %v2732 = vpop.f32.mrb[0].mxu0
  %v2733 = vadd.f32 %v2553, %v2732
  %v2734 = vpop.f32.mrb[0].mxu0
  %v2735 = vpop.f32.mrb[0].mxu0
  %v2736 = vadd.f32 %v2553, %v2735
  %v2737 = vpop.f32.mrb[0].mxu0
  %2738 = vmatprep.mubr.bf16.mxu0 %v2585
  %2739 = vmatmul.mubr.bf16.gmra.mrb[0].mxu0 %v2584
  %v2740 = vpop.f32.mrb[0].mxu0
  %v2741 = vadd.f32 %v2553, %v2740
  %v2742 = vpop.f32.mrb[0].mxu0
  %v2743 = vpop.f32.mrb[0].mxu0
  %v2744 = vadd.f32 %v2553, %v2743
  %v2745 = vpop.f32.mrb[0].mxu0
  %2746 = vmatprep.mubr.bf16.mxu0 %v2587
  %2747 = vmatmul.mubr.bf16.gmra.mrb[0].mxu0 %v2586
  %v2748 = vpop.f32.mrb[0].mxu0
  %v2749 = vadd.f32 %v2553, %v2748
  %v2750 = vpop.f32.mrb[0].mxu0
  %v2751 = vpop.f32.mrb[0].mxu0
  %v2752 = vadd.f32 %v2553, %v2751
  %v2753 = vpop.f32.mrb[0].mxu0
  %2754 = vmatprep.mubr.bf16.mxu0 %v2589
  %2755 = vmatmul.mubr.bf16.gmra.mrb[0].mxu0 %v2588
  %v2756 = vpop.f32.mrb[0].mxu0
  %v2757 = vadd.f32 %v2553, %v2756
  %v2758 = vpop.f32.mrb[0].mxu0
  %v2759 = vpop.f32.mrb[0].mxu0
  %v2760 = vadd.f32 %v2553, %v2759
  %v2761 = vpop.f32.mrb[0].mxu0
  %2762 = vmatprep.mubr.bf16.mxu0 %v2591
  %2763 = vmatmul.mubr.bf16.gmra.mrb[0].mxu0 %v2590
  %v2764 = vpop.f32.mrb[0].mxu0
  %v2765 = vadd.f32 %v2553, %v2764
  %v2766 = vpop.f32.mrb[0].mxu0
  %v2767 = vpop.f32.mrb[0].mxu0
  %v2768 = vpop.f32.mrb[0].mxu0
  %2769 = vdwg.mxu0
  %v2770 = vmax.f32 %v2733, 0.0
  %v2771 = vmax.f32 %v2736, 0.0
  %v2772 = vmax.f32 %v2741, 0.0
  %v2773 = vmax.f32 %v2744, 0.0
  %v2774 = vmax.f32 %v2749, 0.0
  %v2775 = vmax.f32 %v2752, 0.0
  %v2776 = vmax.f32 %v2757, 0.0
  %v2777 = vmax.f32 %v2760, 0.0
  %v2778 = vmax.f32 %v2765, 0.0
  %2779 = vst.msk [vmem:[#allocation2 + $0x10] sm:$0xff] %vm311, %v2770
  %2780 = vst.msk [vmem:[#allocation2 + $0x30] sm:$0xff] %vm311, %v2771
  %2781 = vst.msk [vmem:[#allocation2 + $0x50] sm:$0xff] %vm311, %v2772
  %2782 = vst.msk [vmem:[#allocation2 + $0x70] sm:$0xff] %vm311, %v2773
  %2783 = vst.msk [vmem:[#allocation2 + $0x90] sm:$0xff] %vm311, %v2774
  %2784 = vst.msk [vmem:[#allocation2 + $0xb0] sm:$0xff] %vm311, %v2775
  %2785 = vst.msk [vmem:[#allocation2 + $0xd0] sm:$0xff] %vm311, %v2776
  %2786 = vst.msk [vmem:[#allocation2 + $0xf0] sm:$0xff] %vm311, %v2777
  %2787 = vst.msk [vmem:[#allocation2 + $0x110] sm:$0xff] %vm311, %v2778
  %v2788 = vld [vmem:[%s0 + $0x288] sm:$0xff]
  %v2789 = vld [vmem:[%s0 + $0x290] sm:$0xff]
  %v2790 = vld [vmem:[%s0 + $0x298] sm:$0xff]
  %v2791 = vld [vmem:[%s0 + $0x2a0] sm:$0xff]
  %v2792 = vld [vmem:[%s0 + $0x2a8] sm:$0xff]
  %v2793 = vld [vmem:[%s0 + $0x2b0] sm:$0xff]
  %v2794 = vld [vmem:[%s0 + $0x2b8] sm:$0xff]
  %v2795 = vld [vmem:[%s0 + $0x2c0] sm:$0xff]
  %v2796 = vld [vmem:[%s0 + $0x2c8] sm:$0xff]
  %v2797 = vld [vmem:[%s1] sm:$0xf]
  %v2798 = vld [vmem:[%s1 + $0x4] sm:$0xf]
  %v2799 = vld [vmem:[%s1 + $0x8] sm:$0xf]
  %v2800 = vld [vmem:[%s1 + $0xc] sm:$0xf]
  %v2801 = vld [vmem:[%s1 + $0x10] sm:$0xf]
  %v2802 = vld [vmem:[%s1 + $0x14] sm:$0xf]
  %v2803 = vld [vmem:[%s1 + $0x18] sm:$0xf]
  %v2804 = vld [vmem:[%s1 + $0x1c] sm:$0xf]
  %v2805 = vld [vmem:[%s1 + $0x20] sm:$0xf]
  %v2806 = vld [vmem:[%s1 + $0x24] sm:$0xf]
  %v2807 = vld [vmem:[%s1 + $0x28] sm:$0xf]
  %v2808 = vld [vmem:[%s1 + $0x2c] sm:$0xf]
  %v2809 = vld [vmem:[%s1 + $0x30] sm:$0xf]
  %v2810 = vld [vmem:[%s1 + $0x34] sm:$0xf]
  %v2811 = vld [vmem:[%s1 + $0x38] sm:$0xf]
  %v2812 = vld [vmem:[%s1 + $0x3c] sm:$0xf]
  %v2813 = vld [vmem:[%s1 + $0x40] sm:$0xf]
  %v2814 = vld [vmem:[%s1 + $0x44] sm:$0xf]
  %v2815 = vld [vmem:[%s1 + $0x48] sm:$0xf]
  %v2816 = vld [vmem:[%s1 + $0x4c] sm:$0xf]
  %v2817 = vld [vmem:[%s1 + $0x50] sm:$0xf]
  %v2818 = vld [vmem:[%s1 + $0x54] sm:$0xf]
  %v2819 = vld [vmem:[%s1 + $0x58] sm:$0xf]
  %v2820 = vld [vmem:[%s1 + $0x5c] sm:$0xf]
  %v2821 = vld [vmem:[%s1 + $0x60] sm:$0xf]
  %v2822 = vld [vmem:[%s1 + $0x64] sm:$0xf]
  %v2823 = vld [vmem:[%s1 + $0x68] sm:$0xf]
  %v2824 = vld [vmem:[%s1 + $0x6c] sm:$0xf]
  %v2825 = vld [vmem:[%s1 + $0x70] sm:$0xf]
  %v2826 = vld [vmem:[%s1 + $0x74] sm:$0xf]
  %v2827 = vld [vmem:[%s1 + $0x78] sm:$0xf]
  %v2828 = vld [vmem:[%s1 + $0x7c] sm:$0xf]
  %v2829 = vld [vmem:[%s2] sm:$0x1]
  %v2831 = vlaneseq
  %v2832 = vshrl.u32 %v2831, 7
  %v2833 = vsub.s32 0, %v2832
  %v2834 = vrot.slane %v2829, %v2833
  %v2845 = vunpack.c.l.b16 %v2788
  %v2846 = vunpack.c.h.b16 %v2788
  %v2847 = vunpack.c.l.b16 %v2789
  %v2848 = vunpack.c.h.b16 %v2789
  %v2849 = vunpack.c.l.b16 %v2790
  %v2850 = vunpack.c.h.b16 %v2790
  %v2851 = vunpack.c.l.b16 %v2791
  %v2852 = vunpack.c.h.b16 %v2791
  %v2853 = vunpack.c.l.b16 %v2792
  %v2854 = vunpack.c.h.b16 %v2792
  %v2855 = vunpack.c.l.b16 %v2793
  %v2856 = vunpack.c.h.b16 %v2793
  %v2857 = vunpack.c.l.b16 %v2794
  %v2858 = vunpack.c.h.b16 %v2794
  %v2859 = vunpack.c.l.b16 %v2795
  %v2860 = vunpack.c.h.b16 %v2795
  %v2861 = vunpack.c.l.b16 %v2796
  %v2862 = vunpack.c.h.b16 %v2796
  %v2863 = vpack.c.b16 %v2847, %v2845
  %v2864 = vpack.c.b16 %v2848, %v2846
  %v2865 = vpack.c.b16 %v2851, %v2849
  %v2866 = vpack.c.b16 %v2852, %v2850
  %v2867 = vpack.c.b16 %v2855, %v2853
  %v2868 = vpack.c.b16 %v2856, %v2854
  %v2869 = vpack.c.b16 %v2859, %v2857
  %v2870 = vpack.c.b16 %v2860, %v2858
  %v2871 = vpack.c.b16 %v2861, %v2861
  %v2872 = vpack.c.b16 %v2862, %v2862
  %v2915 = vunpack.c.l.b16 %v2797
  %v2916 = vunpack.c.l.b16 %v2798
  %v2917 = vunpack.c.l.b16 %v2799
  %v2918 = vunpack.c.l.b16 %v2800
  %v2919 = vunpack.c.l.b16 %v2801
  %v2920 = vunpack.c.l.b16 %v2802
  %v2921 = vunpack.c.l.b16 %v2803
  %v2922 = vunpack.c.l.b16 %v2804
  %v2923 = vunpack.c.l.b16 %v2805
  %v2924 = vunpack.c.l.b16 %v2806
  %v2925 = vunpack.c.l.b16 %v2807
  %v2926 = vunpack.c.l.b16 %v2808
  %v2927 = vunpack.c.l.b16 %v2809
  %v2928 = vunpack.c.l.b16 %v2810
  %v2929 = vunpack.c.l.b16 %v2811
  %v2930 = vunpack.c.l.b16 %v2812
  %v2931 = vunpack.c.l.b16 %v2813
  %v2932 = vunpack.c.l.b16 %v2814
  %v2933 = vunpack.c.l.b16 %v2815
  %v2934 = vunpack.c.l.b16 %v2816
  %v2935 = vunpack.c.l.b16 %v2817
  %v2936 = vunpack.c.l.b16 %v2818
  %v2937 = vunpack.c.l.b16 %v2819
  %v2938 = vunpack.c.l.b16 %v2820
  %v2939 = vunpack.c.l.b16 %v2821
  %v2940 = vunpack.c.l.b16 %v2822
  %v2941 = vunpack.c.l.b16 %v2823
  %v2942 = vunpack.c.l.b16 %v2824
  %v2943 = vunpack.c.l.b16 %v2825
  %v2944 = vunpack.c.l.b16 %v2826
  %v2945 = vunpack.c.l.b16 %v2827
  %v2946 = vunpack.c.l.b16 %v2828
  %v2947 = vpack.c.b16 %v2916, %v2915
  %v2948 = vpack.c.b16 %v2918, %v2917
  %v2949 = vpack.c.b16 %v2920, %v2919
  %v2950 = vpack.c.b16 %v2922, %v2921
  %v2951 = vpack.c.b16 %v2924, %v2923
  %v2952 = vpack.c.b16 %v2926, %v2925
  %v2953 = vpack.c.b16 %v2928, %v2927
  %v2954 = vpack.c.b16 %v2930, %v2929
  %v2955 = vpack.c.b16 %v2932, %v2931
  %v2956 = vpack.c.b16 %v2934, %v2933
  %v2957 = vpack.c.b16 %v2936, %v2935
  %v2958 = vpack.c.b16 %v2938, %v2937
  %v2959 = vpack.c.b16 %v2940, %v2939
  %v2960 = vpack.c.b16 %v2942, %v2941
  %v2961 = vpack.c.b16 %v2944, %v2943
  %v2962 = vpack.c.b16 %v2946, %v2945
  %2979 = vmatprep.subr.bf16.mxu0 0
  %2980 = vmatpush1.bf16.msra.mxu0 %v2947
  %2981 = vmatprep.subr.bf16.mxu0 0
  %2982 = vmatpush1.bf16.msra.mxu0 %v2948
  %2983 = vmatprep.subr.bf16.mxu0 0
  %2984 = vmatpush1.bf16.msra.mxu0 %v2949
  %2985 = vmatprep.subr.bf16.mxu0 0
  %2986 = vmatpush1.bf16.msra.mxu0 %v2950
  %2987 = vmatprep.subr.bf16.mxu0 0
  %2988 = vmatpush1.bf16.msra.mxu0 %v2951
  %2989 = vmatprep.subr.bf16.mxu0 0
  %2990 = vmatpush1.bf16.msra.mxu0 %v2952
  %2991 = vmatprep.subr.bf16.mxu0 0
  %2992 = vmatpush1.bf16.msra.mxu0 %v2953
  %2993 = vmatprep.subr.bf16.mxu0 0
  %2994 = vmatpush1.bf16.msra.mxu0 %v2954
  %2995 = vmatprep.subr.bf16.mxu0 0
  %2996 = vmatpush1.bf16.msra.mxu0 %v2955
  %2997 = vmatprep.subr.bf16.mxu0 0
  %2998 = vmatpush1.bf16.msra.mxu0 %v2956
  %2999 = vmatprep.subr.bf16.mxu0 0
  %3000 = vmatpush1.bf16.msra.mxu0 %v2957
  %3001 = vmatprep.subr.bf16.mxu0 0
  %3002 = vmatpush1.bf16.msra.mxu0 %v2958
  %3003 = vmatprep.subr.bf16.mxu0 0
  %3004 = vmatpush1.bf16.msra.mxu0 %v2959
  %3005 = vmatprep.subr.bf16.mxu0 0
  %3006 = vmatpush1.bf16.msra.mxu0 %v2960
  %3007 = vmatprep.subr.bf16.mxu0 0
  %3008 = vmatpush1.bf16.msra.mxu0 %v2961
  %3009 = vmatprep.subr.bf16.mxu0 0
  %3010 = vmatpush1.bf16.msra.mxu0 %v2962
  %3011 = vmatprep.mubr.bf16.mxu0 %v2864
  %3012 = vmatmul.mubr.bf16.gmra.mrb[0].mxu0 %v2863
  %v3013 = vpop.f32.mrb[0].mxu0
  %v3014 = vadd.f32 %v2834, %v3013
  %v3015 = vpop.f32.mrb[0].mxu0
  %v3016 = vpop.f32.mrb[0].mxu0
  %v3017 = vadd.f32 %v2834, %v3016
  %v3018 = vpop.f32.mrb[0].mxu0
  %3019 = vmatprep.mubr.bf16.mxu0 %v2866
  %3020 = vmatmul.mubr.bf16.gmra.mrb[0].mxu0 %v2865
  %v3021 = vpop.f32.mrb[0].mxu0
  %v3022 = vadd.f32 %v2834, %v3021
  %v3023 = vpop.f32.mrb[0].mxu0
  %v3024 = vpop.f32.mrb[0].mxu0
  %v3025 = vadd.f32 %v2834, %v3024
  %v3026 = vpop.f32.mrb[0].mxu0
  %3027 = vmatprep.mubr.bf16.mxu0 %v2868
  %3028 = vmatmul.mubr.bf16.gmra.mrb[0].mxu0 %v2867
  %v3029 = vpop.f32.mrb[0].mxu0
  %v3030 = vadd.f32 %v2834, %v3029
  %v3031 = vpop.f32.mrb[0].mxu0
  %v3032 = vpop.f32.mrb[0].mxu0
  %v3033 = vadd.f32 %v2834, %v3032
  %v3034 = vpop.f32.mrb[0].mxu0
  %3035 = vmatprep.mubr.bf16.mxu0 %v2870
  %3036 = vmatmul.mubr.bf16.gmra.mrb[0].mxu0 %v2869
  %v3037 = vpop.f32.mrb[0].mxu0
  %v3038 = vadd.f32 %v2834, %v3037
  %v3039 = vpop.f32.mrb[0].mxu0
  %v3040 = vpop.f32.mrb[0].mxu0
  %v3041 = vadd.f32 %v2834, %v3040
  %v3042 = vpop.f32.mrb[0].mxu0
  %3043 = vmatprep.mubr.bf16.mxu0 %v2872
  %3044 = vmatmul.mubr.bf16.gmra.mrb[0].mxu0 %v2871
  %v3045 = vpop.f32.mrb[0].mxu0
  %v3046 = vadd.f32 %v2834, %v3045
  %v3047 = vpop.f32.mrb[0].mxu0
  %v3048 = vpop.f32.mrb[0].mxu0
  %v3049 = vpop.f32.mrb[0].mxu0
  %3050 = vdwg.mxu0
  %v3051 = vmax.f32 %v3014, 0.0
  %v3052 = vmax.f32 %v3017, 0.0
  %v3053 = vmax.f32 %v3022, 0.0
  %v3054 = vmax.f32 %v3025, 0.0
  %v3055 = vmax.f32 %v3030, 0.0
  %v3056 = vmax.f32 %v3033, 0.0
  %v3057 = vmax.f32 %v3038, 0.0
  %v3058 = vmax.f32 %v3041, 0.0
  %v3059 = vmax.f32 %v3046, 0.0
  %3069 = vrot.lane.b32.xlu0 %v3051, 32
  %v3070 = vpop.permute.xlu0 %3069
  %3071 = vrot.lane.b32.xlu0 %v3052, 32
  %v3072 = vpop.permute.xlu0 %3071
  %3073 = vrot.lane.b32.xlu0 %v3053, 32
  %v3074 = vpop.permute.xlu0 %3073
  %3075 = vrot.lane.b32.xlu0 %v3054, 32
  %v3076 = vpop.permute.xlu0 %3075
  %3077 = vrot.lane.b32.xlu0 %v3055, 32
  %v3078 = vpop.permute.xlu0 %3077
  %3079 = vrot.lane.b32.xlu0 %v3056, 32
  %v3080 = vpop.permute.xlu0 %3079
  %3081 = vrot.lane.b32.xlu0 %v3057, 32
  %v3082 = vpop.permute.xlu0 %3081
  %3083 = vrot.lane.b32.xlu0 %v3058, 32
  %v3084 = vpop.permute.xlu0 %3083
  %3085 = vrot.lane.b32.xlu0 %v3059, 32
  %v3086 = vpop.permute.xlu0 %3085
  %3096 = vst.msk [vmem:[#allocation2 + $0x10] sm:$0xff] %vm629, %v3070
  %3097 = vst.msk [vmem:[#allocation2 + $0x30] sm:$0xff] %vm629, %v3072
  %3098 = vst.msk [vmem:[#allocation2 + $0x50] sm:$0xff] %vm629, %v3074
  %3099 = vst.msk [vmem:[#allocation2 + $0x70] sm:$0xff] %vm629, %v3076
  %3100 = vst.msk [vmem:[#allocation2 + $0x90] sm:$0xff] %vm629, %v3078
  %3101 = vst.msk [vmem:[#allocation2 + $0xb0] sm:$0xff] %vm629, %v3080
  %3102 = vst.msk [vmem:[#allocation2 + $0xd0] sm:$0xff] %vm629, %v3082
  %3103 = vst.msk [vmem:[#allocation2 + $0xf0] sm:$0xff] %vm629, %v3084
  %3104 = vst.msk [vmem:[#allocation2 + $0x110] sm:$0xff] %vm629, %v3086
  %v3105 = vld [vmem:[%s0 + $0x2d0] sm:$0xff]
  %v3106 = vld [vmem:[%s0 + $0x2d8] sm:$0xff]
  %v3107 = vld [vmem:[%s0 + $0x2e0] sm:$0xff]
  %v3108 = vld [vmem:[%s0 + $0x2e8] sm:$0xff]
  %v3109 = vld [vmem:[%s0 + $0x2f0] sm:$0xff]
  %v3110 = vld [vmem:[%s0 + $0x2f8] sm:$0xff]
  %v3111 = vld [vmem:[%s0 + $0x300] sm:$0xff]
  %v3112 = vld [vmem:[%s0 + $0x308] sm:$0xff]
  %v3113 = vld [vmem:[%s0 + $0x310] sm:$0xff]
  %v3114 = vld [vmem:[%s1] sm:$0xf]
  %v3115 = vld [vmem:[%s1 + $0x4] sm:$0xf]
  %v3116 = vld [vmem:[%s1 + $0x8] sm:$0xf]
  %v3117 = vld [vmem:[%s1 + $0xc] sm:$0xf]
  %v3118 = vld [vmem:[%s1 + $0x10] sm:$0xf]
  %v3119 = vld [vmem:[%s1 + $0x14] sm:$0xf]
  %v3120 = vld [vmem:[%s1 + $0x18] sm:$0xf]
  %v3121 = vld [vmem:[%s1 + $0x1c] sm:$0xf]
  %v3122 = vld [vmem:[%s1 + $0x20] sm:$0xf]
  %v3123 = vld [vmem:[%s1 + $0x24] sm:$0xf]
  %v3124 = vld [vmem:[%s1 + $0x28] sm:$0xf]
  %v3125 = vld [vmem:[%s1 + $0x2c] sm:$0xf]
  %v3126 = vld [vmem:[%s1 + $0x30] sm:$0xf]
  %v3127 = vld [vmem:[%s1 + $0x34] sm:$0xf]
  %v3128 = vld [vmem:[%s1 + $0x38] sm:$0xf]
  %v3129 = vld [vmem:[%s1 + $0x3c] sm:$0xf]
  %v3130 = vld [vmem:[%s1 + $0x40] sm:$0xf]
  %v3131 = vld [vmem:[%s1 + $0x44] sm:$0xf]
  %v3132 = vld [vmem:[%s1 + $0x48] sm:$0xf]
  %v3133 = vld [vmem:[%s1 + $0x4c] sm:$0xf]
  %v3134 = vld [vmem:[%s1 + $0x50] sm:$0xf]
  %v3135 = vld [vmem:[%s1 + $0x54] sm:$0xf]
  %v3136 = vld [vmem:[%s1 + $0x58] sm:$0xf]
  %v3137 = vld [vmem:[%s1 + $0x5c] sm:$0xf]
  %v3138 = vld [vmem:[%s1 + $0x60] sm:$0xf]
  %v3139 = vld [vmem:[%s1 + $0x64] sm:$0xf]
  %v3140 = vld [vmem:[%s1 + $0x68] sm:$0xf]
  %v3141 = vld [vmem:[%s1 + $0x6c] sm:$0xf]
  %v3142 = vld [vmem:[%s1 + $0x70] sm:$0xf]
  %v3143 = vld [vmem:[%s1 + $0x74] sm:$0xf]
  %v3144 = vld [vmem:[%s1 + $0x78] sm:$0xf]
  %v3145 = vld [vmem:[%s1 + $0x7c] sm:$0xf]
  %v3146 = vld [vmem:[%s2] sm:$0x1]
  %v3148 = vlaneseq
  %v3149 = vshrl.u32 %v3148, 7
  %v3150 = vsub.s32 0, %v3149
  %v3151 = vrot.slane %v3146, %v3150
  %v3162 = vunpack.c.l.b16 %v3105
  %v3163 = vunpack.c.h.b16 %v3105
  %v3164 = vunpack.c.l.b16 %v3106
  %v3165 = vunpack.c.h.b16 %v3106
  %v3166 = vunpack.c.l.b16 %v3107
  %v3167 = vunpack.c.h.b16 %v3107
  %v3168 = vunpack.c.l.b16 %v3108
  %v3169 = vunpack.c.h.b16 %v3108
  %v3170 = vunpack.c.l.b16 %v3109
  %v3171 = vunpack.c.h.b16 %v3109
  %v3172 = vunpack.c.l.b16 %v3110
  %v3173 = vunpack.c.h.b16 %v3110
  %v3174 = vunpack.c.l.b16 %v3111
  %v3175 = vunpack.c.h.b16 %v3111
  %v3176 = vunpack.c.l.b16 %v3112
  %v3177 = vunpack.c.h.b16 %v3112
  %v3178 = vunpack.c.l.b16 %v3113
  %v3179 = vunpack.c.h.b16 %v3113
  %v3180 = vpack.c.b16 %v3164, %v3162
  %v3181 = vpack.c.b16 %v3165, %v3163
  %v3182 = vpack.c.b16 %v3168, %v3166
  %v3183 = vpack.c.b16 %v3169, %v3167
  %v3184 = vpack.c.b16 %v3172, %v3170
  %v3185 = vpack.c.b16 %v3173, %v3171
  %v3186 = vpack.c.b16 %v3176, %v3174
  %v3187 = vpack.c.b16 %v3177, %v3175
  %v3188 = vpack.c.b16 %v3178, %v3178
  %v3189 = vpack.c.b16 %v3179, %v3179
  %v3232 = vunpack.c.l.b16 %v3114
  %v3233 = vunpack.c.l.b16 %v3115
  %v3234 = vunpack.c.l.b16 %v3116
  %v3235 = vunpack.c.l.b16 %v3117
  %v3236 = vunpack.c.l.b16 %v3118
  %v3237 = vunpack.c.l.b16 %v3119
  %v3238 = vunpack.c.l.b16 %v3120
  %v3239 = vunpack.c.l.b16 %v3121
  %v3240 = vunpack.c.l.b16 %v3122
  %v3241 = vunpack.c.l.b16 %v3123
  %v3242 = vunpack.c.l.b16 %v3124
  %v3243 = vunpack.c.l.b16 %v3125
  %v3244 = vunpack.c.l.b16 %v3126
  %v3245 = vunpack.c.l.b16 %v3127
  %v3246 = vunpack.c.l.b16 %v3128
  %v3247 = vunpack.c.l.b16 %v3129
  %v3248 = vunpack.c.l.b16 %v3130
  %v3249 = vunpack.c.l.b16 %v3131
  %v3250 = vunpack.c.l.b16 %v3132
  %v3251 = vunpack.c.l.b16 %v3133
  %v3252 = vunpack.c.l.b16 %v3134
  %v3253 = vunpack.c.l.b16 %v3135
  %v3254 = vunpack.c.l.b16 %v3136
  %v3255 = vunpack.c.l.b16 %v3137
  %v3256 = vunpack.c.l.b16 %v3138
  %v3257 = vunpack.c.l.b16 %v3139
  %v3258 = vunpack.c.l.b16 %v3140
  %v3259 = vunpack.c.l.b16 %v3141
  %v3260 = vunpack.c.l.b16 %v3142
  %v3261 = vunpack.c.l.b16 %v3143
  %v3262 = vunpack.c.l.b16 %v3144
  %v3263 = vunpack.c.l.b16 %v3145
  %v3264 = vpack.c.b16 %v3233, %v3232
  %v3265 = vpack.c.b16 %v3235, %v3234
  %v3266 = vpack.c.b16 %v3237, %v3236
  %v3267 = vpack.c.b16 %v3239, %v3238
  %v3268 = vpack.c.b16 %v3241, %v3240
  %v3269 = vpack.c.b16 %v3243, %v3242
  %v3270 = vpack.c.b16 %v3245, %v3244
  %v3271 = vpack.c.b16 %v3247, %v3246
  %v3272 = vpack.c.b16 %v3249, %v3248
  %v3273 = vpack.c.b16 %v3251, %v3250
  %v3274 = vpack.c.b16 %v3253, %v3252
  %v3275 = vpack.c.b16 %v3255, %v3254
  %v3276 = vpack.c.b16 %v3257, %v3256
  %v3277 = vpack.c.b16 %v3259, %v3258
  %v3278 = vpack.c.b16 %v3261, %v3260
  %v3279 = vpack.c.b16 %v3263, %v3262
  %3296 = vmatprep.subr.bf16.mxu0 0
  %3297 = vmatpush1.bf16.msra.mxu0 %v3264
  %3298 = vmatprep.subr.bf16.mxu0 0
  %3299 = vmatpush1.bf16.msra.mxu0 %v3265
  %3300 = vmatprep.subr.bf16.mxu0 0
  %3301 = vmatpush1.bf16.msra.mxu0 %v3266
  %3302 = vmatprep.subr.bf16.mxu0 0
  %3303 = vmatpush1.bf16.msra.mxu0 %v3267
  %3304 = vmatprep.subr.bf16.mxu0 0
  %3305 = vmatpush1.bf16.msra.mxu0 %v3268
  %3306 = vmatprep.subr.bf16.mxu0 0
  %3307 = vmatpush1.bf16.msra.mxu0 %v3269
  %3308 = vmatprep.subr.bf16.mxu0 0
  %3309 = vmatpush1.bf16.msra.mxu0 %v3270
  %3310 = vmatprep.subr.bf16.mxu0 0
  %3311 = vmatpush1.bf16.msra.mxu0 %v3271
  %3312 = vmatprep.subr.bf16.mxu0 0
  %3313 = vmatpush1.bf16.msra.mxu0 %v3272
  %3314 = vmatprep.subr.bf16.mxu0 0
  %3315 = vmatpush1.bf16.msra.mxu0 %v3273
  %3316 = vmatprep.subr.bf16.mxu0 0
  %3317 = vmatpush1.bf16.msra.mxu0 %v3274
  %3318 = vmatprep.subr.bf16.mxu0 0
  %3319 = vmatpush1.bf16.msra.mxu0 %v3275
  %3320 = vmatprep.subr.bf16.mxu0 0
  %3321 = vmatpush1.bf16.msra.mxu0 %v3276
  %3322 = vmatprep.subr.bf16.mxu0 0
  %3323 = vmatpush1.bf16.msra.mxu0 %v3277
  %3324 = vmatprep.subr.bf16.mxu0 0
  %3325 = vmatpush1.bf16.msra.mxu0 %v3278
  %3326 = vmatprep.subr.bf16.mxu0 0
  %3327 = vmatpush1.bf16.msra.mxu0 %v3279
  %3328 = vmatprep.mubr.bf16.mxu0 %v3181
  %3329 = vmatmul.mubr.bf16.gmra.mrb[0].mxu0 %v3180
  %v3330 = vpop.f32.mrb[0].mxu0
  %v3331 = vadd.f32 %v3151, %v3330
  %v3332 = vpop.f32.mrb[0].mxu0
  %v3333 = vpop.f32.mrb[0].mxu0
  %v3334 = vadd.f32 %v3151, %v3333
  %v3335 = vpop.f32.mrb[0].mxu0
  %3336 = vmatprep.mubr.bf16.mxu0 %v3183
  %3337 = vmatmul.mubr.bf16.gmra.mrb[0].mxu0 %v3182
  %v3338 = vpop.f32.mrb[0].mxu0
  %v3339 = vadd.f32 %v3151, %v3338
  %v3340 = vpop.f32.mrb[0].mxu0
  %v3341 = vpop.f32.mrb[0].mxu0
  %v3342 = vadd.f32 %v3151, %v3341
  %v3343 = vpop.f32.mrb[0].mxu0
  %3344 = vmatprep.mubr.bf16.mxu0 %v3185
  %3345 = vmatmul.mubr.bf16.gmra.mrb[0].mxu0 %v3184
  %v3346 = vpop.f32.mrb[0].mxu0
  %v3347 = vadd.f32 %v3151, %v3346
  %v3348 = vpop.f32.mrb[0].mxu0
  %v3349 = vpop.f32.mrb[0].mxu0
  %v3350 = vadd.f32 %v3151, %v3349
  %v3351 = vpop.f32.mrb[0].mxu0
  %3352 = vmatprep.mubr.bf16.mxu0 %v3187
  %3353 = vmatmul.mubr.bf16.gmra.mrb[0].mxu0 %v3186
  %v3354 = vpop.f32.mrb[0].mxu0
  %v3355 = vadd.f32 %v3151, %v3354
  %v3356 = vpop.f32.mrb[0].mxu0
  %v3357 = vpop.f32.mrb[0].mxu0
  %v3358 = vadd.f32 %v3151, %v3357
  %v3359 = vpop.f32.mrb[0].mxu0
  %3360 = vmatprep.mubr.bf16.mxu0 %v3189
  %3361 = vmatmul.mubr.bf16.gmra.mrb[0].mxu0 %v3188
  %v3362 = vpop.f32.mrb[0].mxu0
  %v3363 = vadd.f32 %v3151, %v3362
  %v3364 = vpop.f32.mrb[0].mxu0
  %v3365 = vpop.f32.mrb[0].mxu0
  %v3366 = vpop.f32.mrb[0].mxu0
  %3367 = vdwg.mxu0
  %v3368 = vmax.f32 %v3331, 0.0
  %v3369 = vmax.f32 %v3334, 0.0
  %v3370 = vmax.f32 %v3339, 0.0
  %v3371 = vmax.f32 %v3342, 0.0
  %v3372 = vmax.f32 %v3347, 0.0
  %v3373 = vmax.f32 %v3350, 0.0
  %v3374 = vmax.f32 %v3355, 0.0
  %v3375 = vmax.f32 %v3358, 0.0
  %v3376 = vmax.f32 %v3363, 0.0
  %3386 = vrot.lane.b32.xlu0 %v3368, 64
  %v3387 = vpop.permute.xlu0 %3386
  %3388 = vrot.lane.b32.xlu0 %v3369, 64
  %v3389 = vpop.permute.xlu0 %3388
  %3390 = vrot.lane.b32.xlu0 %v3370, 64
  %v3391 = vpop.permute.xlu0 %3390
  %3392 = vrot.lane.b32.xlu0 %v3371, 64
  %v3393 = vpop.permute.xlu0 %3392
  %3394 = vrot.lane.b32.xlu0 %v3372, 64
  %v3395 = vpop.permute.xlu0 %3394
  %3396 = vrot.lane.b32.xlu0 %v3373, 64
  %v3397 = vpop.permute.xlu0 %3396
  %3398 = vrot.lane.b32.xlu0 %v3374, 64
  %v3399 = vpop.permute.xlu0 %3398
  %3400 = vrot.lane.b32.xlu0 %v3375, 64
  %v3401 = vpop.permute.xlu0 %3400
  %3402 = vrot.lane.b32.xlu0 %v3376, 64
  %v3403 = vpop.permute.xlu0 %3402
  %3413 = vst.msk [vmem:[#allocation2 + $0x10] sm:$0xff] %vm947, %v3387
  %3414 = vst.msk [vmem:[#allocation2 + $0x30] sm:$0xff] %vm947, %v3389
  %3415 = vst.msk [vmem:[#allocation2 + $0x50] sm:$0xff] %vm947, %v3391
  %3416 = vst.msk [vmem:[#allocation2 + $0x70] sm:$0xff] %vm947, %v3393
  %3417 = vst.msk [vmem:[#allocation2 + $0x90] sm:$0xff] %vm947, %v3395
  %3418 = vst.msk [vmem:[#allocation2 + $0xb0] sm:$0xff] %vm947, %v3397
  %3419 = vst.msk [vmem:[#allocation2 + $0xd0] sm:$0xff] %vm947, %v3399
  %3420 = vst.msk [vmem:[#allocation2 + $0xf0] sm:$0xff] %vm947, %v3401
  %3421 = vst.msk [vmem:[#allocation2 + $0x110] sm:$0xff] %vm947, %v3403
  %v3422 = vld [vmem:[%s0 + $0x318] sm:$0xff]
  %v3423 = vld [vmem:[%s0 + $0x320] sm:$0xff]
  %v3424 = vld [vmem:[%s0 + $0x328] sm:$0xff]
  %v3425 = vld [vmem:[%s0 + $0x330] sm:$0xff]
  %v3426 = vld [vmem:[%s0 + $0x338] sm:$0xff]
  %v3427 = vld [vmem:[%s0 + $0x340] sm:$0xff]
  %v3428 = vld [vmem:[%s0 + $0x348] sm:$0xff]
  %v3429 = vld [vmem:[%s0 + $0x350] sm:$0xff]
  %v3430 = vld [vmem:[%s0 + $0x358] sm:$0xff]
  %v3431 = vld [vmem:[%s1] sm:$0xf]
  %v3432 = vld [vmem:[%s1 + $0x4] sm:$0xf]
  %v3433 = vld [vmem:[%s1 + $0x8] sm:$0xf]
  %v3434 = vld [vmem:[%s1 + $0xc] sm:$0xf]
  %v3435 = vld [vmem:[%s1 + $0x10] sm:$0xf]
  %v3436 = vld [vmem:[%s1 + $0x14] sm:$0xf]
  %v3437 = vld [vmem:[%s1 + $0x18] sm:$0xf]
  %v3438 = vld [vmem:[%s1 + $0x1c] sm:$0xf]
  %v3439 = vld [vmem:[%s1 + $0x20] sm:$0xf]
  %v3440 = vld [vmem:[%s1 + $0x24] sm:$0xf]
  %v3441 = vld [vmem:[%s1 + $0x28] sm:$0xf]
  %v3442 = vld [vmem:[%s1 + $0x2c] sm:$0xf]
  %v3443 = vld [vmem:[%s1 + $0x30] sm:$0xf]
  %v3444 = vld [vmem:[%s1 + $0x34] sm:$0xf]
  %v3445 = vld [vmem:[%s1 + $0x38] sm:$0xf]
  %v3446 = vld [vmem:[%s1 + $0x3c] sm:$0xf]
  %v3447 = vld [vmem:[%s1 + $0x40] sm:$0xf]
  %v3448 = vld [vmem:[%s1 + $0x44] sm:$0xf]
  %v3449 = vld [vmem:[%s1 + $0x48] sm:$0xf]
  %v3450 = vld [vmem:[%s1 + $0x4c] sm:$0xf]
  %v3451 = vld [vmem:[%s1 + $0x50] sm:$0xf]
  %v3452 = vld [vmem:[%s1 + $0x54] sm:$0xf]
  %v3453 = vld [vmem:[%s1 + $0x58] sm:$0xf]
  %v3454 = vld [vmem:[%s1 + $0x5c] sm:$0xf]
  %v3455 = vld [vmem:[%s1 + $0x60] sm:$0xf]
  %v3456 = vld [vmem:[%s1 + $0x64] sm:$0xf]
  %v3457 = vld [vmem:[%s1 + $0x68] sm:$0xf]
  %v3458 = vld [vmem:[%s1 + $0x6c] sm:$0xf]
  %v3459 = vld [vmem:[%s1 + $0x70] sm:$0xf]
  %v3460 = vld [vmem:[%s1 + $0x74] sm:$0xf]
  %v3461 = vld [vmem:[%s1 + $0x78] sm:$0xf]
  %v3462 = vld [vmem:[%s1 + $0x7c] sm:$0xf]
  %v3463 = vld [vmem:[%s2] sm:$0x1]
  %v3465 = vlaneseq
  %v3466 = vshrl.u32 %v3465, 7
  %v3467 = vsub.s32 0, %v3466
  %v3468 = vrot.slane %v3463, %v3467
  %v3479 = vunpack.c.l.b16 %v3422
  %v3480 = vunpack.c.h.b16 %v3422
  %v3481 = vunpack.c.l.b16 %v3423
  %v3482 = vunpack.c.h.b16 %v3423
  %v3483 = vunpack.c.l.b16 %v3424
  %v3484 = vunpack.c.h.b16 %v3424
  %v3485 = vunpack.c.l.b16 %v3425
  %v3486 = vunpack.c.h.b16 %v3425
  %v3487 = vunpack.c.l.b16 %v3426
  %v3488 = vunpack.c.h.b16 %v3426
  %v3489 = vunpack.c.l.b16 %v3427
  %v3490 = vunpack.c.h.b16 %v3427
  %v3491 = vunpack.c.l.b16 %v3428
  %v3492 = vunpack.c.h.b16 %v3428
  %v3493 = vunpack.c.l.b16 %v3429
  %v3494 = vunpack.c.h.b16 %v3429
  %v3495 = vunpack.c.l.b16 %v3430
  %v3496 = vunpack.c.h.b16 %v3430
  %v3497 = vpack.c.b16 %v3481, %v3479
  %v3498 = vpack.c.b16 %v3482, %v3480
  %v3499 = vpack.c.b16 %v3485, %v3483
  %v3500 = vpack.c.b16 %v3486, %v3484
  %v3501 = vpack.c.b16 %v3489, %v3487
  %v3502 = vpack.c.b16 %v3490, %v3488
  %v3503 = vpack.c.b16 %v3493, %v3491
  %v3504 = vpack.c.b16 %v3494, %v3492
  %v3505 = vpack.c.b16 %v3495, %v3495
  %v3506 = vpack.c.b16 %v3496, %v3496
  %v3549 = vunpack.c.l.b16 %v3431
  %v3550 = vunpack.c.l.b16 %v3432
  %v3551 = vunpack.c.l.b16 %v3433
  %v3552 = vunpack.c.l.b16 %v3434
  %v3553 = vunpack.c.l.b16 %v3435
  %v3554 = vunpack.c.l.b16 %v3436
  %v3555 = vunpack.c.l.b16 %v3437
  %v3556 = vunpack.c.l.b16 %v3438
  %v3557 = vunpack.c.l.b16 %v3439
  %v3558 = vunpack.c.l.b16 %v3440
  %v3559 = vunpack.c.l.b16 %v3441
  %v3560 = vunpack.c.l.b16 %v3442
  %v3561 = vunpack.c.l.b16 %v3443
  %v3562 = vunpack.c.l.b16 %v3444
  %v3563 = vunpack.c.l.b16 %v3445
  %v3564 = vunpack.c.l.b16 %v3446
  %v3565 = vunpack.c.l.b16 %v3447
  %v3566 = vunpack.c.l.b16 %v3448
  %v3567 = vunpack.c.l.b16 %v3449
  %v3568 = vunpack.c.l.b16 %v3450
  %v3569 = vunpack.c.l.b16 %v3451
  %v3570 = vunpack.c.l.b16 %v3452
  %v3571 = vunpack.c.l.b16 %v3453
  %v3572 = vunpack.c.l.b16 %v3454
  %v3573 = vunpack.c.l.b16 %v3455
  %v3574 = vunpack.c.l.b16 %v3456
  %v3575 = vunpack.c.l.b16 %v3457
  %v3576 = vunpack.c.l.b16 %v3458
  %v3577 = vunpack.c.l.b16 %v3459
  %v3578 = vunpack.c.l.b16 %v3460
  %v3579 = vunpack.c.l.b16 %v3461
  %v3580 = vunpack.c.l.b16 %v3462
  %v3581 = vpack.c.b16 %v3550, %v3549
  %v3582 = vpack.c.b16 %v3552, %v3551
  %v3583 = vpack.c.b16 %v3554, %v3553
  %v3584 = vpack.c.b16 %v3556, %v3555
  %v3585 = vpack.c.b16 %v3558, %v3557
  %v3586 = vpack.c.b16 %v3560, %v3559
  %v3587 = vpack.c.b16 %v3562, %v3561
  %v3588 = vpack.c.b16 %v3564, %v3563
  %v3589 = vpack.c.b16 %v3566, %v3565
  %v3590 = vpack.c.b16 %v3568, %v3567
  %v3591 = vpack.c.b16 %v3570, %v3569
  %v3592 = vpack.c.b16 %v3572, %v3571
  %v3593 = vpack.c.b16 %v3574, %v3573
  %v3594 = vpack.c.b16 %v3576, %v3575
  %v3595 = vpack.c.b16 %v3578, %v3577
  %v3596 = vpack.c.b16 %v3580, %v3579
  %3613 = vmatprep.subr.bf16.mxu0 0
  %3614 = vmatpush1.bf16.msra.mxu0 %v3581
  %3615 = vmatprep.subr.bf16.mxu0 0
  %3616 = vmatpush1.bf16.msra.mxu0 %v3582
  %3617 = vmatprep.subr.bf16.mxu0 0
  %3618 = vmatpush1.bf16.msra.mxu0 %v3583
  %3619 = vmatprep.subr.bf16.mxu0 0
  %3620 = vmatpush1.bf16.msra.mxu0 %v3584
  %3621 = vmatprep.subr.bf16.mxu0 0
  %3622 = vmatpush1.bf16.msra.mxu0 %v3585
  %3623 = vmatprep.subr.bf16.mxu0 0
  %3624 = vmatpush1.bf16.msra.mxu0 %v3586
  %3625 = vmatprep.subr.bf16.mxu0 0
  %3626 = vmatpush1.bf16.msra.mxu0 %v3587
  %3627 = vmatprep.subr.bf16.mxu0 0
  %3628 = vmatpush1.bf16.msra.mxu0 %v3588
  %3629 = vmatprep.subr.bf16.mxu0 0
  %3630 = vmatpush1.bf16.msra.mxu0 %v3589
  %3631 = vmatprep.subr.bf16.mxu0 0
  %3632 = vmatpush1.bf16.msra.mxu0 %v3590
  %3633 = vmatprep.subr.bf16.mxu0 0
  %3634 = vmatpush1.bf16.msra.mxu0 %v3591
  %3635 = vmatprep.subr.bf16.mxu0 0
  %3636 = vmatpush1.bf16.msra.mxu0 %v3592
  %3637 = vmatprep.subr.bf16.mxu0 0
  %3638 = vmatpush1.bf16.msra.mxu0 %v3593
  %3639 = vmatprep.subr.bf16.mxu0 0
  %3640 = vmatpush1.bf16.msra.mxu0 %v3594
  %3641 = vmatprep.subr.bf16.mxu0 0
  %3642 = vmatpush1.bf16.msra.mxu0 %v3595
  %3643 = vmatprep.subr.bf16.mxu0 0
  %3644 = vmatpush1.bf16.msra.mxu0 %v3596
  %3645 = vmatprep.mubr.bf16.mxu0 %v3498
  %3646 = vmatmul.mubr.bf16.gmra.mrb[0].mxu0 %v3497
  %v3647 = vpop.f32.mrb[0].mxu0
  %v3648 = vadd.f32 %v3468, %v3647
  %v3649 = vpop.f32.mrb[0].mxu0
  %v3650 = vpop.f32.mrb[0].mxu0
  %v3651 = vadd.f32 %v3468, %v3650
  %v3652 = vpop.f32.mrb[0].mxu0
  %3653 = vmatprep.mubr.bf16.mxu0 %v3500
  %3654 = vmatmul.mubr.bf16.gmra.mrb[0].mxu0 %v3499
  %v3655 = vpop.f32.mrb[0].mxu0
  %v3656 = vadd.f32 %v3468, %v3655
  %v3657 = vpop.f32.mrb[0].mxu0
  %v3658 = vpop.f32.mrb[0].mxu0
  %v3659 = vadd.f32 %v3468, %v3658
  %v3660 = vpop.f32.mrb[0].mxu0
  %3661 = vmatprep.mubr.bf16.mxu0 %v3502
  %3662 = vmatmul.mubr.bf16.gmra.mrb[0].mxu0 %v3501
  %v3663 = vpop.f32.mrb[0].mxu0
  %v3664 = vadd.f32 %v3468, %v3663
  %v3665 = vpop.f32.mrb[0].mxu0
  %v3666 = vpop.f32.mrb[0].mxu0
  %v3667 = vadd.f32 %v3468, %v3666
  %v3668 = vpop.f32.mrb[0].mxu0
  %3669 = vmatprep.mubr.bf16.mxu0 %v3504
  %3670 = vmatmul.mubr.bf16.gmra.mrb[0].mxu0 %v3503
  %v3671 = vpop.f32.mrb[0].mxu0
  %v3672 = vadd.f32 %v3468, %v3671
  %v3673 = vpop.f32.mrb[0].mxu0
  %v3674 = vpop.f32.mrb[0].mxu0
  %v3675 = vadd.f32 %v3468, %v3674
  %v3676 = vpop.f32.mrb[0].mxu0
  %3677 = vmatprep.mubr.bf16.mxu0 %v3506
  %3678 = vmatmul.mubr.bf16.gmra.mrb[0].mxu0 %v3505
  %v3679 = vpop.f32.mrb[0].mxu0
  %v3680 = vadd.f32 %v3468, %v3679
  %v3681 = vpop.f32.mrb[0].mxu0
  %v3682 = vpop.f32.mrb[0].mxu0
  %v3683 = vpop.f32.mrb[0].mxu0
  %3684 = vdwg.mxu0
  %v3685 = vmax.f32 %v3648, 0.0
  %v3686 = vmax.f32 %v3651, 0.0
  %v3687 = vmax.f32 %v3656, 0.0
  %v3688 = vmax.f32 %v3659, 0.0
  %v3689 = vmax.f32 %v3664, 0.0
  %v3690 = vmax.f32 %v3667, 0.0
  %v3691 = vmax.f32 %v3672, 0.0
  %v3692 = vmax.f32 %v3675, 0.0
  %v3693 = vmax.f32 %v3680, 0.0
  %3703 = vrot.lane.b32.xlu0 %v3685, 96
  %v3704 = vpop.permute.xlu0 %3703
  %3705 = vrot.lane.b32.xlu0 %v3686, 96
  %v3706 = vpop.permute.xlu0 %3705
  %3707 = vrot.lane.b32.xlu0 %v3687, 96
  %v3708 = vpop.permute.xlu0 %3707
  %3709 = vrot.lane.b32.xlu0 %v3688, 96
  %v3710 = vpop.permute.xlu0 %3709
  %3711 = vrot.lane.b32.xlu0 %v3689, 96
  %v3712 = vpop.permute.xlu0 %3711
  %3713 = vrot.lane.b32.xlu0 %v3690, 96
  %v3714 = vpop.permute.xlu0 %3713
  %3715 = vrot.lane.b32.xlu0 %v3691, 96
  %v3716 = vpop.permute.xlu0 %3715
  %3717 = vrot.lane.b32.xlu0 %v3692, 96
  %v3718 = vpop.permute.xlu0 %3717
  %3719 = vrot.lane.b32.xlu0 %v3693, 96
  %v3720 = vpop.permute.xlu0 %3719
  %3730 = vst.msk [vmem:[#allocation2 + $0x10] sm:$0xff] %vm1265, %v3704
  %3731 = vst.msk [vmem:[#allocation2 + $0x30] sm:$0xff] %vm1265, %v3706
  %3732 = vst.msk [vmem:[#allocation2 + $0x50] sm:$0xff] %vm1265, %v3708
  %3733 = vst.msk [vmem:[#allocation2 + $0x70] sm:$0xff] %vm1265, %v3710
  %3734 = vst.msk [vmem:[#allocation2 + $0x90] sm:$0xff] %vm1265, %v3712
  %3735 = vst.msk [vmem:[#allocation2 + $0xb0] sm:$0xff] %vm1265, %v3714
  %3736 = vst.msk [vmem:[#allocation2 + $0xd0] sm:$0xff] %vm1265, %v3716
  %3737 = vst.msk [vmem:[#allocation2 + $0xf0] sm:$0xff] %vm1265, %v3718
  %3738 = vst.msk [vmem:[#allocation2 + $0x110] sm:$0xff] %vm1265, %v3720
  %v3739 = vld [vmem:[%s0 + $0x360] sm:$0xff]
  %v3740 = vld [vmem:[%s0 + $0x368] sm:$0xff]
  %v3741 = vld [vmem:[%s0 + $0x370] sm:$0xff]
  %v3742 = vld [vmem:[%s0 + $0x378] sm:$0xff]
  %v3743 = vld [vmem:[%s0 + $0x380] sm:$0xff]
  %v3744 = vld [vmem:[%s0 + $0x388] sm:$0xff]
  %v3745 = vld [vmem:[%s0 + $0x390] sm:$0xff]
  %v3746 = vld [vmem:[%s0 + $0x398] sm:$0xff]
  %v3747 = vld [vmem:[%s0 + $0x3a0] sm:$0xff]
  %v3748 = vld [vmem:[%s1] sm:$0xf]
  %v3749 = vld [vmem:[%s1 + $0x4] sm:$0xf]
  %v3750 = vld [vmem:[%s1 + $0x8] sm:$0xf]
  %v3751 = vld [vmem:[%s1 + $0xc] sm:$0xf]
  %v3752 = vld [vmem:[%s1 + $0x10] sm:$0xf]
  %v3753 = vld [vmem:[%s1 + $0x14] sm:$0xf]
  %v3754 = vld [vmem:[%s1 + $0x18] sm:$0xf]
  %v3755 = vld [vmem:[%s1 + $0x1c] sm:$0xf]
  %v3756 = vld [vmem:[%s1 + $0x20] sm:$0xf]
  %v3757 = vld [vmem:[%s1 + $0x24] sm:$0xf]
  %v3758 = vld [vmem:[%s1 + $0x28] sm:$0xf]
  %v3759 = vld [vmem:[%s1 + $0x2c] sm:$0xf]
  %v3760 = vld [vmem:[%s1 + $0x30] sm:$0xf]
  %v3761 = vld [vmem:[%s1 + $0x34] sm:$0xf]
  %v3762 = vld [vmem:[%s1 + $0x38] sm:$0xf]
  %v3763 = vld [vmem:[%s1 + $0x3c] sm:$0xf]
  %v3764 = vld [vmem:[%s1 + $0x40] sm:$0xf]
  %v3765 = vld [vmem:[%s1 + $0x44] sm:$0xf]
  %v3766 = vld [vmem:[%s1 + $0x48] sm:$0xf]
  %v3767 = vld [vmem:[%s1 + $0x4c] sm:$0xf]
  %v3768 = vld [vmem:[%s1 + $0x50] sm:$0xf]
  %v3769 = vld [vmem:[%s1 + $0x54] sm:$0xf]
  %v3770 = vld [vmem:[%s1 + $0x58] sm:$0xf]
  %v3771 = vld [vmem:[%s1 + $0x5c] sm:$0xf]
  %v3772 = vld [vmem:[%s1 + $0x60] sm:$0xf]
  %v3773 = vld [vmem:[%s1 + $0x64] sm:$0xf]
  %v3774 = vld [vmem:[%s1 + $0x68] sm:$0xf]
  %v3775 = vld [vmem:[%s1 + $0x6c] sm:$0xf]
  %v3776 = vld [vmem:[%s1 + $0x70] sm:$0xf]
  %v3777 = vld [vmem:[%s1 + $0x74] sm:$0xf]
  %v3778 = vld [vmem:[%s1 + $0x78] sm:$0xf]
  %v3779 = vld [vmem:[%s1 + $0x7c] sm:$0xf]
  %v3780 = vld [vmem:[%s2] sm:$0x1]
  %v3782 = vlaneseq
  %v3783 = vshrl.u32 %v3782, 7
  %v3784 = vsub.s32 0, %v3783
  %v3785 = vrot.slane %v3780, %v3784
  %v3796 = vunpack.c.l.b16 %v3739
  %v3797 = vunpack.c.h.b16 %v3739
  %v3798 = vunpack.c.l.b16 %v3740
  %v3799 = vunpack.c.h.b16 %v3740
  %v3800 = vunpack.c.l.b16 %v3741
  %v3801 = vunpack.c.h.b16 %v3741
  %v3802 = vunpack.c.l.b16 %v3742
  %v3803 = vunpack.c.h.b16 %v3742
  %v3804 = vunpack.c.l.b16 %v3743
  %v3805 = vunpack.c.h.b16 %v3743
  %v3806 = vunpack.c.l.b16 %v3744
  %v3807 = vunpack.c.h.b16 %v3744
  %v3808 = vunpack.c.l.b16 %v3745
  %v3809 = vunpack.c.h.b16 %v3745
  %v3810 = vunpack.c.l.b16 %v3746
  %v3811 = vunpack.c.h.b16 %v3746
  %v3812 = vunpack.c.l.b16 %v3747
  %v3813 = vunpack.c.h.b16 %v3747
  %v3814 = vpack.c.b16 %v3798, %v3796
  %v3815 = vpack.c.b16 %v3799, %v3797
  %v3816 = vpack.c.b16 %v3802, %v3800
  %v3817 = vpack.c.b16 %v3803, %v3801
  %v3818 = vpack.c.b16 %v3806, %v3804
  %v3819 = vpack.c.b16 %v3807, %v3805
  %v3820 = vpack.c.b16 %v3810, %v3808
  %v3821 = vpack.c.b16 %v3811, %v3809
  %v3822 = vpack.c.b16 %v3812, %v3812
  %v3823 = vpack.c.b16 %v3813, %v3813
  %v3866 = vunpack.c.l.b16 %v3748
  %v3867 = vunpack.c.l.b16 %v3749
  %v3868 = vunpack.c.l.b16 %v3750
  %v3869 = vunpack.c.l.b16 %v3751
  %v3870 = vunpack.c.l.b16 %v3752
  %v3871 = vunpack.c.l.b16 %v3753
  %v3872 = vunpack.c.l.b16 %v3754
  %v3873 = vunpack.c.l.b16 %v3755
  %v3874 = vunpack.c.l.b16 %v3756
  %v3875 = vunpack.c.l.b16 %v3757
  %v3876 = vunpack.c.l.b16 %v3758
  %v3877 = vunpack.c.l.b16 %v3759
  %v3878 = vunpack.c.l.b16 %v3760
  %v3879 = vunpack.c.l.b16 %v3761
  %v3880 = vunpack.c.l.b16 %v3762
  %v3881 = vunpack.c.l.b16 %v3763
  %v3882 = vunpack.c.l.b16 %v3764
  %v3883 = vunpack.c.l.b16 %v3765
  %v3884 = vunpack.c.l.b16 %v3766
  %v3885 = vunpack.c.l.b16 %v3767
  %v3886 = vunpack.c.l.b16 %v3768
  %v3887 = vunpack.c.l.b16 %v3769
  %v3888 = vunpack.c.l.b16 %v3770
  %v3889 = vunpack.c.l.b16 %v3771
  %v3890 = vunpack.c.l.b16 %v3772
  %v3891 = vunpack.c.l.b16 %v3773
  %v3892 = vunpack.c.l.b16 %v3774
  %v3893 = vunpack.c.l.b16 %v3775
  %v3894 = vunpack.c.l.b16 %v3776
  %v3895 = vunpack.c.l.b16 %v3777
  %v3896 = vunpack.c.l.b16 %v3778
  %v3897 = vunpack.c.l.b16 %v3779
  %v3898 = vpack.c.b16 %v3867, %v3866
  %v3899 = vpack.c.b16 %v3869, %v3868
  %v3900 = vpack.c.b16 %v3871, %v3870
  %v3901 = vpack.c.b16 %v3873, %v3872
  %v3902 = vpack.c.b16 %v3875, %v3874
  %v3903 = vpack.c.b16 %v3877, %v3876
  %v3904 = vpack.c.b16 %v3879, %v3878
  %v3905 = vpack.c.b16 %v3881, %v3880
  %v3906 = vpack.c.b16 %v3883, %v3882
  %v3907 = vpack.c.b16 %v3885, %v3884
  %v3908 = vpack.c.b16 %v3887, %v3886
  %v3909 = vpack.c.b16 %v3889, %v3888
  %v3910 = vpack.c.b16 %v3891, %v3890
  %v3911 = vpack.c.b16 %v3893, %v3892
  %v3912 = vpack.c.b16 %v3895, %v3894
  %v3913 = vpack.c.b16 %v3897, %v3896
  %3930 = vmatprep.subr.bf16.mxu0 0
  %3931 = vmatpush1.bf16.msra.mxu0 %v3898
  %3932 = vmatprep.subr.bf16.mxu0 0
  %3933 = vmatpush1.bf16.msra.mxu0 %v3899
  %3934 = vmatprep.subr.bf16.mxu0 0
  %3935 = vmatpush1.bf16.msra.mxu0 %v3900
  %3936 = vmatprep.subr.bf16.mxu0 0
  %3937 = vmatpush1.bf16.msra.mxu0 %v3901
  %3938 = vmatprep.subr.bf16.mxu0 0
  %3939 = vmatpush1.bf16.msra.mxu0 %v3902
  %3940 = vmatprep.subr.bf16.mxu0 0
  %3941 = vmatpush1.bf16.msra.mxu0 %v3903
  %3942 = vmatprep.subr.bf16.mxu0 0
  %3943 = vmatpush1.bf16.msra.mxu0 %v3904
  %3944 = vmatprep.subr.bf16.mxu0 0
  %3945 = vmatpush1.bf16.msra.mxu0 %v3905
  %3946 = vmatprep.subr.bf16.mxu0 0
  %3947 = vmatpush1.bf16.msra.mxu0 %v3906
  %3948 = vmatprep.subr.bf16.mxu0 0
  %3949 = vmatpush1.bf16.msra.mxu0 %v3907
  %3950 = vmatprep.subr.bf16.mxu0 0
  %3951 = vmatpush1.bf16.msra.mxu0 %v3908
  %3952 = vmatprep.subr.bf16.mxu0 0
  %3953 = vmatpush1.bf16.msra.mxu0 %v3909
  %3954 = vmatprep.subr.bf16.mxu0 0
  %3955 = vmatpush1.bf16.msra.mxu0 %v3910
  %3956 = vmatprep.subr.bf16.mxu0 0
  %3957 = vmatpush1.bf16.msra.mxu0 %v3911
  %3958 = vmatprep.subr.bf16.mxu0 0
  %3959 = vmatpush1.bf16.msra.mxu0 %v3912
  %3960 = vmatprep.subr.bf16.mxu0 0
  %3961 = vmatpush1.bf16.msra.mxu0 %v3913
  %3962 = vmatprep.mubr.bf16.mxu0 %v3815
  %3963 = vmatmul.mubr.bf16.gmra.mrb[0].mxu0 %v3814
  %v3964 = vpop.f32.mrb[0].mxu0
  %v3965 = vadd.f32 %v3785, %v3964
  %v3966 = vpop.f32.mrb[0].mxu0
  %v3967 = vpop.f32.mrb[0].mxu0
  %v3968 = vadd.f32 %v3785, %v3967
  %v3969 = vpop.f32.mrb[0].mxu0
  %3970 = vmatprep.mubr.bf16.mxu0 %v3817
  %3971 = vmatmul.mubr.bf16.gmra.mrb[0].mxu0 %v3816
  %v3972 = vpop.f32.mrb[0].mxu0
  %v3973 = vadd.f32 %v3785, %v3972
  %v3974 = vpop.f32.mrb[0].mxu0
  %v3975 = vpop.f32.mrb[0].mxu0
  %v3976 = vadd.f32 %v3785, %v3975
  %v3977 = vpop.f32.mrb[0].mxu0
  %3978 = vmatprep.mubr.bf16.mxu0 %v3819
  %3979 = vmatmul.mubr.bf16.gmra.mrb[0].mxu0 %v3818
  %v3980 = vpop.f32.mrb[0].mxu0
  %v3981 = vadd.f32 %v3785, %v3980
  %v3982 = vpop.f32.mrb[0].mxu0
  %v3983 = vpop.f32.mrb[0].mxu0
  %v3984 = vadd.f32 %v3785, %v3983
  %v3985 = vpop.f32.mrb[0].mxu0
  %3986 = vmatprep.mubr.bf16.mxu0 %v3821
  %3987 = vmatmul.mubr.bf16.gmra.mrb[0].mxu0 %v3820
  %v3988 = vpop.f32.mrb[0].mxu0
  %v3989 = vadd.f32 %v3785, %v3988
  %v3990 = vpop.f32.mrb[0].mxu0
  %v3991 = vpop.f32.mrb[0].mxu0
  %v3992 = vadd.f32 %v3785, %v3991
  %v3993 = vpop.f32.mrb[0].mxu0
  %3994 = vmatprep.mubr.bf16.mxu0 %v3823
  %3995 = vmatmul.mubr.bf16.gmra.mrb[0].mxu0 %v3822
  %v3996 = vpop.f32.mrb[0].mxu0
  %v3997 = vadd.f32 %v3785, %v3996
  %v3998 = vpop.f32.mrb[0].mxu0
  %v3999 = vpop.f32.mrb[0].mxu0
  %v4000 = vpop.f32.mrb[0].mxu0
  %4001 = vdwg.mxu0
  %v4002 = vmax.f32 %v3965, 0.0
  %v4003 = vmax.f32 %v3968, 0.0
  %v4004 = vmax.f32 %v3973, 0.0
  %v4005 = vmax.f32 %v3976, 0.0
  %v4006 = vmax.f32 %v3981, 0.0
  %v4007 = vmax.f32 %v3984, 0.0
  %v4008 = vmax.f32 %v3989, 0.0
  %v4009 = vmax.f32 %v3992, 0.0
  %v4010 = vmax.f32 %v3997, 0.0
  %4011 = vst.msk [vmem:[#allocation2 + $0x18] sm:$0xff] %vm311, %v4002
  %4012 = vst.msk [vmem:[#allocation2 + $0x38] sm:$0xff] %vm311, %v4003
  %4013 = vst.msk [vmem:[#allocation2 + $0x58] sm:$0xff] %vm311, %v4004
  %4014 = vst.msk [vmem:[#allocation2 + $0x78] sm:$0xff] %vm311, %v4005
  %4015 = vst.msk [vmem:[#allocation2 + $0x98] sm:$0xff] %vm311, %v4006
  %4016 = vst.msk [vmem:[#allocation2 + $0xb8] sm:$0xff] %vm311, %v4007
  %4017 = vst.msk [vmem:[#allocation2 + $0xd8] sm:$0xff] %vm311, %v4008
  %4018 = vst.msk [vmem:[#allocation2 + $0xf8] sm:$0xff] %vm311, %v4009
  %4019 = vst.msk [vmem:[#allocation2 + $0x118] sm:$0xff] %vm311, %v4010
  %v4020 = vld [vmem:[%s0 + $0x3a8] sm:$0xff]
  %v4021 = vld [vmem:[%s0 + $0x3b0] sm:$0xff]
  %v4022 = vld [vmem:[%s0 + $0x3b8] sm:$0xff]
  %v4023 = vld [vmem:[%s0 + $0x3c0] sm:$0xff]
  %v4024 = vld [vmem:[%s0 + $0x3c8] sm:$0xff]
  %v4025 = vld [vmem:[%s0 + $0x3d0] sm:$0xff]
  %v4026 = vld [vmem:[%s0 + $0x3d8] sm:$0xff]
  %v4027 = vld [vmem:[%s0 + $0x3e0] sm:$0xff]
  %v4028 = vld [vmem:[%s0 + $0x3e8] sm:$0xff]
  %v4029 = vld [vmem:[%s1] sm:$0xf]
  %v4030 = vld [vmem:[%s1 + $0x4] sm:$0xf]
  %v4031 = vld [vmem:[%s1 + $0x8] sm:$0xf]
  %v4032 = vld [vmem:[%s1 + $0xc] sm:$0xf]
  %v4033 = vld [vmem:[%s1 + $0x10] sm:$0xf]
  %v4034 = vld [vmem:[%s1 + $0x14] sm:$0xf]
  %v4035 = vld [vmem:[%s1 + $0x18] sm:$0xf]
  %v4036 = vld [vmem:[%s1 + $0x1c] sm:$0xf]
  %v4037 = vld [vmem:[%s1 + $0x20] sm:$0xf]
  %v4038 = vld [vmem:[%s1 + $0x24] sm:$0xf]
  %v4039 = vld [vmem:[%s1 + $0x28] sm:$0xf]
  %v4040 = vld [vmem:[%s1 + $0x2c] sm:$0xf]
  %v4041 = vld [vmem:[%s1 + $0x30] sm:$0xf]
  %v4042 = vld [vmem:[%s1 + $0x34] sm:$0xf]
  %v4043 = vld [vmem:[%s1 + $0x38] sm:$0xf]
  %v4044 = vld [vmem:[%s1 + $0x3c] sm:$0xf]
  %v4045 = vld [vmem:[%s1 + $0x40] sm:$0xf]
  %v4046 = vld [vmem:[%s1 + $0x44] sm:$0xf]
  %v4047 = vld [vmem:[%s1 + $0x48] sm:$0xf]
  %v4048 = vld [vmem:[%s1 + $0x4c] sm:$0xf]
  %v4049 = vld [vmem:[%s1 + $0x50] sm:$0xf]
  %v4050 = vld [vmem:[%s1 + $0x54] sm:$0xf]
  %v4051 = vld [vmem:[%s1 + $0x58] sm:$0xf]
  %v4052 = vld [vmem:[%s1 + $0x5c] sm:$0xf]
  %v4053 = vld [vmem:[%s1 + $0x60] sm:$0xf]
  %v4054 = vld [vmem:[%s1 + $0x64] sm:$0xf]
  %v4055 = vld [vmem:[%s1 + $0x68] sm:$0xf]
  %v4056 = vld [vmem:[%s1 + $0x6c] sm:$0xf]
  %v4057 = vld [vmem:[%s1 + $0x70] sm:$0xf]
  %v4058 = vld [vmem:[%s1 + $0x74] sm:$0xf]
  %v4059 = vld [vmem:[%s1 + $0x78] sm:$0xf]
  %v4060 = vld [vmem:[%s1 + $0x7c] sm:$0xf]
  %v4061 = vld [vmem:[%s2] sm:$0x1]
  %v4063 = vlaneseq
  %v4064 = vshrl.u32 %v4063, 7
  %v4065 = vsub.s32 0, %v4064
  %v4066 = vrot.slane %v4061, %v4065
  %v4077 = vunpack.c.l.b16 %v4020
  %v4078 = vunpack.c.h.b16 %v4020
  %v4079 = vunpack.c.l.b16 %v4021
  %v4080 = vunpack.c.h.b16 %v4021
  %v4081 = vunpack.c.l.b16 %v4022
  %v4082 = vunpack.c.h.b16 %v4022
  %v4083 = vunpack.c.l.b16 %v4023
  %v4084 = vunpack.c.h.b16 %v4023
  %v4085 = vunpack.c.l.b16 %v4024
  %v4086 = vunpack.c.h.b16 %v4024
  %v4087 = vunpack.c.l.b16 %v4025
  %v4088 = vunpack.c.h.b16 %v4025
  %v4089 = vunpack.c.l.b16 %v4026
  %v4090 = vunpack.c.h.b16 %v4026
  %v4091 = vunpack.c.l.b16 %v4027
  %v4092 = vunpack.c.h.b16 %v4027
  %v4093 = vunpack.c.l.b16 %v4028
  %v4094 = vunpack.c.h.b16 %v4028
  %v4095 = vpack.c.b16 %v4079, %v4077
  %v4096 = vpack.c.b16 %v4080, %v4078
  %v4097 = vpack.c.b16 %v4083, %v4081
  %v4098 = vpack.c.b16 %v4084, %v4082
  %v4099 = vpack.c.b16 %v4087, %v4085
  %v4100 = vpack.c.b16 %v4088, %v4086
  %v4101 = vpack.c.b16 %v4091, %v4089
  %v4102 = vpack.c.b16 %v4092, %v4090
  %v4103 = vpack.c.b16 %v4093, %v4093
  %v4104 = vpack.c.b16 %v4094, %v4094
  %v4147 = vunpack.c.l.b16 %v4029
  %v4148 = vunpack.c.l.b16 %v4030
  %v4149 = vunpack.c.l.b16 %v4031
  %v4150 = vunpack.c.l.b16 %v4032
  %v4151 = vunpack.c.l.b16 %v4033
  %v4152 = vunpack.c.l.b16 %v4034
  %v4153 = vunpack.c.l.b16 %v4035
  %v4154 = vunpack.c.l.b16 %v4036
  %v4155 = vunpack.c.l.b16 %v4037
  %v4156 = vunpack.c.l.b16 %v4038
  %v4157 = vunpack.c.l.b16 %v4039
  %v4158 = vunpack.c.l.b16 %v4040
  %v4159 = vunpack.c.l.b16 %v4041
  %v4160 = vunpack.c.l.b16 %v4042
  %v4161 = vunpack.c.l.b16 %v4043
  %v4162 = vunpack.c.l.b16 %v4044
  %v4163 = vunpack.c.l.b16 %v4045
  %v4164 = vunpack.c.l.b16 %v4046
  %v4165 = vunpack.c.l.b16 %v4047
  %v4166 = vunpack.c.l.b16 %v4048
  %v4167 = vunpack.c.l.b16 %v4049
  %v4168 = vunpack.c.l.b16 %v4050
  %v4169 = vunpack.c.l.b16 %v4051
  %v4170 = vunpack.c.l.b16 %v4052
  %v4171 = vunpack.c.l.b16 %v4053
  %v4172 = vunpack.c.l.b16 %v4054
  %v4173 = vunpack.c.l.b16 %v4055
  %v4174 = vunpack.c.l.b16 %v4056
  %v4175 = vunpack.c.l.b16 %v4057
  %v4176 = vunpack.c.l.b16 %v4058
  %v4177 = vunpack.c.l.b16 %v4059
  %v4178 = vunpack.c.l.b16 %v4060
  %v4179 = vpack.c.b16 %v4148, %v4147
  %v4180 = vpack.c.b16 %v4150, %v4149
  %v4181 = vpack.c.b16 %v4152, %v4151
  %v4182 = vpack.c.b16 %v4154, %v4153
  %v4183 = vpack.c.b16 %v4156, %v4155
  %v4184 = vpack.c.b16 %v4158, %v4157
  %v4185 = vpack.c.b16 %v4160, %v4159
  %v4186 = vpack.c.b16 %v4162, %v4161
  %v4187 = vpack.c.b16 %v4164, %v4163
  %v4188 = vpack.c.b16 %v4166, %v4165
  %v4189 = vpack.c.b16 %v4168, %v4167
  %v4190 = vpack.c.b16 %v4170, %v4169
  %v4191 = vpack.c.b16 %v4172, %v4171
  %v4192 = vpack.c.b16 %v4174, %v4173
  %v4193 = vpack.c.b16 %v4176, %v4175
  %v4194 = vpack.c.b16 %v4178, %v4177
  %4211 = vmatprep.subr.bf16.mxu0 0
  %4212 = vmatpush1.bf16.msra.mxu0 %v4179
  %4213 = vmatprep.subr.bf16.mxu0 0
  %4214 = vmatpush1.bf16.msra.mxu0 %v4180
  %4215 = vmatprep.subr.bf16.mxu0 0
  %4216 = vmatpush1.bf16.msra.mxu0 %v4181
  %4217 = vmatprep.subr.bf16.mxu0 0
  %4218 = vmatpush1.bf16.msra.mxu0 %v4182
  %4219 = vmatprep.subr.bf16.mxu0 0
  %4220 = vmatpush1.bf16.msra.mxu0 %v4183
  %4221 = vmatprep.subr.bf16.mxu0 0
  %4222 = vmatpush1.bf16.msra.mxu0 %v4184
  %4223 = vmatprep.subr.bf16.mxu0 0
  %4224 = vmatpush1.bf16.msra.mxu0 %v4185
  %4225 = vmatprep.subr.bf16.mxu0 0
  %4226 = vmatpush1.bf16.msra.mxu0 %v4186
  %4227 = vmatprep.subr.bf16.mxu0 0
  %4228 = vmatpush1.bf16.msra.mxu0 %v4187
  %4229 = vmatprep.subr.bf16.mxu0 0
  %4230 = vmatpush1.bf16.msra.mxu0 %v4188
  %4231 = vmatprep.subr.bf16.mxu0 0
  %4232 = vmatpush1.bf16.msra.mxu0 %v4189
  %4233 = vmatprep.subr.bf16.mxu0 0
  %4234 = vmatpush1.bf16.msra.mxu0 %v4190
  %4235 = vmatprep.subr.bf16.mxu0 0
  %4236 = vmatpush1.bf16.msra.mxu0 %v4191
  %4237 = vmatprep.subr.bf16.mxu0 0
  %4238 = vmatpush1.bf16.msra.mxu0 %v4192
  %4239 = vmatprep.subr.bf16.mxu0 0
  %4240 = vmatpush1.bf16.msra.mxu0 %v4193
  %4241 = vmatprep.subr.bf16.mxu0 0
  %4242 = vmatpush1.bf16.msra.mxu0 %v4194
  %4243 = vmatprep.mubr.bf16.mxu0 %v4096
  %4244 = vmatmul.mubr.bf16.gmra.mrb[0].mxu0 %v4095
  %v4245 = vpop.f32.mrb[0].mxu0
  %v4246 = vadd.f32 %v4066, %v4245
  %v4247 = vpop.f32.mrb[0].mxu0
  %v4248 = vpop.f32.mrb[0].mxu0
  %v4249 = vadd.f32 %v4066, %v4248
  %v4250 = vpop.f32.mrb[0].mxu0
  %4251 = vmatprep.mubr.bf16.mxu0 %v4098
  %4252 = vmatmul.mubr.bf16.gmra.mrb[0].mxu0 %v4097
  %v4253 = vpop.f32.mrb[0].mxu0
  %v4254 = vadd.f32 %v4066, %v4253
  %v4255 = vpop.f32.mrb[0].mxu0
  %v4256 = vpop.f32.mrb[0].mxu0
  %v4257 = vadd.f32 %v4066, %v4256
  %v4258 = vpop.f32.mrb[0].mxu0
  %4259 = vmatprep.mubr.bf16.mxu0 %v4100
  %4260 = vmatmul.mubr.bf16.gmra.mrb[0].mxu0 %v4099
  %v4261 = vpop.f32.mrb[0].mxu0
  %v4262 = vadd.f32 %v4066, %v4261
  %v4263 = vpop.f32.mrb[0].mxu0
  %v4264 = vpop.f32.mrb[0].mxu0
  %v4265 = vadd.f32 %v4066, %v4264
  %v4266 = vpop.f32.mrb[0].mxu0
  %4267 = vmatprep.mubr.bf16.mxu0 %v4102
  %4268 = vmatmul.mubr.bf16.gmra.mrb[0].mxu0 %v4101
  %v4269 = vpop.f32.mrb[0].mxu0
  %v4270 = vadd.f32 %v4066, %v4269
  %v4271 = vpop.f32.mrb[0].mxu0
  %v4272 = vpop.f32.mrb[0].mxu0
  %v4273 = vadd.f32 %v4066, %v4272
  %v4274 = vpop.f32.mrb[0].mxu0
  %4275 = vmatprep.mubr.bf16.mxu0 %v4104
  %4276 = vmatmul.mubr.bf16.gmra.mrb[0].mxu0 %v4103
  %v4277 = vpop.f32.mrb[0].mxu0
  %v4278 = vadd.f32 %v4066, %v4277
  %v4279 = vpop.f32.mrb[0].mxu0
  %v4280 = vpop.f32.mrb[0].mxu0
  %v4281 = vpop.f32.mrb[0].mxu0
  %4282 = vdwg.mxu0
  %v4283 = vmax.f32 %v4246, 0.0
  %v4284 = vmax.f32 %v4249, 0.0
  %v4285 = vmax.f32 %v4254, 0.0
  %v4286 = vmax.f32 %v4257, 0.0
  %v4287 = vmax.f32 %v4262, 0.0
  %v4288 = vmax.f32 %v4265, 0.0
  %v4289 = vmax.f32 %v4270, 0.0
  %v4290 = vmax.f32 %v4273, 0.0
  %v4291 = vmax.f32 %v4278, 0.0
  %4301 = vrot.lane.b32.xlu0 %v4283, 32
  %v4302 = vpop.permute.xlu0 %4301
  %4303 = vrot.lane.b32.xlu0 %v4284, 32
  %v4304 = vpop.permute.xlu0 %4303
  %4305 = vrot.lane.b32.xlu0 %v4285, 32
  %v4306 = vpop.permute.xlu0 %4305
  %4307 = vrot.lane.b32.xlu0 %v4286, 32
  %v4308 = vpop.permute.xlu0 %4307
  %4309 = vrot.lane.b32.xlu0 %v4287, 32
  %v4310 = vpop.permute.xlu0 %4309
  %4311 = vrot.lane.b32.xlu0 %v4288, 32
  %v4312 = vpop.permute.xlu0 %4311
  %4313 = vrot.lane.b32.xlu0 %v4289, 32
  %v4314 = vpop.permute.xlu0 %4313
  %4315 = vrot.lane.b32.xlu0 %v4290, 32
  %v4316 = vpop.permute.xlu0 %4315
  %4317 = vrot.lane.b32.xlu0 %v4291, 32
  %v4318 = vpop.permute.xlu0 %4317
  %4328 = vst.msk [vmem:[#allocation2 + $0x18] sm:$0xff] %vm629, %v4302
  %4329 = vst.msk [vmem:[#allocation2 + $0x38] sm:$0xff] %vm629, %v4304
  %4330 = vst.msk [vmem:[#allocation2 + $0x58] sm:$0xff] %vm629, %v4306
  %4331 = vst.msk [vmem:[#allocation2 + $0x78] sm:$0xff] %vm629, %v4308
  %4332 = vst.msk [vmem:[#allocation2 + $0x98] sm:$0xff] %vm629, %v4310
  %4333 = vst.msk [vmem:[#allocation2 + $0xb8] sm:$0xff] %vm629, %v4312
  %4334 = vst.msk [vmem:[#allocation2 + $0xd8] sm:$0xff] %vm629, %v4314
  %4335 = vst.msk [vmem:[#allocation2 + $0xf8] sm:$0xff] %vm629, %v4316
  %4336 = vst.msk [vmem:[#allocation2 + $0x118] sm:$0xff] %vm629, %v4318
  %v4337 = vld [vmem:[%s0 + $0x3f0] sm:$0xff]
  %v4338 = vld [vmem:[%s0 + $0x3f8] sm:$0xff]
  %v4339 = vld [vmem:[%s0 + $0x400] sm:$0xff]
  %v4340 = vld [vmem:[%s0 + $0x408] sm:$0xff]
  %v4341 = vld [vmem:[%s0 + $0x410] sm:$0xff]
  %v4342 = vld [vmem:[%s0 + $0x418] sm:$0xff]
  %v4343 = vld [vmem:[%s0 + $0x420] sm:$0xff]
  %v4344 = vld [vmem:[%s0 + $0x428] sm:$0xff]
  %v4345 = vld [vmem:[%s0 + $0x430] sm:$0xff]
  %v4346 = vld [vmem:[%s1] sm:$0xf]
  %v4347 = vld [vmem:[%s1 + $0x4] sm:$0xf]
  %v4348 = vld [vmem:[%s1 + $0x8] sm:$0xf]
  %v4349 = vld [vmem:[%s1 + $0xc] sm:$0xf]
  %v4350 = vld [vmem:[%s1 + $0x10] sm:$0xf]
  %v4351 = vld [vmem:[%s1 + $0x14] sm:$0xf]
  %v4352 = vld [vmem:[%s1 + $0x18] sm:$0xf]
  %v4353 = vld [vmem:[%s1 + $0x1c] sm:$0xf]
  %v4354 = vld [vmem:[%s1 + $0x20] sm:$0xf]
  %v4355 = vld [vmem:[%s1 + $0x24] sm:$0xf]
  %v4356 = vld [vmem:[%s1 + $0x28] sm:$0xf]
  %v4357 = vld [vmem:[%s1 + $0x2c] sm:$0xf]
  %v4358 = vld [vmem:[%s1 + $0x30] sm:$0xf]
  %v4359 = vld [vmem:[%s1 + $0x34] sm:$0xf]
  %v4360 = vld [vmem:[%s1 + $0x38] sm:$0xf]
  %v4361 = vld [vmem:[%s1 + $0x3c] sm:$0xf]
  %v4362 = vld [vmem:[%s1 + $0x40] sm:$0xf]
  %v4363 = vld [vmem:[%s1 + $0x44] sm:$0xf]
  %v4364 = vld [vmem:[%s1 + $0x48] sm:$0xf]
  %v4365 = vld [vmem:[%s1 + $0x4c] sm:$0xf]
  %v4366 = vld [vmem:[%s1 + $0x50] sm:$0xf]
  %v4367 = vld [vmem:[%s1 + $0x54] sm:$0xf]
  %v4368 = vld [vmem:[%s1 + $0x58] sm:$0xf]
  %v4369 = vld [vmem:[%s1 + $0x5c] sm:$0xf]
  %v4370 = vld [vmem:[%s1 + $0x60] sm:$0xf]
  %v4371 = vld [vmem:[%s1 + $0x64] sm:$0xf]
  %v4372 = vld [vmem:[%s1 + $0x68] sm:$0xf]
  %v4373 = vld [vmem:[%s1 + $0x6c] sm:$0xf]
  %v4374 = vld [vmem:[%s1 + $0x70] sm:$0xf]
  %v4375 = vld [vmem:[%s1 + $0x74] sm:$0xf]
  %v4376 = vld [vmem:[%s1 + $0x78] sm:$0xf]
  %v4377 = vld [vmem:[%s1 + $0x7c] sm:$0xf]
  %v4378 = vld [vmem:[%s2] sm:$0x1]
  %v4380 = vlaneseq
  %v4381 = vshrl.u32 %v4380, 7
  %v4382 = vsub.s32 0, %v4381
  %v4383 = vrot.slane %v4378, %v4382
  %v4394 = vunpack.c.l.b16 %v4337
  %v4395 = vunpack.c.h.b16 %v4337
  %v4396 = vunpack.c.l.b16 %v4338
  %v4397 = vunpack.c.h.b16 %v4338
  %v4398 = vunpack.c.l.b16 %v4339
  %v4399 = vunpack.c.h.b16 %v4339
  %v4400 = vunpack.c.l.b16 %v4340
  %v4401 = vunpack.c.h.b16 %v4340
  %v4402 = vunpack.c.l.b16 %v4341
  %v4403 = vunpack.c.h.b16 %v4341
  %v4404 = vunpack.c.l.b16 %v4342
  %v4405 = vunpack.c.h.b16 %v4342
  %v4406 = vunpack.c.l.b16 %v4343
  %v4407 = vunpack.c.h.b16 %v4343
  %v4408 = vunpack.c.l.b16 %v4344
  %v4409 = vunpack.c.h.b16 %v4344
  %v4410 = vunpack.c.l.b16 %v4345
  %v4411 = vunpack.c.h.b16 %v4345
  %v4412 = vpack.c.b16 %v4396, %v4394
  %v4413 = vpack.c.b16 %v4397, %v4395
  %v4414 = vpack.c.b16 %v4400, %v4398
  %v4415 = vpack.c.b16 %v4401, %v4399
  %v4416 = vpack.c.b16 %v4404, %v4402
  %v4417 = vpack.c.b16 %v4405, %v4403
  %v4418 = vpack.c.b16 %v4408, %v4406
  %v4419 = vpack.c.b16 %v4409, %v4407
  %v4420 = vpack.c.b16 %v4410, %v4410
  %v4421 = vpack.c.b16 %v4411, %v4411
  %v4464 = vunpack.c.l.b16 %v4346
  %v4465 = vunpack.c.l.b16 %v4347
  %v4466 = vunpack.c.l.b16 %v4348
  %v4467 = vunpack.c.l.b16 %v4349
  %v4468 = vunpack.c.l.b16 %v4350
  %v4469 = vunpack.c.l.b16 %v4351
  %v4470 = vunpack.c.l.b16 %v4352
  %v4471 = vunpack.c.l.b16 %v4353
  %v4472 = vunpack.c.l.b16 %v4354
  %v4473 = vunpack.c.l.b16 %v4355
  %v4474 = vunpack.c.l.b16 %v4356
  %v4475 = vunpack.c.l.b16 %v4357
  %v4476 = vunpack.c.l.b16 %v4358
  %v4477 = vunpack.c.l.b16 %v4359
  %v4478 = vunpack.c.l.b16 %v4360
  %v4479 = vunpack.c.l.b16 %v4361
  %v4480 = vunpack.c.l.b16 %v4362
  %v4481 = vunpack.c.l.b16 %v4363
  %v4482 = vunpack.c.l.b16 %v4364
  %v4483 = vunpack.c.l.b16 %v4365
  %v4484 = vunpack.c.l.b16 %v4366
  %v4485 = vunpack.c.l.b16 %v4367
  %v4486 = vunpack.c.l.b16 %v4368
  %v4487 = vunpack.c.l.b16 %v4369
  %v4488 = vunpack.c.l.b16 %v4370
  %v4489 = vunpack.c.l.b16 %v4371
  %v4490 = vunpack.c.l.b16 %v4372
  %v4491 = vunpack.c.l.b16 %v4373
  %v4492 = vunpack.c.l.b16 %v4374
  %v4493 = vunpack.c.l.b16 %v4375
  %v4494 = vunpack.c.l.b16 %v4376
  %v4495 = vunpack.c.l.b16 %v4377
  %v4496 = vpack.c.b16 %v4465, %v4464
  %v4497 = vpack.c.b16 %v4467, %v4466
  %v4498 = vpack.c.b16 %v4469, %v4468
  %v4499 = vpack.c.b16 %v4471, %v4470
  %v4500 = vpack.c.b16 %v4473, %v4472
  %v4501 = vpack.c.b16 %v4475, %v4474
  %v4502 = vpack.c.b16 %v4477, %v4476
  %v4503 = vpack.c.b16 %v4479, %v4478
  %v4504 = vpack.c.b16 %v4481, %v4480
  %v4505 = vpack.c.b16 %v4483, %v4482
  %v4506 = vpack.c.b16 %v4485, %v4484
  %v4507 = vpack.c.b16 %v4487, %v4486
  %v4508 = vpack.c.b16 %v4489, %v4488
  %v4509 = vpack.c.b16 %v4491, %v4490
  %v4510 = vpack.c.b16 %v4493, %v4492
  %v4511 = vpack.c.b16 %v4495, %v4494
  %4528 = vmatprep.subr.bf16.mxu0 0
  %4529 = vmatpush1.bf16.msra.mxu0 %v4496
  %4530 = vmatprep.subr.bf16.mxu0 0
  %4531 = vmatpush1.bf16.msra.mxu0 %v4497
  %4532 = vmatprep.subr.bf16.mxu0 0
  %4533 = vmatpush1.bf16.msra.mxu0 %v4498
  %4534 = vmatprep.subr.bf16.mxu0 0
  %4535 = vmatpush1.bf16.msra.mxu0 %v4499
  %4536 = vmatprep.subr.bf16.mxu0 0
  %4537 = vmatpush1.bf16.msra.mxu0 %v4500
  %4538 = vmatprep.subr.bf16.mxu0 0
  %4539 = vmatpush1.bf16.msra.mxu0 %v4501
  %4540 = vmatprep.subr.bf16.mxu0 0
  %4541 = vmatpush1.bf16.msra.mxu0 %v4502
  %4542 = vmatprep.subr.bf16.mxu0 0
  %4543 = vmatpush1.bf16.msra.mxu0 %v4503
  %4544 = vmatprep.subr.bf16.mxu0 0
  %4545 = vmatpush1.bf16.msra.mxu0 %v4504
  %4546 = vmatprep.subr.bf16.mxu0 0
  %4547 = vmatpush1.bf16.msra.mxu0 %v4505
  %4548 = vmatprep.subr.bf16.mxu0 0
  %4549 = vmatpush1.bf16.msra.mxu0 %v4506
  %4550 = vmatprep.subr.bf16.mxu0 0
  %4551 = vmatpush1.bf16.msra.mxu0 %v4507
  %4552 = vmatprep.subr.bf16.mxu0 0
  %4553 = vmatpush1.bf16.msra.mxu0 %v4508
  %4554 = vmatprep.subr.bf16.mxu0 0
  %4555 = vmatpush1.bf16.msra.mxu0 %v4509
  %4556 = vmatprep.subr.bf16.mxu0 0
  %4557 = vmatpush1.bf16.msra.mxu0 %v4510
  %4558 = vmatprep.subr.bf16.mxu0 0
  %4559 = vmatpush1.bf16.msra.mxu0 %v4511
  %4560 = vmatprep.mubr.bf16.mxu0 %v4413
  %4561 = vmatmul.mubr.bf16.gmra.mrb[0].mxu0 %v4412
  %v4562 = vpop.f32.mrb[0].mxu0
  %v4563 = vadd.f32 %v4383, %v4562
  %v4564 = vpop.f32.mrb[0].mxu0
  %v4565 = vpop.f32.mrb[0].mxu0
  %v4566 = vadd.f32 %v4383, %v4565
  %v4567 = vpop.f32.mrb[0].mxu0
  %4568 = vmatprep.mubr.bf16.mxu0 %v4415
  %4569 = vmatmul.mubr.bf16.gmra.mrb[0].mxu0 %v4414
  %v4570 = vpop.f32.mrb[0].mxu0
  %v4571 = vadd.f32 %v4383, %v4570
  %v4572 = vpop.f32.mrb[0].mxu0
  %v4573 = vpop.f32.mrb[0].mxu0
  %v4574 = vadd.f32 %v4383, %v4573
  %v4575 = vpop.f32.mrb[0].mxu0
  %4576 = vmatprep.mubr.bf16.mxu0 %v4417
  %4577 = vmatmul.mubr.bf16.gmra.mrb[0].mxu0 %v4416
  %v4578 = vpop.f32.mrb[0].mxu0
  %v4579 = vadd.f32 %v4383, %v4578
  %v4580 = vpop.f32.mrb[0].mxu0
  %v4581 = vpop.f32.mrb[0].mxu0
  %v4582 = vadd.f32 %v4383, %v4581
  %v4583 = vpop.f32.mrb[0].mxu0
  %4584 = vmatprep.mubr.bf16.mxu0 %v4419
  %4585 = vmatmul.mubr.bf16.gmra.mrb[0].mxu0 %v4418
  %v4586 = vpop.f32.mrb[0].mxu0
  %v4587 = vadd.f32 %v4383, %v4586
  %v4588 = vpop.f32.mrb[0].mxu0
  %v4589 = vpop.f32.mrb[0].mxu0
  %v4590 = vadd.f32 %v4383, %v4589
  %v4591 = vpop.f32.mrb[0].mxu0
  %4592 = vmatprep.mubr.bf16.mxu0 %v4421
  %4593 = vmatmul.mubr.bf16.gmra.mrb[0].mxu0 %v4420
  %v4594 = vpop.f32.mrb[0].mxu0
  %v4595 = vadd.f32 %v4383, %v4594
  %v4596 = vpop.f32.mrb[0].mxu0
  %v4597 = vpop.f32.mrb[0].mxu0
  %v4598 = vpop.f32.mrb[0].mxu0
  %4599 = vdwg.mxu0
  %v4600 = vmax.f32 %v4563, 0.0
  %v4601 = vmax.f32 %v4566, 0.0
  %v4602 = vmax.f32 %v4571, 0.0
  %v4603 = vmax.f32 %v4574, 0.0
  %v4604 = vmax.f32 %v4579, 0.0
  %v4605 = vmax.f32 %v4582, 0.0
  %v4606 = vmax.f32 %v4587, 0.0
  %v4607 = vmax.f32 %v4590, 0.0
  %v4608 = vmax.f32 %v4595, 0.0
  %4618 = vrot.lane.b32.xlu0 %v4600, 64
  %v4619 = vpop.permute.xlu0 %4618
  %4620 = vrot.lane.b32.xlu0 %v4601, 64
  %v4621 = vpop.permute.xlu0 %4620
  %4622 = vrot.lane.b32.xlu0 %v4602, 64
  %v4623 = vpop.permute.xlu0 %4622
  %4624 = vrot.lane.b32.xlu0 %v4603, 64
  %v4625 = vpop.permute.xlu0 %4624
  %4626 = vrot.lane.b32.xlu0 %v4604, 64
  %v4627 = vpop.permute.xlu0 %4626
  %4628 = vrot.lane.b32.xlu0 %v4605, 64
  %v4629 = vpop.permute.xlu0 %4628
  %4630 = vrot.lane.b32.xlu0 %v4606, 64
  %v4631 = vpop.permute.xlu0 %4630
  %4632 = vrot.lane.b32.xlu0 %v4607, 64
  %v4633 = vpop.permute.xlu0 %4632
  %4634 = vrot.lane.b32.xlu0 %v4608, 64
  %v4635 = vpop.permute.xlu0 %4634
  %4645 = vst.msk [vmem:[#allocation2 + $0x18] sm:$0xff] %vm947, %v4619
  %4646 = vst.msk [vmem:[#allocation2 + $0x38] sm:$0xff] %vm947, %v4621
  %4647 = vst.msk [vmem:[#allocation2 + $0x58] sm:$0xff] %vm947, %v4623
  %4648 = vst.msk [vmem:[#allocation2 + $0x78] sm:$0xff] %vm947, %v4625
  %4649 = vst.msk [vmem:[#allocation2 + $0x98] sm:$0xff] %vm947, %v4627
  %4650 = vst.msk [vmem:[#allocation2 + $0xb8] sm:$0xff] %vm947, %v4629
  %4651 = vst.msk [vmem:[#allocation2 + $0xd8] sm:$0xff] %vm947, %v4631
  %4652 = vst.msk [vmem:[#allocation2 + $0xf8] sm:$0xff] %vm947, %v4633
  %4653 = vst.msk [vmem:[#allocation2 + $0x118] sm:$0xff] %vm947, %v4635
  %v4654 = vld [vmem:[%s0 + $0x438] sm:$0xff]
  %v4655 = vld [vmem:[%s0 + $0x440] sm:$0xff]
  %v4656 = vld [vmem:[%s0 + $0x448] sm:$0xff]
  %v4657 = vld [vmem:[%s0 + $0x450] sm:$0xff]
  %v4658 = vld [vmem:[%s0 + $0x458] sm:$0xff]
  %v4659 = vld [vmem:[%s0 + $0x460] sm:$0xff]
  %v4660 = vld [vmem:[%s0 + $0x468] sm:$0xff]
  %v4661 = vld [vmem:[%s0 + $0x470] sm:$0xff]
  %v4662 = vld [vmem:[%s0 + $0x478] sm:$0xff]
  %v4663 = vld [vmem:[%s1] sm:$0xf]
  %v4664 = vld [vmem:[%s1 + $0x4] sm:$0xf]
  %v4665 = vld [vmem:[%s1 + $0x8] sm:$0xf]
  %v4666 = vld [vmem:[%s1 + $0xc] sm:$0xf]
  %v4667 = vld [vmem:[%s1 + $0x10] sm:$0xf]
  %v4668 = vld [vmem:[%s1 + $0x14] sm:$0xf]
  %v4669 = vld [vmem:[%s1 + $0x18] sm:$0xf]
  %v4670 = vld [vmem:[%s1 + $0x1c] sm:$0xf]
  %v4671 = vld [vmem:[%s1 + $0x20] sm:$0xf]
  %v4672 = vld [vmem:[%s1 + $0x24] sm:$0xf]
  %v4673 = vld [vmem:[%s1 + $0x28] sm:$0xf]
  %v4674 = vld [vmem:[%s1 + $0x2c] sm:$0xf]
  %v4675 = vld [vmem:[%s1 + $0x30] sm:$0xf]
  %v4676 = vld [vmem:[%s1 + $0x34] sm:$0xf]
  %v4677 = vld [vmem:[%s1 + $0x38] sm:$0xf]
  %v4678 = vld [vmem:[%s1 + $0x3c] sm:$0xf]
  %v4679 = vld [vmem:[%s1 + $0x40] sm:$0xf]
  %v4680 = vld [vmem:[%s1 + $0x44] sm:$0xf]
  %v4681 = vld [vmem:[%s1 + $0x48] sm:$0xf]
  %v4682 = vld [vmem:[%s1 + $0x4c] sm:$0xf]
  %v4683 = vld [vmem:[%s1 + $0x50] sm:$0xf]
  %v4684 = vld [vmem:[%s1 + $0x54] sm:$0xf]
  %v4685 = vld [vmem:[%s1 + $0x58] sm:$0xf]
  %v4686 = vld [vmem:[%s1 + $0x5c] sm:$0xf]
  %v4687 = vld [vmem:[%s1 + $0x60] sm:$0xf]
  %v4688 = vld [vmem:[%s1 + $0x64] sm:$0xf]
  %v4689 = vld [vmem:[%s1 + $0x68] sm:$0xf]
  %v4690 = vld [vmem:[%s1 + $0x6c] sm:$0xf]
  %v4691 = vld [vmem:[%s1 + $0x70] sm:$0xf]
  %v4692 = vld [vmem:[%s1 + $0x74] sm:$0xf]
  %v4693 = vld [vmem:[%s1 + $0x78] sm:$0xf]
  %v4694 = vld [vmem:[%s1 + $0x7c] sm:$0xf]
  %v4695 = vld [vmem:[%s2] sm:$0x1]
  %v4697 = vlaneseq
  %v4698 = vshrl.u32 %v4697, 7
  %v4699 = vsub.s32 0, %v4698
  %v4700 = vrot.slane %v4695, %v4699
  %v4711 = vunpack.c.l.b16 %v4654
  %v4712 = vunpack.c.h.b16 %v4654
  %v4713 = vunpack.c.l.b16 %v4655
  %v4714 = vunpack.c.h.b16 %v4655
  %v4715 = vunpack.c.l.b16 %v4656
  %v4716 = vunpack.c.h.b16 %v4656
  %v4717 = vunpack.c.l.b16 %v4657
  %v4718 = vunpack.c.h.b16 %v4657
  %v4719 = vunpack.c.l.b16 %v4658
  %v4720 = vunpack.c.h.b16 %v4658
  %v4721 = vunpack.c.l.b16 %v4659
  %v4722 = vunpack.c.h.b16 %v4659
  %v4723 = vunpack.c.l.b16 %v4660
  %v4724 = vunpack.c.h.b16 %v4660
  %v4725 = vunpack.c.l.b16 %v4661
  %v4726 = vunpack.c.h.b16 %v4661
  %v4727 = vunpack.c.l.b16 %v4662
  %v4728 = vunpack.c.h.b16 %v4662
  %v4729 = vpack.c.b16 %v4713, %v4711
  %v4730 = vpack.c.b16 %v4714, %v4712
  %v4731 = vpack.c.b16 %v4717, %v4715
  %v4732 = vpack.c.b16 %v4718, %v4716
  %v4733 = vpack.c.b16 %v4721, %v4719
  %v4734 = vpack.c.b16 %v4722, %v4720
  %v4735 = vpack.c.b16 %v4725, %v4723
  %v4736 = vpack.c.b16 %v4726, %v4724
  %v4737 = vpack.c.b16 %v4727, %v4727
  %v4738 = vpack.c.b16 %v4728, %v4728
  %v4781 = vunpack.c.l.b16 %v4663
  %v4782 = vunpack.c.l.b16 %v4664
  %v4783 = vunpack.c.l.b16 %v4665
  %v4784 = vunpack.c.l.b16 %v4666
  %v4785 = vunpack.c.l.b16 %v4667
  %v4786 = vunpack.c.l.b16 %v4668
  %v4787 = vunpack.c.l.b16 %v4669
  %v4788 = vunpack.c.l.b16 %v4670
  %v4789 = vunpack.c.l.b16 %v4671
  %v4790 = vunpack.c.l.b16 %v4672
  %v4791 = vunpack.c.l.b16 %v4673
  %v4792 = vunpack.c.l.b16 %v4674
  %v4793 = vunpack.c.l.b16 %v4675
  %v4794 = vunpack.c.l.b16 %v4676
  %v4795 = vunpack.c.l.b16 %v4677
  %v4796 = vunpack.c.l.b16 %v4678
  %v4797 = vunpack.c.l.b16 %v4679
  %v4798 = vunpack.c.l.b16 %v4680
  %v4799 = vunpack.c.l.b16 %v4681
  %v4800 = vunpack.c.l.b16 %v4682
  %v4801 = vunpack.c.l.b16 %v4683
  %v4802 = vunpack.c.l.b16 %v4684
  %v4803 = vunpack.c.l.b16 %v4685
  %v4804 = vunpack.c.l.b16 %v4686
  %v4805 = vunpack.c.l.b16 %v4687
  %v4806 = vunpack.c.l.b16 %v4688
  %v4807 = vunpack.c.l.b16 %v4689
  %v4808 = vunpack.c.l.b16 %v4690
  %v4809 = vunpack.c.l.b16 %v4691
  %v4810 = vunpack.c.l.b16 %v4692
  %v4811 = vunpack.c.l.b16 %v4693
  %v4812 = vunpack.c.l.b16 %v4694
  %v4813 = vpack.c.b16 %v4782, %v4781
  %v4814 = vpack.c.b16 %v4784, %v4783
  %v4815 = vpack.c.b16 %v4786, %v4785
  %v4816 = vpack.c.b16 %v4788, %v4787
  %v4817 = vpack.c.b16 %v4790, %v4789
  %v4818 = vpack.c.b16 %v4792, %v4791
  %v4819 = vpack.c.b16 %v4794, %v4793
  %v4820 = vpack.c.b16 %v4796, %v4795
  %v4821 = vpack.c.b16 %v4798, %v4797
  %v4822 = vpack.c.b16 %v4800, %v4799
  %v4823 = vpack.c.b16 %v4802, %v4801
  %v4824 = vpack.c.b16 %v4804, %v4803
  %v4825 = vpack.c.b16 %v4806, %v4805
  %v4826 = vpack.c.b16 %v4808, %v4807
  %v4827 = vpack.c.b16 %v4810, %v4809
  %v4828 = vpack.c.b16 %v4812, %v4811
  %4845 = vmatprep.subr.bf16.mxu0 0
  %4846 = vmatpush1.bf16.msra.mxu0 %v4813
  %4847 = vmatprep.subr.bf16.mxu0 0
  %4848 = vmatpush1.bf16.msra.mxu0 %v4814
  %4849 = vmatprep.subr.bf16.mxu0 0
  %4850 = vmatpush1.bf16.msra.mxu0 %v4815
  %4851 = vmatprep.subr.bf16.mxu0 0
  %4852 = vmatpush1.bf16.msra.mxu0 %v4816
  %4853 = vmatprep.subr.bf16.mxu0 0
  %4854 = vmatpush1.bf16.msra.mxu0 %v4817
  %4855 = vmatprep.subr.bf16.mxu0 0
  %4856 = vmatpush1.bf16.msra.mxu0 %v4818
  %4857 = vmatprep.subr.bf16.mxu0 0
  %4858 = vmatpush1.bf16.msra.mxu0 %v4819
  %4859 = vmatprep.subr.bf16.mxu0 0
  %4860 = vmatpush1.bf16.msra.mxu0 %v4820
  %4861 = vmatprep.subr.bf16.mxu0 0
  %4862 = vmatpush1.bf16.msra.mxu0 %v4821
  %4863 = vmatprep.subr.bf16.mxu0 0
  %4864 = vmatpush1.bf16.msra.mxu0 %v4822
  %4865 = vmatprep.subr.bf16.mxu0 0
  %4866 = vmatpush1.bf16.msra.mxu0 %v4823
  %4867 = vmatprep.subr.bf16.mxu0 0
  %4868 = vmatpush1.bf16.msra.mxu0 %v4824
  %4869 = vmatprep.subr.bf16.mxu0 0
  %4870 = vmatpush1.bf16.msra.mxu0 %v4825
  %4871 = vmatprep.subr.bf16.mxu0 0
  %4872 = vmatpush1.bf16.msra.mxu0 %v4826
  %4873 = vmatprep.subr.bf16.mxu0 0
  %4874 = vmatpush1.bf16.msra.mxu0 %v4827
  %4875 = vmatprep.subr.bf16.mxu0 0
  %4876 = vmatpush1.bf16.msra.mxu0 %v4828
  %4877 = vmatprep.mubr.bf16.mxu0 %v4730
  %4878 = vmatmul.mubr.bf16.gmra.mrb[0].mxu0 %v4729
  %v4879 = vpop.f32.mrb[0].mxu0
  %v4880 = vadd.f32 %v4700, %v4879
  %v4881 = vpop.f32.mrb[0].mxu0
  %v4882 = vpop.f32.mrb[0].mxu0
  %v4883 = vadd.f32 %v4700, %v4882
  %v4884 = vpop.f32.mrb[0].mxu0
  %4885 = vmatprep.mubr.bf16.mxu0 %v4732
  %4886 = vmatmul.mubr.bf16.gmra.mrb[0].mxu0 %v4731
  %v4887 = vpop.f32.mrb[0].mxu0
  %v4888 = vadd.f32 %v4700, %v4887
  %v4889 = vpop.f32.mrb[0].mxu0
  %v4890 = vpop.f32.mrb[0].mxu0
  %v4891 = vadd.f32 %v4700, %v4890
  %v4892 = vpop.f32.mrb[0].mxu0
  %4893 = vmatprep.mubr.bf16.mxu0 %v4734
  %4894 = vmatmul.mubr.bf16.gmra.mrb[0].mxu0 %v4733
  %v4895 = vpop.f32.mrb[0].mxu0
  %v4896 = vadd.f32 %v4700, %v4895
  %v4897 = vpop.f32.mrb[0].mxu0
  %v4898 = vpop.f32.mrb[0].mxu0
  %v4899 = vadd.f32 %v4700, %v4898
  %v4900 = vpop.f32.mrb[0].mxu0
  %4901 = vmatprep.mubr.bf16.mxu0 %v4736
  %4902 = vmatmul.mubr.bf16.gmra.mrb[0].mxu0 %v4735
  %v4903 = vpop.f32.mrb[0].mxu0
  %v4904 = vadd.f32 %v4700, %v4903
  %v4905 = vpop.f32.mrb[0].mxu0
  %v4906 = vpop.f32.mrb[0].mxu0
  %v4907 = vadd.f32 %v4700, %v4906
  %v4908 = vpop.f32.mrb[0].mxu0
  %4909 = vmatprep.mubr.bf16.mxu0 %v4738
  %4910 = vmatmul.mubr.bf16.gmra.mrb[0].mxu0 %v4737
  %v4911 = vpop.f32.mrb[0].mxu0
  %v4912 = vadd.f32 %v4700, %v4911
  %v4913 = vpop.f32.mrb[0].mxu0
  %v4914 = vpop.f32.mrb[0].mxu0
  %v4915 = vpop.f32.mrb[0].mxu0
  %4916 = vdwg.mxu0
  %v4917 = vmax.f32 %v4880, 0.0
  %v4918 = vmax.f32 %v4883, 0.0
  %v4919 = vmax.f32 %v4888, 0.0
  %v4920 = vmax.f32 %v4891, 0.0
  %v4921 = vmax.f32 %v4896, 0.0
  %v4922 = vmax.f32 %v4899, 0.0
  %v4923 = vmax.f32 %v4904, 0.0
  %v4924 = vmax.f32 %v4907, 0.0
  %v4925 = vmax.f32 %v4912, 0.0
  %4935 = vrot.lane.b32.xlu0 %v4917, 96
  %v4936 = vpop.permute.xlu0 %4935
  %4937 = vrot.lane.b32.xlu0 %v4918, 96
  %v4938 = vpop.permute.xlu0 %4937
  %4939 = vrot.lane.b32.xlu0 %v4919, 96
  %v4940 = vpop.permute.xlu0 %4939
  %4941 = vrot.lane.b32.xlu0 %v4920, 96
  %v4942 = vpop.permute.xlu0 %4941
  %4943 = vrot.lane.b32.xlu0 %v4921, 96
  %v4944 = vpop.permute.xlu0 %4943
  %4945 = vrot.lane.b32.xlu0 %v4922, 96
  %v4946 = vpop.permute.xlu0 %4945
  %4947 = vrot.lane.b32.xlu0 %v4923, 96
  %v4948 = vpop.permute.xlu0 %4947
  %4949 = vrot.lane.b32.xlu0 %v4924, 96
  %v4950 = vpop.permute.xlu0 %4949
  %4951 = vrot.lane.b32.xlu0 %v4925, 96
  %v4952 = vpop.permute.xlu0 %4951
  %4962 = vst.msk [vmem:[#allocation2 + $0x18] sm:$0xff] %vm1265, %v4936
  %4963 = vst.msk [vmem:[#allocation2 + $0x38] sm:$0xff] %vm1265, %v4938
  %4964 = vst.msk [vmem:[#allocation2 + $0x58] sm:$0xff] %vm1265, %v4940
  %4965 = vst.msk [vmem:[#allocation2 + $0x78] sm:$0xff] %vm1265, %v4942
  %4966 = vst.msk [vmem:[#allocation2 + $0x98] sm:$0xff] %vm1265, %v4944
  %4967 = vst.msk [vmem:[#allocation2 + $0xb8] sm:$0xff] %vm1265, %v4946
  %4968 = vst.msk [vmem:[#allocation2 + $0xd8] sm:$0xff] %vm1265, %v4948
  %4969 = vst.msk [vmem:[#allocation2 + $0xf8] sm:$0xff] %vm1265, %v4950
  %4970 = vst.msk [vmem:[#allocation2 + $0x118] sm:$0xff] %vm1265, %v4952
  %v4971 = vld [vmem:[#allocation2] sm:$0xff]
  %v4972 = vld [vmem:[#allocation2 + $0x8] sm:$0xff]
  %v4973 = vld [vmem:[#allocation2 + $0x10] sm:$0xff]
  %v4974 = vld [vmem:[#allocation2 + $0x18] sm:$0xff]
  %v4975 = vpack.c.bf16 %v4971, %v4971
  %v4976 = vpack.c.bf16 %v4972, %v4972
  %v4977 = vpack.c.bf16 %v4973, %v4973
  %v4978 = vpack.c.bf16 %v4974, %v4974
  %v4979 = vld [vmem:[%s3] sm:$0xf]
  %v4980 = vld [vmem:[%s3 + $0x4] sm:$0xf]
  %v4981 = vld [vmem:[%s3 + $0x8] sm:$0xf]
  %v4982 = vld [vmem:[%s3 + $0xc] sm:$0xf]
  %v4983 = vld [vmem:[%s3 + $0x10] sm:$0xf]
  %v4984 = vld [vmem:[%s3 + $0x14] sm:$0xf]
  %v4985 = vld [vmem:[%s3 + $0x18] sm:$0xf]
  %v4986 = vld [vmem:[%s3 + $0x1c] sm:$0xf]
  %v4987 = vld [vmem:[%s3 + $0x20] sm:$0xf]
  %v4988 = vld [vmem:[%s3 + $0x24] sm:$0xf]
  %v4989 = vld [vmem:[%s3 + $0x28] sm:$0xf]
  %v4990 = vld [vmem:[%s3 + $0x2c] sm:$0xf]
  %v4991 = vld [vmem:[%s3 + $0x30] sm:$0xf]
  %v4992 = vld [vmem:[%s3 + $0x34] sm:$0xf]
  %v4993 = vld [vmem:[%s3 + $0x38] sm:$0xf]
  %v4994 = vld [vmem:[%s3 + $0x3c] sm:$0xf]
  %v4995 = vld [vmem:[%s3 + $0x40] sm:$0xf]
  %v4996 = vld [vmem:[%s3 + $0x44] sm:$0xf]
  %v4997 = vld [vmem:[%s3 + $0x48] sm:$0xf]
  %v4998 = vld [vmem:[%s3 + $0x4c] sm:$0xf]
  %v4999 = vld [vmem:[%s3 + $0x50] sm:$0xf]
  %v5000 = vld [vmem:[%s3 + $0x54] sm:$0xf]
  %v5001 = vld [vmem:[%s3 + $0x58] sm:$0xf]
  %v5002 = vld [vmem:[%s3 + $0x5c] sm:$0xf]
  %v5003 = vld [vmem:[%s3 + $0x60] sm:$0xf]
  %v5004 = vld [vmem:[%s3 + $0x64] sm:$0xf]
  %v5005 = vld [vmem:[%s3 + $0x68] sm:$0xf]
  %v5006 = vld [vmem:[%s3 + $0x6c] sm:$0xf]
  %v5007 = vld [vmem:[%s3 + $0x70] sm:$0xf]
  %v5008 = vld [vmem:[%s3 + $0x74] sm:$0xf]
  %v5009 = vld [vmem:[%s3 + $0x78] sm:$0xf]
  %v5010 = vld [vmem:[%s3 + $0x7c] sm:$0xf]
  %v5011 = vld [vmem:[%s3 + $0x80] sm:$0xf]
  %v5012 = vld [vmem:[%s3 + $0x84] sm:$0xf]
  %v5013 = vld [vmem:[%s3 + $0x88] sm:$0xf]
  %v5014 = vld [vmem:[%s3 + $0x8c] sm:$0xf]
  %v5015 = vld [vmem:[%s3 + $0x90] sm:$0xf]
  %v5016 = vld [vmem:[%s3 + $0x94] sm:$0xf]
  %v5017 = vld [vmem:[%s3 + $0x98] sm:$0xf]
  %v5018 = vld [vmem:[%s3 + $0x9c] sm:$0xf]
  %v5019 = vld [vmem:[%s3 + $0xa0] sm:$0xf]
  %v5020 = vld [vmem:[%s3 + $0xa4] sm:$0xf]
  %v5021 = vld [vmem:[%s3 + $0xa8] sm:$0xf]
  %v5022 = vld [vmem:[%s3 + $0xac] sm:$0xf]
  %v5023 = vld [vmem:[%s3 + $0xb0] sm:$0xf]
  %v5024 = vld [vmem:[%s3 + $0xb4] sm:$0xf]
  %v5025 = vld [vmem:[%s3 + $0xb8] sm:$0xf]
  %v5026 = vld [vmem:[%s3 + $0xbc] sm:$0xf]
  %v5027 = vld [vmem:[%s3 + $0xc0] sm:$0xf]
  %v5028 = vld [vmem:[%s3 + $0xc4] sm:$0xf]
  %v5029 = vld [vmem:[%s3 + $0xc8] sm:$0xf]
  %v5030 = vld [vmem:[%s3 + $0xcc] sm:$0xf]
  %v5031 = vld [vmem:[%s3 + $0xd0] sm:$0xf]
  %v5032 = vld [vmem:[%s3 + $0xd4] sm:$0xf]
  %v5033 = vld [vmem:[%s3 + $0xd8] sm:$0xf]
  %v5034 = vld [vmem:[%s3 + $0xdc] sm:$0xf]
  %v5035 = vld [vmem:[%s3 + $0xe0] sm:$0xf]
  %v5036 = vld [vmem:[%s3 + $0xe4] sm:$0xf]
  %v5037 = vld [vmem:[%s3 + $0xe8] sm:$0xf]
  %v5038 = vld [vmem:[%s3 + $0xec] sm:$0xf]
  %v5039 = vld [vmem:[%s3 + $0xf0] sm:$0xf]
  %v5040 = vld [vmem:[%s3 + $0xf4] sm:$0xf]
  %v5041 = vld [vmem:[%s3 + $0xf8] sm:$0xf]
  %v5042 = vld [vmem:[%s3 + $0xfc] sm:$0xf]
  %v5043 = vld [vmem:[%s4] sm:$0x1]
  %v5045 = vlaneseq
  %v5046 = vshrl.u32 %v5045, 7
  %v5047 = vsub.s32 0, %v5046
  %v5048 = vrot.slane %v5043, %v5047
  %v5114 = vunpack.c.l.b16 %v4979
  %v5115 = vunpack.c.l.b16 %v4980
  %v5116 = vunpack.c.l.b16 %v4981
  %v5117 = vunpack.c.l.b16 %v4982
  %v5118 = vunpack.c.l.b16 %v4983
  %v5119 = vunpack.c.l.b16 %v4984
  %v5120 = vunpack.c.l.b16 %v4985
  %v5121 = vunpack.c.l.b16 %v4986
  %v5122 = vunpack.c.l.b16 %v4987
  %v5123 = vunpack.c.l.b16 %v4988
  %v5124 = vunpack.c.l.b16 %v4989
  %v5125 = vunpack.c.l.b16 %v4990
  %v5126 = vunpack.c.l.b16 %v4991
  %v5127 = vunpack.c.l.b16 %v4992
  %v5128 = vunpack.c.l.b16 %v4993
  %v5129 = vunpack.c.l.b16 %v4994
  %v5130 = vunpack.c.l.b16 %v4995
  %v5131 = vunpack.c.l.b16 %v4996
  %v5132 = vunpack.c.l.b16 %v4997
  %v5133 = vunpack.c.l.b16 %v4998
  %v5134 = vunpack.c.l.b16 %v4999
  %v5135 = vunpack.c.l.b16 %v5000
  %v5136 = vunpack.c.l.b16 %v5001
  %v5137 = vunpack.c.l.b16 %v5002
  %v5138 = vunpack.c.l.b16 %v5003
  %v5139 = vunpack.c.l.b16 %v5004
  %v5140 = vunpack.c.l.b16 %v5005
  %v5141 = vunpack.c.l.b16 %v5006
  %v5142 = vunpack.c.l.b16 %v5007
  %v5143 = vunpack.c.l.b16 %v5008
  %v5144 = vunpack.c.l.b16 %v5009
  %v5145 = vunpack.c.l.b16 %v5010
  %v5146 = vunpack.c.l.b16 %v5011
  %v5147 = vunpack.c.l.b16 %v5012
  %v5148 = vunpack.c.l.b16 %v5013
  %v5149 = vunpack.c.l.b16 %v5014
  %v5150 = vunpack.c.l.b16 %v5015
  %v5151 = vunpack.c.l.b16 %v5016
  %v5152 = vunpack.c.l.b16 %v5017
  %v5153 = vunpack.c.l.b16 %v5018
  %v5154 = vunpack.c.l.b16 %v5019
  %v5155 = vunpack.c.l.b16 %v5020
  %v5156 = vunpack.c.l.b16 %v5021
  %v5157 = vunpack.c.l.b16 %v5022
  %v5158 = vunpack.c.l.b16 %v5023
  %v5159 = vunpack.c.l.b16 %v5024
  %v5160 = vunpack.c.l.b16 %v5025
  %v5161 = vunpack.c.l.b16 %v5026
  %v5162 = vunpack.c.l.b16 %v5027
  %v5163 = vunpack.c.l.b16 %v5028
  %v5164 = vunpack.c.l.b16 %v5029
  %v5165 = vunpack.c.l.b16 %v5030
  %v5166 = vunpack.c.l.b16 %v5031
  %v5167 = vunpack.c.l.b16 %v5032
  %v5168 = vunpack.c.l.b16 %v5033
  %v5169 = vunpack.c.l.b16 %v5034
  %v5170 = vunpack.c.l.b16 %v5035
  %v5171 = vunpack.c.l.b16 %v5036
  %v5172 = vunpack.c.l.b16 %v5037
  %v5173 = vunpack.c.l.b16 %v5038
  %v5174 = vunpack.c.l.b16 %v5039
  %v5175 = vunpack.c.l.b16 %v5040
  %v5176 = vunpack.c.l.b16 %v5041
  %v5177 = vunpack.c.l.b16 %v5042
  %v5178 = vpack.c.b16 %v5115, %v5114
  %v5179 = vpack.c.b16 %v5117, %v5116
  %v5180 = vpack.c.b16 %v5119, %v5118
  %v5181 = vpack.c.b16 %v5121, %v5120
  %v5182 = vpack.c.b16 %v5123, %v5122
  %v5183 = vpack.c.b16 %v5125, %v5124
  %v5184 = vpack.c.b16 %v5127, %v5126
  %v5185 = vpack.c.b16 %v5129, %v5128
  %v5186 = vpack.c.b16 %v5131, %v5130
  %v5187 = vpack.c.b16 %v5133, %v5132
  %v5188 = vpack.c.b16 %v5135, %v5134
  %v5189 = vpack.c.b16 %v5137, %v5136
  %v5190 = vpack.c.b16 %v5139, %v5138
  %v5191 = vpack.c.b16 %v5141, %v5140
  %v5192 = vpack.c.b16 %v5143, %v5142
  %v5193 = vpack.c.b16 %v5145, %v5144
  %v5194 = vpack.c.b16 %v5147, %v5146
  %v5195 = vpack.c.b16 %v5149, %v5148
  %v5196 = vpack.c.b16 %v5151, %v5150
  %v5197 = vpack.c.b16 %v5153, %v5152
  %v5198 = vpack.c.b16 %v5155, %v5154
  %v5199 = vpack.c.b16 %v5157, %v5156
  %v5200 = vpack.c.b16 %v5159, %v5158
  %v5201 = vpack.c.b16 %v5161, %v5160
  %v5202 = vpack.c.b16 %v5163, %v5162
  %v5203 = vpack.c.b16 %v5165, %v5164
  %v5204 = vpack.c.b16 %v5167, %v5166
  %v5205 = vpack.c.b16 %v5169, %v5168
  %v5206 = vpack.c.b16 %v5171, %v5170
  %v5207 = vpack.c.b16 %v5173, %v5172
  %v5208 = vpack.c.b16 %v5175, %v5174
  %v5209 = vpack.c.b16 %v5177, %v5176
  %5242 = vmatprep.subr.bf16.mxu0 0
  %5243 = vmatpush1.bf16.msra.mxu0 %v5178
  %5244 = vmatprep.subr.bf16.mxu0 0
  %5245 = vmatpush1.bf16.msra.mxu0 %v5179
  %5246 = vmatprep.subr.bf16.mxu0 0
  %5247 = vmatpush1.bf16.msra.mxu0 %v5180
  %5248 = vmatprep.subr.bf16.mxu0 0
  %5249 = vmatpush1.bf16.msra.mxu0 %v5181
  %5250 = vmatprep.subr.bf16.mxu0 0
  %5251 = vmatpush1.bf16.msra.mxu0 %v5182
  %5252 = vmatprep.subr.bf16.mxu0 0
  %5253 = vmatpush1.bf16.msra.mxu0 %v5183
  %5254 = vmatprep.subr.bf16.mxu0 0
  %5255 = vmatpush1.bf16.msra.mxu0 %v5184
  %5256 = vmatprep.subr.bf16.mxu0 0
  %5257 = vmatpush1.bf16.msra.mxu0 %v5185
  %5258 = vmatprep.subr.bf16.mxu0 0
  %5259 = vmatpush1.bf16.msra.mxu0 %v5186
  %5260 = vmatprep.subr.bf16.mxu0 0
  %5261 = vmatpush1.bf16.msra.mxu0 %v5187
  %5262 = vmatprep.subr.bf16.mxu0 0
  %5263 = vmatpush1.bf16.msra.mxu0 %v5188
  %5264 = vmatprep.subr.bf16.mxu0 0
  %5265 = vmatpush1.bf16.msra.mxu0 %v5189
  %5266 = vmatprep.subr.bf16.mxu0 0
  %5267 = vmatpush1.bf16.msra.mxu0 %v5190
  %5268 = vmatprep.subr.bf16.mxu0 0
  %5269 = vmatpush1.bf16.msra.mxu0 %v5191
  %5270 = vmatprep.subr.bf16.mxu0 0
  %5271 = vmatpush1.bf16.msra.mxu0 %v5192
  %5272 = vmatprep.subr.bf16.mxu0 0
  %5273 = vmatpush1.bf16.msra.mxu0 %v5193
  %5274 = vmatprep.mubr.bf16.mxu0 %v4976
  %5275 = vmatmul.mubr.bf16.gmra.mrb[0].mxu0 %v4975
  %v5276 = vpop.f32.mrb[0].mxu0
  %v5277 = vadd.f32 %v5048, %v5276
  %v5278 = vpop.f32.mrb[0].mxu0
  %v5279 = vpop.f32.mrb[0].mxu0
  %v5280 = vpop.f32.mrb[0].mxu0
  %5281 = vdwg.mxu0
  %5282 = vmatprep.subr.bf16.mxu0 0
  %5283 = vmatpush1.bf16.msra.mxu0 %v5194
  %5284 = vmatprep.subr.bf16.mxu0 0
  %5285 = vmatpush1.bf16.msra.mxu0 %v5195
  %5286 = vmatprep.subr.bf16.mxu0 0
  %5287 = vmatpush1.bf16.msra.mxu0 %v5196
  %5288 = vmatprep.subr.bf16.mxu0 0
  %5289 = vmatpush1.bf16.msra.mxu0 %v5197
  %5290 = vmatprep.subr.bf16.mxu0 0
  %5291 = vmatpush1.bf16.msra.mxu0 %v5198
  %5292 = vmatprep.subr.bf16.mxu0 0
  %5293 = vmatpush1.bf16.msra.mxu0 %v5199
  %5294 = vmatprep.subr.bf16.mxu0 0
  %5295 = vmatpush1.bf16.msra.mxu0 %v5200
  %5296 = vmatprep.subr.bf16.mxu0 0
  %5297 = vmatpush1.bf16.msra.mxu0 %v5201
  %5298 = vmatprep.subr.bf16.mxu0 0
  %5299 = vmatpush1.bf16.msra.mxu0 %v5202
  %5300 = vmatprep.subr.bf16.mxu0 0
  %5301 = vmatpush1.bf16.msra.mxu0 %v5203
  %5302 = vmatprep.subr.bf16.mxu0 0
  %5303 = vmatpush1.bf16.msra.mxu0 %v5204
  %5304 = vmatprep.subr.bf16.mxu0 0
  %5305 = vmatpush1.bf16.msra.mxu0 %v5205
  %5306 = vmatprep.subr.bf16.mxu0 0
  %5307 = vmatpush1.bf16.msra.mxu0 %v5206
  %5308 = vmatprep.subr.bf16.mxu0 0
  %5309 = vmatpush1.bf16.msra.mxu0 %v5207
  %5310 = vmatprep.subr.bf16.mxu0 0
  %5311 = vmatpush1.bf16.msra.mxu0 %v5208
  %5312 = vmatprep.subr.bf16.mxu0 0
  %5313 = vmatpush1.bf16.msra.mxu0 %v5209
  %5314 = vmatprep.mubr.bf16.mxu0 %v4978
  %5315 = vmatmul.mubr.bf16.gmra.mrb[0].mxu0 %v4977
  %v5316 = vpop.f32.mrb[0].mxu0
  %v5317 = vadd.f32 %v5277, %v5316
  %v5318 = vpop.f32.mrb[0].mxu0
  %v5319 = vpop.f32.mrb[0].mxu0
  %v5320 = vpop.f32.mrb[0].mxu0
  %5321 = vdwg.mxu0
  %v5322 = vmax.f32 %v5317, 0.0
  %vm5323 = vcmask 523264
  %5324 = vst.msk [vmem:[#allocation3] sm:$0xff] %vm5323, %v5322
  %v5325 = vld [vmem:[#allocation2 + $0x20] sm:$0xff]
  %v5326 = vld [vmem:[#allocation2 + $0x28] sm:$0xff]
  %v5327 = vld [vmem:[#allocation2 + $0x30] sm:$0xff]
  %v5328 = vld [vmem:[#allocation2 + $0x38] sm:$0xff]
  %v5329 = vpack.c.bf16 %v5325, %v5325
  %v5330 = vpack.c.bf16 %v5326, %v5326
  %v5331 = vpack.c.bf16 %v5327, %v5327
  %v5332 = vpack.c.bf16 %v5328, %v5328
  %v5333 = vld [vmem:[%s3] sm:$0xf]
  %v5334 = vld [vmem:[%s3 + $0x4] sm:$0xf]
  %v5335 = vld [vmem:[%s3 + $0x8] sm:$0xf]
  %v5336 = vld [vmem:[%s3 + $0xc] sm:$0xf]
  %v5337 = vld [vmem:[%s3 + $0x10] sm:$0xf]
  %v5338 = vld [vmem:[%s3 + $0x14] sm:$0xf]
  %v5339 = vld [vmem:[%s3 + $0x18] sm:$0xf]
  %v5340 = vld [vmem:[%s3 + $0x1c] sm:$0xf]
  %v5341 = vld [vmem:[%s3 + $0x20] sm:$0xf]
  %v5342 = vld [vmem:[%s3 + $0x24] sm:$0xf]
  %v5343 = vld [vmem:[%s3 + $0x28] sm:$0xf]
  %v5344 = vld [vmem:[%s3 + $0x2c] sm:$0xf]
  %v5345 = vld [vmem:[%s3 + $0x30] sm:$0xf]
  %v5346 = vld [vmem:[%s3 + $0x34] sm:$0xf]
  %v5347 = vld [vmem:[%s3 + $0x38] sm:$0xf]
  %v5348 = vld [vmem:[%s3 + $0x3c] sm:$0xf]
  %v5349 = vld [vmem:[%s3 + $0x40] sm:$0xf]
  %v5350 = vld [vmem:[%s3 + $0x44] sm:$0xf]
  %v5351 = vld [vmem:[%s3 + $0x48] sm:$0xf]
  %v5352 = vld [vmem:[%s3 + $0x4c] sm:$0xf]
  %v5353 = vld [vmem:[%s3 + $0x50] sm:$0xf]
  %v5354 = vld [vmem:[%s3 + $0x54] sm:$0xf]
  %v5355 = vld [vmem:[%s3 + $0x58] sm:$0xf]
  %v5356 = vld [vmem:[%s3 + $0x5c] sm:$0xf]
  %v5357 = vld [vmem:[%s3 + $0x60] sm:$0xf]
  %v5358 = vld [vmem:[%s3 + $0x64] sm:$0xf]
  %v5359 = vld [vmem:[%s3 + $0x68] sm:$0xf]
  %v5360 = vld [vmem:[%s3 + $0x6c] sm:$0xf]
  %v5361 = vld [vmem:[%s3 + $0x70] sm:$0xf]
  %v5362 = vld [vmem:[%s3 + $0x74] sm:$0xf]
  %v5363 = vld [vmem:[%s3 + $0x78] sm:$0xf]
  %v5364 = vld [vmem:[%s3 + $0x7c] sm:$0xf]
  %v5365 = vld [vmem:[%s3 + $0x80] sm:$0xf]
  %v5366 = vld [vmem:[%s3 + $0x84] sm:$0xf]
  %v5367 = vld [vmem:[%s3 + $0x88] sm:$0xf]
  %v5368 = vld [vmem:[%s3 + $0x8c] sm:$0xf]
  %v5369 = vld [vmem:[%s3 + $0x90] sm:$0xf]
  %v5370 = vld [vmem:[%s3 + $0x94] sm:$0xf]
  %v5371 = vld [vmem:[%s3 + $0x98] sm:$0xf]
  %v5372 = vld [vmem:[%s3 + $0x9c] sm:$0xf]
  %v5373 = vld [vmem:[%s3 + $0xa0] sm:$0xf]
  %v5374 = vld [vmem:[%s3 + $0xa4] sm:$0xf]
  %v5375 = vld [vmem:[%s3 + $0xa8] sm:$0xf]
  %v5376 = vld [vmem:[%s3 + $0xac] sm:$0xf]
  %v5377 = vld [vmem:[%s3 + $0xb0] sm:$0xf]
  %v5378 = vld [vmem:[%s3 + $0xb4] sm:$0xf]
  %v5379 = vld [vmem:[%s3 + $0xb8] sm:$0xf]
  %v5380 = vld [vmem:[%s3 + $0xbc] sm:$0xf]
  %v5381 = vld [vmem:[%s3 + $0xc0] sm:$0xf]
  %v5382 = vld [vmem:[%s3 + $0xc4] sm:$0xf]
  %v5383 = vld [vmem:[%s3 + $0xc8] sm:$0xf]
  %v5384 = vld [vmem:[%s3 + $0xcc] sm:$0xf]
  %v5385 = vld [vmem:[%s3 + $0xd0] sm:$0xf]
  %v5386 = vld [vmem:[%s3 + $0xd4] sm:$0xf]
  %v5387 = vld [vmem:[%s3 + $0xd8] sm:$0xf]
  %v5388 = vld [vmem:[%s3 + $0xdc] sm:$0xf]
  %v5389 = vld [vmem:[%s3 + $0xe0] sm:$0xf]
  %v5390 = vld [vmem:[%s3 + $0xe4] sm:$0xf]
  %v5391 = vld [vmem:[%s3 + $0xe8] sm:$0xf]
  %v5392 = vld [vmem:[%s3 + $0xec] sm:$0xf]
  %v5393 = vld [vmem:[%s3 + $0xf0] sm:$0xf]
  %v5394 = vld [vmem:[%s3 + $0xf4] sm:$0xf]
  %v5395 = vld [vmem:[%s3 + $0xf8] sm:$0xf]
  %v5396 = vld [vmem:[%s3 + $0xfc] sm:$0xf]
  %v5397 = vld [vmem:[%s4] sm:$0x1]
  %v5399 = vlaneseq
  %v5400 = vshrl.u32 %v5399, 7
  %v5401 = vsub.s32 0, %v5400
  %v5402 = vrot.slane %v5397, %v5401
  %v5468 = vunpack.c.l.b16 %v5333
  %v5469 = vunpack.c.l.b16 %v5334
  %v5470 = vunpack.c.l.b16 %v5335
  %v5471 = vunpack.c.l.b16 %v5336
  %v5472 = vunpack.c.l.b16 %v5337
  %v5473 = vunpack.c.l.b16 %v5338
  %v5474 = vunpack.c.l.b16 %v5339
  %v5475 = vunpack.c.l.b16 %v5340
  %v5476 = vunpack.c.l.b16 %v5341
  %v5477 = vunpack.c.l.b16 %v5342
  %v5478 = vunpack.c.l.b16 %v5343
  %v5479 = vunpack.c.l.b16 %v5344
  %v5480 = vunpack.c.l.b16 %v5345
  %v5481 = vunpack.c.l.b16 %v5346
  %v5482 = vunpack.c.l.b16 %v5347
  %v5483 = vunpack.c.l.b16 %v5348
  %v5484 = vunpack.c.l.b16 %v5349
  %v5485 = vunpack.c.l.b16 %v5350
  %v5486 = vunpack.c.l.b16 %v5351
  %v5487 = vunpack.c.l.b16 %v5352
  %v5488 = vunpack.c.l.b16 %v5353
  %v5489 = vunpack.c.l.b16 %v5354
  %v5490 = vunpack.c.l.b16 %v5355
  %v5491 = vunpack.c.l.b16 %v5356
  %v5492 = vunpack.c.l.b16 %v5357
  %v5493 = vunpack.c.l.b16 %v5358
  %v5494 = vunpack.c.l.b16 %v5359
  %v5495 = vunpack.c.l.b16 %v5360
  %v5496 = vunpack.c.l.b16 %v5361
  %v5497 = vunpack.c.l.b16 %v5362
  %v5498 = vunpack.c.l.b16 %v5363
  %v5499 = vunpack.c.l.b16 %v5364
  %v5500 = vunpack.c.l.b16 %v5365
  %v5501 = vunpack.c.l.b16 %v5366
  %v5502 = vunpack.c.l.b16 %v5367
  %v5503 = vunpack.c.l.b16 %v5368
  %v5504 = vunpack.c.l.b16 %v5369
  %v5505 = vunpack.c.l.b16 %v5370
  %v5506 = vunpack.c.l.b16 %v5371
  %v5507 = vunpack.c.l.b16 %v5372
  %v5508 = vunpack.c.l.b16 %v5373
  %v5509 = vunpack.c.l.b16 %v5374
  %v5510 = vunpack.c.l.b16 %v5375
  %v5511 = vunpack.c.l.b16 %v5376
  %v5512 = vunpack.c.l.b16 %v5377
  %v5513 = vunpack.c.l.b16 %v5378
  %v5514 = vunpack.c.l.b16 %v5379
  %v5515 = vunpack.c.l.b16 %v5380
  %v5516 = vunpack.c.l.b16 %v5381
  %v5517 = vunpack.c.l.b16 %v5382
  %v5518 = vunpack.c.l.b16 %v5383
  %v5519 = vunpack.c.l.b16 %v5384
  %v5520 = vunpack.c.l.b16 %v5385
  %v5521 = vunpack.c.l.b16 %v5386
  %v5522 = vunpack.c.l.b16 %v5387
  %v5523 = vunpack.c.l.b16 %v5388
  %v5524 = vunpack.c.l.b16 %v5389
  %v5525 = vunpack.c.l.b16 %v5390
  %v5526 = vunpack.c.l.b16 %v5391
  %v5527 = vunpack.c.l.b16 %v5392
  %v5528 = vunpack.c.l.b16 %v5393
  %v5529 = vunpack.c.l.b16 %v5394
  %v5530 = vunpack.c.l.b16 %v5395
  %v5531 = vunpack.c.l.b16 %v5396
  %v5532 = vpack.c.b16 %v5469, %v5468
  %v5533 = vpack.c.b16 %v5471, %v5470
  %v5534 = vpack.c.b16 %v5473, %v5472
  %v5535 = vpack.c.b16 %v5475, %v5474
  %v5536 = vpack.c.b16 %v5477, %v5476
  %v5537 = vpack.c.b16 %v5479, %v5478
  %v5538 = vpack.c.b16 %v5481, %v5480
  %v5539 = vpack.c.b16 %v5483, %v5482
  %v5540 = vpack.c.b16 %v5485, %v5484
  %v5541 = vpack.c.b16 %v5487, %v5486
  %v5542 = vpack.c.b16 %v5489, %v5488
  %v5543 = vpack.c.b16 %v5491, %v5490
  %v5544 = vpack.c.b16 %v5493, %v5492
  %v5545 = vpack.c.b16 %v5495, %v5494
  %v5546 = vpack.c.b16 %v5497, %v5496
  %v5547 = vpack.c.b16 %v5499, %v5498
  %v5548 = vpack.c.b16 %v5501, %v5500
  %v5549 = vpack.c.b16 %v5503, %v5502
  %v5550 = vpack.c.b16 %v5505, %v5504
  %v5551 = vpack.c.b16 %v5507, %v5506
  %v5552 = vpack.c.b16 %v5509, %v5508
  %v5553 = vpack.c.b16 %v5511, %v5510
  %v5554 = vpack.c.b16 %v5513, %v5512
  %v5555 = vpack.c.b16 %v5515, %v5514
  %v5556 = vpack.c.b16 %v5517, %v5516
  %v5557 = vpack.c.b16 %v5519, %v5518
  %v5558 = vpack.c.b16 %v5521, %v5520
  %v5559 = vpack.c.b16 %v5523, %v5522
  %v5560 = vpack.c.b16 %v5525, %v5524
  %v5561 = vpack.c.b16 %v5527, %v5526
  %v5562 = vpack.c.b16 %v5529, %v5528
  %v5563 = vpack.c.b16 %v5531, %v5530
  %5596 = vmatprep.subr.bf16.mxu0 0
  %5597 = vmatpush1.bf16.msra.mxu0 %v5532
  %5598 = vmatprep.subr.bf16.mxu0 0
  %5599 = vmatpush1.bf16.msra.mxu0 %v5533
  %5600 = vmatprep.subr.bf16.mxu0 0
  %5601 = vmatpush1.bf16.msra.mxu0 %v5534
  %5602 = vmatprep.subr.bf16.mxu0 0
  %5603 = vmatpush1.bf16.msra.mxu0 %v5535
  %5604 = vmatprep.subr.bf16.mxu0 0
  %5605 = vmatpush1.bf16.msra.mxu0 %v5536
  %5606 = vmatprep.subr.bf16.mxu0 0
  %5607 = vmatpush1.bf16.msra.mxu0 %v5537
  %5608 = vmatprep.subr.bf16.mxu0 0
  %5609 = vmatpush1.bf16.msra.mxu0 %v5538
  %5610 = vmatprep.subr.bf16.mxu0 0
  %5611 = vmatpush1.bf16.msra.mxu0 %v5539
  %5612 = vmatprep.subr.bf16.mxu0 0
  %5613 = vmatpush1.bf16.msra.mxu0 %v5540
  %5614 = vmatprep.subr.bf16.mxu0 0
  %5615 = vmatpush1.bf16.msra.mxu0 %v5541
  %5616 = vmatprep.subr.bf16.mxu0 0
  %5617 = vmatpush1.bf16.msra.mxu0 %v5542
  %5618 = vmatprep.subr.bf16.mxu0 0
  %5619 = vmatpush1.bf16.msra.mxu0 %v5543
  %5620 = vmatprep.subr.bf16.mxu0 0
  %5621 = vmatpush1.bf16.msra.mxu0 %v5544
  %5622 = vmatprep.subr.bf16.mxu0 0
  %5623 = vmatpush1.bf16.msra.mxu0 %v5545
  %5624 = vmatprep.subr.bf16.mxu0 0
  %5625 = vmatpush1.bf16.msra.mxu0 %v5546
  %5626 = vmatprep.subr.bf16.mxu0 0
  %5627 = vmatpush1.bf16.msra.mxu0 %v5547
  %5628 = vmatprep.mubr.bf16.mxu0 %v5330
  %5629 = vmatmul.mubr.bf16.gmra.mrb[0].mxu0 %v5329
  %v5630 = vpop.f32.mrb[0].mxu0
  %v5631 = vadd.f32 %v5402, %v5630
  %v5632 = vpop.f32.mrb[0].mxu0
  %v5633 = vpop.f32.mrb[0].mxu0
  %v5634 = vpop.f32.mrb[0].mxu0
  %5635 = vdwg.mxu0
  %5636 = vmatprep.subr.bf16.mxu0 0
  %5637 = vmatpush1.bf16.msra.mxu0 %v5548
  %5638 = vmatprep.subr.bf16.mxu0 0
  %5639 = vmatpush1.bf16.msra.mxu0 %v5549
  %5640 = vmatprep.subr.bf16.mxu0 0
  %5641 = vmatpush1.bf16.msra.mxu0 %v5550
  %5642 = vmatprep.subr.bf16.mxu0 0
  %5643 = vmatpush1.bf16.msra.mxu0 %v5551
  %5644 = vmatprep.subr.bf16.mxu0 0
  %5645 = vmatpush1.bf16.msra.mxu0 %v5552
  %5646 = vmatprep.subr.bf16.mxu0 0
  %5647 = vmatpush1.bf16.msra.mxu0 %v5553
  %5648 = vmatprep.subr.bf16.mxu0 0
  %5649 = vmatpush1.bf16.msra.mxu0 %v5554
  %5650 = vmatprep.subr.bf16.mxu0 0
  %5651 = vmatpush1.bf16.msra.mxu0 %v5555
  %5652 = vmatprep.subr.bf16.mxu0 0
  %5653 = vmatpush1.bf16.msra.mxu0 %v5556
  %5654 = vmatprep.subr.bf16.mxu0 0
  %5655 = vmatpush1.bf16.msra.mxu0 %v5557
  %5656 = vmatprep.subr.bf16.mxu0 0
  %5657 = vmatpush1.bf16.msra.mxu0 %v5558
  %5658 = vmatprep.subr.bf16.mxu0 0
  %5659 = vmatpush1.bf16.msra.mxu0 %v5559
  %5660 = vmatprep.subr.bf16.mxu0 0
  %5661 = vmatpush1.bf16.msra.mxu0 %v5560
  %5662 = vmatprep.subr.bf16.mxu0 0
  %5663 = vmatpush1.bf16.msra.mxu0 %v5561
  %5664 = vmatprep.subr.bf16.mxu0 0
  %5665 = vmatpush1.bf16.msra.mxu0 %v5562
  %5666 = vmatprep.subr.bf16.mxu0 0
  %5667 = vmatpush1.bf16.msra.mxu0 %v5563
  %5668 = vmatprep.mubr.bf16.mxu0 %v5332
  %5669 = vmatmul.mubr.bf16.gmra.mrb[0].mxu0 %v5331
  %v5670 = vpop.f32.mrb[0].mxu0
  %v5671 = vadd.f32 %v5631, %v5670
  %v5672 = vpop.f32.mrb[0].mxu0
  %v5673 = vpop.f32.mrb[0].mxu0
  %v5674 = vpop.f32.mrb[0].mxu0
  %5675 = vdwg.mxu0
  %v5676 = vmax.f32 %v5671, 0.0
  %5678 = vrot.lane.b32.xlu0 %v5676, 64
  %v5679 = vpop.permute.xlu0 %5678
  %vm5681 = vcmask 1048064
  %5682 = vst.msk [vmem:[#allocation3] sm:$0xff] %vm5681, %v5679
  %v5683 = vld [vmem:[#allocation2 + $0x40] sm:$0xff]
  %v5684 = vld [vmem:[#allocation2 + $0x48] sm:$0xff]
  %v5685 = vld [vmem:[#allocation2 + $0x50] sm:$0xff]
  %v5686 = vld [vmem:[#allocation2 + $0x58] sm:$0xff]
  %v5687 = vpack.c.bf16 %v5683, %v5683
  %v5688 = vpack.c.bf16 %v5684, %v5684
  %v5689 = vpack.c.bf16 %v5685, %v5685
  %v5690 = vpack.c.bf16 %v5686, %v5686
  %v5691 = vld [vmem:[%s3] sm:$0xf]
  %v5692 = vld [vmem:[%s3 + $0x4] sm:$0xf]
  %v5693 = vld [vmem:[%s3 + $0x8] sm:$0xf]
  %v5694 = vld [vmem:[%s3 + $0xc] sm:$0xf]
  %v5695 = vld [vmem:[%s3 + $0x10] sm:$0xf]
  %v5696 = vld [vmem:[%s3 + $0x14] sm:$0xf]
  %v5697 = vld [vmem:[%s3 + $0x18] sm:$0xf]
  %v5698 = vld [vmem:[%s3 + $0x1c] sm:$0xf]
  %v5699 = vld [vmem:[%s3 + $0x20] sm:$0xf]
  %v5700 = vld [vmem:[%s3 + $0x24] sm:$0xf]
  %v5701 = vld [vmem:[%s3 + $0x28] sm:$0xf]
  %v5702 = vld [vmem:[%s3 + $0x2c] sm:$0xf]
  %v5703 = vld [vmem:[%s3 + $0x30] sm:$0xf]
  %v5704 = vld [vmem:[%s3 + $0x34] sm:$0xf]
  %v5705 = vld [vmem:[%s3 + $0x38] sm:$0xf]
  %v5706 = vld [vmem:[%s3 + $0x3c] sm:$0xf]
  %v5707 = vld [vmem:[%s3 + $0x40] sm:$0xf]
  %v5708 = vld [vmem:[%s3 + $0x44] sm:$0xf]
  %v5709 = vld [vmem:[%s3 + $0x48] sm:$0xf]
  %v5710 = vld [vmem:[%s3 + $0x4c] sm:$0xf]
  %v5711 = vld [vmem:[%s3 + $0x50] sm:$0xf]
  %v5712 = vld [vmem:[%s3 + $0x54] sm:$0xf]
  %v5713 = vld [vmem:[%s3 + $0x58] sm:$0xf]
  %v5714 = vld [vmem:[%s3 + $0x5c] sm:$0xf]
  %v5715 = vld [vmem:[%s3 + $0x60] sm:$0xf]
  %v5716 = vld [vmem:[%s3 + $0x64] sm:$0xf]
  %v5717 = vld [vmem:[%s3 + $0x68] sm:$0xf]
  %v5718 = vld [vmem:[%s3 + $0x6c] sm:$0xf]
  %v5719 = vld [vmem:[%s3 + $0x70] sm:$0xf]
  %v5720 = vld [vmem:[%s3 + $0x74] sm:$0xf]
  %v5721 = vld [vmem:[%s3 + $0x78] sm:$0xf]
  %v5722 = vld [vmem:[%s3 + $0x7c] sm:$0xf]
  %v5723 = vld [vmem:[%s3 + $0x80] sm:$0xf]
  %v5724 = vld [vmem:[%s3 + $0x84] sm:$0xf]
  %v5725 = vld [vmem:[%s3 + $0x88] sm:$0xf]
  %v5726 = vld [vmem:[%s3 + $0x8c] sm:$0xf]
  %v5727 = vld [vmem:[%s3 + $0x90] sm:$0xf]
  %v5728 = vld [vmem:[%s3 + $0x94] sm:$0xf]
  %v5729 = vld [vmem:[%s3 + $0x98] sm:$0xf]
  %v5730 = vld [vmem:[%s3 + $0x9c] sm:$0xf]
  %v5731 = vld [vmem:[%s3 + $0xa0] sm:$0xf]
  %v5732 = vld [vmem:[%s3 + $0xa4] sm:$0xf]
  %v5733 = vld [vmem:[%s3 + $0xa8] sm:$0xf]
  %v5734 = vld [vmem:[%s3 + $0xac] sm:$0xf]
  %v5735 = vld [vmem:[%s3 + $0xb0] sm:$0xf]
  %v5736 = vld [vmem:[%s3 + $0xb4] sm:$0xf]
  %v5737 = vld [vmem:[%s3 + $0xb8] sm:$0xf]
  %v5738 = vld [vmem:[%s3 + $0xbc] sm:$0xf]
  %v5739 = vld [vmem:[%s3 + $0xc0] sm:$0xf]
  %v5740 = vld [vmem:[%s3 + $0xc4] sm:$0xf]
  %v5741 = vld [vmem:[%s3 + $0xc8] sm:$0xf]
  %v5742 = vld [vmem:[%s3 + $0xcc] sm:$0xf]
  %v5743 = vld [vmem:[%s3 + $0xd0] sm:$0xf]
  %v5744 = vld [vmem:[%s3 + $0xd4] sm:$0xf]
  %v5745 = vld [vmem:[%s3 + $0xd8] sm:$0xf]
  %v5746 = vld [vmem:[%s3 + $0xdc] sm:$0xf]
  %v5747 = vld [vmem:[%s3 + $0xe0] sm:$0xf]
  %v5748 = vld [vmem:[%s3 + $0xe4] sm:$0xf]
  %v5749 = vld [vmem:[%s3 + $0xe8] sm:$0xf]
  %v5750 = vld [vmem:[%s3 + $0xec] sm:$0xf]
  %v5751 = vld [vmem:[%s3 + $0xf0] sm:$0xf]
  %v5752 = vld [vmem:[%s3 + $0xf4] sm:$0xf]
  %v5753 = vld [vmem:[%s3 + $0xf8] sm:$0xf]
  %v5754 = vld [vmem:[%s3 + $0xfc] sm:$0xf]
  %v5755 = vld [vmem:[%s4] sm:$0x1]
  %v5757 = vlaneseq
  %v5758 = vshrl.u32 %v5757, 7
  %v5759 = vsub.s32 0, %v5758
  %v5760 = vrot.slane %v5755, %v5759
  %v5826 = vunpack.c.l.b16 %v5691
  %v5827 = vunpack.c.l.b16 %v5692
  %v5828 = vunpack.c.l.b16 %v5693
  %v5829 = vunpack.c.l.b16 %v5694
  %v5830 = vunpack.c.l.b16 %v5695
  %v5831 = vunpack.c.l.b16 %v5696
  %v5832 = vunpack.c.l.b16 %v5697
  %v5833 = vunpack.c.l.b16 %v5698
  %v5834 = vunpack.c.l.b16 %v5699
  %v5835 = vunpack.c.l.b16 %v5700
  %v5836 = vunpack.c.l.b16 %v5701
  %v5837 = vunpack.c.l.b16 %v5702
  %v5838 = vunpack.c.l.b16 %v5703
  %v5839 = vunpack.c.l.b16 %v5704
  %v5840 = vunpack.c.l.b16 %v5705
  %v5841 = vunpack.c.l.b16 %v5706
  %v5842 = vunpack.c.l.b16 %v5707
  %v5843 = vunpack.c.l.b16 %v5708
  %v5844 = vunpack.c.l.b16 %v5709
  %v5845 = vunpack.c.l.b16 %v5710
  %v5846 = vunpack.c.l.b16 %v5711
  %v5847 = vunpack.c.l.b16 %v5712
  %v5848 = vunpack.c.l.b16 %v5713
  %v5849 = vunpack.c.l.b16 %v5714
  %v5850 = vunpack.c.l.b16 %v5715
  %v5851 = vunpack.c.l.b16 %v5716
  %v5852 = vunpack.c.l.b16 %v5717
  %v5853 = vunpack.c.l.b16 %v5718
  %v5854 = vunpack.c.l.b16 %v5719
  %v5855 = vunpack.c.l.b16 %v5720
  %v5856 = vunpack.c.l.b16 %v5721
  %v5857 = vunpack.c.l.b16 %v5722
  %v5858 = vunpack.c.l.b16 %v5723
  %v5859 = vunpack.c.l.b16 %v5724
  %v5860 = vunpack.c.l.b16 %v5725
  %v5861 = vunpack.c.l.b16 %v5726
  %v5862 = vunpack.c.l.b16 %v5727
  %v5863 = vunpack.c.l.b16 %v5728
  %v5864 = vunpack.c.l.b16 %v5729
  %v5865 = vunpack.c.l.b16 %v5730
  %v5866 = vunpack.c.l.b16 %v5731
  %v5867 = vunpack.c.l.b16 %v5732
  %v5868 = vunpack.c.l.b16 %v5733
  %v5869 = vunpack.c.l.b16 %v5734
  %v5870 = vunpack.c.l.b16 %v5735
  %v5871 = vunpack.c.l.b16 %v5736
  %v5872 = vunpack.c.l.b16 %v5737
  %v5873 = vunpack.c.l.b16 %v5738
  %v5874 = vunpack.c.l.b16 %v5739
  %v5875 = vunpack.c.l.b16 %v5740
  %v5876 = vunpack.c.l.b16 %v5741
  %v5877 = vunpack.c.l.b16 %v5742
  %v5878 = vunpack.c.l.b16 %v5743
  %v5879 = vunpack.c.l.b16 %v5744
  %v5880 = vunpack.c.l.b16 %v5745
  %v5881 = vunpack.c.l.b16 %v5746
  %v5882 = vunpack.c.l.b16 %v5747
  %v5883 = vunpack.c.l.b16 %v5748
  %v5884 = vunpack.c.l.b16 %v5749
  %v5885 = vunpack.c.l.b16 %v5750
  %v5886 = vunpack.c.l.b16 %v5751
  %v5887 = vunpack.c.l.b16 %v5752
  %v5888 = vunpack.c.l.b16 %v5753
  %v5889 = vunpack.c.l.b16 %v5754
  %v5890 = vpack.c.b16 %v5827, %v5826
  %v5891 = vpack.c.b16 %v5829, %v5828
  %v5892 = vpack.c.b16 %v5831, %v5830
  %v5893 = vpack.c.b16 %v5833, %v5832
  %v5894 = vpack.c.b16 %v5835, %v5834
  %v5895 = vpack.c.b16 %v5837, %v5836
  %v5896 = vpack.c.b16 %v5839, %v5838
  %v5897 = vpack.c.b16 %v5841, %v5840
  %v5898 = vpack.c.b16 %v5843, %v5842
  %v5899 = vpack.c.b16 %v5845, %v5844
  %v5900 = vpack.c.b16 %v5847, %v5846
  %v5901 = vpack.c.b16 %v5849, %v5848
  %v5902 = vpack.c.b16 %v5851, %v5850
  %v5903 = vpack.c.b16 %v5853, %v5852
  %v5904 = vpack.c.b16 %v5855, %v5854
  %v5905 = vpack.c.b16 %v5857, %v5856
  %v5906 = vpack.c.b16 %v5859, %v5858
  %v5907 = vpack.c.b16 %v5861, %v5860
  %v5908 = vpack.c.b16 %v5863, %v5862
  %v5909 = vpack.c.b16 %v5865, %v5864
  %v5910 = vpack.c.b16 %v5867, %v5866
  %v5911 = vpack.c.b16 %v5869, %v5868
  %v5912 = vpack.c.b16 %v5871, %v5870
  %v5913 = vpack.c.b16 %v5873, %v5872
  %v5914 = vpack.c.b16 %v5875, %v5874
  %v5915 = vpack.c.b16 %v5877, %v5876
  %v5916 = vpack.c.b16 %v5879, %v5878
  %v5917 = vpack.c.b16 %v5881, %v5880
  %v5918 = vpack.c.b16 %v5883, %v5882
  %v5919 = vpack.c.b16 %v5885, %v5884
  %v5920 = vpack.c.b16 %v5887, %v5886
  %v5921 = vpack.c.b16 %v5889, %v5888
  %5954 = vmatprep.subr.bf16.mxu0 0
  %5955 = vmatpush1.bf16.msra.mxu0 %v5890
  %5956 = vmatprep.subr.bf16.mxu0 0
  %5957 = vmatpush1.bf16.msra.mxu0 %v5891
  %5958 = vmatprep.subr.bf16.mxu0 0
  %5959 = vmatpush1.bf16.msra.mxu0 %v5892
  %5960 = vmatprep.subr.bf16.mxu0 0
  %5961 = vmatpush1.bf16.msra.mxu0 %v5893
  %5962 = vmatprep.subr.bf16.mxu0 0
  %5963 = vmatpush1.bf16.msra.mxu0 %v5894
  %5964 = vmatprep.subr.bf16.mxu0 0
  %5965 = vmatpush1.bf16.msra.mxu0 %v5895
  %5966 = vmatprep.subr.bf16.mxu0 0
  %5967 = vmatpush1.bf16.msra.mxu0 %v5896
  %5968 = vmatprep.subr.bf16.mxu0 0
  %5969 = vmatpush1.bf16.msra.mxu0 %v5897
  %5970 = vmatprep.subr.bf16.mxu0 0
  %5971 = vmatpush1.bf16.msra.mxu0 %v5898
  %5972 = vmatprep.subr.bf16.mxu0 0
  %5973 = vmatpush1.bf16.msra.mxu0 %v5899
  %5974 = vmatprep.subr.bf16.mxu0 0
  %5975 = vmatpush1.bf16.msra.mxu0 %v5900
  %5976 = vmatprep.subr.bf16.mxu0 0
  %5977 = vmatpush1.bf16.msra.mxu0 %v5901
  %5978 = vmatprep.subr.bf16.mxu0 0
  %5979 = vmatpush1.bf16.msra.mxu0 %v5902
  %5980 = vmatprep.subr.bf16.mxu0 0
  %5981 = vmatpush1.bf16.msra.mxu0 %v5903
  %5982 = vmatprep.subr.bf16.mxu0 0
  %5983 = vmatpush1.bf16.msra.mxu0 %v5904
  %5984 = vmatprep.subr.bf16.mxu0 0
  %5985 = vmatpush1.bf16.msra.mxu0 %v5905
  %5986 = vmatprep.mubr.bf16.mxu0 %v5688
  %5987 = vmatmul.mubr.bf16.gmra.mrb[0].mxu0 %v5687
  %v5988 = vpop.f32.mrb[0].mxu0
  %v5989 = vadd.f32 %v5760, %v5988
  %v5990 = vpop.f32.mrb[0].mxu0
  %v5991 = vpop.f32.mrb[0].mxu0
  %v5992 = vpop.f32.mrb[0].mxu0
  %5993 = vdwg.mxu0
  %5994 = vmatprep.subr.bf16.mxu0 0
  %5995 = vmatpush1.bf16.msra.mxu0 %v5906
  %5996 = vmatprep.subr.bf16.mxu0 0
  %5997 = vmatpush1.bf16.msra.mxu0 %v5907
  %5998 = vmatprep.subr.bf16.mxu0 0
  %5999 = vmatpush1.bf16.msra.mxu0 %v5908
  %6000 = vmatprep.subr.bf16.mxu0 0
  %6001 = vmatpush1.bf16.msra.mxu0 %v5909
  %6002 = vmatprep.subr.bf16.mxu0 0
  %6003 = vmatpush1.bf16.msra.mxu0 %v5910
  %6004 = vmatprep.subr.bf16.mxu0 0
  %6005 = vmatpush1.bf16.msra.mxu0 %v5911
  %6006 = vmatprep.subr.bf16.mxu0 0
  %6007 = vmatpush1.bf16.msra.mxu0 %v5912
  %6008 = vmatprep.subr.bf16.mxu0 0
  %6009 = vmatpush1.bf16.msra.mxu0 %v5913
  %6010 = vmatprep.subr.bf16.mxu0 0
  %6011 = vmatpush1.bf16.msra.mxu0 %v5914
  %6012 = vmatprep.subr.bf16.mxu0 0
  %6013 = vmatpush1.bf16.msra.mxu0 %v5915
  %6014 = vmatprep.subr.bf16.mxu0 0
  %6015 = vmatpush1.bf16.msra.mxu0 %v5916
  %6016 = vmatprep.subr.bf16.mxu0 0
  %6017 = vmatpush1.bf16.msra.mxu0 %v5917
  %6018 = vmatprep.subr.bf16.mxu0 0
  %6019 = vmatpush1.bf16.msra.mxu0 %v5918
  %6020 = vmatprep.subr.bf16.mxu0 0
  %6021 = vmatpush1.bf16.msra.mxu0 %v5919
  %6022 = vmatprep.subr.bf16.mxu0 0
  %6023 = vmatpush1.bf16.msra.mxu0 %v5920
  %6024 = vmatprep.subr.bf16.mxu0 0
  %6025 = vmatpush1.bf16.msra.mxu0 %v5921
  %6026 = vmatprep.mubr.bf16.mxu0 %v5690
  %6027 = vmatmul.mubr.bf16.gmra.mrb[0].mxu0 %v5689
  %v6028 = vpop.f32.mrb[0].mxu0
  %v6029 = vadd.f32 %v5989, %v6028
  %v6030 = vpop.f32.mrb[0].mxu0
  %v6031 = vpop.f32.mrb[0].mxu0
  %v6032 = vpop.f32.mrb[0].mxu0
  %6033 = vdwg.mxu0
  %v6034 = vmax.f32 %v6029, 0.0
  %6035 = vst.msk [vmem:[#allocation3 + $0x8] sm:$0xff] %vm5323, %v6034
  %v6036 = vld [vmem:[#allocation2 + $0x60] sm:$0xff]
  %v6037 = vld [vmem:[#allocation2 + $0x68] sm:$0xff]
  %v6038 = vld [vmem:[#allocation2 + $0x70] sm:$0xff]
  %v6039 = vld [vmem:[#allocation2 + $0x78] sm:$0xff]
  %v6040 = vpack.c.bf16 %v6036, %v6036
  %v6041 = vpack.c.bf16 %v6037, %v6037
  %v6042 = vpack.c.bf16 %v6038, %v6038
  %v6043 = vpack.c.bf16 %v6039, %v6039
  %v6044 = vld [vmem:[%s3] sm:$0xf]
  %v6045 = vld [vmem:[%s3 + $0x4] sm:$0xf]
  %v6046 = vld [vmem:[%s3 + $0x8] sm:$0xf]
  %v6047 = vld [vmem:[%s3 + $0xc] sm:$0xf]
  %v6048 = vld [vmem:[%s3 + $0x10] sm:$0xf]
  %v6049 = vld [vmem:[%s3 + $0x14] sm:$0xf]
  %v6050 = vld [vmem:[%s3 + $0x18] sm:$0xf]
  %v6051 = vld [vmem:[%s3 + $0x1c] sm:$0xf]
  %v6052 = vld [vmem:[%s3 + $0x20] sm:$0xf]
  %v6053 = vld [vmem:[%s3 + $0x24] sm:$0xf]
  %v6054 = vld [vmem:[%s3 + $0x28] sm:$0xf]
  %v6055 = vld [vmem:[%s3 + $0x2c] sm:$0xf]
  %v6056 = vld [vmem:[%s3 + $0x30] sm:$0xf]
  %v6057 = vld [vmem:[%s3 + $0x34] sm:$0xf]
  %v6058 = vld [vmem:[%s3 + $0x38] sm:$0xf]
  %v6059 = vld [vmem:[%s3 + $0x3c] sm:$0xf]
  %v6060 = vld [vmem:[%s3 + $0x40] sm:$0xf]
  %v6061 = vld [vmem:[%s3 + $0x44] sm:$0xf]
  %v6062 = vld [vmem:[%s3 + $0x48] sm:$0xf]
  %v6063 = vld [vmem:[%s3 + $0x4c] sm:$0xf]
  %v6064 = vld [vmem:[%s3 + $0x50] sm:$0xf]
  %v6065 = vld [vmem:[%s3 + $0x54] sm:$0xf]
  %v6066 = vld [vmem:[%s3 + $0x58] sm:$0xf]
  %v6067 = vld [vmem:[%s3 + $0x5c] sm:$0xf]
  %v6068 = vld [vmem:[%s3 + $0x60] sm:$0xf]
  %v6069 = vld [vmem:[%s3 + $0x64] sm:$0xf]
  %v6070 = vld [vmem:[%s3 + $0x68] sm:$0xf]
  %v6071 = vld [vmem:[%s3 + $0x6c] sm:$0xf]
  %v6072 = vld [vmem:[%s3 + $0x70] sm:$0xf]
  %v6073 = vld [vmem:[%s3 + $0x74] sm:$0xf]
  %v6074 = vld [vmem:[%s3 + $0x78] sm:$0xf]
  %v6075 = vld [vmem:[%s3 + $0x7c] sm:$0xf]
  %v6076 = vld [vmem:[%s3 + $0x80] sm:$0xf]
  %v6077 = vld [vmem:[%s3 + $0x84] sm:$0xf]
  %v6078 = vld [vmem:[%s3 + $0x88] sm:$0xf]
  %v6079 = vld [vmem:[%s3 + $0x8c] sm:$0xf]
  %v6080 = vld [vmem:[%s3 + $0x90] sm:$0xf]
  %v6081 = vld [vmem:[%s3 + $0x94] sm:$0xf]
  %v6082 = vld [vmem:[%s3 + $0x98] sm:$0xf]
  %v6083 = vld [vmem:[%s3 + $0x9c] sm:$0xf]
  %v6084 = vld [vmem:[%s3 + $0xa0] sm:$0xf]
  %v6085 = vld [vmem:[%s3 + $0xa4] sm:$0xf]
  %v6086 = vld [vmem:[%s3 + $0xa8] sm:$0xf]
  %v6087 = vld [vmem:[%s3 + $0xac] sm:$0xf]
  %v6088 = vld [vmem:[%s3 + $0xb0] sm:$0xf]
  %v6089 = vld [vmem:[%s3 + $0xb4] sm:$0xf]
  %v6090 = vld [vmem:[%s3 + $0xb8] sm:$0xf]
  %v6091 = vld [vmem:[%s3 + $0xbc] sm:$0xf]
  %v6092 = vld [vmem:[%s3 + $0xc0] sm:$0xf]
  %v6093 = vld [vmem:[%s3 + $0xc4] sm:$0xf]
  %v6094 = vld [vmem:[%s3 + $0xc8] sm:$0xf]
  %v6095 = vld [vmem:[%s3 + $0xcc] sm:$0xf]
  %v6096 = vld [vmem:[%s3 + $0xd0] sm:$0xf]
  %v6097 = vld [vmem:[%s3 + $0xd4] sm:$0xf]
  %v6098 = vld [vmem:[%s3 + $0xd8] sm:$0xf]
  %v6099 = vld [vmem:[%s3 + $0xdc] sm:$0xf]
  %v6100 = vld [vmem:[%s3 + $0xe0] sm:$0xf]
  %v6101 = vld [vmem:[%s3 + $0xe4] sm:$0xf]
  %v6102 = vld [vmem:[%s3 + $0xe8] sm:$0xf]
  %v6103 = vld [vmem:[%s3 + $0xec] sm:$0xf]
  %v6104 = vld [vmem:[%s3 + $0xf0] sm:$0xf]
  %v6105 = vld [vmem:[%s3 + $0xf4] sm:$0xf]
  %v6106 = vld [vmem:[%s3 + $0xf8] sm:$0xf]
  %v6107 = vld [vmem:[%s3 + $0xfc] sm:$0xf]
  %v6108 = vld [vmem:[%s4] sm:$0x1]
  %v6110 = vlaneseq
  %v6111 = vshrl.u32 %v6110, 7
  %v6112 = vsub.s32 0, %v6111
  %v6113 = vrot.slane %v6108, %v6112
  %v6179 = vunpack.c.l.b16 %v6044
  %v6180 = vunpack.c.l.b16 %v6045
  %v6181 = vunpack.c.l.b16 %v6046
  %v6182 = vunpack.c.l.b16 %v6047
  %v6183 = vunpack.c.l.b16 %v6048
  %v6184 = vunpack.c.l.b16 %v6049
  %v6185 = vunpack.c.l.b16 %v6050
  %v6186 = vunpack.c.l.b16 %v6051
  %v6187 = vunpack.c.l.b16 %v6052
  %v6188 = vunpack.c.l.b16 %v6053
  %v6189 = vunpack.c.l.b16 %v6054
  %v6190 = vunpack.c.l.b16 %v6055
  %v6191 = vunpack.c.l.b16 %v6056
  %v6192 = vunpack.c.l.b16 %v6057
  %v6193 = vunpack.c.l.b16 %v6058
  %v6194 = vunpack.c.l.b16 %v6059
  %v6195 = vunpack.c.l.b16 %v6060
  %v6196 = vunpack.c.l.b16 %v6061
  %v6197 = vunpack.c.l.b16 %v6062
  %v6198 = vunpack.c.l.b16 %v6063
  %v6199 = vunpack.c.l.b16 %v6064
  %v6200 = vunpack.c.l.b16 %v6065
  %v6201 = vunpack.c.l.b16 %v6066
  %v6202 = vunpack.c.l.b16 %v6067
  %v6203 = vunpack.c.l.b16 %v6068
  %v6204 = vunpack.c.l.b16 %v6069
  %v6205 = vunpack.c.l.b16 %v6070
  %v6206 = vunpack.c.l.b16 %v6071
  %v6207 = vunpack.c.l.b16 %v6072
  %v6208 = vunpack.c.l.b16 %v6073
  %v6209 = vunpack.c.l.b16 %v6074
  %v6210 = vunpack.c.l.b16 %v6075
  %v6211 = vunpack.c.l.b16 %v6076
  %v6212 = vunpack.c.l.b16 %v6077
  %v6213 = vunpack.c.l.b16 %v6078
  %v6214 = vunpack.c.l.b16 %v6079
  %v6215 = vunpack.c.l.b16 %v6080
  %v6216 = vunpack.c.l.b16 %v6081
  %v6217 = vunpack.c.l.b16 %v6082
  %v6218 = vunpack.c.l.b16 %v6083
  %v6219 = vunpack.c.l.b16 %v6084
  %v6220 = vunpack.c.l.b16 %v6085
  %v6221 = vunpack.c.l.b16 %v6086
  %v6222 = vunpack.c.l.b16 %v6087
  %v6223 = vunpack.c.l.b16 %v6088
  %v6224 = vunpack.c.l.b16 %v6089
  %v6225 = vunpack.c.l.b16 %v6090
  %v6226 = vunpack.c.l.b16 %v6091
  %v6227 = vunpack.c.l.b16 %v6092
  %v6228 = vunpack.c.l.b16 %v6093
  %v6229 = vunpack.c.l.b16 %v6094
  %v6230 = vunpack.c.l.b16 %v6095
  %v6231 = vunpack.c.l.b16 %v6096
  %v6232 = vunpack.c.l.b16 %v6097
  %v6233 = vunpack.c.l.b16 %v6098
  %v6234 = vunpack.c.l.b16 %v6099
  %v6235 = vunpack.c.l.b16 %v6100
  %v6236 = vunpack.c.l.b16 %v6101
  %v6237 = vunpack.c.l.b16 %v6102
  %v6238 = vunpack.c.l.b16 %v6103
  %v6239 = vunpack.c.l.b16 %v6104
  %v6240 = vunpack.c.l.b16 %v6105
  %v6241 = vunpack.c.l.b16 %v6106
  %v6242 = vunpack.c.l.b16 %v6107
  %v6243 = vpack.c.b16 %v6180, %v6179
  %v6244 = vpack.c.b16 %v6182, %v6181
  %v6245 = vpack.c.b16 %v6184, %v6183
  %v6246 = vpack.c.b16 %v6186, %v6185
  %v6247 = vpack.c.b16 %v6188, %v6187
  %v6248 = vpack.c.b16 %v6190, %v6189
  %v6249 = vpack.c.b16 %v6192, %v6191
  %v6250 = vpack.c.b16 %v6194, %v6193
  %v6251 = vpack.c.b16 %v6196, %v6195
  %v6252 = vpack.c.b16 %v6198, %v6197
  %v6253 = vpack.c.b16 %v6200, %v6199
  %v6254 = vpack.c.b16 %v6202, %v6201
  %v6255 = vpack.c.b16 %v6204, %v6203
  %v6256 = vpack.c.b16 %v6206, %v6205
  %v6257 = vpack.c.b16 %v6208, %v6207
  %v6258 = vpack.c.b16 %v6210, %v6209
  %v6259 = vpack.c.b16 %v6212, %v6211
  %v6260 = vpack.c.b16 %v6214, %v6213
  %v6261 = vpack.c.b16 %v6216, %v6215
  %v6262 = vpack.c.b16 %v6218, %v6217
  %v6263 = vpack.c.b16 %v6220, %v6219
  %v6264 = vpack.c.b16 %v6222, %v6221
  %v6265 = vpack.c.b16 %v6224, %v6223
  %v6266 = vpack.c.b16 %v6226, %v6225
  %v6267 = vpack.c.b16 %v6228, %v6227
  %v6268 = vpack.c.b16 %v6230, %v6229
  %v6269 = vpack.c.b16 %v6232, %v6231
  %v6270 = vpack.c.b16 %v6234, %v6233
  %v6271 = vpack.c.b16 %v6236, %v6235
  %v6272 = vpack.c.b16 %v6238, %v6237
  %v6273 = vpack.c.b16 %v6240, %v6239
  %v6274 = vpack.c.b16 %v6242, %v6241
  %6307 = vmatprep.subr.bf16.mxu0 0
  %6308 = vmatpush1.bf16.msra.mxu0 %v6243
  %6309 = vmatprep.subr.bf16.mxu0 0
  %6310 = vmatpush1.bf16.msra.mxu0 %v6244
  %6311 = vmatprep.subr.bf16.mxu0 0
  %6312 = vmatpush1.bf16.msra.mxu0 %v6245
  %6313 = vmatprep.subr.bf16.mxu0 0
  %6314 = vmatpush1.bf16.msra.mxu0 %v6246
  %6315 = vmatprep.subr.bf16.mxu0 0
  %6316 = vmatpush1.bf16.msra.mxu0 %v6247
  %6317 = vmatprep.subr.bf16.mxu0 0
  %6318 = vmatpush1.bf16.msra.mxu0 %v6248
  %6319 = vmatprep.subr.bf16.mxu0 0
  %6320 = vmatpush1.bf16.msra.mxu0 %v6249
  %6321 = vmatprep.subr.bf16.mxu0 0
  %6322 = vmatpush1.bf16.msra.mxu0 %v6250
  %6323 = vmatprep.subr.bf16.mxu0 0
  %6324 = vmatpush1.bf16.msra.mxu0 %v6251
  %6325 = vmatprep.subr.bf16.mxu0 0
  %6326 = vmatpush1.bf16.msra.mxu0 %v6252
  %6327 = vmatprep.subr.bf16.mxu0 0
  %6328 = vmatpush1.bf16.msra.mxu0 %v6253
  %6329 = vmatprep.subr.bf16.mxu0 0
  %6330 = vmatpush1.bf16.msra.mxu0 %v6254
  %6331 = vmatprep.subr.bf16.mxu0 0
  %6332 = vmatpush1.bf16.msra.mxu0 %v6255
  %6333 = vmatprep.subr.bf16.mxu0 0
  %6334 = vmatpush1.bf16.msra.mxu0 %v6256
  %6335 = vmatprep.subr.bf16.mxu0 0
  %6336 = vmatpush1.bf16.msra.mxu0 %v6257
  %6337 = vmatprep.subr.bf16.mxu0 0
  %6338 = vmatpush1.bf16.msra.mxu0 %v6258
  %6339 = vmatprep.mubr.bf16.mxu0 %v6041
  %6340 = vmatmul.mubr.bf16.gmra.mrb[0].mxu0 %v6040
  %v6341 = vpop.f32.mrb[0].mxu0
  %v6342 = vadd.f32 %v6113, %v6341
  %v6343 = vpop.f32.mrb[0].mxu0
  %v6344 = vpop.f32.mrb[0].mxu0
  %v6345 = vpop.f32.mrb[0].mxu0
  %6346 = vdwg.mxu0
  %6347 = vmatprep.subr.bf16.mxu0 0
  %6348 = vmatpush1.bf16.msra.mxu0 %v6259
  %6349 = vmatprep.subr.bf16.mxu0 0
  %6350 = vmatpush1.bf16.msra.mxu0 %v6260
  %6351 = vmatprep.subr.bf16.mxu0 0
  %6352 = vmatpush1.bf16.msra.mxu0 %v6261
  %6353 = vmatprep.subr.bf16.mxu0 0
  %6354 = vmatpush1.bf16.msra.mxu0 %v6262
  %6355 = vmatprep.subr.bf16.mxu0 0
  %6356 = vmatpush1.bf16.msra.mxu0 %v6263
  %6357 = vmatprep.subr.bf16.mxu0 0
  %6358 = vmatpush1.bf16.msra.mxu0 %v6264
  %6359 = vmatprep.subr.bf16.mxu0 0
  %6360 = vmatpush1.bf16.msra.mxu0 %v6265
  %6361 = vmatprep.subr.bf16.mxu0 0
  %6362 = vmatpush1.bf16.msra.mxu0 %v6266
  %6363 = vmatprep.subr.bf16.mxu0 0
  %6364 = vmatpush1.bf16.msra.mxu0 %v6267
  %6365 = vmatprep.subr.bf16.mxu0 0
  %6366 = vmatpush1.bf16.msra.mxu0 %v6268
  %6367 = vmatprep.subr.bf16.mxu0 0
  %6368 = vmatpush1.bf16.msra.mxu0 %v6269
  %6369 = vmatprep.subr.bf16.mxu0 0
  %6370 = vmatpush1.bf16.msra.mxu0 %v6270
  %6371 = vmatprep.subr.bf16.mxu0 0
  %6372 = vmatpush1.bf16.msra.mxu0 %v6271
  %6373 = vmatprep.subr.bf16.mxu0 0
  %6374 = vmatpush1.bf16.msra.mxu0 %v6272
  %6375 = vmatprep.subr.bf16.mxu0 0
  %6376 = vmatpush1.bf16.msra.mxu0 %v6273
  %6377 = vmatprep.subr.bf16.mxu0 0
  %6378 = vmatpush1.bf16.msra.mxu0 %v6274
  %6379 = vmatprep.mubr.bf16.mxu0 %v6043
  %6380 = vmatmul.mubr.bf16.gmra.mrb[0].mxu0 %v6042
  %v6381 = vpop.f32.mrb[0].mxu0
  %v6382 = vadd.f32 %v6342, %v6381
  %v6383 = vpop.f32.mrb[0].mxu0
  %v6384 = vpop.f32.mrb[0].mxu0
  %v6385 = vpop.f32.mrb[0].mxu0
  %6386 = vdwg.mxu0
  %v6387 = vmax.f32 %v6382, 0.0
  %6389 = vrot.lane.b32.xlu0 %v6387, 64
  %v6390 = vpop.permute.xlu0 %6389
  %6392 = vst.msk [vmem:[#allocation3 + $0x8] sm:$0xff] %vm5681, %v6390
  %v6393 = vld [vmem:[#allocation2 + $0x80] sm:$0xff]
  %v6394 = vld [vmem:[#allocation2 + $0x88] sm:$0xff]
  %v6395 = vld [vmem:[#allocation2 + $0x90] sm:$0xff]
  %v6396 = vld [vmem:[#allocation2 + $0x98] sm:$0xff]
  %v6397 = vpack.c.bf16 %v6393, %v6393
  %v6398 = vpack.c.bf16 %v6394, %v6394
  %v6399 = vpack.c.bf16 %v6395, %v6395
  %v6400 = vpack.c.bf16 %v6396, %v6396
  %v6401 = vld [vmem:[%s3] sm:$0xf]
  %v6402 = vld [vmem:[%s3 + $0x4] sm:$0xf]
  %v6403 = vld [vmem:[%s3 + $0x8] sm:$0xf]
  %v6404 = vld [vmem:[%s3 + $0xc] sm:$0xf]
  %v6405 = vld [vmem:[%s3 + $0x10] sm:$0xf]
  %v6406 = vld [vmem:[%s3 + $0x14] sm:$0xf]
  %v6407 = vld [vmem:[%s3 + $0x18] sm:$0xf]
  %v6408 = vld [vmem:[%s3 + $0x1c] sm:$0xf]
  %v6409 = vld [vmem:[%s3 + $0x20] sm:$0xf]
  %v6410 = vld [vmem:[%s3 + $0x24] sm:$0xf]
  %v6411 = vld [vmem:[%s3 + $0x28] sm:$0xf]
  %v6412 = vld [vmem:[%s3 + $0x2c] sm:$0xf]
  %v6413 = vld [vmem:[%s3 + $0x30] sm:$0xf]
  %v6414 = vld [vmem:[%s3 + $0x34] sm:$0xf]
  %v6415 = vld [vmem:[%s3 + $0x38] sm:$0xf]
  %v6416 = vld [vmem:[%s3 + $0x3c] sm:$0xf]
  %v6417 = vld [vmem:[%s3 + $0x40] sm:$0xf]
  %v6418 = vld [vmem:[%s3 + $0x44] sm:$0xf]
  %v6419 = vld [vmem:[%s3 + $0x48] sm:$0xf]
  %v6420 = vld [vmem:[%s3 + $0x4c] sm:$0xf]
  %v6421 = vld [vmem:[%s3 + $0x50] sm:$0xf]
  %v6422 = vld [vmem:[%s3 + $0x54] sm:$0xf]
  %v6423 = vld [vmem:[%s3 + $0x58] sm:$0xf]
  %v6424 = vld [vmem:[%s3 + $0x5c] sm:$0xf]
  %v6425 = vld [vmem:[%s3 + $0x60] sm:$0xf]
  %v6426 = vld [vmem:[%s3 + $0x64] sm:$0xf]
  %v6427 = vld [vmem:[%s3 + $0x68] sm:$0xf]
  %v6428 = vld [vmem:[%s3 + $0x6c] sm:$0xf]
  %v6429 = vld [vmem:[%s3 + $0x70] sm:$0xf]
  %v6430 = vld [vmem:[%s3 + $0x74] sm:$0xf]
  %v6431 = vld [vmem:[%s3 + $0x78] sm:$0xf]
  %v6432 = vld [vmem:[%s3 + $0x7c] sm:$0xf]
  %v6433 = vld [vmem:[%s3 + $0x80] sm:$0xf]
  %v6434 = vld [vmem:[%s3 + $0x84] sm:$0xf]
  %v6435 = vld [vmem:[%s3 + $0x88] sm:$0xf]
  %v6436 = vld [vmem:[%s3 + $0x8c] sm:$0xf]
  %v6437 = vld [vmem:[%s3 + $0x90] sm:$0xf]
  %v6438 = vld [vmem:[%s3 + $0x94] sm:$0xf]
  %v6439 = vld [vmem:[%s3 + $0x98] sm:$0xf]
  %v6440 = vld [vmem:[%s3 + $0x9c] sm:$0xf]
  %v6441 = vld [vmem:[%s3 + $0xa0] sm:$0xf]
  %v6442 = vld [vmem:[%s3 + $0xa4] sm:$0xf]
  %v6443 = vld [vmem:[%s3 + $0xa8] sm:$0xf]
  %v6444 = vld [vmem:[%s3 + $0xac] sm:$0xf]
  %v6445 = vld [vmem:[%s3 + $0xb0] sm:$0xf]
  %v6446 = vld [vmem:[%s3 + $0xb4] sm:$0xf]
  %v6447 = vld [vmem:[%s3 + $0xb8] sm:$0xf]
  %v6448 = vld [vmem:[%s3 + $0xbc] sm:$0xf]
  %v6449 = vld [vmem:[%s3 + $0xc0] sm:$0xf]
  %v6450 = vld [vmem:[%s3 + $0xc4] sm:$0xf]
  %v6451 = vld [vmem:[%s3 + $0xc8] sm:$0xf]
  %v6452 = vld [vmem:[%s3 + $0xcc] sm:$0xf]
  %v6453 = vld [vmem:[%s3 + $0xd0] sm:$0xf]
  %v6454 = vld [vmem:[%s3 + $0xd4] sm:$0xf]
  %v6455 = vld [vmem:[%s3 + $0xd8] sm:$0xf]
  %v6456 = vld [vmem:[%s3 + $0xdc] sm:$0xf]
  %v6457 = vld [vmem:[%s3 + $0xe0] sm:$0xf]
  %v6458 = vld [vmem:[%s3 + $0xe4] sm:$0xf]
  %v6459 = vld [vmem:[%s3 + $0xe8] sm:$0xf]
  %v6460 = vld [vmem:[%s3 + $0xec] sm:$0xf]
  %v6461 = vld [vmem:[%s3 + $0xf0] sm:$0xf]
  %v6462 = vld [vmem:[%s3 + $0xf4] sm:$0xf]
  %v6463 = vld [vmem:[%s3 + $0xf8] sm:$0xf]
  %v6464 = vld [vmem:[%s3 + $0xfc] sm:$0xf]
  %v6465 = vld [vmem:[%s4] sm:$0x1]
  %v6467 = vlaneseq
  %v6468 = vshrl.u32 %v6467, 7
  %v6469 = vsub.s32 0, %v6468
  %v6470 = vrot.slane %v6465, %v6469
  %v6536 = vunpack.c.l.b16 %v6401
  %v6537 = vunpack.c.l.b16 %v6402
  %v6538 = vunpack.c.l.b16 %v6403
  %v6539 = vunpack.c.l.b16 %v6404
  %v6540 = vunpack.c.l.b16 %v6405
  %v6541 = vunpack.c.l.b16 %v6406
  %v6542 = vunpack.c.l.b16 %v6407
  %v6543 = vunpack.c.l.b16 %v6408
  %v6544 = vunpack.c.l.b16 %v6409
  %v6545 = vunpack.c.l.b16 %v6410
  %v6546 = vunpack.c.l.b16 %v6411
  %v6547 = vunpack.c.l.b16 %v6412
  %v6548 = vunpack.c.l.b16 %v6413
  %v6549 = vunpack.c.l.b16 %v6414
  %v6550 = vunpack.c.l.b16 %v6415
  %v6551 = vunpack.c.l.b16 %v6416
  %v6552 = vunpack.c.l.b16 %v6417
  %v6553 = vunpack.c.l.b16 %v6418
  %v6554 = vunpack.c.l.b16 %v6419
  %v6555 = vunpack.c.l.b16 %v6420
  %v6556 = vunpack.c.l.b16 %v6421
  %v6557 = vunpack.c.l.b16 %v6422
  %v6558 = vunpack.c.l.b16 %v6423
  %v6559 = vunpack.c.l.b16 %v6424
  %v6560 = vunpack.c.l.b16 %v6425
  %v6561 = vunpack.c.l.b16 %v6426
  %v6562 = vunpack.c.l.b16 %v6427
  %v6563 = vunpack.c.l.b16 %v6428
  %v6564 = vunpack.c.l.b16 %v6429
  %v6565 = vunpack.c.l.b16 %v6430
  %v6566 = vunpack.c.l.b16 %v6431
  %v6567 = vunpack.c.l.b16 %v6432
  %v6568 = vunpack.c.l.b16 %v6433
  %v6569 = vunpack.c.l.b16 %v6434
  %v6570 = vunpack.c.l.b16 %v6435
  %v6571 = vunpack.c.l.b16 %v6436
  %v6572 = vunpack.c.l.b16 %v6437
  %v6573 = vunpack.c.l.b16 %v6438
  %v6574 = vunpack.c.l.b16 %v6439
  %v6575 = vunpack.c.l.b16 %v6440
  %v6576 = vunpack.c.l.b16 %v6441
  %v6577 = vunpack.c.l.b16 %v6442
  %v6578 = vunpack.c.l.b16 %v6443
  %v6579 = vunpack.c.l.b16 %v6444
  %v6580 = vunpack.c.l.b16 %v6445
  %v6581 = vunpack.c.l.b16 %v6446
  %v6582 = vunpack.c.l.b16 %v6447
  %v6583 = vunpack.c.l.b16 %v6448
  %v6584 = vunpack.c.l.b16 %v6449
  %v6585 = vunpack.c.l.b16 %v6450
  %v6586 = vunpack.c.l.b16 %v6451
  %v6587 = vunpack.c.l.b16 %v6452
  %v6588 = vunpack.c.l.b16 %v6453
  %v6589 = vunpack.c.l.b16 %v6454
  %v6590 = vunpack.c.l.b16 %v6455
  %v6591 = vunpack.c.l.b16 %v6456
  %v6592 = vunpack.c.l.b16 %v6457
  %v6593 = vunpack.c.l.b16 %v6458
  %v6594 = vunpack.c.l.b16 %v6459
  %v6595 = vunpack.c.l.b16 %v6460
  %v6596 = vunpack.c.l.b16 %v6461
  %v6597 = vunpack.c.l.b16 %v6462
  %v6598 = vunpack.c.l.b16 %v6463
  %v6599 = vunpack.c.l.b16 %v6464
  %v6600 = vpack.c.b16 %v6537, %v6536
  %v6601 = vpack.c.b16 %v6539, %v6538
  %v6602 = vpack.c.b16 %v6541, %v6540
  %v6603 = vpack.c.b16 %v6543, %v6542
  %v6604 = vpack.c.b16 %v6545, %v6544
  %v6605 = vpack.c.b16 %v6547, %v6546
  %v6606 = vpack.c.b16 %v6549, %v6548
  %v6607 = vpack.c.b16 %v6551, %v6550
  %v6608 = vpack.c.b16 %v6553, %v6552
  %v6609 = vpack.c.b16 %v6555, %v6554
  %v6610 = vpack.c.b16 %v6557, %v6556
  %v6611 = vpack.c.b16 %v6559, %v6558
  %v6612 = vpack.c.b16 %v6561, %v6560
  %v6613 = vpack.c.b16 %v6563, %v6562
  %v6614 = vpack.c.b16 %v6565, %v6564
  %v6615 = vpack.c.b16 %v6567, %v6566
  %v6616 = vpack.c.b16 %v6569, %v6568
  %v6617 = vpack.c.b16 %v6571, %v6570
  %v6618 = vpack.c.b16 %v6573, %v6572
  %v6619 = vpack.c.b16 %v6575, %v6574
  %v6620 = vpack.c.b16 %v6577, %v6576
  %v6621 = vpack.c.b16 %v6579, %v6578
  %v6622 = vpack.c.b16 %v6581, %v6580
  %v6623 = vpack.c.b16 %v6583, %v6582
  %v6624 = vpack.c.b16 %v6585, %v6584
  %v6625 = vpack.c.b16 %v6587, %v6586
  %v6626 = vpack.c.b16 %v6589, %v6588
  %v6627 = vpack.c.b16 %v6591, %v6590
  %v6628 = vpack.c.b16 %v6593, %v6592
  %v6629 = vpack.c.b16 %v6595, %v6594
  %v6630 = vpack.c.b16 %v6597, %v6596
  %v6631 = vpack.c.b16 %v6599, %v6598
  %6664 = vmatprep.subr.bf16.mxu0 0
  %6665 = vmatpush1.bf16.msra.mxu0 %v6600
  %6666 = vmatprep.subr.bf16.mxu0 0
  %6667 = vmatpush1.bf16.msra.mxu0 %v6601
  %6668 = vmatprep.subr.bf16.mxu0 0
  %6669 = vmatpush1.bf16.msra.mxu0 %v6602
  %6670 = vmatprep.subr.bf16.mxu0 0
  %6671 = vmatpush1.bf16.msra.mxu0 %v6603
  %6672 = vmatprep.subr.bf16.mxu0 0
  %6673 = vmatpush1.bf16.msra.mxu0 %v6604
  %6674 = vmatprep.subr.bf16.mxu0 0
  %6675 = vmatpush1.bf16.msra.mxu0 %v6605
  %6676 = vmatprep.subr.bf16.mxu0 0
  %6677 = vmatpush1.bf16.msra.mxu0 %v6606
  %6678 = vmatprep.subr.bf16.mxu0 0
  %6679 = vmatpush1.bf16.msra.mxu0 %v6607
  %6680 = vmatprep.subr.bf16.mxu0 0
  %6681 = vmatpush1.bf16.msra.mxu0 %v6608
  %6682 = vmatprep.subr.bf16.mxu0 0
  %6683 = vmatpush1.bf16.msra.mxu0 %v6609
  %6684 = vmatprep.subr.bf16.mxu0 0
  %6685 = vmatpush1.bf16.msra.mxu0 %v6610
  %6686 = vmatprep.subr.bf16.mxu0 0
  %6687 = vmatpush1.bf16.msra.mxu0 %v6611
  %6688 = vmatprep.subr.bf16.mxu0 0
  %6689 = vmatpush1.bf16.msra.mxu0 %v6612
  %6690 = vmatprep.subr.bf16.mxu0 0
  %6691 = vmatpush1.bf16.msra.mxu0 %v6613
  %6692 = vmatprep.subr.bf16.mxu0 0
  %6693 = vmatpush1.bf16.msra.mxu0 %v6614
  %6694 = vmatprep.subr.bf16.mxu0 0
  %6695 = vmatpush1.bf16.msra.mxu0 %v6615
  %6696 = vmatprep.mubr.bf16.mxu0 %v6398
  %6697 = vmatmul.mubr.bf16.gmra.mrb[0].mxu0 %v6397
  %v6698 = vpop.f32.mrb[0].mxu0
  %v6699 = vadd.f32 %v6470, %v6698
  %v6700 = vpop.f32.mrb[0].mxu0
  %v6701 = vpop.f32.mrb[0].mxu0
  %v6702 = vpop.f32.mrb[0].mxu0
  %6703 = vdwg.mxu0
  %6704 = vmatprep.subr.bf16.mxu0 0
  %6705 = vmatpush1.bf16.msra.mxu0 %v6616
  %6706 = vmatprep.subr.bf16.mxu0 0
  %6707 = vmatpush1.bf16.msra.mxu0 %v6617
  %6708 = vmatprep.subr.bf16.mxu0 0
  %6709 = vmatpush1.bf16.msra.mxu0 %v6618
  %6710 = vmatprep.subr.bf16.mxu0 0
  %6711 = vmatpush1.bf16.msra.mxu0 %v6619
  %6712 = vmatprep.subr.bf16.mxu0 0
  %6713 = vmatpush1.bf16.msra.mxu0 %v6620
  %6714 = vmatprep.subr.bf16.mxu0 0
  %6715 = vmatpush1.bf16.msra.mxu0 %v6621
  %6716 = vmatprep.subr.bf16.mxu0 0
  %6717 = vmatpush1.bf16.msra.mxu0 %v6622
  %6718 = vmatprep.subr.bf16.mxu0 0
  %6719 = vmatpush1.bf16.msra.mxu0 %v6623
  %6720 = vmatprep.subr.bf16.mxu0 0
  %6721 = vmatpush1.bf16.msra.mxu0 %v6624
  %6722 = vmatprep.subr.bf16.mxu0 0
  %6723 = vmatpush1.bf16.msra.mxu0 %v6625
  %6724 = vmatprep.subr.bf16.mxu0 0
  %6725 = vmatpush1.bf16.msra.mxu0 %v6626
  %6726 = vmatprep.subr.bf16.mxu0 0
  %6727 = vmatpush1.bf16.msra.mxu0 %v6627
  %6728 = vmatprep.subr.bf16.mxu0 0
  %6729 = vmatpush1.bf16.msra.mxu0 %v6628
  %6730 = vmatprep.subr.bf16.mxu0 0
  %6731 = vmatpush1.bf16.msra.mxu0 %v6629
  %6732 = vmatprep.subr.bf16.mxu0 0
  %6733 = vmatpush1.bf16.msra.mxu0 %v6630
  %6734 = vmatprep.subr.bf16.mxu0 0
  %6735 = vmatpush1.bf16.msra.mxu0 %v6631
  %6736 = vmatprep.mubr.bf16.mxu0 %v6400
  %6737 = vmatmul.mubr.bf16.gmra.mrb[0].mxu0 %v6399
  %v6738 = vpop.f32.mrb[0].mxu0
  %v6739 = vadd.f32 %v6699, %v6738
  %v6740 = vpop.f32.mrb[0].mxu0
  %v6741 = vpop.f32.mrb[0].mxu0
  %v6742 = vpop.f32.mrb[0].mxu0
  %6743 = vdwg.mxu0
  %v6744 = vmax.f32 %v6739, 0.0
  %6745 = vst.msk [vmem:[#allocation3 + $0x10] sm:$0xff] %vm5323, %v6744
  %v6746 = vld [vmem:[#allocation2 + $0xa0] sm:$0xff]
  %v6747 = vld [vmem:[#allocation2 + $0xa8] sm:$0xff]
  %v6748 = vld [vmem:[#allocation2 + $0xb0] sm:$0xff]
  %v6749 = vld [vmem:[#allocation2 + $0xb8] sm:$0xff]
  %v6750 = vpack.c.bf16 %v6746, %v6746
  %v6751 = vpack.c.bf16 %v6747, %v6747
  %v6752 = vpack.c.bf16 %v6748, %v6748
  %v6753 = vpack.c.bf16 %v6749, %v6749
  %v6754 = vld [vmem:[%s3] sm:$0xf]
  %v6755 = vld [vmem:[%s3 + $0x4] sm:$0xf]
  %v6756 = vld [vmem:[%s3 + $0x8] sm:$0xf]
  %v6757 = vld [vmem:[%s3 + $0xc] sm:$0xf]
  %v6758 = vld [vmem:[%s3 + $0x10] sm:$0xf]
  %v6759 = vld [vmem:[%s3 + $0x14] sm:$0xf]
  %v6760 = vld [vmem:[%s3 + $0x18] sm:$0xf]
  %v6761 = vld [vmem:[%s3 + $0x1c] sm:$0xf]
  %v6762 = vld [vmem:[%s3 + $0x20] sm:$0xf]
  %v6763 = vld [vmem:[%s3 + $0x24] sm:$0xf]
  %v6764 = vld [vmem:[%s3 + $0x28] sm:$0xf]
  %v6765 = vld [vmem:[%s3 + $0x2c] sm:$0xf]
  %v6766 = vld [vmem:[%s3 + $0x30] sm:$0xf]
  %v6767 = vld [vmem:[%s3 + $0x34] sm:$0xf]
  %v6768 = vld [vmem:[%s3 + $0x38] sm:$0xf]
  %v6769 = vld [vmem:[%s3 + $0x3c] sm:$0xf]
  %v6770 = vld [vmem:[%s3 + $0x40] sm:$0xf]
  %v6771 = vld [vmem:[%s3 + $0x44] sm:$0xf]
  %v6772 = vld [vmem:[%s3 + $0x48] sm:$0xf]
  %v6773 = vld [vmem:[%s3 + $0x4c] sm:$0xf]
  %v6774 = vld [vmem:[%s3 + $0x50] sm:$0xf]
  %v6775 = vld [vmem:[%s3 + $0x54] sm:$0xf]
  %v6776 = vld [vmem:[%s3 + $0x58] sm:$0xf]
  %v6777 = vld [vmem:[%s3 + $0x5c] sm:$0xf]
  %v6778 = vld [vmem:[%s3 + $0x60] sm:$0xf]
  %v6779 = vld [vmem:[%s3 + $0x64] sm:$0xf]
  %v6780 = vld [vmem:[%s3 + $0x68] sm:$0xf]
  %v6781 = vld [vmem:[%s3 + $0x6c] sm:$0xf]
  %v6782 = vld [vmem:[%s3 + $0x70] sm:$0xf]
  %v6783 = vld [vmem:[%s3 + $0x74] sm:$0xf]
  %v6784 = vld [vmem:[%s3 + $0x78] sm:$0xf]
  %v6785 = vld [vmem:[%s3 + $0x7c] sm:$0xf]
  %v6786 = vld [vmem:[%s3 + $0x80] sm:$0xf]
  %v6787 = vld [vmem:[%s3 + $0x84] sm:$0xf]
  %v6788 = vld [vmem:[%s3 + $0x88] sm:$0xf]
  %v6789 = vld [vmem:[%s3 + $0x8c] sm:$0xf]
  %v6790 = vld [vmem:[%s3 + $0x90] sm:$0xf]
  %v6791 = vld [vmem:[%s3 + $0x94] sm:$0xf]
  %v6792 = vld [vmem:[%s3 + $0x98] sm:$0xf]
  %v6793 = vld [vmem:[%s3 + $0x9c] sm:$0xf]
  %v6794 = vld [vmem:[%s3 + $0xa0] sm:$0xf]
  %v6795 = vld [vmem:[%s3 + $0xa4] sm:$0xf]
  %v6796 = vld [vmem:[%s3 + $0xa8] sm:$0xf]
  %v6797 = vld [vmem:[%s3 + $0xac] sm:$0xf]
  %v6798 = vld [vmem:[%s3 + $0xb0] sm:$0xf]
  %v6799 = vld [vmem:[%s3 + $0xb4] sm:$0xf]
  %v6800 = vld [vmem:[%s3 + $0xb8] sm:$0xf]
  %v6801 = vld [vmem:[%s3 + $0xbc] sm:$0xf]
  %v6802 = vld [vmem:[%s3 + $0xc0] sm:$0xf]
  %v6803 = vld [vmem:[%s3 + $0xc4] sm:$0xf]
  %v6804 = vld [vmem:[%s3 + $0xc8] sm:$0xf]
  %v6805 = vld [vmem:[%s3 + $0xcc] sm:$0xf]
  %v6806 = vld [vmem:[%s3 + $0xd0] sm:$0xf]
  %v6807 = vld [vmem:[%s3 + $0xd4] sm:$0xf]
  %v6808 = vld [vmem:[%s3 + $0xd8] sm:$0xf]
  %v6809 = vld [vmem:[%s3 + $0xdc] sm:$0xf]
  %v6810 = vld [vmem:[%s3 + $0xe0] sm:$0xf]
  %v6811 = vld [vmem:[%s3 + $0xe4] sm:$0xf]
  %v6812 = vld [vmem:[%s3 + $0xe8] sm:$0xf]
  %v6813 = vld [vmem:[%s3 + $0xec] sm:$0xf]
  %v6814 = vld [vmem:[%s3 + $0xf0] sm:$0xf]
  %v6815 = vld [vmem:[%s3 + $0xf4] sm:$0xf]
  %v6816 = vld [vmem:[%s3 + $0xf8] sm:$0xf]
  %v6817 = vld [vmem:[%s3 + $0xfc] sm:$0xf]
  %v6818 = vld [vmem:[%s4] sm:$0x1]
  %v6820 = vlaneseq
  %v6821 = vshrl.u32 %v6820, 7
  %v6822 = vsub.s32 0, %v6821
  %v6823 = vrot.slane %v6818, %v6822
  %v6889 = vunpack.c.l.b16 %v6754
  %v6890 = vunpack.c.l.b16 %v6755
  %v6891 = vunpack.c.l.b16 %v6756
  %v6892 = vunpack.c.l.b16 %v6757
  %v6893 = vunpack.c.l.b16 %v6758
  %v6894 = vunpack.c.l.b16 %v6759
  %v6895 = vunpack.c.l.b16 %v6760
  %v6896 = vunpack.c.l.b16 %v6761
  %v6897 = vunpack.c.l.b16 %v6762
  %v6898 = vunpack.c.l.b16 %v6763
  %v6899 = vunpack.c.l.b16 %v6764
  %v6900 = vunpack.c.l.b16 %v6765
  %v6901 = vunpack.c.l.b16 %v6766
  %v6902 = vunpack.c.l.b16 %v6767
  %v6903 = vunpack.c.l.b16 %v6768
  %v6904 = vunpack.c.l.b16 %v6769
  %v6905 = vunpack.c.l.b16 %v6770
  %v6906 = vunpack.c.l.b16 %v6771
  %v6907 = vunpack.c.l.b16 %v6772
  %v6908 = vunpack.c.l.b16 %v6773
  %v6909 = vunpack.c.l.b16 %v6774
  %v6910 = vunpack.c.l.b16 %v6775
  %v6911 = vunpack.c.l.b16 %v6776
  %v6912 = vunpack.c.l.b16 %v6777
  %v6913 = vunpack.c.l.b16 %v6778
  %v6914 = vunpack.c.l.b16 %v6779
  %v6915 = vunpack.c.l.b16 %v6780
  %v6916 = vunpack.c.l.b16 %v6781
  %v6917 = vunpack.c.l.b16 %v6782
  %v6918 = vunpack.c.l.b16 %v6783
  %v6919 = vunpack.c.l.b16 %v6784
  %v6920 = vunpack.c.l.b16 %v6785
  %v6921 = vunpack.c.l.b16 %v6786
  %v6922 = vunpack.c.l.b16 %v6787
  %v6923 = vunpack.c.l.b16 %v6788
  %v6924 = vunpack.c.l.b16 %v6789
  %v6925 = vunpack.c.l.b16 %v6790
  %v6926 = vunpack.c.l.b16 %v6791
  %v6927 = vunpack.c.l.b16 %v6792
  %v6928 = vunpack.c.l.b16 %v6793
  %v6929 = vunpack.c.l.b16 %v6794
  %v6930 = vunpack.c.l.b16 %v6795
  %v6931 = vunpack.c.l.b16 %v6796
  %v6932 = vunpack.c.l.b16 %v6797
  %v6933 = vunpack.c.l.b16 %v6798
  %v6934 = vunpack.c.l.b16 %v6799
  %v6935 = vunpack.c.l.b16 %v6800
  %v6936 = vunpack.c.l.b16 %v6801
  %v6937 = vunpack.c.l.b16 %v6802
  %v6938 = vunpack.c.l.b16 %v6803
  %v6939 = vunpack.c.l.b16 %v6804
  %v6940 = vunpack.c.l.b16 %v6805
  %v6941 = vunpack.c.l.b16 %v6806
  %v6942 = vunpack.c.l.b16 %v6807
  %v6943 = vunpack.c.l.b16 %v6808
  %v6944 = vunpack.c.l.b16 %v6809
  %v6945 = vunpack.c.l.b16 %v6810
  %v6946 = vunpack.c.l.b16 %v6811
  %v6947 = vunpack.c.l.b16 %v6812
  %v6948 = vunpack.c.l.b16 %v6813
  %v6949 = vunpack.c.l.b16 %v6814
  %v6950 = vunpack.c.l.b16 %v6815
  %v6951 = vunpack.c.l.b16 %v6816
  %v6952 = vunpack.c.l.b16 %v6817
  %v6953 = vpack.c.b16 %v6890, %v6889
  %v6954 = vpack.c.b16 %v6892, %v6891
  %v6955 = vpack.c.b16 %v6894, %v6893
  %v6956 = vpack.c.b16 %v6896, %v6895
  %v6957 = vpack.c.b16 %v6898, %v6897
  %v6958 = vpack.c.b16 %v6900, %v6899
  %v6959 = vpack.c.b16 %v6902, %v6901
  %v6960 = vpack.c.b16 %v6904, %v6903
  %v6961 = vpack.c.b16 %v6906, %v6905
  %v6962 = vpack.c.b16 %v6908, %v6907
  %v6963 = vpack.c.b16 %v6910, %v6909
  %v6964 = vpack.c.b16 %v6912, %v6911
  %v6965 = vpack.c.b16 %v6914, %v6913
  %v6966 = vpack.c.b16 %v6916, %v6915
  %v6967 = vpack.c.b16 %v6918, %v6917
  %v6968 = vpack.c.b16 %v6920, %v6919
  %v6969 = vpack.c.b16 %v6922, %v6921
  %v6970 = vpack.c.b16 %v6924, %v6923
  %v6971 = vpack.c.b16 %v6926, %v6925
  %v6972 = vpack.c.b16 %v6928, %v6927
  %v6973 = vpack.c.b16 %v6930, %v6929
  %v6974 = vpack.c.b16 %v6932, %v6931
  %v6975 = vpack.c.b16 %v6934, %v6933
  %v6976 = vpack.c.b16 %v6936, %v6935
  %v6977 = vpack.c.b16 %v6938, %v6937
  %v6978 = vpack.c.b16 %v6940, %v6939
  %v6979 = vpack.c.b16 %v6942, %v6941
  %v6980 = vpack.c.b16 %v6944, %v6943
  %v6981 = vpack.c.b16 %v6946, %v6945
  %v6982 = vpack.c.b16 %v6948, %v6947
  %v6983 = vpack.c.b16 %v6950, %v6949
  %v6984 = vpack.c.b16 %v6952, %v6951
  %7017 = vmatprep.subr.bf16.mxu0 0
  %7018 = vmatpush1.bf16.msra.mxu0 %v6953
  %7019 = vmatprep.subr.bf16.mxu0 0
  %7020 = vmatpush1.bf16.msra.mxu0 %v6954
  %7021 = vmatprep.subr.bf16.mxu0 0
  %7022 = vmatpush1.bf16.msra.mxu0 %v6955
  %7023 = vmatprep.subr.bf16.mxu0 0
  %7024 = vmatpush1.bf16.msra.mxu0 %v6956
  %7025 = vmatprep.subr.bf16.mxu0 0
  %7026 = vmatpush1.bf16.msra.mxu0 %v6957
  %7027 = vmatprep.subr.bf16.mxu0 0
  %7028 = vmatpush1.bf16.msra.mxu0 %v6958
  %7029 = vmatprep.subr.bf16.mxu0 0
  %7030 = vmatpush1.bf16.msra.mxu0 %v6959
  %7031 = vmatprep.subr.bf16.mxu0 0
  %7032 = vmatpush1.bf16.msra.mxu0 %v6960
  %7033 = vmatprep.subr.bf16.mxu0 0
  %7034 = vmatpush1.bf16.msra.mxu0 %v6961
  %7035 = vmatprep.subr.bf16.mxu0 0
  %7036 = vmatpush1.bf16.msra.mxu0 %v6962
  %7037 = vmatprep.subr.bf16.mxu0 0
  %7038 = vmatpush1.bf16.msra.mxu0 %v6963
  %7039 = vmatprep.subr.bf16.mxu0 0
  %7040 = vmatpush1.bf16.msra.mxu0 %v6964
  %7041 = vmatprep.subr.bf16.mxu0 0
  %7042 = vmatpush1.bf16.msra.mxu0 %v6965
  %7043 = vmatprep.subr.bf16.mxu0 0
  %7044 = vmatpush1.bf16.msra.mxu0 %v6966
  %7045 = vmatprep.subr.bf16.mxu0 0
  %7046 = vmatpush1.bf16.msra.mxu0 %v6967
  %7047 = vmatprep.subr.bf16.mxu0 0
  %7048 = vmatpush1.bf16.msra.mxu0 %v6968
  %7049 = vmatprep.mubr.bf16.mxu0 %v6751
  %7050 = vmatmul.mubr.bf16.gmra.mrb[0].mxu0 %v6750
  %v7051 = vpop.f32.mrb[0].mxu0
  %v7052 = vadd.f32 %v6823, %v7051
  %v7053 = vpop.f32.mrb[0].mxu0
  %v7054 = vpop.f32.mrb[0].mxu0
  %v7055 = vpop.f32.mrb[0].mxu0
  %7056 = vdwg.mxu0
  %7057 = vmatprep.subr.bf16.mxu0 0
  %7058 = vmatpush1.bf16.msra.mxu0 %v6969
  %7059 = vmatprep.subr.bf16.mxu0 0
  %7060 = vmatpush1.bf16.msra.mxu0 %v6970
  %7061 = vmatprep.subr.bf16.mxu0 0
  %7062 = vmatpush1.bf16.msra.mxu0 %v6971
  %7063 = vmatprep.subr.bf16.mxu0 0
  %7064 = vmatpush1.bf16.msra.mxu0 %v6972
  %7065 = vmatprep.subr.bf16.mxu0 0
  %7066 = vmatpush1.bf16.msra.mxu0 %v6973
  %7067 = vmatprep.subr.bf16.mxu0 0
  %7068 = vmatpush1.bf16.msra.mxu0 %v6974
  %7069 = vmatprep.subr.bf16.mxu0 0
  %7070 = vmatpush1.bf16.msra.mxu0 %v6975
  %7071 = vmatprep.subr.bf16.mxu0 0
  %7072 = vmatpush1.bf16.msra.mxu0 %v6976
  %7073 = vmatprep.subr.bf16.mxu0 0
  %7074 = vmatpush1.bf16.msra.mxu0 %v6977
  %7075 = vmatprep.subr.bf16.mxu0 0
  %7076 = vmatpush1.bf16.msra.mxu0 %v6978
  %7077 = vmatprep.subr.bf16.mxu0 0
  %7078 = vmatpush1.bf16.msra.mxu0 %v6979
  %7079 = vmatprep.subr.bf16.mxu0 0
  %7080 = vmatpush1.bf16.msra.mxu0 %v6980
  %7081 = vmatprep.subr.bf16.mxu0 0
  %7082 = vmatpush1.bf16.msra.mxu0 %v6981
  %7083 = vmatprep.subr.bf16.mxu0 0
  %7084 = vmatpush1.bf16.msra.mxu0 %v6982
  %7085 = vmatprep.subr.bf16.mxu0 0
  %7086 = vmatpush1.bf16.msra.mxu0 %v6983
  %7087 = vmatprep.subr.bf16.mxu0 0
  %7088 = vmatpush1.bf16.msra.mxu0 %v6984
  %7089 = vmatprep.mubr.bf16.mxu0 %v6753
  %7090 = vmatmul.mubr.bf16.gmra.mrb[0].mxu0 %v6752
  %v7091 = vpop.f32.mrb[0].mxu0
  %v7092 = vadd.f32 %v7052, %v7091
  %v7093 = vpop.f32.mrb[0].mxu0
  %v7094 = vpop.f32.mrb[0].mxu0
  %v7095 = vpop.f32.mrb[0].mxu0
  %7096 = vdwg.mxu0
  %v7097 = vmax.f32 %v7092, 0.0
  %7099 = vrot.lane.b32.xlu0 %v7097, 64
  %v7100 = vpop.permute.xlu0 %7099
  %7102 = vst.msk [vmem:[#allocation3 + $0x10] sm:$0xff] %vm5681, %v7100
  %v7103 = vld [vmem:[#allocation2 + $0xc0] sm:$0xff]
  %v7104 = vld [vmem:[#allocation2 + $0xc8] sm:$0xff]
  %v7105 = vld [vmem:[#allocation2 + $0xd0] sm:$0xff]
  %v7106 = vld [vmem:[#allocation2 + $0xd8] sm:$0xff]
  %v7107 = vpack.c.bf16 %v7103, %v7103
  %v7108 = vpack.c.bf16 %v7104, %v7104
  %v7109 = vpack.c.bf16 %v7105, %v7105
  %v7110 = vpack.c.bf16 %v7106, %v7106
  %v7111 = vld [vmem:[%s3] sm:$0xf]
  %v7112 = vld [vmem:[%s3 + $0x4] sm:$0xf]
  %v7113 = vld [vmem:[%s3 + $0x8] sm:$0xf]
  %v7114 = vld [vmem:[%s3 + $0xc] sm:$0xf]
  %v7115 = vld [vmem:[%s3 + $0x10] sm:$0xf]
  %v7116 = vld [vmem:[%s3 + $0x14] sm:$0xf]
  %v7117 = vld [vmem:[%s3 + $0x18] sm:$0xf]
  %v7118 = vld [vmem:[%s3 + $0x1c] sm:$0xf]
  %v7119 = vld [vmem:[%s3 + $0x20] sm:$0xf]
  %v7120 = vld [vmem:[%s3 + $0x24] sm:$0xf]
  %v7121 = vld [vmem:[%s3 + $0x28] sm:$0xf]
  %v7122 = vld [vmem:[%s3 + $0x2c] sm:$0xf]
  %v7123 = vld [vmem:[%s3 + $0x30] sm:$0xf]
  %v7124 = vld [vmem:[%s3 + $0x34] sm:$0xf]
  %v7125 = vld [vmem:[%s3 + $0x38] sm:$0xf]
  %v7126 = vld [vmem:[%s3 + $0x3c] sm:$0xf]
  %v7127 = vld [vmem:[%s3 + $0x40] sm:$0xf]
  %v7128 = vld [vmem:[%s3 + $0x44] sm:$0xf]
  %v7129 = vld [vmem:[%s3 + $0x48] sm:$0xf]
  %v7130 = vld [vmem:[%s3 + $0x4c] sm:$0xf]
  %v7131 = vld [vmem:[%s3 + $0x50] sm:$0xf]
  %v7132 = vld [vmem:[%s3 + $0x54] sm:$0xf]
  %v7133 = vld [vmem:[%s3 + $0x58] sm:$0xf]
  %v7134 = vld [vmem:[%s3 + $0x5c] sm:$0xf]
  %v7135 = vld [vmem:[%s3 + $0x60] sm:$0xf]
  %v7136 = vld [vmem:[%s3 + $0x64] sm:$0xf]
  %v7137 = vld [vmem:[%s3 + $0x68] sm:$0xf]
  %v7138 = vld [vmem:[%s3 + $0x6c] sm:$0xf]
  %v7139 = vld [vmem:[%s3 + $0x70] sm:$0xf]
  %v7140 = vld [vmem:[%s3 + $0x74] sm:$0xf]
  %v7141 = vld [vmem:[%s3 + $0x78] sm:$0xf]
  %v7142 = vld [vmem:[%s3 + $0x7c] sm:$0xf]
  %v7143 = vld [vmem:[%s3 + $0x80] sm:$0xf]
  %v7144 = vld [vmem:[%s3 + $0x84] sm:$0xf]
  %v7145 = vld [vmem:[%s3 + $0x88] sm:$0xf]
  %v7146 = vld [vmem:[%s3 + $0x8c] sm:$0xf]
  %v7147 = vld [vmem:[%s3 + $0x90] sm:$0xf]
  %v7148 = vld [vmem:[%s3 + $0x94] sm:$0xf]
  %v7149 = vld [vmem:[%s3 + $0x98] sm:$0xf]
  %v7150 = vld [vmem:[%s3 + $0x9c] sm:$0xf]
  %v7151 = vld [vmem:[%s3 + $0xa0] sm:$0xf]
  %v7152 = vld [vmem:[%s3 + $0xa4] sm:$0xf]
  %v7153 = vld [vmem:[%s3 + $0xa8] sm:$0xf]
  %v7154 = vld [vmem:[%s3 + $0xac] sm:$0xf]
  %v7155 = vld [vmem:[%s3 + $0xb0] sm:$0xf]
  %v7156 = vld [vmem:[%s3 + $0xb4] sm:$0xf]
  %v7157 = vld [vmem:[%s3 + $0xb8] sm:$0xf]
  %v7158 = vld [vmem:[%s3 + $0xbc] sm:$0xf]
  %v7159 = vld [vmem:[%s3 + $0xc0] sm:$0xf]
  %v7160 = vld [vmem:[%s3 + $0xc4] sm:$0xf]
  %v7161 = vld [vmem:[%s3 + $0xc8] sm:$0xf]
  %v7162 = vld [vmem:[%s3 + $0xcc] sm:$0xf]
  %v7163 = vld [vmem:[%s3 + $0xd0] sm:$0xf]
  %v7164 = vld [vmem:[%s3 + $0xd4] sm:$0xf]
  %v7165 = vld [vmem:[%s3 + $0xd8] sm:$0xf]
  %v7166 = vld [vmem:[%s3 + $0xdc] sm:$0xf]
  %v7167 = vld [vmem:[%s3 + $0xe0] sm:$0xf]
  %v7168 = vld [vmem:[%s3 + $0xe4] sm:$0xf]
  %v7169 = vld [vmem:[%s3 + $0xe8] sm:$0xf]
  %v7170 = vld [vmem:[%s3 + $0xec] sm:$0xf]
  %v7171 = vld [vmem:[%s3 + $0xf0] sm:$0xf]
  %v7172 = vld [vmem:[%s3 + $0xf4] sm:$0xf]
  %v7173 = vld [vmem:[%s3 + $0xf8] sm:$0xf]
  %v7174 = vld [vmem:[%s3 + $0xfc] sm:$0xf]
  %v7175 = vld [vmem:[%s4] sm:$0x1]
  %v7177 = vlaneseq
  %v7178 = vshrl.u32 %v7177, 7
  %v7179 = vsub.s32 0, %v7178
  %v7180 = vrot.slane %v7175, %v7179
  %v7246 = vunpack.c.l.b16 %v7111
  %v7247 = vunpack.c.l.b16 %v7112
  %v7248 = vunpack.c.l.b16 %v7113
  %v7249 = vunpack.c.l.b16 %v7114
  %v7250 = vunpack.c.l.b16 %v7115
  %v7251 = vunpack.c.l.b16 %v7116
  %v7252 = vunpack.c.l.b16 %v7117
  %v7253 = vunpack.c.l.b16 %v7118
  %v7254 = vunpack.c.l.b16 %v7119
  %v7255 = vunpack.c.l.b16 %v7120
  %v7256 = vunpack.c.l.b16 %v7121
  %v7257 = vunpack.c.l.b16 %v7122
  %v7258 = vunpack.c.l.b16 %v7123
  %v7259 = vunpack.c.l.b16 %v7124
  %v7260 = vunpack.c.l.b16 %v7125
  %v7261 = vunpack.c.l.b16 %v7126
  %v7262 = vunpack.c.l.b16 %v7127
  %v7263 = vunpack.c.l.b16 %v7128
  %v7264 = vunpack.c.l.b16 %v7129
  %v7265 = vunpack.c.l.b16 %v7130
  %v7266 = vunpack.c.l.b16 %v7131
  %v7267 = vunpack.c.l.b16 %v7132
  %v7268 = vunpack.c.l.b16 %v7133
  %v7269 = vunpack.c.l.b16 %v7134
  %v7270 = vunpack.c.l.b16 %v7135
  %v7271 = vunpack.c.l.b16 %v7136
  %v7272 = vunpack.c.l.b16 %v7137
  %v7273 = vunpack.c.l.b16 %v7138
  %v7274 = vunpack.c.l.b16 %v7139
  %v7275 = vunpack.c.l.b16 %v7140
  %v7276 = vunpack.c.l.b16 %v7141
  %v7277 = vunpack.c.l.b16 %v7142
  %v7278 = vunpack.c.l.b16 %v7143
  %v7279 = vunpack.c.l.b16 %v7144
  %v7280 = vunpack.c.l.b16 %v7145
  %v7281 = vunpack.c.l.b16 %v7146
  %v7282 = vunpack.c.l.b16 %v7147
  %v7283 = vunpack.c.l.b16 %v7148
  %v7284 = vunpack.c.l.b16 %v7149
  %v7285 = vunpack.c.l.b16 %v7150
  %v7286 = vunpack.c.l.b16 %v7151
  %v7287 = vunpack.c.l.b16 %v7152
  %v7288 = vunpack.c.l.b16 %v7153
  %v7289 = vunpack.c.l.b16 %v7154
  %v7290 = vunpack.c.l.b16 %v7155
  %v7291 = vunpack.c.l.b16 %v7156
  %v7292 = vunpack.c.l.b16 %v7157
  %v7293 = vunpack.c.l.b16 %v7158
  %v7294 = vunpack.c.l.b16 %v7159
  %v7295 = vunpack.c.l.b16 %v7160
  %v7296 = vunpack.c.l.b16 %v7161
  %v7297 = vunpack.c.l.b16 %v7162
  %v7298 = vunpack.c.l.b16 %v7163
  %v7299 = vunpack.c.l.b16 %v7164
  %v7300 = vunpack.c.l.b16 %v7165
  %v7301 = vunpack.c.l.b16 %v7166
  %v7302 = vunpack.c.l.b16 %v7167
  %v7303 = vunpack.c.l.b16 %v7168
  %v7304 = vunpack.c.l.b16 %v7169
  %v7305 = vunpack.c.l.b16 %v7170
  %v7306 = vunpack.c.l.b16 %v7171
  %v7307 = vunpack.c.l.b16 %v7172
  %v7308 = vunpack.c.l.b16 %v7173
  %v7309 = vunpack.c.l.b16 %v7174
  %v7310 = vpack.c.b16 %v7247, %v7246
  %v7311 = vpack.c.b16 %v7249, %v7248
  %v7312 = vpack.c.b16 %v7251, %v7250
  %v7313 = vpack.c.b16 %v7253, %v7252
  %v7314 = vpack.c.b16 %v7255, %v7254
  %v7315 = vpack.c.b16 %v7257, %v7256
  %v7316 = vpack.c.b16 %v7259, %v7258
  %v7317 = vpack.c.b16 %v7261, %v7260
  %v7318 = vpack.c.b16 %v7263, %v7262
  %v7319 = vpack.c.b16 %v7265, %v7264
  %v7320 = vpack.c.b16 %v7267, %v7266
  %v7321 = vpack.c.b16 %v7269, %v7268
  %v7322 = vpack.c.b16 %v7271, %v7270
  %v7323 = vpack.c.b16 %v7273, %v7272
  %v7324 = vpack.c.b16 %v7275, %v7274
  %v7325 = vpack.c.b16 %v7277, %v7276
  %v7326 = vpack.c.b16 %v7279, %v7278
  %v7327 = vpack.c.b16 %v7281, %v7280
  %v7328 = vpack.c.b16 %v7283, %v7282
  %v7329 = vpack.c.b16 %v7285, %v7284
  %v7330 = vpack.c.b16 %v7287, %v7286
  %v7331 = vpack.c.b16 %v7289, %v7288
  %v7332 = vpack.c.b16 %v7291, %v7290
  %v7333 = vpack.c.b16 %v7293, %v7292
  %v7334 = vpack.c.b16 %v7295, %v7294
  %v7335 = vpack.c.b16 %v7297, %v7296
  %v7336 = vpack.c.b16 %v7299, %v7298
  %v7337 = vpack.c.b16 %v7301, %v7300
  %v7338 = vpack.c.b16 %v7303, %v7302
  %v7339 = vpack.c.b16 %v7305, %v7304
  %v7340 = vpack.c.b16 %v7307, %v7306
  %v7341 = vpack.c.b16 %v7309, %v7308
  %7374 = vmatprep.subr.bf16.mxu0 0
  %7375 = vmatpush1.bf16.msra.mxu0 %v7310
  %7376 = vmatprep.subr.bf16.mxu0 0
  %7377 = vmatpush1.bf16.msra.mxu0 %v7311
  %7378 = vmatprep.subr.bf16.mxu0 0
  %7379 = vmatpush1.bf16.msra.mxu0 %v7312
  %7380 = vmatprep.subr.bf16.mxu0 0
  %7381 = vmatpush1.bf16.msra.mxu0 %v7313
  %7382 = vmatprep.subr.bf16.mxu0 0
  %7383 = vmatpush1.bf16.msra.mxu0 %v7314
  %7384 = vmatprep.subr.bf16.mxu0 0
  %7385 = vmatpush1.bf16.msra.mxu0 %v7315
  %7386 = vmatprep.subr.bf16.mxu0 0
  %7387 = vmatpush1.bf16.msra.mxu0 %v7316
  %7388 = vmatprep.subr.bf16.mxu0 0
  %7389 = vmatpush1.bf16.msra.mxu0 %v7317
  %7390 = vmatprep.subr.bf16.mxu0 0
  %7391 = vmatpush1.bf16.msra.mxu0 %v7318
  %7392 = vmatprep.subr.bf16.mxu0 0
  %7393 = vmatpush1.bf16.msra.mxu0 %v7319
  %7394 = vmatprep.subr.bf16.mxu0 0
  %7395 = vmatpush1.bf16.msra.mxu0 %v7320
  %7396 = vmatprep.subr.bf16.mxu0 0
  %7397 = vmatpush1.bf16.msra.mxu0 %v7321
  %7398 = vmatprep.subr.bf16.mxu0 0
  %7399 = vmatpush1.bf16.msra.mxu0 %v7322
  %7400 = vmatprep.subr.bf16.mxu0 0
  %7401 = vmatpush1.bf16.msra.mxu0 %v7323
  %7402 = vmatprep.subr.bf16.mxu0 0
  %7403 = vmatpush1.bf16.msra.mxu0 %v7324
  %7404 = vmatprep.subr.bf16.mxu0 0
  %7405 = vmatpush1.bf16.msra.mxu0 %v7325
  %7406 = vmatprep.mubr.bf16.mxu0 %v7108
  %7407 = vmatmul.mubr.bf16.gmra.mrb[0].mxu0 %v7107
  %v7408 = vpop.f32.mrb[0].mxu0
  %v7409 = vadd.f32 %v7180, %v7408
  %v7410 = vpop.f32.mrb[0].mxu0
  %v7411 = vpop.f32.mrb[0].mxu0
  %v7412 = vpop.f32.mrb[0].mxu0
  %7413 = vdwg.mxu0
  %7414 = vmatprep.subr.bf16.mxu0 0
  %7415 = vmatpush1.bf16.msra.mxu0 %v7326
  %7416 = vmatprep.subr.bf16.mxu0 0
  %7417 = vmatpush1.bf16.msra.mxu0 %v7327
  %7418 = vmatprep.subr.bf16.mxu0 0
  %7419 = vmatpush1.bf16.msra.mxu0 %v7328
  %7420 = vmatprep.subr.bf16.mxu0 0
  %7421 = vmatpush1.bf16.msra.mxu0 %v7329
  %7422 = vmatprep.subr.bf16.mxu0 0
  %7423 = vmatpush1.bf16.msra.mxu0 %v7330
  %7424 = vmatprep.subr.bf16.mxu0 0
  %7425 = vmatpush1.bf16.msra.mxu0 %v7331
  %7426 = vmatprep.subr.bf16.mxu0 0
  %7427 = vmatpush1.bf16.msra.mxu0 %v7332
  %7428 = vmatprep.subr.bf16.mxu0 0
  %7429 = vmatpush1.bf16.msra.mxu0 %v7333
  %7430 = vmatprep.subr.bf16.mxu0 0
  %7431 = vmatpush1.bf16.msra.mxu0 %v7334
  %7432 = vmatprep.subr.bf16.mxu0 0
  %7433 = vmatpush1.bf16.msra.mxu0 %v7335
  %7434 = vmatprep.subr.bf16.mxu0 0
  %7435 = vmatpush1.bf16.msra.mxu0 %v7336
  %7436 = vmatprep.subr.bf16.mxu0 0
  %7437 = vmatpush1.bf16.msra.mxu0 %v7337
  %7438 = vmatprep.subr.bf16.mxu0 0
  %7439 = vmatpush1.bf16.msra.mxu0 %v7338
  %7440 = vmatprep.subr.bf16.mxu0 0
  %7441 = vmatpush1.bf16.msra.mxu0 %v7339
  %7442 = vmatprep.subr.bf16.mxu0 0
  %7443 = vmatpush1.bf16.msra.mxu0 %v7340
  %7444 = vmatprep.subr.bf16.mxu0 0
  %7445 = vmatpush1.bf16.msra.mxu0 %v7341
  %7446 = vmatprep.mubr.bf16.mxu0 %v7110
  %7447 = vmatmul.mubr.bf16.gmra.mrb[0].mxu0 %v7109
  %v7448 = vpop.f32.mrb[0].mxu0
  %v7449 = vadd.f32 %v7409, %v7448
  %v7450 = vpop.f32.mrb[0].mxu0
  %v7451 = vpop.f32.mrb[0].mxu0
  %v7452 = vpop.f32.mrb[0].mxu0
  %7453 = vdwg.mxu0
  %v7454 = vmax.f32 %v7449, 0.0
  %7455 = vst.msk [vmem:[#allocation3 + $0x18] sm:$0xff] %vm5323, %v7454
  %v7456 = vld [vmem:[#allocation2 + $0xe0] sm:$0xff]
  %v7457 = vld [vmem:[#allocation2 + $0xe8] sm:$0xff]
  %v7458 = vld [vmem:[#allocation2 + $0xf0] sm:$0xff]
  %v7459 = vld [vmem:[#allocation2 + $0xf8] sm:$0xff]
  %v7460 = vpack.c.bf16 %v7456, %v7456
  %v7461 = vpack.c.bf16 %v7457, %v7457
  %v7462 = vpack.c.bf16 %v7458, %v7458
  %v7463 = vpack.c.bf16 %v7459, %v7459
  %v7464 = vld [vmem:[%s3] sm:$0xf]
  %v7465 = vld [vmem:[%s3 + $0x4] sm:$0xf]
  %v7466 = vld [vmem:[%s3 + $0x8] sm:$0xf]
  %v7467 = vld [vmem:[%s3 + $0xc] sm:$0xf]
  %v7468 = vld [vmem:[%s3 + $0x10] sm:$0xf]
  %v7469 = vld [vmem:[%s3 + $0x14] sm:$0xf]
  %v7470 = vld [vmem:[%s3 + $0x18] sm:$0xf]
  %v7471 = vld [vmem:[%s3 + $0x1c] sm:$0xf]
  %v7472 = vld [vmem:[%s3 + $0x20] sm:$0xf]
  %v7473 = vld [vmem:[%s3 + $0x24] sm:$0xf]
  %v7474 = vld [vmem:[%s3 + $0x28] sm:$0xf]
  %v7475 = vld [vmem:[%s3 + $0x2c] sm:$0xf]
  %v7476 = vld [vmem:[%s3 + $0x30] sm:$0xf]
  %v7477 = vld [vmem:[%s3 + $0x34] sm:$0xf]
  %v7478 = vld [vmem:[%s3 + $0x38] sm:$0xf]
  %v7479 = vld [vmem:[%s3 + $0x3c] sm:$0xf]
  %v7480 = vld [vmem:[%s3 + $0x40] sm:$0xf]
  %v7481 = vld [vmem:[%s3 + $0x44] sm:$0xf]
  %v7482 = vld [vmem:[%s3 + $0x48] sm:$0xf]
  %v7483 = vld [vmem:[%s3 + $0x4c] sm:$0xf]
  %v7484 = vld [vmem:[%s3 + $0x50] sm:$0xf]
  %v7485 = vld [vmem:[%s3 + $0x54] sm:$0xf]
  %v7486 = vld [vmem:[%s3 + $0x58] sm:$0xf]
  %v7487 = vld [vmem:[%s3 + $0x5c] sm:$0xf]
  %v7488 = vld [vmem:[%s3 + $0x60] sm:$0xf]
  %v7489 = vld [vmem:[%s3 + $0x64] sm:$0xf]
  %v7490 = vld [vmem:[%s3 + $0x68] sm:$0xf]
  %v7491 = vld [vmem:[%s3 + $0x6c] sm:$0xf]
  %v7492 = vld [vmem:[%s3 + $0x70] sm:$0xf]
  %v7493 = vld [vmem:[%s3 + $0x74] sm:$0xf]
  %v7494 = vld [vmem:[%s3 + $0x78] sm:$0xf]
  %v7495 = vld [vmem:[%s3 + $0x7c] sm:$0xf]
  %v7496 = vld [vmem:[%s3 + $0x80] sm:$0xf]
  %v7497 = vld [vmem:[%s3 + $0x84] sm:$0xf]
  %v7498 = vld [vmem:[%s3 + $0x88] sm:$0xf]
  %v7499 = vld [vmem:[%s3 + $0x8c] sm:$0xf]
  %v7500 = vld [vmem:[%s3 + $0x90] sm:$0xf]
  %v7501 = vld [vmem:[%s3 + $0x94] sm:$0xf]
  %v7502 = vld [vmem:[%s3 + $0x98] sm:$0xf]
  %v7503 = vld [vmem:[%s3 + $0x9c] sm:$0xf]
  %v7504 = vld [vmem:[%s3 + $0xa0] sm:$0xf]
  %v7505 = vld [vmem:[%s3 + $0xa4] sm:$0xf]
  %v7506 = vld [vmem:[%s3 + $0xa8] sm:$0xf]
  %v7507 = vld [vmem:[%s3 + $0xac] sm:$0xf]
  %v7508 = vld [vmem:[%s3 + $0xb0] sm:$0xf]
  %v7509 = vld [vmem:[%s3 + $0xb4] sm:$0xf]
  %v7510 = vld [vmem:[%s3 + $0xb8] sm:$0xf]
  %v7511 = vld [vmem:[%s3 + $0xbc] sm:$0xf]
  %v7512 = vld [vmem:[%s3 + $0xc0] sm:$0xf]
  %v7513 = vld [vmem:[%s3 + $0xc4] sm:$0xf]
  %v7514 = vld [vmem:[%s3 + $0xc8] sm:$0xf]
  %v7515 = vld [vmem:[%s3 + $0xcc] sm:$0xf]
  %v7516 = vld [vmem:[%s3 + $0xd0] sm:$0xf]
  %v7517 = vld [vmem:[%s3 + $0xd4] sm:$0xf]
  %v7518 = vld [vmem:[%s3 + $0xd8] sm:$0xf]
  %v7519 = vld [vmem:[%s3 + $0xdc] sm:$0xf]
  %v7520 = vld [vmem:[%s3 + $0xe0] sm:$0xf]
  %v7521 = vld [vmem:[%s3 + $0xe4] sm:$0xf]
  %v7522 = vld [vmem:[%s3 + $0xe8] sm:$0xf]
  %v7523 = vld [vmem:[%s3 + $0xec] sm:$0xf]
  %v7524 = vld [vmem:[%s3 + $0xf0] sm:$0xf]
  %v7525 = vld [vmem:[%s3 + $0xf4] sm:$0xf]
  %v7526 = vld [vmem:[%s3 + $0xf8] sm:$0xf]
  %v7527 = vld [vmem:[%s3 + $0xfc] sm:$0xf]
  %v7528 = vld [vmem:[%s4] sm:$0x1]
  %v7530 = vlaneseq
  %v7531 = vshrl.u32 %v7530, 7
  %v7532 = vsub.s32 0, %v7531
  %v7533 = vrot.slane %v7528, %v7532
  %v7599 = vunpack.c.l.b16 %v7464
  %v7600 = vunpack.c.l.b16 %v7465
  %v7601 = vunpack.c.l.b16 %v7466
  %v7602 = vunpack.c.l.b16 %v7467
  %v7603 = vunpack.c.l.b16 %v7468
  %v7604 = vunpack.c.l.b16 %v7469
  %v7605 = vunpack.c.l.b16 %v7470
  %v7606 = vunpack.c.l.b16 %v7471
  %v7607 = vunpack.c.l.b16 %v7472
  %v7608 = vunpack.c.l.b16 %v7473
  %v7609 = vunpack.c.l.b16 %v7474
  %v7610 = vunpack.c.l.b16 %v7475
  %v7611 = vunpack.c.l.b16 %v7476
  %v7612 = vunpack.c.l.b16 %v7477
  %v7613 = vunpack.c.l.b16 %v7478
  %v7614 = vunpack.c.l.b16 %v7479
  %v7615 = vunpack.c.l.b16 %v7480
  %v7616 = vunpack.c.l.b16 %v7481
  %v7617 = vunpack.c.l.b16 %v7482
  %v7618 = vunpack.c.l.b16 %v7483
  %v7619 = vunpack.c.l.b16 %v7484
  %v7620 = vunpack.c.l.b16 %v7485
  %v7621 = vunpack.c.l.b16 %v7486
  %v7622 = vunpack.c.l.b16 %v7487
  %v7623 = vunpack.c.l.b16 %v7488
  %v7624 = vunpack.c.l.b16 %v7489
  %v7625 = vunpack.c.l.b16 %v7490
  %v7626 = vunpack.c.l.b16 %v7491
  %v7627 = vunpack.c.l.b16 %v7492
  %v7628 = vunpack.c.l.b16 %v7493
  %v7629 = vunpack.c.l.b16 %v7494
  %v7630 = vunpack.c.l.b16 %v7495
  %v7631 = vunpack.c.l.b16 %v7496
  %v7632 = vunpack.c.l.b16 %v7497
  %v7633 = vunpack.c.l.b16 %v7498
  %v7634 = vunpack.c.l.b16 %v7499
  %v7635 = vunpack.c.l.b16 %v7500
  %v7636 = vunpack.c.l.b16 %v7501
  %v7637 = vunpack.c.l.b16 %v7502
  %v7638 = vunpack.c.l.b16 %v7503
  %v7639 = vunpack.c.l.b16 %v7504
  %v7640 = vunpack.c.l.b16 %v7505
  %v7641 = vunpack.c.l.b16 %v7506
  %v7642 = vunpack.c.l.b16 %v7507
  %v7643 = vunpack.c.l.b16 %v7508
  %v7644 = vunpack.c.l.b16 %v7509
  %v7645 = vunpack.c.l.b16 %v7510
  %v7646 = vunpack.c.l.b16 %v7511
  %v7647 = vunpack.c.l.b16 %v7512
  %v7648 = vunpack.c.l.b16 %v7513
  %v7649 = vunpack.c.l.b16 %v7514
  %v7650 = vunpack.c.l.b16 %v7515
  %v7651 = vunpack.c.l.b16 %v7516
  %v7652 = vunpack.c.l.b16 %v7517
  %v7653 = vunpack.c.l.b16 %v7518
  %v7654 = vunpack.c.l.b16 %v7519
  %v7655 = vunpack.c.l.b16 %v7520
  %v7656 = vunpack.c.l.b16 %v7521
  %v7657 = vunpack.c.l.b16 %v7522
  %v7658 = vunpack.c.l.b16 %v7523
  %v7659 = vunpack.c.l.b16 %v7524
  %v7660 = vunpack.c.l.b16 %v7525
  %v7661 = vunpack.c.l.b16 %v7526
  %v7662 = vunpack.c.l.b16 %v7527
  %v7663 = vpack.c.b16 %v7600, %v7599
  %v7664 = vpack.c.b16 %v7602, %v7601
  %v7665 = vpack.c.b16 %v7604, %v7603
  %v7666 = vpack.c.b16 %v7606, %v7605
  %v7667 = vpack.c.b16 %v7608, %v7607
  %v7668 = vpack.c.b16 %v7610, %v7609
  %v7669 = vpack.c.b16 %v7612, %v7611
  %v7670 = vpack.c.b16 %v7614, %v7613
  %v7671 = vpack.c.b16 %v7616, %v7615
  %v7672 = vpack.c.b16 %v7618, %v7617
  %v7673 = vpack.c.b16 %v7620, %v7619
  %v7674 = vpack.c.b16 %v7622, %v7621
  %v7675 = vpack.c.b16 %v7624, %v7623
  %v7676 = vpack.c.b16 %v7626, %v7625
  %v7677 = vpack.c.b16 %v7628, %v7627
  %v7678 = vpack.c.b16 %v7630, %v7629
  %v7679 = vpack.c.b16 %v7632, %v7631
  %v7680 = vpack.c.b16 %v7634, %v7633
  %v7681 = vpack.c.b16 %v7636, %v7635
  %v7682 = vpack.c.b16 %v7638, %v7637
  %v7683 = vpack.c.b16 %v7640, %v7639
  %v7684 = vpack.c.b16 %v7642, %v7641
  %v7685 = vpack.c.b16 %v7644, %v7643
  %v7686 = vpack.c.b16 %v7646, %v7645
  %v7687 = vpack.c.b16 %v7648, %v7647
  %v7688 = vpack.c.b16 %v7650, %v7649
  %v7689 = vpack.c.b16 %v7652, %v7651
  %v7690 = vpack.c.b16 %v7654, %v7653
  %v7691 = vpack.c.b16 %v7656, %v7655
  %v7692 = vpack.c.b16 %v7658, %v7657
  %v7693 = vpack.c.b16 %v7660, %v7659
  %v7694 = vpack.c.b16 %v7662, %v7661
  %7727 = vmatprep.subr.bf16.mxu0 0
  %7728 = vmatpush1.bf16.msra.mxu0 %v7663
  %7729 = vmatprep.subr.bf16.mxu0 0
  %7730 = vmatpush1.bf16.msra.mxu0 %v7664
  %7731 = vmatprep.subr.bf16.mxu0 0
  %7732 = vmatpush1.bf16.msra.mxu0 %v7665
  %7733 = vmatprep.subr.bf16.mxu0 0
  %7734 = vmatpush1.bf16.msra.mxu0 %v7666
  %7735 = vmatprep.subr.bf16.mxu0 0
  %7736 = vmatpush1.bf16.msra.mxu0 %v7667
  %7737 = vmatprep.subr.bf16.mxu0 0
  %7738 = vmatpush1.bf16.msra.mxu0 %v7668
  %7739 = vmatprep.subr.bf16.mxu0 0
  %7740 = vmatpush1.bf16.msra.mxu0 %v7669
  %7741 = vmatprep.subr.bf16.mxu0 0
  %7742 = vmatpush1.bf16.msra.mxu0 %v7670
  %7743 = vmatprep.subr.bf16.mxu0 0
  %7744 = vmatpush1.bf16.msra.mxu0 %v7671
  %7745 = vmatprep.subr.bf16.mxu0 0
  %7746 = vmatpush1.bf16.msra.mxu0 %v7672
  %7747 = vmatprep.subr.bf16.mxu0 0
  %7748 = vmatpush1.bf16.msra.mxu0 %v7673
  %7749 = vmatprep.subr.bf16.mxu0 0
  %7750 = vmatpush1.bf16.msra.mxu0 %v7674
  %7751 = vmatprep.subr.bf16.mxu0 0
  %7752 = vmatpush1.bf16.msra.mxu0 %v7675
  %7753 = vmatprep.subr.bf16.mxu0 0
  %7754 = vmatpush1.bf16.msra.mxu0 %v7676
  %7755 = vmatprep.subr.bf16.mxu0 0
  %7756 = vmatpush1.bf16.msra.mxu0 %v7677
  %7757 = vmatprep.subr.bf16.mxu0 0
  %7758 = vmatpush1.bf16.msra.mxu0 %v7678
  %7759 = vmatprep.mubr.bf16.mxu0 %v7461
  %7760 = vmatmul.mubr.bf16.gmra.mrb[0].mxu0 %v7460
  %v7761 = vpop.f32.mrb[0].mxu0
  %v7762 = vadd.f32 %v7533, %v7761
  %v7763 = vpop.f32.mrb[0].mxu0
  %v7764 = vpop.f32.mrb[0].mxu0
  %v7765 = vpop.f32.mrb[0].mxu0
  %7766 = vdwg.mxu0
  %7767 = vmatprep.subr.bf16.mxu0 0
  %7768 = vmatpush1.bf16.msra.mxu0 %v7679
  %7769 = vmatprep.subr.bf16.mxu0 0
  %7770 = vmatpush1.bf16.msra.mxu0 %v7680
  %7771 = vmatprep.subr.bf16.mxu0 0
  %7772 = vmatpush1.bf16.msra.mxu0 %v7681
  %7773 = vmatprep.subr.bf16.mxu0 0
  %7774 = vmatpush1.bf16.msra.mxu0 %v7682
  %7775 = vmatprep.subr.bf16.mxu0 0
  %7776 = vmatpush1.bf16.msra.mxu0 %v7683
  %7777 = vmatprep.subr.bf16.mxu0 0
  %7778 = vmatpush1.bf16.msra.mxu0 %v7684
  %7779 = vmatprep.subr.bf16.mxu0 0
  %7780 = vmatpush1.bf16.msra.mxu0 %v7685
  %7781 = vmatprep.subr.bf16.mxu0 0
  %7782 = vmatpush1.bf16.msra.mxu0 %v7686
  %7783 = vmatprep.subr.bf16.mxu0 0
  %7784 = vmatpush1.bf16.msra.mxu0 %v7687
  %7785 = vmatprep.subr.bf16.mxu0 0
  %7786 = vmatpush1.bf16.msra.mxu0 %v7688
  %7787 = vmatprep.subr.bf16.mxu0 0
  %7788 = vmatpush1.bf16.msra.mxu0 %v7689
  %7789 = vmatprep.subr.bf16.mxu0 0
  %7790 = vmatpush1.bf16.msra.mxu0 %v7690
  %7791 = vmatprep.subr.bf16.mxu0 0
  %7792 = vmatpush1.bf16.msra.mxu0 %v7691
  %7793 = vmatprep.subr.bf16.mxu0 0
  %7794 = vmatpush1.bf16.msra.mxu0 %v7692
  %7795 = vmatprep.subr.bf16.mxu0 0
  %7796 = vmatpush1.bf16.msra.mxu0 %v7693
  %7797 = vmatprep.subr.bf16.mxu0 0
  %7798 = vmatpush1.bf16.msra.mxu0 %v7694
  %7799 = vmatprep.mubr.bf16.mxu0 %v7463
  %7800 = vmatmul.mubr.bf16.gmra.mrb[0].mxu0 %v7462
  %v7801 = vpop.f32.mrb[0].mxu0
  %v7802 = vadd.f32 %v7762, %v7801
  %v7803 = vpop.f32.mrb[0].mxu0
  %v7804 = vpop.f32.mrb[0].mxu0
  %v7805 = vpop.f32.mrb[0].mxu0
  %7806 = vdwg.mxu0
  %v7807 = vmax.f32 %v7802, 0.0
  %7809 = vrot.lane.b32.xlu0 %v7807, 64
  %v7810 = vpop.permute.xlu0 %7809
  %7812 = vst.msk [vmem:[#allocation3 + $0x18] sm:$0xff] %vm5681, %v7810
  %v7813 = vld [vmem:[#allocation2 + $0x100] sm:$0xff]
  %v7814 = vld [vmem:[#allocation2 + $0x108] sm:$0xff]
  %v7815 = vld [vmem:[#allocation2 + $0x110] sm:$0xff]
  %v7816 = vld [vmem:[#allocation2 + $0x118] sm:$0xff]
  %v7817 = vpack.c.bf16 %v7813, %v7813
  %v7818 = vpack.c.bf16 %v7814, %v7814
  %v7819 = vpack.c.bf16 %v7815, %v7815
  %v7820 = vpack.c.bf16 %v7816, %v7816
  %v7821 = vld [vmem:[%s3] sm:$0xf]
  %v7822 = vld [vmem:[%s3 + $0x4] sm:$0xf]
  %v7823 = vld [vmem:[%s3 + $0x8] sm:$0xf]
  %v7824 = vld [vmem:[%s3 + $0xc] sm:$0xf]
  %v7825 = vld [vmem:[%s3 + $0x10] sm:$0xf]
  %v7826 = vld [vmem:[%s3 + $0x14] sm:$0xf]
  %v7827 = vld [vmem:[%s3 + $0x18] sm:$0xf]
  %v7828 = vld [vmem:[%s3 + $0x1c] sm:$0xf]
  %v7829 = vld [vmem:[%s3 + $0x20] sm:$0xf]
  %v7830 = vld [vmem:[%s3 + $0x24] sm:$0xf]
  %v7831 = vld [vmem:[%s3 + $0x28] sm:$0xf]
  %v7832 = vld [vmem:[%s3 + $0x2c] sm:$0xf]
  %v7833 = vld [vmem:[%s3 + $0x30] sm:$0xf]
  %v7834 = vld [vmem:[%s3 + $0x34] sm:$0xf]
  %v7835 = vld [vmem:[%s3 + $0x38] sm:$0xf]
  %v7836 = vld [vmem:[%s3 + $0x3c] sm:$0xf]
  %v7837 = vld [vmem:[%s3 + $0x40] sm:$0xf]
  %v7838 = vld [vmem:[%s3 + $0x44] sm:$0xf]
  %v7839 = vld [vmem:[%s3 + $0x48] sm:$0xf]
  %v7840 = vld [vmem:[%s3 + $0x4c] sm:$0xf]
  %v7841 = vld [vmem:[%s3 + $0x50] sm:$0xf]
  %v7842 = vld [vmem:[%s3 + $0x54] sm:$0xf]
  %v7843 = vld [vmem:[%s3 + $0x58] sm:$0xf]
  %v7844 = vld [vmem:[%s3 + $0x5c] sm:$0xf]
  %v7845 = vld [vmem:[%s3 + $0x60] sm:$0xf]
  %v7846 = vld [vmem:[%s3 + $0x64] sm:$0xf]
  %v7847 = vld [vmem:[%s3 + $0x68] sm:$0xf]
  %v7848 = vld [vmem:[%s3 + $0x6c] sm:$0xf]
  %v7849 = vld [vmem:[%s3 + $0x70] sm:$0xf]
  %v7850 = vld [vmem:[%s3 + $0x74] sm:$0xf]
  %v7851 = vld [vmem:[%s3 + $0x78] sm:$0xf]
  %v7852 = vld [vmem:[%s3 + $0x7c] sm:$0xf]
  %v7853 = vld [vmem:[%s3 + $0x80] sm:$0xf]
  %v7854 = vld [vmem:[%s3 + $0x84] sm:$0xf]
  %v7855 = vld [vmem:[%s3 + $0x88] sm:$0xf]
  %v7856 = vld [vmem:[%s3 + $0x8c] sm:$0xf]
  %v7857 = vld [vmem:[%s3 + $0x90] sm:$0xf]
  %v7858 = vld [vmem:[%s3 + $0x94] sm:$0xf]
  %v7859 = vld [vmem:[%s3 + $0x98] sm:$0xf]
  %v7860 = vld [vmem:[%s3 + $0x9c] sm:$0xf]
  %v7861 = vld [vmem:[%s3 + $0xa0] sm:$0xf]
  %v7862 = vld [vmem:[%s3 + $0xa4] sm:$0xf]
  %v7863 = vld [vmem:[%s3 + $0xa8] sm:$0xf]
  %v7864 = vld [vmem:[%s3 + $0xac] sm:$0xf]
  %v7865 = vld [vmem:[%s3 + $0xb0] sm:$0xf]
  %v7866 = vld [vmem:[%s3 + $0xb4] sm:$0xf]
  %v7867 = vld [vmem:[%s3 + $0xb8] sm:$0xf]
  %v7868 = vld [vmem:[%s3 + $0xbc] sm:$0xf]
  %v7869 = vld [vmem:[%s3 + $0xc0] sm:$0xf]
  %v7870 = vld [vmem:[%s3 + $0xc4] sm:$0xf]
  %v7871 = vld [vmem:[%s3 + $0xc8] sm:$0xf]
  %v7872 = vld [vmem:[%s3 + $0xcc] sm:$0xf]
  %v7873 = vld [vmem:[%s3 + $0xd0] sm:$0xf]
  %v7874 = vld [vmem:[%s3 + $0xd4] sm:$0xf]
  %v7875 = vld [vmem:[%s3 + $0xd8] sm:$0xf]
  %v7876 = vld [vmem:[%s3 + $0xdc] sm:$0xf]
  %v7877 = vld [vmem:[%s3 + $0xe0] sm:$0xf]
  %v7878 = vld [vmem:[%s3 + $0xe4] sm:$0xf]
  %v7879 = vld [vmem:[%s3 + $0xe8] sm:$0xf]
  %v7880 = vld [vmem:[%s3 + $0xec] sm:$0xf]
  %v7881 = vld [vmem:[%s3 + $0xf0] sm:$0xf]
  %v7882 = vld [vmem:[%s3 + $0xf4] sm:$0xf]
  %v7883 = vld [vmem:[%s3 + $0xf8] sm:$0xf]
  %v7884 = vld [vmem:[%s3 + $0xfc] sm:$0xf]
  %v7885 = vld [vmem:[%s4] sm:$0x1]
  %v7887 = vlaneseq
  %v7888 = vshrl.u32 %v7887, 7
  %v7889 = vsub.s32 0, %v7888
  %v7890 = vrot.slane %v7885, %v7889
  %v7956 = vunpack.c.l.b16 %v7821
  %v7957 = vunpack.c.l.b16 %v7822
  %v7958 = vunpack.c.l.b16 %v7823
  %v7959 = vunpack.c.l.b16 %v7824
  %v7960 = vunpack.c.l.b16 %v7825
  %v7961 = vunpack.c.l.b16 %v7826
  %v7962 = vunpack.c.l.b16 %v7827
  %v7963 = vunpack.c.l.b16 %v7828
  %v7964 = vunpack.c.l.b16 %v7829
  %v7965 = vunpack.c.l.b16 %v7830
  %v7966 = vunpack.c.l.b16 %v7831
  %v7967 = vunpack.c.l.b16 %v7832
  %v7968 = vunpack.c.l.b16 %v7833
  %v7969 = vunpack.c.l.b16 %v7834
  %v7970 = vunpack.c.l.b16 %v7835
  %v7971 = vunpack.c.l.b16 %v7836
  %v7972 = vunpack.c.l.b16 %v7837
  %v7973 = vunpack.c.l.b16 %v7838
  %v7974 = vunpack.c.l.b16 %v7839
  %v7975 = vunpack.c.l.b16 %v7840
  %v7976 = vunpack.c.l.b16 %v7841
  %v7977 = vunpack.c.l.b16 %v7842
  %v7978 = vunpack.c.l.b16 %v7843
  %v7979 = vunpack.c.l.b16 %v7844
  %v7980 = vunpack.c.l.b16 %v7845
  %v7981 = vunpack.c.l.b16 %v7846
  %v7982 = vunpack.c.l.b16 %v7847
  %v7983 = vunpack.c.l.b16 %v7848
  %v7984 = vunpack.c.l.b16 %v7849
  %v7985 = vunpack.c.l.b16 %v7850
  %v7986 = vunpack.c.l.b16 %v7851
  %v7987 = vunpack.c.l.b16 %v7852
  %v7988 = vunpack.c.l.b16 %v7853
  %v7989 = vunpack.c.l.b16 %v7854
  %v7990 = vunpack.c.l.b16 %v7855
  %v7991 = vunpack.c.l.b16 %v7856
  %v7992 = vunpack.c.l.b16 %v7857
  %v7993 = vunpack.c.l.b16 %v7858
  %v7994 = vunpack.c.l.b16 %v7859
  %v7995 = vunpack.c.l.b16 %v7860
  %v7996 = vunpack.c.l.b16 %v7861
  %v7997 = vunpack.c.l.b16 %v7862
  %v7998 = vunpack.c.l.b16 %v7863
  %v7999 = vunpack.c.l.b16 %v7864
  %v8000 = vunpack.c.l.b16 %v7865
  %v8001 = vunpack.c.l.b16 %v7866
  %v8002 = vunpack.c.l.b16 %v7867
  %v8003 = vunpack.c.l.b16 %v7868
  %v8004 = vunpack.c.l.b16 %v7869
  %v8005 = vunpack.c.l.b16 %v7870
  %v8006 = vunpack.c.l.b16 %v7871
  %v8007 = vunpack.c.l.b16 %v7872
  %v8008 = vunpack.c.l.b16 %v7873
  %v8009 = vunpack.c.l.b16 %v7874
  %v8010 = vunpack.c.l.b16 %v7875
  %v8011 = vunpack.c.l.b16 %v7876
  %v8012 = vunpack.c.l.b16 %v7877
  %v8013 = vunpack.c.l.b16 %v7878
  %v8014 = vunpack.c.l.b16 %v7879
  %v8015 = vunpack.c.l.b16 %v7880
  %v8016 = vunpack.c.l.b16 %v7881
  %v8017 = vunpack.c.l.b16 %v7882
  %v8018 = vunpack.c.l.b16 %v7883
  %v8019 = vunpack.c.l.b16 %v7884
  %v8020 = vpack.c.b16 %v7957, %v7956
  %v8021 = vpack.c.b16 %v7959, %v7958
  %v8022 = vpack.c.b16 %v7961, %v7960
  %v8023 = vpack.c.b16 %v7963, %v7962
  %v8024 = vpack.c.b16 %v7965, %v7964
  %v8025 = vpack.c.b16 %v7967, %v7966
  %v8026 = vpack.c.b16 %v7969, %v7968
  %v8027 = vpack.c.b16 %v7971, %v7970
  %v8028 = vpack.c.b16 %v7973, %v7972
  %v8029 = vpack.c.b16 %v7975, %v7974
  %v8030 = vpack.c.b16 %v7977, %v7976
  %v8031 = vpack.c.b16 %v7979, %v7978
  %v8032 = vpack.c.b16 %v7981, %v7980
  %v8033 = vpack.c.b16 %v7983, %v7982
  %v8034 = vpack.c.b16 %v7985, %v7984
  %v8035 = vpack.c.b16 %v7987, %v7986
  %v8036 = vpack.c.b16 %v7989, %v7988
  %v8037 = vpack.c.b16 %v7991, %v7990
  %v8038 = vpack.c.b16 %v7993, %v7992
  %v8039 = vpack.c.b16 %v7995, %v7994
  %v8040 = vpack.c.b16 %v7997, %v7996
  %v8041 = vpack.c.b16 %v7999, %v7998
  %v8042 = vpack.c.b16 %v8001, %v8000
  %v8043 = vpack.c.b16 %v8003, %v8002
  %v8044 = vpack.c.b16 %v8005, %v8004
  %v8045 = vpack.c.b16 %v8007, %v8006
  %v8046 = vpack.c.b16 %v8009, %v8008
  %v8047 = vpack.c.b16 %v8011, %v8010
  %v8048 = vpack.c.b16 %v8013, %v8012
  %v8049 = vpack.c.b16 %v8015, %v8014
  %v8050 = vpack.c.b16 %v8017, %v8016
  %v8051 = vpack.c.b16 %v8019, %v8018
  %8084 = vmatprep.subr.bf16.mxu0 0
  %8085 = vmatpush1.bf16.msra.mxu0 %v8020
  %8086 = vmatprep.subr.bf16.mxu0 0
  %8087 = vmatpush1.bf16.msra.mxu0 %v8021
  %8088 = vmatprep.subr.bf16.mxu0 0
  %8089 = vmatpush1.bf16.msra.mxu0 %v8022
  %8090 = vmatprep.subr.bf16.mxu0 0
  %8091 = vmatpush1.bf16.msra.mxu0 %v8023
  %8092 = vmatprep.subr.bf16.mxu0 0
  %8093 = vmatpush1.bf16.msra.mxu0 %v8024
  %8094 = vmatprep.subr.bf16.mxu0 0
  %8095 = vmatpush1.bf16.msra.mxu0 %v8025
  %8096 = vmatprep.subr.bf16.mxu0 0
  %8097 = vmatpush1.bf16.msra.mxu0 %v8026
  %8098 = vmatprep.subr.bf16.mxu0 0
  %8099 = vmatpush1.bf16.msra.mxu0 %v8027
  %8100 = vmatprep.subr.bf16.mxu0 0
  %8101 = vmatpush1.bf16.msra.mxu0 %v8028
  %8102 = vmatprep.subr.bf16.mxu0 0
  %8103 = vmatpush1.bf16.msra.mxu0 %v8029
  %8104 = vmatprep.subr.bf16.mxu0 0
  %8105 = vmatpush1.bf16.msra.mxu0 %v8030
  %8106 = vmatprep.subr.bf16.mxu0 0
  %8107 = vmatpush1.bf16.msra.mxu0 %v8031
  %8108 = vmatprep.subr.bf16.mxu0 0
  %8109 = vmatpush1.bf16.msra.mxu0 %v8032
  %8110 = vmatprep.subr.bf16.mxu0 0
  %8111 = vmatpush1.bf16.msra.mxu0 %v8033
  %8112 = vmatprep.subr.bf16.mxu0 0
  %8113 = vmatpush1.bf16.msra.mxu0 %v8034
  %8114 = vmatprep.subr.bf16.mxu0 0
  %8115 = vmatpush1.bf16.msra.mxu0 %v8035
  %8116 = vmatprep.mubr.bf16.mxu0 %v7818
  %8117 = vmatmul.mubr.bf16.gmra.mrb[0].mxu0 %v7817
  %v8118 = vpop.f32.mrb[0].mxu0
  %v8119 = vadd.f32 %v7890, %v8118
  %v8120 = vpop.f32.mrb[0].mxu0
  %v8121 = vpop.f32.mrb[0].mxu0
  %v8122 = vpop.f32.mrb[0].mxu0
  %8123 = vdwg.mxu0
  %8124 = vmatprep.subr.bf16.mxu0 0
  %8125 = vmatpush1.bf16.msra.mxu0 %v8036
  %8126 = vmatprep.subr.bf16.mxu0 0
  %8127 = vmatpush1.bf16.msra.mxu0 %v8037
  %8128 = vmatprep.subr.bf16.mxu0 0
  %8129 = vmatpush1.bf16.msra.mxu0 %v8038
  %8130 = vmatprep.subr.bf16.mxu0 0
  %8131 = vmatpush1.bf16.msra.mxu0 %v8039
  %8132 = vmatprep.subr.bf16.mxu0 0
  %8133 = vmatpush1.bf16.msra.mxu0 %v8040
  %8134 = vmatprep.subr.bf16.mxu0 0
  %8135 = vmatpush1.bf16.msra.mxu0 %v8041
  %8136 = vmatprep.subr.bf16.mxu0 0
  %8137 = vmatpush1.bf16.msra.mxu0 %v8042
  %8138 = vmatprep.subr.bf16.mxu0 0
  %8139 = vmatpush1.bf16.msra.mxu0 %v8043
  %8140 = vmatprep.subr.bf16.mxu0 0
  %8141 = vmatpush1.bf16.msra.mxu0 %v8044
  %8142 = vmatprep.subr.bf16.mxu0 0
  %8143 = vmatpush1.bf16.msra.mxu0 %v8045
  %8144 = vmatprep.subr.bf16.mxu0 0
  %8145 = vmatpush1.bf16.msra.mxu0 %v8046
  %8146 = vmatprep.subr.bf16.mxu0 0
  %8147 = vmatpush1.bf16.msra.mxu0 %v8047
  %8148 = vmatprep.subr.bf16.mxu0 0
  %8149 = vmatpush1.bf16.msra.mxu0 %v8048
  %8150 = vmatprep.subr.bf16.mxu0 0
  %8151 = vmatpush1.bf16.msra.mxu0 %v8049
  %8152 = vmatprep.subr.bf16.mxu0 0
  %8153 = vmatpush1.bf16.msra.mxu0 %v8050
  %8154 = vmatprep.subr.bf16.mxu0 0
  %8155 = vmatpush1.bf16.msra.mxu0 %v8051
  %8156 = vmatprep.mubr.bf16.mxu0 %v7820
  %8157 = vmatmul.mubr.bf16.gmra.mrb[0].mxu0 %v7819
  %v8158 = vpop.f32.mrb[0].mxu0
  %v8159 = vadd.f32 %v8119, %v8158
  %v8160 = vpop.f32.mrb[0].mxu0
  %v8161 = vpop.f32.mrb[0].mxu0
  %v8162 = vpop.f32.mrb[0].mxu0
  %8163 = vdwg.mxu0
  %v8164 = vmax.f32 %v8159, 0.0
  %8165 = vst.msk [vmem:[#allocation3 + $0x20] sm:$0xff] %vm5323, %v8164
  %v8166 = vld [vmem:[#allocation3] sm:$0xff]
  %v8167 = vld [vmem:[#allocation3 + $0x8] sm:$0xff]
  %v8168 = vld [vmem:[#allocation3 + $0x10] sm:$0xff]
  %v8169 = vld [vmem:[#allocation3 + $0x18] sm:$0xff]
  %v8170 = vld [vmem:[#allocation3 + $0x20] sm:$0xff]
  %v8171 = vpack.c.bf16 %v8166, %v8166
  %v8172 = vpack.c.bf16 %v8167, %v8167
  %v8173 = vpack.c.bf16 %v8168, %v8168
  %v8174 = vpack.c.bf16 %v8169, %v8169
  %v8175 = vpack.c.bf16 %v8170, %v8170
  %v8176 = vld [vmem:[%s5] sm:$0xf]
  %v8177 = vld [vmem:[%s5 + $0x4] sm:$0xf]
  %v8178 = vld [vmem:[%s5 + $0x8] sm:$0xf]
  %v8179 = vld [vmem:[%s5 + $0xc] sm:$0xf]
  %v8180 = vld [vmem:[%s5 + $0x10] sm:$0xf]
  %v8181 = vld [vmem:[%s5 + $0x14] sm:$0xf]
  %v8182 = vld [vmem:[%s5 + $0x18] sm:$0xf]
  %v8183 = vld [vmem:[%s5 + $0x1c] sm:$0xf]
  %v8184 = vld [vmem:[%s5 + $0x20] sm:$0xf]
  %v8185 = vld [vmem:[%s5 + $0x24] sm:$0xf]
  %v8186 = vld [vmem:[%s5 + $0x28] sm:$0xf]
  %v8187 = vld [vmem:[%s5 + $0x2c] sm:$0xf]
  %v8188 = vld [vmem:[%s5 + $0x30] sm:$0xf]
  %v8189 = vld [vmem:[%s5 + $0x34] sm:$0xf]
  %v8190 = vld [vmem:[%s5 + $0x38] sm:$0xf]
  %v8191 = vld [vmem:[%s5 + $0x3c] sm:$0xf]
  %v8192 = vld [vmem:[%s5 + $0x40] sm:$0xf]
  %v8193 = vld [vmem:[%s5 + $0x44] sm:$0xf]
  %v8194 = vld [vmem:[%s5 + $0x48] sm:$0xf]
  %v8195 = vld [vmem:[%s5 + $0x4c] sm:$0xf]
  %v8196 = vld [vmem:[%s5 + $0x50] sm:$0xf]
  %v8197 = vld [vmem:[%s5 + $0x54] sm:$0xf]
  %v8198 = vld [vmem:[%s5 + $0x58] sm:$0xf]
  %v8199 = vld [vmem:[%s5 + $0x5c] sm:$0xf]
  %v8200 = vld [vmem:[%s5 + $0x60] sm:$0xf]
  %v8201 = vld [vmem:[%s5 + $0x64] sm:$0xf]
  %v8202 = vld [vmem:[%s5 + $0x68] sm:$0xf]
  %v8203 = vld [vmem:[%s5 + $0x6c] sm:$0xf]
  %v8204 = vld [vmem:[%s5 + $0x70] sm:$0xf]
  %v8205 = vld [vmem:[%s5 + $0x74] sm:$0xf]
  %v8206 = vld [vmem:[%s5 + $0x78] sm:$0xf]
  %v8207 = vld [vmem:[%s5 + $0x7c] sm:$0xf]
  %v8208 = vld [vmem:[%s5 + $0x80] sm:$0xf]
  %v8209 = vld [vmem:[%s5 + $0x84] sm:$0xf]
  %v8210 = vld [vmem:[%s5 + $0x88] sm:$0xf]
  %v8211 = vld [vmem:[%s5 + $0x8c] sm:$0xf]
  %v8212 = vld [vmem:[%s5 + $0x90] sm:$0xf]
  %v8213 = vld [vmem:[%s5 + $0x94] sm:$0xf]
  %v8214 = vld [vmem:[%s5 + $0x98] sm:$0xf]
  %v8215 = vld [vmem:[%s5 + $0x9c] sm:$0xf]
  %v8216 = vld [vmem:[%s5 + $0xa0] sm:$0xf]
  %v8217 = vld [vmem:[%s5 + $0xa4] sm:$0xf]
  %v8218 = vld [vmem:[%s5 + $0xa8] sm:$0xf]
  %v8219 = vld [vmem:[%s5 + $0xac] sm:$0xf]
  %v8220 = vld [vmem:[%s5 + $0xb0] sm:$0xf]
  %v8221 = vld [vmem:[%s5 + $0xb4] sm:$0xf]
  %v8222 = vld [vmem:[%s5 + $0xb8] sm:$0xf]
  %v8223 = vld [vmem:[%s5 + $0xbc] sm:$0xf]
  %v8224 = vld [vmem:[%s5 + $0xc0] sm:$0xf]
  %v8225 = vld [vmem:[%s5 + $0xc4] sm:$0xf]
  %v8226 = vld [vmem:[%s5 + $0xc8] sm:$0xf]
  %v8227 = vld [vmem:[%s5 + $0xcc] sm:$0xf]
  %v8228 = vld [vmem:[%s5 + $0xd0] sm:$0xf]
  %v8229 = vld [vmem:[%s5 + $0xd4] sm:$0xf]
  %v8230 = vld [vmem:[%s5 + $0xd8] sm:$0xf]
  %v8231 = vld [vmem:[%s5 + $0xdc] sm:$0xf]
  %v8232 = vld [vmem:[%s5 + $0xe0] sm:$0xf]
  %v8233 = vld [vmem:[%s5 + $0xe4] sm:$0xf]
  %v8234 = vld [vmem:[%s5 + $0xe8] sm:$0xf]
  %v8235 = vld [vmem:[%s5 + $0xec] sm:$0xf]
  %v8236 = vld [vmem:[%s5 + $0xf0] sm:$0xf]
  %v8237 = vld [vmem:[%s5 + $0xf4] sm:$0xf]
  %v8238 = vld [vmem:[%s5 + $0xf8] sm:$0xf]
  %v8239 = vld [vmem:[%s5 + $0xfc] sm:$0xf]
  %v8240 = vld [vmem:[%s5 + $0x100] sm:$0xf]
  %v8241 = vld [vmem:[%s5 + $0x104] sm:$0xf]
  %v8242 = vld [vmem:[%s5 + $0x108] sm:$0xf]
  %v8243 = vld [vmem:[%s5 + $0x10c] sm:$0xf]
  %v8244 = vld [vmem:[%s5 + $0x110] sm:$0xf]
  %v8245 = vld [vmem:[%s5 + $0x114] sm:$0xf]
  %v8246 = vld [vmem:[%s5 + $0x118] sm:$0xf]
  %v8247 = vld [vmem:[%s5 + $0x11c] sm:$0xf]
  %v8248 = vld [vmem:[%s6] sm:$0x1]
  %v8250 = vlaneseq
  %v8251 = vshrl.u32 %v8250, 7
  %v8252 = vsub.s32 0, %v8251
  %v8253 = vrot.slane %v8248, %v8252
  %v8327 = vunpack.c.l.b16 %v8176
  %v8328 = vunpack.c.l.b16 %v8177
  %v8329 = vunpack.c.l.b16 %v8178
  %v8330 = vunpack.c.l.b16 %v8179
  %v8331 = vunpack.c.l.b16 %v8180
  %v8332 = vunpack.c.l.b16 %v8181
  %v8333 = vunpack.c.l.b16 %v8182
  %v8334 = vunpack.c.l.b16 %v8183
  %v8335 = vunpack.c.l.b16 %v8184
  %v8336 = vunpack.c.l.b16 %v8185
  %v8337 = vunpack.c.l.b16 %v8186
  %v8338 = vunpack.c.l.b16 %v8187
  %v8339 = vunpack.c.l.b16 %v8188
  %v8340 = vunpack.c.l.b16 %v8189
  %v8341 = vunpack.c.l.b16 %v8190
  %v8342 = vunpack.c.l.b16 %v8191
  %v8343 = vunpack.c.l.b16 %v8192
  %v8344 = vunpack.c.l.b16 %v8193
  %v8345 = vunpack.c.l.b16 %v8194
  %v8346 = vunpack.c.l.b16 %v8195
  %v8347 = vunpack.c.l.b16 %v8196
  %v8348 = vunpack.c.l.b16 %v8197
  %v8349 = vunpack.c.l.b16 %v8198
  %v8350 = vunpack.c.l.b16 %v8199
  %v8351 = vunpack.c.l.b16 %v8200
  %v8352 = vunpack.c.l.b16 %v8201
  %v8353 = vunpack.c.l.b16 %v8202
  %v8354 = vunpack.c.l.b16 %v8203
  %v8355 = vunpack.c.l.b16 %v8204
  %v8356 = vunpack.c.l.b16 %v8205
  %v8357 = vunpack.c.l.b16 %v8206
  %v8358 = vunpack.c.l.b16 %v8207
  %v8359 = vunpack.c.l.b16 %v8208
  %v8360 = vunpack.c.l.b16 %v8209
  %v8361 = vunpack.c.l.b16 %v8210
  %v8362 = vunpack.c.l.b16 %v8211
  %v8363 = vunpack.c.l.b16 %v8212
  %v8364 = vunpack.c.l.b16 %v8213
  %v8365 = vunpack.c.l.b16 %v8214
  %v8366 = vunpack.c.l.b16 %v8215
  %v8367 = vunpack.c.l.b16 %v8216
  %v8368 = vunpack.c.l.b16 %v8217
  %v8369 = vunpack.c.l.b16 %v8218
  %v8370 = vunpack.c.l.b16 %v8219
  %v8371 = vunpack.c.l.b16 %v8220
  %v8372 = vunpack.c.l.b16 %v8221
  %v8373 = vunpack.c.l.b16 %v8222
  %v8374 = vunpack.c.l.b16 %v8223
  %v8375 = vunpack.c.l.b16 %v8224
  %v8376 = vunpack.c.l.b16 %v8225
  %v8377 = vunpack.c.l.b16 %v8226
  %v8378 = vunpack.c.l.b16 %v8227
  %v8379 = vunpack.c.l.b16 %v8228
  %v8380 = vunpack.c.l.b16 %v8229
  %v8381 = vunpack.c.l.b16 %v8230
  %v8382 = vunpack.c.l.b16 %v8231
  %v8383 = vunpack.c.l.b16 %v8232
  %v8384 = vunpack.c.l.b16 %v8233
  %v8385 = vunpack.c.l.b16 %v8234
  %v8386 = vunpack.c.l.b16 %v8235
  %v8387 = vunpack.c.l.b16 %v8236
  %v8388 = vunpack.c.l.b16 %v8237
  %v8389 = vunpack.c.l.b16 %v8238
  %v8390 = vunpack.c.l.b16 %v8239
  %v8391 = vunpack.c.l.b16 %v8240
  %v8392 = vunpack.c.l.b16 %v8241
  %v8393 = vunpack.c.l.b16 %v8242
  %v8394 = vunpack.c.l.b16 %v8243
  %v8395 = vunpack.c.l.b16 %v8244
  %v8396 = vunpack.c.l.b16 %v8245
  %v8397 = vunpack.c.l.b16 %v8246
  %v8398 = vunpack.c.l.b16 %v8247
  %v8399 = vpack.c.b16 %v8328, %v8327
  %v8400 = vpack.c.b16 %v8330, %v8329
  %v8401 = vpack.c.b16 %v8332, %v8331
  %v8402 = vpack.c.b16 %v8334, %v8333
  %v8403 = vpack.c.b16 %v8336, %v8335
  %v8404 = vpack.c.b16 %v8338, %v8337
  %v8405 = vpack.c.b16 %v8340, %v8339
  %v8406 = vpack.c.b16 %v8342, %v8341
  %v8407 = vpack.c.b16 %v8344, %v8343
  %v8408 = vpack.c.b16 %v8346, %v8345
  %v8409 = vpack.c.b16 %v8348, %v8347
  %v8410 = vpack.c.b16 %v8350, %v8349
  %v8411 = vpack.c.b16 %v8352, %v8351
  %v8412 = vpack.c.b16 %v8354, %v8353
  %v8413 = vpack.c.b16 %v8356, %v8355
  %v8414 = vpack.c.b16 %v8358, %v8357
  %v8415 = vpack.c.b16 %v8360, %v8359
  %v8416 = vpack.c.b16 %v8362, %v8361
  %v8417 = vpack.c.b16 %v8364, %v8363
  %v8418 = vpack.c.b16 %v8366, %v8365
  %v8419 = vpack.c.b16 %v8368, %v8367
  %v8420 = vpack.c.b16 %v8370, %v8369
  %v8421 = vpack.c.b16 %v8372, %v8371
  %v8422 = vpack.c.b16 %v8374, %v8373
  %v8423 = vpack.c.b16 %v8376, %v8375
  %v8424 = vpack.c.b16 %v8378, %v8377
  %v8425 = vpack.c.b16 %v8380, %v8379
  %v8426 = vpack.c.b16 %v8382, %v8381
  %v8427 = vpack.c.b16 %v8384, %v8383
  %v8428 = vpack.c.b16 %v8386, %v8385
  %v8429 = vpack.c.b16 %v8388, %v8387
  %v8430 = vpack.c.b16 %v8390, %v8389
  %v8431 = vpack.c.b16 %v8392, %v8391
  %v8432 = vpack.c.b16 %v8394, %v8393
  %v8433 = vpack.c.b16 %v8396, %v8395
  %v8434 = vpack.c.b16 %v8398, %v8397
  %v8472 = vsel %vm5323, %v8175, 0
  %8474 = vmatprep.subr.bf16.mxu0 0
  %8475 = vmatpush1.bf16.msra.mxu0 %v8399
  %8476 = vmatprep.subr.bf16.mxu0 0
  %8477 = vmatpush1.bf16.msra.mxu0 %v8400
  %8478 = vmatprep.subr.bf16.mxu0 0
  %8479 = vmatpush1.bf16.msra.mxu0 %v8401
  %8480 = vmatprep.subr.bf16.mxu0 0
  %8481 = vmatpush1.bf16.msra.mxu0 %v8402
  %8482 = vmatprep.subr.bf16.mxu0 0
  %8483 = vmatpush1.bf16.msra.mxu0 %v8403
  %8484 = vmatprep.subr.bf16.mxu0 0
  %8485 = vmatpush1.bf16.msra.mxu0 %v8404
  %8486 = vmatprep.subr.bf16.mxu0 0
  %8487 = vmatpush1.bf16.msra.mxu0 %v8405
  %8488 = vmatprep.subr.bf16.mxu0 0
  %8489 = vmatpush1.bf16.msra.mxu0 %v8406
  %8490 = vmatprep.subr.bf16.mxu0 0
  %8491 = vmatpush1.bf16.msra.mxu0 %v8407
  %8492 = vmatprep.subr.bf16.mxu0 0
  %8493 = vmatpush1.bf16.msra.mxu0 %v8408
  %8494 = vmatprep.subr.bf16.mxu0 0
  %8495 = vmatpush1.bf16.msra.mxu0 %v8409
  %8496 = vmatprep.subr.bf16.mxu0 0
  %8497 = vmatpush1.bf16.msra.mxu0 %v8410
  %8498 = vmatprep.subr.bf16.mxu0 0
  %8499 = vmatpush1.bf16.msra.mxu0 %v8411
  %8500 = vmatprep.subr.bf16.mxu0 0
  %8501 = vmatpush1.bf16.msra.mxu0 %v8412
  %8502 = vmatprep.subr.bf16.mxu0 0
  %8503 = vmatpush1.bf16.msra.mxu0 %v8413
  %8504 = vmatprep.subr.bf16.mxu0 0
  %8505 = vmatpush1.bf16.msra.mxu0 %v8414
  %8506 = vmatprep.mubr.bf16.mxu0 %v8172
  %8507 = vmatmul.mubr.bf16.gmra.mrb[0].mxu0 %v8171
  %v8508 = vpop.f32.mrb[0].mxu0
  %v8509 = vadd.f32 %v8253, %v8508
  %v8510 = vpop.f32.mrb[0].mxu0
  %v8511 = vpop.f32.mrb[0].mxu0
  %v8512 = vpop.f32.mrb[0].mxu0
  %8513 = vdwg.mxu0
  %8514 = vmatprep.subr.bf16.mxu0 0
  %8515 = vmatpush1.bf16.msra.mxu0 %v8415
  %8516 = vmatprep.subr.bf16.mxu0 0
  %8517 = vmatpush1.bf16.msra.mxu0 %v8416
  %8518 = vmatprep.subr.bf16.mxu0 0
  %8519 = vmatpush1.bf16.msra.mxu0 %v8417
  %8520 = vmatprep.subr.bf16.mxu0 0
  %8521 = vmatpush1.bf16.msra.mxu0 %v8418
  %8522 = vmatprep.subr.bf16.mxu0 0
  %8523 = vmatpush1.bf16.msra.mxu0 %v8419
  %8524 = vmatprep.subr.bf16.mxu0 0
  %8525 = vmatpush1.bf16.msra.mxu0 %v8420
  %8526 = vmatprep.subr.bf16.mxu0 0
  %8527 = vmatpush1.bf16.msra.mxu0 %v8421
  %8528 = vmatprep.subr.bf16.mxu0 0
  %8529 = vmatpush1.bf16.msra.mxu0 %v8422
  %8530 = vmatprep.subr.bf16.mxu0 0
  %8531 = vmatpush1.bf16.msra.mxu0 %v8423
  %8532 = vmatprep.subr.bf16.mxu0 0
  %8533 = vmatpush1.bf16.msra.mxu0 %v8424
  %8534 = vmatprep.subr.bf16.mxu0 0
  %8535 = vmatpush1.bf16.msra.mxu0 %v8425
  %8536 = vmatprep.subr.bf16.mxu0 0
  %8537 = vmatpush1.bf16.msra.mxu0 %v8426
  %8538 = vmatprep.subr.bf16.mxu0 0
  %8539 = vmatpush1.bf16.msra.mxu0 %v8427
  %8540 = vmatprep.subr.bf16.mxu0 0
  %8541 = vmatpush1.bf16.msra.mxu0 %v8428
  %8542 = vmatprep.subr.bf16.mxu0 0
  %8543 = vmatpush1.bf16.msra.mxu0 %v8429
  %8544 = vmatprep.subr.bf16.mxu0 0
  %8545 = vmatpush1.bf16.msra.mxu0 %v8430
  %8546 = vmatprep.mubr.bf16.mxu0 %v8174
  %8547 = vmatmul.mubr.bf16.gmra.mrb[0].mxu0 %v8173
  %v8548 = vpop.f32.mrb[0].mxu0
  %v8549 = vadd.f32 %v8509, %v8548
  %v8550 = vpop.f32.mrb[0].mxu0
  %v8551 = vpop.f32.mrb[0].mxu0
  %v8552 = vpop.f32.mrb[0].mxu0
  %8553 = vdwg.mxu0
  %8554 = vmatprep.subr.bf16.mxu0 0
  %8555 = vmatpush1.bf16.msra.mxu0 %v8431
  %8556 = vmatprep.subr.bf16.mxu0 0
  %8557 = vmatpush1.bf16.msra.mxu0 %v8432
  %8558 = vmatprep.subr.bf16.mxu0 0
  %8559 = vmatpush1.bf16.msra.mxu0 %v8433
  %8560 = vmatprep.subr.bf16.mxu0 0
  %8561 = vmatpush1.bf16.msra.mxu0 %v8434
  %8562 = vmatprep.subr.bf16.mxu0 0
  %8563 = vmatpush1.bf16.msra.mxu0 0
  %8564 = vmatprep.subr.bf16.mxu0 0
  %8565 = vmatpush1.bf16.msra.mxu0 0
  %8566 = vmatprep.subr.bf16.mxu0 0
  %8567 = vmatpush1.bf16.msra.mxu0 0
  %8568 = vmatprep.subr.bf16.mxu0 0
  %8569 = vmatpush1.bf16.msra.mxu0 0
  %8570 = vmatprep.subr.bf16.mxu0 0
  %8571 = vmatpush1.bf16.msra.mxu0 0
  %8572 = vmatprep.subr.bf16.mxu0 0
  %8573 = vmatpush1.bf16.msra.mxu0 0
  %8574 = vmatprep.subr.bf16.mxu0 0
  %8575 = vmatpush1.bf16.msra.mxu0 0
  %8576 = vmatprep.subr.bf16.mxu0 0
  %8577 = vmatpush1.bf16.msra.mxu0 0
  %8578 = vmatprep.subr.bf16.mxu0 0
  %8579 = vmatpush1.bf16.msra.mxu0 0
  %8580 = vmatprep.subr.bf16.mxu0 0
  %8581 = vmatpush1.bf16.msra.mxu0 0
  %8582 = vmatprep.subr.bf16.mxu0 0
  %8583 = vmatpush1.bf16.msra.mxu0 0
  %8584 = vmatprep.subr.bf16.mxu0 0
  %8585 = vmatpush1.bf16.msra.mxu0 0
  %8586 = vmatprep.mubr.bf16.mxu0 0
  %8587 = vmatmul.mubr.bf16.gmra.mrb[0].mxu0 %v8472
  %v8588 = vpop.f32.mrb[0].mxu0
  %v8589 = vadd.f32 %v8549, %v8588
  %v8590 = vpop.f32.mrb[0].mxu0
  %v8591 = vpop.f32.mrb[0].mxu0
  %v8592 = vpop.f32.mrb[0].mxu0
  %8593 = vdwg.mxu0
  %v8594 = vmax.f32 %v8589, 0.0
  %v8595 = vpack.c.bf16 %v8594, %v8594
  %v8596 = vld [vmem:[%s7] sm:$0xff]
  %v8597 = vld [vmem:[%s7 + $0x8] sm:$0xff]
  %v8598 = vld [vmem:[%s7 + $0x10] sm:$0xff]
  %v8599 = vld [vmem:[%s7 + $0x18] sm:$0xff]
  %v8600 = vld [vmem:[%s7 + $0x20] sm:$0xff]
  %v8601 = vld [vmem:[%s7 + $0x28] sm:$0xff]
  %v8602 = vld [vmem:[%s7 + $0x30] sm:$0xff]
  %v8603 = vld [vmem:[%s7 + $0x38] sm:$0xff]
  %v8604 = vld [vmem:[%s7 + $0x40] sm:$0xff]
  %v8605 = vld [vmem:[%s7 + $0x48] sm:$0xff]
  %v8606 = vld [vmem:[%s7 + $0x50] sm:$0xff]
  %v8607 = vld [vmem:[%s7 + $0x58] sm:$0xff]
  %v8608 = vld [vmem:[%s7 + $0x60] sm:$0xff]
  %v8609 = vld [vmem:[%s7 + $0x68] sm:$0xff]
  %v8610 = vld [vmem:[%s7 + $0x70] sm:$0xff]
  %v8611 = vld [vmem:[%s7 + $0x78] sm:$0xff]
  %v8612 = vld [vmem:[%s8] sm:$0xf]
  %v8614 = vlaneseq
  %v8615 = vshrl.u32 %v8614, 7
  %v8616 = vsub.s32 0, %v8615
  %v8617 = vrot.slane %v8612, %v8616
  %v8618 = vlaneseq
  %v8619 = vshrl.u32 %v8618, 7
  %v8620 = vsub.s32 1, %v8619
  %v8621 = vrot.slane %v8612, %v8620
  %v8622 = vlaneseq
  %v8623 = vshrl.u32 %v8622, 7
  %v8624 = vsub.s32 2, %v8623
  %v8625 = vrot.slane %v8612, %v8624
  %v8626 = vlaneseq
  %v8627 = vshrl.u32 %v8626, 7
  %v8628 = vsub.s32 3, %v8627
  %v8629 = vrot.slane %v8612, %v8628
  %v8650 = vunpack.c.l.b16 %v8596
  %v8651 = vunpack.c.h.b16 %v8596
  %v8652 = vunpack.c.l.b16 %v8597
  %v8653 = vunpack.c.h.b16 %v8597
  %v8654 = vunpack.c.l.b16 %v8598
  %v8655 = vunpack.c.h.b16 %v8598
  %v8656 = vunpack.c.l.b16 %v8599
  %v8657 = vunpack.c.h.b16 %v8599
  %v8658 = vunpack.c.l.b16 %v8600
  %v8659 = vunpack.c.h.b16 %v8600
  %v8660 = vunpack.c.l.b16 %v8601
  %v8661 = vunpack.c.h.b16 %v8601
  %v8662 = vunpack.c.l.b16 %v8602
  %v8663 = vunpack.c.h.b16 %v8602
  %v8664 = vunpack.c.l.b16 %v8603
  %v8665 = vunpack.c.h.b16 %v8603
  %v8666 = vunpack.c.l.b16 %v8604
  %v8667 = vunpack.c.h.b16 %v8604
  %v8668 = vunpack.c.l.b16 %v8605
  %v8669 = vunpack.c.h.b16 %v8605
  %v8670 = vunpack.c.l.b16 %v8606
  %v8671 = vunpack.c.h.b16 %v8606
  %v8672 = vunpack.c.l.b16 %v8607
  %v8673 = vunpack.c.h.b16 %v8607
  %v8674 = vunpack.c.l.b16 %v8608
  %v8675 = vunpack.c.h.b16 %v8608
  %v8676 = vunpack.c.l.b16 %v8609
  %v8677 = vunpack.c.h.b16 %v8609
  %v8678 = vunpack.c.l.b16 %v8610
  %v8679 = vunpack.c.h.b16 %v8610
  %v8680 = vunpack.c.l.b16 %v8611
  %v8681 = vunpack.c.h.b16 %v8611
  %v8682 = vpack.c.b16 %v8654, %v8650
  %v8683 = vpack.c.b16 %v8655, %v8651
  %v8684 = vpack.c.b16 %v8656, %v8652
  %v8685 = vpack.c.b16 %v8657, %v8653
  %v8686 = vpack.c.b16 %v8662, %v8658
  %v8687 = vpack.c.b16 %v8663, %v8659
  %v8688 = vpack.c.b16 %v8664, %v8660
  %v8689 = vpack.c.b16 %v8665, %v8661
  %v8690 = vpack.c.b16 %v8670, %v8666
  %v8691 = vpack.c.b16 %v8671, %v8667
  %v8692 = vpack.c.b16 %v8672, %v8668
  %v8693 = vpack.c.b16 %v8673, %v8669
  %v8694 = vpack.c.b16 %v8678, %v8674
  %v8695 = vpack.c.b16 %v8679, %v8675
  %v8696 = vpack.c.b16 %v8680, %v8676
  %v8697 = vpack.c.b16 %v8681, %v8677
  %v8715 = vsel %vm5323, %v8595, 0
  %8717 = vmatprep.subr.bf16.mxu0 %v8683
  %8718 = vmatpush1.bf16.msra.mxu0 %v8682
  %8719 = vmatprep.subr.bf16.mxu0 %v8687
  %8720 = vmatpush1.bf16.msra.mxu0 %v8686
  %8721 = vmatprep.subr.bf16.mxu0 %v8691
  %8722 = vmatpush1.bf16.msra.mxu0 %v8690
  %8723 = vmatprep.subr.bf16.mxu0 %v8695
  %8724 = vmatpush1.bf16.msra.mxu0 %v8694
  %8725 = vmatprep.subr.bf16.mxu0 0
  %8726 = vmatpush1.bf16.msra.mxu0 0
  %8727 = vmatprep.subr.bf16.mxu0 0
  %8728 = vmatpush1.bf16.msra.mxu0 0
  %8729 = vmatprep.subr.bf16.mxu0 0
  %8730 = vmatpush1.bf16.msra.mxu0 0
  %8731 = vmatprep.subr.bf16.mxu0 0
  %8732 = vmatpush1.bf16.msra.mxu0 0
  %8733 = vmatprep.subr.bf16.mxu0 0
  %8734 = vmatpush1.bf16.msra.mxu0 0
  %8735 = vmatprep.subr.bf16.mxu0 0
  %8736 = vmatpush1.bf16.msra.mxu0 0
  %8737 = vmatprep.subr.bf16.mxu0 0
  %8738 = vmatpush1.bf16.msra.mxu0 0
  %8739 = vmatprep.subr.bf16.mxu0 0
  %8740 = vmatpush1.bf16.msra.mxu0 0
  %8741 = vmatprep.subr.bf16.mxu0 0
  %8742 = vmatpush1.bf16.msra.mxu0 0
  %8743 = vmatprep.subr.bf16.mxu0 0
  %8744 = vmatpush1.bf16.msra.mxu0 0
  %8745 = vmatprep.subr.bf16.mxu0 0
  %8746 = vmatpush1.bf16.msra.mxu0 0
  %8747 = vmatprep.subr.bf16.mxu0 0
  %8748 = vmatpush1.bf16.msra.mxu0 0
  %8749 = vmatprep.mubr.bf16.mxu0 0
  %8750 = vmatmul.mubr.bf16.gmra.mrb[0].mxu0 %v8715
  %v8751 = vpop.f32.mrb[0].mxu0
  %v8752 = vadd.f32 %v8617, %v8751
  %v8753 = vpop.f32.mrb[0].mxu0
  %v8754 = vadd.f32 %v8621, %v8753
  %v8755 = vpop.f32.mrb[0].mxu0
  %v8756 = vpop.f32.mrb[0].mxu0
  %8757 = vdwg.mxu0
  %8758 = vmatprep.subr.bf16.mxu0 %v8685
  %8759 = vmatpush1.bf16.msra.mxu0 %v8684
  %8760 = vmatprep.subr.bf16.mxu0 %v8689
  %8761 = vmatpush1.bf16.msra.mxu0 %v8688
  %8762 = vmatprep.subr.bf16.mxu0 %v8693
  %8763 = vmatpush1.bf16.msra.mxu0 %v8692
  %8764 = vmatprep.subr.bf16.mxu0 %v8697
  %8765 = vmatpush1.bf16.msra.mxu0 %v8696
  %8766 = vmatprep.subr.bf16.mxu0 0
  %8767 = vmatpush1.bf16.msra.mxu0 0
  %8768 = vmatprep.subr.bf16.mxu0 0
  %8769 = vmatpush1.bf16.msra.mxu0 0
  %8770 = vmatprep.subr.bf16.mxu0 0
  %8771 = vmatpush1.bf16.msra.mxu0 0
  %8772 = vmatprep.subr.bf16.mxu0 0
  %8773 = vmatpush1.bf16.msra.mxu0 0
  %8774 = vmatprep.subr.bf16.mxu0 0
  %8775 = vmatpush1.bf16.msra.mxu0 0
  %8776 = vmatprep.subr.bf16.mxu0 0
  %8777 = vmatpush1.bf16.msra.mxu0 0
  %8778 = vmatprep.subr.bf16.mxu0 0
  %8779 = vmatpush1.bf16.msra.mxu0 0
  %8780 = vmatprep.subr.bf16.mxu0 0
  %8781 = vmatpush1.bf16.msra.mxu0 0
  %8782 = vmatprep.subr.bf16.mxu0 0
  %8783 = vmatpush1.bf16.msra.mxu0 0
  %8784 = vmatprep.subr.bf16.mxu0 0
  %8785 = vmatpush1.bf16.msra.mxu0 0
  %8786 = vmatprep.subr.bf16.mxu0 0
  %8787 = vmatpush1.bf16.msra.mxu0 0
  %8788 = vmatprep.subr.bf16.mxu0 0
  %8789 = vmatpush1.bf16.msra.mxu0 0
  %8790 = vmatprep.mubr.bf16.mxu0 0
  %8791 = vmatmul.mubr.bf16.gmra.mrb[0].mxu0 %v8715
  %v8792 = vpop.f32.mrb[0].mxu0
  %v8793 = vadd.f32 %v8625, %v8792
  %v8794 = vpop.f32.mrb[0].mxu0
  %v8795 = vadd.f32 %v8629, %v8794
  %v8796 = vpop.f32.mrb[0].mxu0
  %v8797 = vpop.f32.mrb[0].mxu0
  %8798 = vdwg.mxu0
  %v8799 = vmax.f32 %v8752, 0.0
  %v8800 = vmax.f32 %v8754, 0.0
  %v8801 = vmax.f32 %v8793, 0.0
  %v8802 = vmax.f32 %v8795, 0.0
  %v8803 = vpack.c.bf16 %v8799, %v8799
  %v8804 = vpack.c.bf16 %v8800, %v8800
  %v8805 = vpack.c.bf16 %v8801, %v8801
  %v8806 = vpack.c.bf16 %v8802, %v8802
  %v8807 = vld [vmem:[%s9] sm:$0xf]
  %v8808 = vld [vmem:[%s9 + $0x4] sm:$0xf]
  %v8809 = vld [vmem:[%s9 + $0x8] sm:$0xf]
  %v8810 = vld [vmem:[%s9 + $0xc] sm:$0xf]
  %v8811 = vld [vmem:[%s9 + $0x10] sm:$0xf]
  %v8812 = vld [vmem:[%s9 + $0x14] sm:$0xf]
  %v8813 = vld [vmem:[%s9 + $0x18] sm:$0xf]
  %v8814 = vld [vmem:[%s9 + $0x1c] sm:$0xf]
  %v8815 = vld [vmem:[%s9 + $0x20] sm:$0xf]
  %v8816 = vld [vmem:[%s9 + $0x24] sm:$0xf]
  %v8817 = vld [vmem:[%s9 + $0x28] sm:$0xf]
  %v8818 = vld [vmem:[%s9 + $0x2c] sm:$0xf]
  %v8819 = vld [vmem:[%s9 + $0x30] sm:$0xf]
  %v8820 = vld [vmem:[%s9 + $0x34] sm:$0xf]
  %v8821 = vld [vmem:[%s9 + $0x38] sm:$0xf]
  %v8822 = vld [vmem:[%s9 + $0x3c] sm:$0xf]
  %v8823 = vld [vmem:[%s9 + $0x40] sm:$0xf]
  %v8824 = vld [vmem:[%s9 + $0x44] sm:$0xf]
  %v8825 = vld [vmem:[%s9 + $0x48] sm:$0xf]
  %v8826 = vld [vmem:[%s9 + $0x4c] sm:$0xf]
  %v8827 = vld [vmem:[%s9 + $0x50] sm:$0xf]
  %v8828 = vld [vmem:[%s9 + $0x54] sm:$0xf]
  %v8829 = vld [vmem:[%s9 + $0x58] sm:$0xf]
  %v8830 = vld [vmem:[%s9 + $0x5c] sm:$0xf]
  %v8831 = vld [vmem:[%s9 + $0x60] sm:$0xf]
  %v8832 = vld [vmem:[%s9 + $0x64] sm:$0xf]
  %v8833 = vld [vmem:[%s9 + $0x68] sm:$0xf]
  %v8834 = vld [vmem:[%s9 + $0x6c] sm:$0xf]
  %v8835 = vld [vmem:[%s9 + $0x70] sm:$0xf]
  %v8836 = vld [vmem:[%s9 + $0x74] sm:$0xf]
  %v8837 = vld [vmem:[%s9 + $0x78] sm:$0xf]
  %v8838 = vld [vmem:[%s9 + $0x7c] sm:$0xf]
  %v8839 = vld [vmem:[%s9 + $0x80] sm:$0xf]
  %v8840 = vld [vmem:[%s9 + $0x84] sm:$0xf]
  %v8841 = vld [vmem:[%s9 + $0x88] sm:$0xf]
  %v8842 = vld [vmem:[%s9 + $0x8c] sm:$0xf]
  %v8843 = vld [vmem:[%s9 + $0x90] sm:$0xf]
  %v8844 = vld [vmem:[%s9 + $0x94] sm:$0xf]
  %v8845 = vld [vmem:[%s9 + $0x98] sm:$0xf]
  %v8846 = vld [vmem:[%s9 + $0x9c] sm:$0xf]
  %v8847 = vld [vmem:[%s9 + $0xa0] sm:$0xf]
  %v8848 = vld [vmem:[%s9 + $0xa4] sm:$0xf]
  %v8849 = vld [vmem:[%s9 + $0xa8] sm:$0xf]
  %v8850 = vld [vmem:[%s9 + $0xac] sm:$0xf]
  %v8851 = vld [vmem:[%s9 + $0xb0] sm:$0xf]
  %v8852 = vld [vmem:[%s9 + $0xb4] sm:$0xf]
  %v8853 = vld [vmem:[%s9 + $0xb8] sm:$0xf]
  %v8854 = vld [vmem:[%s9 + $0xbc] sm:$0xf]
  %v8855 = vld [vmem:[%s9 + $0xc0] sm:$0xf]
  %v8856 = vld [vmem:[%s9 + $0xc4] sm:$0xf]
  %v8857 = vld [vmem:[%s9 + $0xc8] sm:$0xf]
  %v8858 = vld [vmem:[%s9 + $0xcc] sm:$0xf]
  %v8859 = vld [vmem:[%s9 + $0xd0] sm:$0xf]
  %v8860 = vld [vmem:[%s9 + $0xd4] sm:$0xf]
  %v8861 = vld [vmem:[%s9 + $0xd8] sm:$0xf]
  %v8862 = vld [vmem:[%s9 + $0xdc] sm:$0xf]
  %v8863 = vld [vmem:[%s9 + $0xe0] sm:$0xf]
  %v8864 = vld [vmem:[%s9 + $0xe4] sm:$0xf]
  %v8865 = vld [vmem:[%s9 + $0xe8] sm:$0xf]
  %v8866 = vld [vmem:[%s9 + $0xec] sm:$0xf]
  %v8867 = vld [vmem:[%s9 + $0xf0] sm:$0xf]
  %v8868 = vld [vmem:[%s9 + $0xf4] sm:$0xf]
  %v8869 = vld [vmem:[%s9 + $0xf8] sm:$0xf]
  %v8870 = vld [vmem:[%s9 + $0xfc] sm:$0xf]
  %v8871 = vld [vmem:[%s10] sm:$0x1]
  %v8873 = vlaneseq
  %v8874 = vshrl.u32 %v8873, 7
  %v8875 = vsub.s32 0, %v8874
  %v8876 = vrot.slane %v8871, %v8875
  %v8942 = vunpack.c.l.b16 %v8807
  %v8943 = vunpack.c.l.b16 %v8808
  %v8944 = vunpack.c.l.b16 %v8809
  %v8945 = vunpack.c.l.b16 %v8810
  %v8946 = vunpack.c.l.b16 %v8811
  %v8947 = vunpack.c.l.b16 %v8812
  %v8948 = vunpack.c.l.b16 %v8813
  %v8949 = vunpack.c.l.b16 %v8814
  %v8950 = vunpack.c.l.b16 %v8815
  %v8951 = vunpack.c.l.b16 %v8816
  %v8952 = vunpack.c.l.b16 %v8817
  %v8953 = vunpack.c.l.b16 %v8818
  %v8954 = vunpack.c.l.b16 %v8819
  %v8955 = vunpack.c.l.b16 %v8820
  %v8956 = vunpack.c.l.b16 %v8821
  %v8957 = vunpack.c.l.b16 %v8822
  %v8958 = vunpack.c.l.b16 %v8823
  %v8959 = vunpack.c.l.b16 %v8824
  %v8960 = vunpack.c.l.b16 %v8825
  %v8961 = vunpack.c.l.b16 %v8826
  %v8962 = vunpack.c.l.b16 %v8827
  %v8963 = vunpack.c.l.b16 %v8828
  %v8964 = vunpack.c.l.b16 %v8829
  %v8965 = vunpack.c.l.b16 %v8830
  %v8966 = vunpack.c.l.b16 %v8831
  %v8967 = vunpack.c.l.b16 %v8832
  %v8968 = vunpack.c.l.b16 %v8833
  %v8969 = vunpack.c.l.b16 %v8834
  %v8970 = vunpack.c.l.b16 %v8835
  %v8971 = vunpack.c.l.b16 %v8836
  %v8972 = vunpack.c.l.b16 %v8837
  %v8973 = vunpack.c.l.b16 %v8838
  %v8974 = vunpack.c.l.b16 %v8839
  %v8975 = vunpack.c.l.b16 %v8840
  %v8976 = vunpack.c.l.b16 %v8841
  %v8977 = vunpack.c.l.b16 %v8842
  %v8978 = vunpack.c.l.b16 %v8843
  %v8979 = vunpack.c.l.b16 %v8844
  %v8980 = vunpack.c.l.b16 %v8845
  %v8981 = vunpack.c.l.b16 %v8846
  %v8982 = vunpack.c.l.b16 %v8847
  %v8983 = vunpack.c.l.b16 %v8848
  %v8984 = vunpack.c.l.b16 %v8849
  %v8985 = vunpack.c.l.b16 %v8850
  %v8986 = vunpack.c.l.b16 %v8851
  %v8987 = vunpack.c.l.b16 %v8852
  %v8988 = vunpack.c.l.b16 %v8853
  %v8989 = vunpack.c.l.b16 %v8854
  %v8990 = vunpack.c.l.b16 %v8855
  %v8991 = vunpack.c.l.b16 %v8856
  %v8992 = vunpack.c.l.b16 %v8857
  %v8993 = vunpack.c.l.b16 %v8858
  %v8994 = vunpack.c.l.b16 %v8859
  %v8995 = vunpack.c.l.b16 %v8860
  %v8996 = vunpack.c.l.b16 %v8861
  %v8997 = vunpack.c.l.b16 %v8862
  %v8998 = vunpack.c.l.b16 %v8863
  %v8999 = vunpack.c.l.b16 %v8864
  %v9000 = vunpack.c.l.b16 %v8865
  %v9001 = vunpack.c.l.b16 %v8866
  %v9002 = vunpack.c.l.b16 %v8867
  %v9003 = vunpack.c.l.b16 %v8868
  %v9004 = vunpack.c.l.b16 %v8869
  %v9005 = vunpack.c.l.b16 %v8870
  %v9006 = vpack.c.b16 %v8943, %v8942
  %v9007 = vpack.c.b16 %v8945, %v8944
  %v9008 = vpack.c.b16 %v8947, %v8946
  %v9009 = vpack.c.b16 %v8949, %v8948
  %v9010 = vpack.c.b16 %v8951, %v8950
  %v9011 = vpack.c.b16 %v8953, %v8952
  %v9012 = vpack.c.b16 %v8955, %v8954
  %v9013 = vpack.c.b16 %v8957, %v8956
  %v9014 = vpack.c.b16 %v8959, %v8958
  %v9015 = vpack.c.b16 %v8961, %v8960
  %v9016 = vpack.c.b16 %v8963, %v8962
  %v9017 = vpack.c.b16 %v8965, %v8964
  %v9018 = vpack.c.b16 %v8967, %v8966
  %v9019 = vpack.c.b16 %v8969, %v8968
  %v9020 = vpack.c.b16 %v8971, %v8970
  %v9021 = vpack.c.b16 %v8973, %v8972
  %v9022 = vpack.c.b16 %v8975, %v8974
  %v9023 = vpack.c.b16 %v8977, %v8976
  %v9024 = vpack.c.b16 %v8979, %v8978
  %v9025 = vpack.c.b16 %v8981, %v8980
  %v9026 = vpack.c.b16 %v8983, %v8982
  %v9027 = vpack.c.b16 %v8985, %v8984
  %v9028 = vpack.c.b16 %v8987, %v8986
  %v9029 = vpack.c.b16 %v8989, %v8988
  %v9030 = vpack.c.b16 %v8991, %v8990
  %v9031 = vpack.c.b16 %v8993, %v8992
  %v9032 = vpack.c.b16 %v8995, %v8994
  %v9033 = vpack.c.b16 %v8997, %v8996
  %v9034 = vpack.c.b16 %v8999, %v8998
  %v9035 = vpack.c.b16 %v9001, %v9000
  %v9036 = vpack.c.b16 %v9003, %v9002
  %v9037 = vpack.c.b16 %v9005, %v9004
  %9070 = vmatprep.subr.bf16.mxu0 0
  %9071 = vmatpush1.bf16.msra.mxu0 %v9006
  %9072 = vmatprep.subr.bf16.mxu0 0
  %9073 = vmatpush1.bf16.msra.mxu0 %v9007
  %9074 = vmatprep.subr.bf16.mxu0 0
  %9075 = vmatpush1.bf16.msra.mxu0 %v9008
  %9076 = vmatprep.subr.bf16.mxu0 0
  %9077 = vmatpush1.bf16.msra.mxu0 %v9009
  %9078 = vmatprep.subr.bf16.mxu0 0
  %9079 = vmatpush1.bf16.msra.mxu0 %v9010
  %9080 = vmatprep.subr.bf16.mxu0 0
  %9081 = vmatpush1.bf16.msra.mxu0 %v9011
  %9082 = vmatprep.subr.bf16.mxu0 0
  %9083 = vmatpush1.bf16.msra.mxu0 %v9012
  %9084 = vmatprep.subr.bf16.mxu0 0
  %9085 = vmatpush1.bf16.msra.mxu0 %v9013
  %9086 = vmatprep.subr.bf16.mxu0 0
  %9087 = vmatpush1.bf16.msra.mxu0 %v9014
  %9088 = vmatprep.subr.bf16.mxu0 0
  %9089 = vmatpush1.bf16.msra.mxu0 %v9015
  %9090 = vmatprep.subr.bf16.mxu0 0
  %9091 = vmatpush1.bf16.msra.mxu0 %v9016
  %9092 = vmatprep.subr.bf16.mxu0 0
  %9093 = vmatpush1.bf16.msra.mxu0 %v9017
  %9094 = vmatprep.subr.bf16.mxu0 0
  %9095 = vmatpush1.bf16.msra.mxu0 %v9018
  %9096 = vmatprep.subr.bf16.mxu0 0
  %9097 = vmatpush1.bf16.msra.mxu0 %v9019
  %9098 = vmatprep.subr.bf16.mxu0 0
  %9099 = vmatpush1.bf16.msra.mxu0 %v9020
  %9100 = vmatprep.subr.bf16.mxu0 0
  %9101 = vmatpush1.bf16.msra.mxu0 %v9021
  %9102 = vmatprep.mubr.bf16.mxu0 %v8804
  %9103 = vmatmul.mubr.bf16.gmra.mrb[0].mxu0 %v8803
  %v9104 = vpop.f32.mrb[0].mxu0
  %v9105 = vadd.f32 %v8876, %v9104
  %v9106 = vpop.f32.mrb[0].mxu0
  %v9107 = vpop.f32.mrb[0].mxu0
  %v9108 = vpop.f32.mrb[0].mxu0
  %9109 = vdwg.mxu0
  %9110 = vmatprep.subr.bf16.mxu0 0
  %9111 = vmatpush1.bf16.msra.mxu0 %v9022
  %9112 = vmatprep.subr.bf16.mxu0 0
  %9113 = vmatpush1.bf16.msra.mxu0 %v9023
  %9114 = vmatprep.subr.bf16.mxu0 0
  %9115 = vmatpush1.bf16.msra.mxu0 %v9024
  %9116 = vmatprep.subr.bf16.mxu0 0
  %9117 = vmatpush1.bf16.msra.mxu0 %v9025
  %9118 = vmatprep.subr.bf16.mxu0 0
  %9119 = vmatpush1.bf16.msra.mxu0 %v9026
  %9120 = vmatprep.subr.bf16.mxu0 0
  %9121 = vmatpush1.bf16.msra.mxu0 %v9027
  %9122 = vmatprep.subr.bf16.mxu0 0
  %9123 = vmatpush1.bf16.msra.mxu0 %v9028
  %9124 = vmatprep.subr.bf16.mxu0 0
  %9125 = vmatpush1.bf16.msra.mxu0 %v9029
  %9126 = vmatprep.subr.bf16.mxu0 0
  %9127 = vmatpush1.bf16.msra.mxu0 %v9030
  %9128 = vmatprep.subr.bf16.mxu0 0
  %9129 = vmatpush1.bf16.msra.mxu0 %v9031
  %9130 = vmatprep.subr.bf16.mxu0 0
  %9131 = vmatpush1.bf16.msra.mxu0 %v9032
  %9132 = vmatprep.subr.bf16.mxu0 0
  %9133 = vmatpush1.bf16.msra.mxu0 %v9033
  %9134 = vmatprep.subr.bf16.mxu0 0
  %9135 = vmatpush1.bf16.msra.mxu0 %v9034
  %9136 = vmatprep.subr.bf16.mxu0 0
  %9137 = vmatpush1.bf16.msra.mxu0 %v9035
  %9138 = vmatprep.subr.bf16.mxu0 0
  %9139 = vmatpush1.bf16.msra.mxu0 %v9036
  %9140 = vmatprep.subr.bf16.mxu0 0
  %9141 = vmatpush1.bf16.msra.mxu0 %v9037
  %9142 = vmatprep.mubr.bf16.mxu0 %v8806
  %9143 = vmatmul.mubr.bf16.gmra.mrb[0].mxu0 %v8805
  %v9144 = vpop.f32.mrb[0].mxu0
  %v9145 = vadd.f32 %v9105, %v9144
  %v9146 = vpop.f32.mrb[0].mxu0
  %v9147 = vpop.f32.mrb[0].mxu0
  %v9148 = vpop.f32.mrb[0].mxu0
  %9149 = vdwg.mxu0
  %vm9150 = vcmask 64512
  %9151 = vst.msk [vmem:[%s11] sm:$0xff] %vm9150, %v9145
  // Predicated region
  $region46: #{dqn_forward.1} parent=0 // pred_check
    _
  $region47: #{dqn_forward.1} parent=0 // pred_check_branch
    %9153 = sbr.rel (0) target = $region49
  $region48: #{dqn_forward.1} parent=0 // pred_region
    _
  $region49: #{dqn_forward.1} parent=0 // pred_fallthru
    _
  // Predicated region
  $region50: #{dqn_forward.1} parent=0 // pred_check
    _
  $region51: #{dqn_forward.1} parent=0 // pred_check_branch
    %9155 = sbr.rel (0) target = $region53
  $region52: #{dqn_forward.1} parent=0 // pred_region
    _
  $region53: #{dqn_forward.1} parent=0 // pred_fallthru
    _

</llo_original>
